<compile_context>
chip_gen: v7x
topology: tpu7x:2x2x1
jax: 0.10.0
libtpu: 0.0.40
codegen_flags: <defaults>
</compile_context>

<pallas_src>
import jax
import jax.numpy as jnp
from jax.experimental import pallas as pl
from jax.experimental.pallas import tpu as pltpu

INPUT_SIZE = 784
HIDDEN_SIZE = 500
OUTPUT_SIZE = 10

# Lane-aligned (multiple-of-128) padded sizes. Zero padding is numerically exact:
# padded weight rows/cols and bias lanes are 0, relu(0)=0, and the residual
# subtract sees 0 - 0 in padded lanes; padded batch rows are sliced off.
IN_PAD = 896     # 784 -> 7*128
HID_PAD = 512    # 500 -> 4*128
OUT_PAD = 128    # 10  -> 1*128


def _round_up(x, m):
    return (x + m - 1) // m * m


def _pad2(a, rows, cols):
    return jnp.zeros((rows, cols), a.dtype).at[: a.shape[0], : a.shape[1]].set(a)


def _device_kind():
    try:
        return jax.devices()[0].device_kind.lower()
    except Exception:
        return ""


def _default_fuse_lr():
    # Fold lr∘l2 into one HIDxHID matmul only on 256-wide-MXU chips (v6e / v7x).
    kind = _device_kind()
    return not any(g in kind for g in ("v2", "v3", "v4", "v5"))


def make_ffnet_kernel(fuse_lr):
    def kernel(x_ref,
               w1_ref, b1_ref,
               wh_ref, bh_ref,
               w2_ref, b2_ref,
               wx_ref, bx_ref,     # (wr_t, br) or, if fused, (wc_t, bc)
               o_ref):
        # x already bf16; MXU gets bf16 operands, f32 accumulation, f32 elementwise.
        x = x_ref[...]
        b1 = b1_ref[...]
        bh = bh_ref[...]   # hoisted: reused by both lh applications
        b2 = b2_ref[...]   # hoisted: reused by both l2 applications
        bx = bx_ref[...]

        # out1 = l1(x)
        out1 = jnp.dot(x, w1_ref[...], preferred_element_type=jnp.float32) + b1
        # out2 = relu(out1)
        out2 = jnp.maximum(out1, 0.0)
        # out3 = lh(out2); out4 = relu(out3)
        out3 = jnp.dot(out2.astype(jnp.bfloat16), wh_ref[...],
                       preferred_element_type=jnp.float32) + bh
        out4 = jnp.maximum(out3, 0.0)

        if fuse_lr:
            # lr(l2(out4)) folded into a single HID x HID matmul.
            lr_of_l2 = jnp.dot(out4.astype(jnp.bfloat16), wx_ref[...],
                               preferred_element_type=jnp.float32) + bx
        else:
            # out5 = l2(out4); lr(out5)
            out5 = jnp.dot(out4.astype(jnp.bfloat16), w2_ref[...],
                           preferred_element_type=jnp.float32) + b2
            lr_of_l2 = jnp.dot(out5.astype(jnp.bfloat16), wx_ref[...],
                               preferred_element_type=jnp.float32) + bx

        # outr = out1 - lr(out5); out7 = relu(outr)
        outr = out1 - lr_of_l2
        out7 = jnp.maximum(outr, 0.0)
        # out8 = lh(out7); out9 = relu(out8)
        out8 = jnp.dot(out7.astype(jnp.bfloat16), wh_ref[...],
                       preferred_element_type=jnp.float32) + bh
        out9 = jnp.maximum(out8, 0.0)
        # out10 = l2(out9)
        out10 = jnp.dot(out9.astype(jnp.bfloat16), w2_ref[...],
                        preferred_element_type=jnp.float32) + b2

        o_ref[...] = out10.astype(o_ref.dtype)
    return kernel


def _build_call(TB, Bp, fuse_lr, weight_mode, vmem_limit_bytes):
    wx_rows = HID_PAD if fuse_lr else OUT_PAD

    def wspec(shape):
        # Resident operands: constant index_map; optionally single-buffered.
        if weight_mode is None:
            return pl.BlockSpec(shape, lambda i: (0, 0))
        return pl.BlockSpec(shape, lambda i: (0, 0), pipeline_mode=weight_mode)

    return pl.pallas_call(
        make_ffnet_kernel(fuse_lr),
        out_shape=jax.ShapeDtypeStruct((Bp, OUT_PAD), jnp.float32),
        grid_spec=pltpu.PrefetchScalarGridSpec(
            num_scalar_prefetch=0,
            grid=(Bp // TB,),
            in_specs=[
                # x: one bf16 batch tile per grid step (double-buffered by Pallas).
                pl.BlockSpec((TB, IN_PAD), lambda i: (i, 0)),
                wspec((IN_PAD, HID_PAD)),    # w1_t
                wspec((1, HID_PAD)),         # b1
                wspec((HID_PAD, HID_PAD)),   # wh_t
                wspec((1, HID_PAD)),         # bh
                wspec((HID_PAD, OUT_PAD)),   # w2_t
                wspec((1, OUT_PAD)),         # b2
                wspec((wx_rows, HID_PAD)),   # wr_t or wc_t
                wspec((1, HID_PAD)),         # br or bc
            ],
            out_specs=pl.BlockSpec((TB, OUT_PAD), lambda i: (i, 0)),
        ),
        compiler_params=pltpu.CompilerParams(
            dimension_semantics=("parallel",),   # shard batch tiles across TCs (v7x)
            vmem_limit_bytes=vmem_limit_bytes,
        ),
    )


def ffnet_forward(x, params, *, batch_tile=1024, fuse_lr=None,
                  vmem_limit_bytes=48 << 20):
    """x: [B, INPUT_SIZE] f32; params: padded bf16 weights + f32 bias rows."""
    B = x.shape[0]
    if fuse_lr is None:
        fuse_lr = _default_fuse_lr()
    multicore = "v7" in _device_kind()

    # Balance tile size across the actual tile count (padding waste < 16 rows/tile).
    # bf16 x requires the batch tile to be a multiple of 16 (sublane packing).
    n = max(pl.cdiv(B, batch_tile), 1)
    if multicore and n == 1 and B > 16:
        n = 2                     # v7x megacore: give the parallel axis >= 2 tiles
    TB = _round_up(pl.cdiv(B, n), 16)
    Bp = n * TB

    # Fuse the zero-pad and the bf16 cast into one wrapper op; padded lanes/rows
    # stay exactly zero end-to-end.
    x_pad = jnp.zeros((Bp, IN_PAD), jnp.bfloat16).at[:B, :INPUT_SIZE].set(
        x.astype(jnp.bfloat16))

    if fuse_lr:
        wx, bx = params["wc_t"], params["bc"]
    else:
        wx, bx = params["wr_t"], params["br"]
    args = (x_pad,
            params["w1_t"], params["b1"],
            params["wh_t"], params["bh"],
            params["w2_t"], params["b2"],
            wx, bx)

    try:
        # Single-buffer the resident weights/biases; x/out stay double-buffered.
        out_pad = _build_call(TB, Bp, fuse_lr, pl.Buffered(1), vmem_limit_bytes)(*args)
    except Exception:
        # Fallback: default buffering (still correct, slightly more VMEM).
        out_pad = _build_call(TB, Bp, fuse_lr, None, vmem_limit_bytes)(*args)
    return out_pad[:B, :OUTPUT_SIZE]


def init_linear(key, in_f, out_f):
    """Mimic PyTorch nn.Linear default init (uniform +/- 1/sqrt(fan_in))."""
    kw, kb = jax.random.split(key)
    bound = 1.0 / (in_f ** 0.5)
    w = jax.random.uniform(kw, (out_f, in_f), jnp.float32, -bound, bound)
    b = jax.random.uniform(kb, (out_f,), jnp.float32, -bound, bound)
    return w, b


def make_params(key):
    k1, kh, k2, kr = jax.random.split(key, 4)
    w1, b1 = init_linear(k1, INPUT_SIZE, HIDDEN_SIZE)   # l1
    wh, bh = init_linear(kh, HIDDEN_SIZE, HIDDEN_SIZE)  # lh
    w2, b2 = init_linear(k2, HIDDEN_SIZE, OUTPUT_SIZE)  # l2
    wr, br = init_linear(kr, OUTPUT_SIZE, HIDDEN_SIZE)  # lr

    raw = {"w1": w1, "b1": b1, "wh": wh, "bh": bh,
           "w2": w2, "b2": b2, "wr": wr, "br": br}

    # Folded lr∘l2 (combined in f32, then cast to bf16):
    #   lr(l2(h)) = h @ (wr @ w2).T + (b2 @ wr.T + br)
    wc = wr @ w2              # (HIDDEN, HIDDEN), PyTorch [out, in] layout
    bc = b2 @ wr.T + br       # (HIDDEN,)

    # Kernel params: pre-transposed to [in, out], zero-padded to lane multiples,
    # weights in bf16 (MXU-native), biases as f32 broadcast rows.
    padded = {
        "w1_t": _pad2(w1.T, IN_PAD, HID_PAD).astype(jnp.bfloat16),
        "b1": _pad2(b1.reshape(1, -1), 1, HID_PAD),
        "wh_t": _pad2(wh.T, HID_PAD, HID_PAD).astype(jnp.bfloat16),
        "bh": _pad2(bh.reshape(1, -1), 1, HID_PAD),
        "w2_t": _pad2(w2.T, HID_PAD, OUT_PAD).astype(jnp.bfloat16),
        "b2": _pad2(b2.reshape(1, -1), 1, OUT_PAD),
        "wr_t": _pad2(wr.T, OUT_PAD, HID_PAD).astype(jnp.bfloat16),
        "br": _pad2(br.reshape(1, -1), 1, HID_PAD),
        "wc_t": _pad2(wc.T, HID_PAD, HID_PAD).astype(jnp.bfloat16),
        "bc": _pad2(bc.reshape(1, -1), 1, HID_PAD),
    }
    return raw, padded


def ffnet_reference_f32(x, p):
    """Exact f32 equivalent of the PyTorch forward."""
    out1 = x @ p["w1"].T + p["b1"]
    out2 = jnp.maximum(out1, 0.0)
    out3 = out2 @ p["wh"].T + p["bh"]
    out4 = jnp.maximum(out3, 0.0)
    out5 = out4 @ p["w2"].T + p["b2"]
    outr = out1 - (out5 @ p["wr"].T + p["br"])
    out7 = jnp.maximum(outr, 0.0)
    out8 = out7 @ p["wh"].T + p["bh"]
    out9 = jnp.maximum(out8, 0.0)
    return out9 @ p["w2"].T + p["b2"]


def ffnet_reference_mirror(x, kp, fuse_lr):
    """Pure-JAX mirror of the kernel's padded bf16/f32 math (tight check)."""
    B = x.shape[0]
    xb = jnp.zeros((B, IN_PAD), jnp.bfloat16).at[:, :INPUT_SIZE].set(
        x.astype(jnp.bfloat16))

    def dot(a, w):
        return jnp.dot(a.astype(jnp.bfloat16), w, preferred_element_type=jnp.float32)

    out1 = dot(xb, kp["w1_t"]) + kp["b1"]
    out2 = jnp.maximum(out1, 0.0)
    out3 = dot(out2, kp["wh_t"]) + kp["bh"]
    out4 = jnp.maximum(out3, 0.0)
    if fuse_lr:
        lr_of_l2 = dot(out4, kp["wc_t"]) + kp["bc"]
    else:
        out5 = dot(out4, kp["w2_t"]) + kp["b2"]
        lr_of_l2 = dot(out5, kp["wr_t"]) + kp["br"]
    outr = out1 - lr_of_l2
    out7 = jnp.maximum(outr, 0.0)
    out8 = dot(out7, kp["wh_t"]) + kp["bh"]
    out9 = jnp.maximum(out8, 0.0)
    out10 = dot(out9, kp["w2_t"]) + kp["b2"]
    return out10[:, :OUTPUT_SIZE]


if __name__ == "__main__":
    key = jax.random.PRNGKey(0)
    kx1, kx2, kp = jax.random.split(key, 3)

    raw_params, kernel_params = make_params(kp)
    fuse = _default_fuse_lr()

    # Small-batch smoke test (single 16-row padded tile).
    x_small = jax.random.normal(kx1, (8, INPUT_SIZE), jnp.float32)
    out_small = jax.block_until_ready(
        ffnet_forward(x_small, kernel_params, fuse_lr=fuse))
    assert out_small.shape == (8, OUTPUT_SIZE)

    # Multi-tile test with an awkward batch (exercises tile balancing + padding).
    x_big = jax.random.normal(kx2, (300, INPUT_SIZE), jnp.float32)
    out_big = jax.block_until_ready(
        ffnet_forward(x_big, kernel_params, batch_tile=128, fuse_lr=fuse))
    assert out_big.shape == (300, OUTPUT_SIZE)

    for x, out in ((x_small, out_small), (x_big, out_big)):
        # Tight check vs a bf16-mirrored reference with identical math.
        ref_bf16 = ffnet_reference_mirror(x, kernel_params, fuse)
        assert jnp.allclose(out, ref_bf16, atol=1e-2, rtol=1e-2), \
            "mismatch vs bf16 mirror reference"
        # Loose check vs the exact f32 PyTorch-equivalent forward (bf16 weights).
        ref_f32 = ffnet_reference_f32(x, raw_params)
        assert jnp.allclose(out, ref_f32, atol=5e-2, rtol=5e-2), \
            "mismatch vs f32 reference"

    print("KERNEL_OK")
</pallas_src>

<mosaic_0001>
module attributes {stable_mosaic.version = 11 : i64} {
  func.func @kernel(%arg0: i32, %arg1: memref<16x896xbf16, #tpu.memory_space<vmem>>, %arg2: memref<896x512xbf16, #tpu.memory_space<vmem>>, %arg3: memref<1x512xf32, #tpu.memory_space<vmem>>, %arg4: memref<512x512xbf16, #tpu.memory_space<vmem>>, %arg5: memref<1x512xf32, #tpu.memory_space<vmem>>, %arg6: memref<512x128xbf16, #tpu.memory_space<vmem>>, %arg7: memref<1x128xf32, #tpu.memory_space<vmem>>, %arg8: memref<512x512xbf16, #tpu.memory_space<vmem>>, %arg9: memref<1x512xf32, #tpu.memory_space<vmem>>, %arg10: memref<16x128xf32, #tpu.memory_space<vmem>>) attributes {dimension_semantics = [#tpu.dimension_semantics<parallel>], iteration_bounds = array<i64: 1>, scalar_prefetch = 0 : i64, scratch_operands = 0 : i64, tpu.core_type = #tpu.core_type<tc>, window_params = [{transform_indices = @transform_0, window_bounds = array<i64: 16, 896>}, {pipeline_mode = #tpu.pipeline_mode<synchronous>, transform_indices = @transform_1, window_bounds = array<i64: 896, 512>}, {pipeline_mode = #tpu.pipeline_mode<synchronous>, transform_indices = @transform_2, window_bounds = array<i64: 1, 512>}, {pipeline_mode = #tpu.pipeline_mode<synchronous>, transform_indices = @transform_3, window_bounds = array<i64: 512, 512>}, {pipeline_mode = #tpu.pipeline_mode<synchronous>, transform_indices = @transform_4, window_bounds = array<i64: 1, 512>}, {pipeline_mode = #tpu.pipeline_mode<synchronous>, transform_indices = @transform_5, window_bounds = array<i64: 512, 128>}, {pipeline_mode = #tpu.pipeline_mode<synchronous>, transform_indices = @transform_6, window_bounds = array<i64: 1, 128>}, {pipeline_mode = #tpu.pipeline_mode<synchronous>, transform_indices = @transform_7, window_bounds = array<i64: 512, 512>}, {pipeline_mode = #tpu.pipeline_mode<synchronous>, transform_indices = @transform_8, window_bounds = array<i64: 1, 512>}, {transform_indices = @transform_9, window_bounds = array<i64: 16, 128>}]} {
    %c0 = arith.constant 0 : index
    %c0_0 = arith.constant 0 : index
    %0 = vector.load %arg1[%c0, %c0_0] : memref<16x896xbf16, #tpu.memory_space<vmem>>, vector<16x896xbf16>
    %c0_1 = arith.constant 0 : index
    %c0_2 = arith.constant 0 : index
    %1 = vector.load %arg3[%c0_1, %c0_2] : memref<1x512xf32, #tpu.memory_space<vmem>>, vector<1x512xf32>
    %c0_3 = arith.constant 0 : index
    %c0_4 = arith.constant 0 : index
    %2 = vector.load %arg5[%c0_3, %c0_4] : memref<1x512xf32, #tpu.memory_space<vmem>>, vector<1x512xf32>
    %c0_5 = arith.constant 0 : index
    %c0_6 = arith.constant 0 : index
    %3 = vector.load %arg7[%c0_5, %c0_6] : memref<1x128xf32, #tpu.memory_space<vmem>>, vector<1x128xf32>
    %c0_7 = arith.constant 0 : index
    %c0_8 = arith.constant 0 : index
    %4 = vector.load %arg9[%c0_7, %c0_8] : memref<1x512xf32, #tpu.memory_space<vmem>>, vector<1x512xf32>
    %c0_9 = arith.constant 0 : index
    %c0_10 = arith.constant 0 : index
    %5 = vector.load %arg2[%c0_9, %c0_10] : memref<896x512xbf16, #tpu.memory_space<vmem>>, vector<896x512xbf16>
    %cst = arith.constant dense<0.000000e+00> : vector<16x512xf32>
    %6 = tpu.matmul %0, %5, %cst {dimension_numbers = #tpu.dot_dimension_numbers<[1], [0], [0], [1], [0, 0, 1, 1], [], []>} : vector<16x896xbf16>, vector<896x512xbf16>, vector<16x512xf32> -> vector<16x512xf32>
    %7 = vector.broadcast %1 : vector<1x512xf32> to vector<16x512xf32>
    %8 = arith.addf %6, %7 : vector<16x512xf32>
    %cst_11 = arith.constant 0.000000e+00 : f32
    %9 = vector.broadcast %cst_11 : f32 to vector<16x512xf32>
    %10 = arith.maximumf %8, %9 : vector<16x512xf32>
    %11 = arith.truncf %10 : vector<16x512xf32> to vector<16x512xbf16>
    %c0_12 = arith.constant 0 : index
    %c0_13 = arith.constant 0 : index
    %12 = vector.load %arg4[%c0_12, %c0_13] : memref<512x512xbf16, #tpu.memory_space<vmem>>, vector<512x512xbf16>
    %cst_14 = arith.constant dense<0.000000e+00> : vector<16x512xf32>
    %13 = tpu.matmul %11, %12, %cst_14 {dimension_numbers = #tpu.dot_dimension_numbers<[1], [0], [0], [1], [0, 0, 1, 1], [], []>} : vector<16x512xbf16>, vector<512x512xbf16>, vector<16x512xf32> -> vector<16x512xf32>
    %14 = vector.broadcast %2 : vector<1x512xf32> to vector<16x512xf32>
    %15 = arith.addf %13, %14 : vector<16x512xf32>
    %cst_15 = arith.constant 0.000000e+00 : f32
    %16 = vector.broadcast %cst_15 : f32 to vector<16x512xf32>
    %17 = arith.maximumf %15, %16 : vector<16x512xf32>
    %18 = arith.truncf %17 : vector<16x512xf32> to vector<16x512xbf16>
    %c0_16 = arith.constant 0 : index
    %c0_17 = arith.constant 0 : index
    %19 = vector.load %arg8[%c0_16, %c0_17] : memref<512x512xbf16, #tpu.memory_space<vmem>>, vector<512x512xbf16>
    %cst_18 = arith.constant dense<0.000000e+00> : vector<16x512xf32>
    %20 = tpu.matmul %18, %19, %cst_18 {dimension_numbers = #tpu.dot_dimension_numbers<[1], [0], [0], [1], [0, 0, 1, 1], [], []>} : vector<16x512xbf16>, vector<512x512xbf16>, vector<16x512xf32> -> vector<16x512xf32>
    %21 = vector.broadcast %4 : vector<1x512xf32> to vector<16x512xf32>
    %22 = arith.addf %20, %21 : vector<16x512xf32>
    %23 = arith.subf %8, %22 : vector<16x512xf32>
    %cst_19 = arith.constant 0.000000e+00 : f32
    %24 = vector.broadcast %cst_19 : f32 to vector<16x512xf32>
    %25 = arith.maximumf %23, %24 : vector<16x512xf32>
    %26 = arith.truncf %25 : vector<16x512xf32> to vector<16x512xbf16>
    %c0_20 = arith.constant 0 : index
    %c0_21 = arith.constant 0 : index
    %27 = vector.load %arg4[%c0_20, %c0_21] : memref<512x512xbf16, #tpu.memory_space<vmem>>, vector<512x512xbf16>
    %cst_22 = arith.constant dense<0.000000e+00> : vector<16x512xf32>
    %28 = tpu.matmul %26, %27, %cst_22 {dimension_numbers = #tpu.dot_dimension_numbers<[1], [0], [0], [1], [0, 0, 1, 1], [], []>} : vector<16x512xbf16>, vector<512x512xbf16>, vector<16x512xf32> -> vector<16x512xf32>
    %29 = vector.broadcast %2 : vector<1x512xf32> to vector<16x512xf32>
    %30 = arith.addf %28, %29 : vector<16x512xf32>
    %cst_23 = arith.constant 0.000000e+00 : f32
    %31 = vector.broadcast %cst_23 : f32 to vector<16x512xf32>
    %32 = arith.maximumf %30, %31 : vector<16x512xf32>
    %33 = arith.truncf %32 : vector<16x512xf32> to vector<16x512xbf16>
    %c0_24 = arith.constant 0 : index
    %c0_25 = arith.constant 0 : index
    %34 = vector.load %arg6[%c0_24, %c0_25] : memref<512x128xbf16, #tpu.memory_space<vmem>>, vector<512x128xbf16>
    %cst_26 = arith.constant dense<0.000000e+00> : vector<16x128xf32>
    %35 = tpu.matmul %33, %34, %cst_26 {dimension_numbers = #tpu.dot_dimension_numbers<[1], [0], [0], [1], [0, 0, 1, 1], [], []>} : vector<16x512xbf16>, vector<512x128xbf16>, vector<16x128xf32> -> vector<16x128xf32>
    %36 = vector.broadcast %3 : vector<1x128xf32> to vector<16x128xf32>
    %37 = arith.addf %35, %36 : vector<16x128xf32>
    %c0_27 = arith.constant 0 : index
    %c0_28 = arith.constant 0 : index
    %38 = vector.load %arg10[%c0_27, %c0_28] : memref<16x128xf32, #tpu.memory_space<vmem>>, vector<16x128xf32>
    tpu.vector_store %arg10[%c0_27, %c0_28], %37 {strides = array<i32>} : memref<16x128xf32, #tpu.memory_space<vmem>>, vector<16x128xf32>,
    return
  }
  func.func @transform_0(%arg0: i32) -> (i32, i32) {
    %c0_i32 = arith.constant 0 : i32
    %c0_i32_0 = arith.constant 0 : i32
    return %arg0, %c0_i32 : i32, i32
  }
  func.func @transform_1(%arg0: i32) -> (i32, i32) {
    %c0_i32 = arith.constant 0 : i32
    %c0_i32_0 = arith.constant 0 : i32
    %c0_i32_1 = arith.constant 0 : i32
    return %c0_i32, %c0_i32_0 : i32, i32
  }
  func.func @transform_2(%arg0: i32) -> (i32, i32) {
    %c0_i32 = arith.constant 0 : i32
    %c0_i32_0 = arith.constant 0 : i32
    %c0_i32_1 = arith.constant 0 : i32
    return %c0_i32, %c0_i32_0 : i32, i32
  }
  func.func @transform_3(%arg0: i32) -> (i32, i32) {
    %c0_i32 = arith.constant 0 : i32
    %c0_i32_0 = arith.constant 0 : i32
    %c0_i32_1 = arith.constant 0 : i32
    return %c0_i32, %c0_i32_0 : i32, i32
  }
  func.func @transform_4(%arg0: i32) -> (i32, i32) {
    %c0_i32 = arith.constant 0 : i32
    %c0_i32_0 = arith.constant 0 : i32
    %c0_i32_1 = arith.constant 0 : i32
    return %c0_i32, %c0_i32_0 : i32, i32
  }
  func.func @transform_5(%arg0: i32) -> (i32, i32) {
    %c0_i32 = arith.constant 0 : i32
    %c0_i32_0 = arith.constant 0 : i32
    %c0_i32_1 = arith.constant 0 : i32
    return %c0_i32, %c0_i32_0 : i32, i32
  }
  func.func @transform_6(%arg0: i32) -> (i32, i32) {
    %c0_i32 = arith.constant 0 : i32
    %c0_i32_0 = arith.constant 0 : i32
    %c0_i32_1 = arith.constant 0 : i32
    return %c0_i32, %c0_i32_0 : i32, i32
  }
  func.func @transform_7(%arg0: i32) -> (i32, i32) {
    %c0_i32 = arith.constant 0 : i32
    %c0_i32_0 = arith.constant 0 : i32
    %c0_i32_1 = arith.constant 0 : i32
    return %c0_i32, %c0_i32_0 : i32, i32
  }
  func.func @transform_8(%arg0: i32) -> (i32, i32) {
    %c0_i32 = arith.constant 0 : i32
    %c0_i32_0 = arith.constant 0 : i32
    %c0_i32_1 = arith.constant 0 : i32
    return %c0_i32, %c0_i32_0 : i32, i32
  }
  func.func @transform_9(%arg0: i32) -> (i32, i32) {
    %c0_i32 = arith.constant 0 : i32
    %c0_i32_0 = arith.constant 0 : i32
    return %arg0, %c0_i32 : i32, i32
  }
}

module attributes {stable_mosaic.version = 11 : i64} {
  func.func @kernel(%arg0: i32, %arg1: memref<16x896xbf16, #tpu.memory_space<vmem>>, %arg2: memref<896x512xbf16, #tpu.memory_space<vmem>>, %arg3: memref<1x512xf32, #tpu.memory_space<vmem>>, %arg4: memref<512x512xbf16, #tpu.memory_space<vmem>>, %arg5: memref<1x512xf32, #tpu.memory_space<vmem>>, %arg6: memref<512x128xbf16, #tpu.memory_space<vmem>>, %arg7: memref<1x128xf32, #tpu.memory_space<vmem>>, %arg8: memref<512x512xbf16, #tpu.memory_space<vmem>>, %arg9: memref<1x512xf32, #tpu.memory_space<vmem>>, %arg10: memref<16x128xf32, #tpu.memory_space<vmem>>) attributes {dimension_semantics = [#tpu.dimension_semantics<parallel>], iteration_bounds = array<i64: 1>, scalar_prefetch = 0 : i64, scratch_operands = 0 : i64, tpu.core_type = #tpu.core_type<tc>, window_params = [{transform_indices = @transform_0, window_bounds = array<i64: 16, 896>}, {pipeline_mode = #tpu.pipeline_mode<synchronous>, transform_indices = @transform_1, window_bounds = array<i64: 896, 512>}, {pipeline_mode = #tpu.pipeline_mode<synchronous>, transform_indices = @transform_2, window_bounds = array<i64: 1, 512>}, {pipeline_mode = #tpu.pipeline_mode<synchronous>, transform_indices = @transform_3, window_bounds = array<i64: 512, 512>}, {pipeline_mode = #tpu.pipeline_mode<synchronous>, transform_indices = @transform_4, window_bounds = array<i64: 1, 512>}, {pipeline_mode = #tpu.pipeline_mode<synchronous>, transform_indices = @transform_5, window_bounds = array<i64: 512, 128>}, {pipeline_mode = #tpu.pipeline_mode<synchronous>, transform_indices = @transform_6, window_bounds = array<i64: 1, 128>}, {pipeline_mode = #tpu.pipeline_mode<synchronous>, transform_indices = @transform_7, window_bounds = array<i64: 512, 512>}, {pipeline_mode = #tpu.pipeline_mode<synchronous>, transform_indices = @transform_8, window_bounds = array<i64: 1, 512>}, {transform_indices = @transform_9, window_bounds = array<i64: 16, 128>}]} {
    %c0 = arith.constant 0 : index
    %c0_0 = arith.constant 0 : index
    %0 = vector.load %arg1[%c0, %c0_0] : memref<16x896xbf16, #tpu.memory_space<vmem>>, vector<16x896xbf16>
    %c0_1 = arith.constant 0 : index
    %c0_2 = arith.constant 0 : index
    %1 = vector.load %arg3[%c0_1, %c0_2] : memref<1x512xf32, #tpu.memory_space<vmem>>, vector<1x512xf32>
    %c0_3 = arith.constant 0 : index
    %c0_4 = arith.constant 0 : index
    %2 = vector.load %arg5[%c0_3, %c0_4] : memref<1x512xf32, #tpu.memory_space<vmem>>, vector<1x512xf32>
    %c0_5 = arith.constant 0 : index
    %c0_6 = arith.constant 0 : index
    %3 = vector.load %arg7[%c0_5, %c0_6] : memref<1x128xf32, #tpu.memory_space<vmem>>, vector<1x128xf32>
    %c0_7 = arith.constant 0 : index
    %c0_8 = arith.constant 0 : index
    %4 = vector.load %arg9[%c0_7, %c0_8] : memref<1x512xf32, #tpu.memory_space<vmem>>, vector<1x512xf32>
    %c0_9 = arith.constant 0 : index
    %c0_10 = arith.constant 0 : index
    %5 = vector.load %arg2[%c0_9, %c0_10] : memref<896x512xbf16, #tpu.memory_space<vmem>>, vector<896x512xbf16>
    %cst = arith.constant dense<0.000000e+00> : vector<16x512xf32>
    %6 = tpu.matmul %0, %5, %cst {dimension_numbers = #tpu.dot_dimension_numbers<[1], [0], [0], [1], [0, 0, 1, 1], [], []>} : vector<16x896xbf16>, vector<896x512xbf16>, vector<16x512xf32> -> vector<16x512xf32>
    %7 = vector.broadcast %1 : vector<1x512xf32> to vector<16x512xf32>
    %8 = arith.addf %6, %7 : vector<16x512xf32>
    %cst_11 = arith.constant 0.000000e+00 : f32
    %9 = vector.broadcast %cst_11 : f32 to vector<16x512xf32>
    %10 = arith.maximumf %8, %9 : vector<16x512xf32>
    %11 = arith.truncf %10 : vector<16x512xf32> to vector<16x512xbf16>
    %c0_12 = arith.constant 0 : index
    %c0_13 = arith.constant 0 : index
    %12 = vector.load %arg4[%c0_12, %c0_13] : memref<512x512xbf16, #tpu.memory_space<vmem>>, vector<512x512xbf16>
    %cst_14 = arith.constant dense<0.000000e+00> : vector<16x512xf32>
    %13 = tpu.matmul %11, %12, %cst_14 {dimension_numbers = #tpu.dot_dimension_numbers<[1], [0], [0], [1], [0, 0, 1, 1], [], []>} : vector<16x512xbf16>, vector<512x512xbf16>, vector<16x512xf32> -> vector<16x512xf32>
    %14 = vector.broadcast %2 : vector<1x512xf32> to vector<16x512xf32>
    %15 = arith.addf %13, %14 : vector<16x512xf32>
    %cst_15 = arith.constant 0.000000e+00 : f32
    %16 = vector.broadcast %cst_15 : f32 to vector<16x512xf32>
    %17 = arith.maximumf %15, %16 : vector<16x512xf32>
    %18 = arith.truncf %17 : vector<16x512xf32> to vector<16x512xbf16>
    %c0_16 = arith.constant 0 : index
    %c0_17 = arith.constant 0 : index
    %19 = vector.load %arg8[%c0_16, %c0_17] : memref<512x512xbf16, #tpu.memory_space<vmem>>, vector<512x512xbf16>
    %cst_18 = arith.constant dense<0.000000e+00> : vector<16x512xf32>
    %20 = tpu.matmul %18, %19, %cst_18 {dimension_numbers = #tpu.dot_dimension_numbers<[1], [0], [0], [1], [0, 0, 1, 1], [], []>} : vector<16x512xbf16>, vector<512x512xbf16>, vector<16x512xf32> -> vector<16x512xf32>
    %21 = vector.broadcast %4 : vector<1x512xf32> to vector<16x512xf32>
    %22 = arith.addf %20, %21 : vector<16x512xf32>
    %23 = arith.subf %8, %22 : vector<16x512xf32>
    %cst_19 = arith.constant 0.000000e+00 : f32
    %24 = vector.broadcast %cst_19 : f32 to vector<16x512xf32>
    %25 = arith.maximumf %23, %24 : vector<16x512xf32>
    %26 = arith.truncf %25 : vector<16x512xf32> to vector<16x512xbf16>
    %c0_20 = arith.constant 0 : index
    %c0_21 = arith.constant 0 : index
    %27 = vector.load %arg4[%c0_20, %c0_21] : memref<512x512xbf16, #tpu.memory_space<vmem>>, vector<512x512xbf16>
    %cst_22 = arith.constant dense<0.000000e+00> : vector<16x512xf32>
    %28 = tpu.matmul %26, %27, %cst_22 {dimension_numbers = #tpu.dot_dimension_numbers<[1], [0], [0], [1], [0, 0, 1, 1], [], []>} : vector<16x512xbf16>, vector<512x512xbf16>, vector<16x512xf32> -> vector<16x512xf32>
    %29 = vector.broadcast %2 : vector<1x512xf32> to vector<16x512xf32>
    %30 = arith.addf %28, %29 : vector<16x512xf32>
    %cst_23 = arith.constant 0.000000e+00 : f32
    %31 = vector.broadcast %cst_23 : f32 to vector<16x512xf32>
    %32 = arith.maximumf %30, %31 : vector<16x512xf32>
    %33 = arith.truncf %32 : vector<16x512xf32> to vector<16x512xbf16>
    %c0_24 = arith.constant 0 : index
    %c0_25 = arith.constant 0 : index
    %34 = vector.load %arg6[%c0_24, %c0_25] : memref<512x128xbf16, #tpu.memory_space<vmem>>, vector<512x128xbf16>
    %cst_26 = arith.constant dense<0.000000e+00> : vector<16x128xf32>
    %35 = tpu.matmul %33, %34, %cst_26 {dimension_numbers = #tpu.dot_dimension_numbers<[1], [0], [0], [1], [0, 0, 1, 1], [], []>} : vector<16x512xbf16>, vector<512x128xbf16>, vector<16x128xf32> -> vector<16x128xf32>
    %36 = vector.broadcast %3 : vector<1x128xf32> to vector<16x128xf32>
    %37 = arith.addf %35, %36 : vector<16x128xf32>
    %c0_27 = arith.constant 0 : index
    %c0_28 = arith.constant 0 : index
    %38 = vector.load %arg10[%c0_27, %c0_28] : memref<16x128xf32, #tpu.memory_space<vmem>>, vector<16x128xf32>
    tpu.vector_store %arg10[%c0_27, %c0_28], %37 {strides = array<i32>} : memref<16x128xf32, #tpu.memory_space<vmem>>, vector<16x128xf32>,
    return
  }
  func.func @transform_0(%arg0: i32) -> (i32, i32) {
    %c0_i32 = arith.constant 0 : i32
    %c0_i32_0 = arith.constant 0 : i32
    return %arg0, %c0_i32 : i32, i32
  }
  func.func @transform_1(%arg0: i32) -> (i32, i32) {
    %c0_i32 = arith.constant 0 : i32
    %c0_i32_0 = arith.constant 0 : i32
    %c0_i32_1 = arith.constant 0 : i32
    return %c0_i32, %c0_i32_0 : i32, i32
  }
  func.func @transform_2(%arg0: i32) -> (i32, i32) {
    %c0_i32 = arith.constant 0 : i32
    %c0_i32_0 = arith.constant 0 : i32
    %c0_i32_1 = arith.constant 0 : i32
    return %c0_i32, %c0_i32_0 : i32, i32
  }
  func.func @transform_3(%arg0: i32) -> (i32, i32) {
    %c0_i32 = arith.constant 0 : i32
    %c0_i32_0 = arith.constant 0 : i32
    %c0_i32_1 = arith.constant 0 : i32
    return %c0_i32, %c0_i32_0 : i32, i32
  }
  func.func @transform_4(%arg0: i32) -> (i32, i32) {
    %c0_i32 = arith.constant 0 : i32
    %c0_i32_0 = arith.constant 0 : i32
    %c0_i32_1 = arith.constant 0 : i32
    return %c0_i32, %c0_i32_0 : i32, i32
  }
  func.func @transform_5(%arg0: i32) -> (i32, i32) {
    %c0_i32 = arith.constant 0 : i32
    %c0_i32_0 = arith.constant 0 : i32
    %c0_i32_1 = arith.constant 0 : i32
    return %c0_i32, %c0_i32_0 : i32, i32
  }
  func.func @transform_6(%arg0: i32) -> (i32, i32) {
    %c0_i32 = arith.constant 0 : i32
    %c0_i32_0 = arith.constant 0 : i32
    %c0_i32_1 = arith.constant 0 : i32
    return %c0_i32, %c0_i32_0 : i32, i32
  }
  func.func @transform_7(%arg0: i32) -> (i32, i32) {
    %c0_i32 = arith.constant 0 : i32
    %c0_i32_0 = arith.constant 0 : i32
    %c0_i32_1 = arith.constant 0 : i32
    return %c0_i32, %c0_i32_0 : i32, i32
  }
  func.func @transform_8(%arg0: i32) -> (i32, i32) {
    %c0_i32 = arith.constant 0 : i32
    %c0_i32_0 = arith.constant 0 : i32
    %c0_i32_1 = arith.constant 0 : i32
    return %c0_i32, %c0_i32_0 : i32, i32
  }
  func.func @transform_9(%arg0: i32) -> (i32, i32) {
    %c0_i32 = arith.constant 0 : i32
    %c0_i32_0 = arith.constant 0 : i32
    return %arg0, %c0_i32 : i32, i32
  }
}

</mosaic_0001>

<llo_original>
// kernel: tpu_custom_call.1
$region0: #{tpu_custom_call.1}
  #allocation0 [shape = 'u32[]', space=smem, size = 0x4, offset = 0x4, fixed_abs, tag = 'smem constant byte address 0x4 - core index']
  #allocation1 [shape = 'u32[144,128]{1,0:T(1,128)}', space=vmem, size = 0x12000, scoped, tag = 'internal scratch']
  %s0 = inlined_call_operand.hbm [shape: bf16[16,896], index: 0, kind: input, shape index: {}]
  %s1 = inlined_call_operand.hbm [shape: bf16[896,512], index: 1, kind: input, shape index: {}]
  %s2 = inlined_call_operand.vmem [shape: f32[1,512], index: 2, kind: input, shape index: {}]
  %s3 = inlined_call_operand.hbm [shape: bf16[512,512], index: 3, kind: input, shape index: {}]
  %s4 = inlined_call_operand.vmem [shape: f32[1,512], index: 4, kind: input, shape index: {}]
  %s5 = inlined_call_operand.hbm [shape: bf16[512,128], index: 5, kind: input, shape index: {}]
  %s6 = inlined_call_operand.vmem [shape: f32[1,128], index: 6, kind: input, shape index: {}]
  %s7 = inlined_call_operand.hbm [shape: bf16[512,512], index: 7, kind: input, shape index: {}]
  %s8 = inlined_call_operand.vmem [shape: f32[1,512], index: 8, kind: input, shape index: {}]
  %s9 = inlined_call_operand.hbm [shape: f32[16,128], index: 9, kind: output, shape index: {}]
  %s10 = sld [smem:[#allocation0]]
  $region66: #{tpu_custom_call.1} parent=0
    _
  %s12 = ssub.s32 1, %s10
  %s13 = scalar_select 0, %s12, %s10
  $region1: #{tpu_custom_call.1} parent=0
    #allocation2 [shape = 'u8[28672]{0}', space=vmem, size = 0x7000, scoped, tag = 'input window, operand 0, single buffered']
    #allocation3 [shape = 's32[1]{0}', space=sflag, size = 0x4, scoped, tag = 'scoped memory for tpu_custom_call.1']
    #allocation4 [shape = 's32[1]{0}', space=sflag, size = 0x4, scoped, tag = 'scoped memory for tpu_custom_call.1']
    #allocation5 [shape = 'u8[917504]{0}', space=vmem, size = 0xe0000, scoped, tag = 'input window, operand 1, single buffered']
    #allocation6 [shape = 's32[1]{0}', space=sflag, size = 0x4, scoped, tag = 'scoped memory for tpu_custom_call.1']
    #allocation7 [shape = 'u8[524288]{0}', space=vmem, size = 0x80000, scoped, tag = 'input window, operand 3, single buffered']
    #allocation8 [shape = 'u8[131072]{0}', space=vmem, size = 0x20000, scoped, tag = 'input window, operand 5, single buffered']
    #allocation9 [shape = 's32[1]{0}', space=sflag, size = 0x4, scoped, tag = 'scoped memory for tpu_custom_call.1']
    #allocation10 [shape = 'u8[524288]{0}', space=vmem, size = 0x80000, scoped, tag = 'input window, operand 7, single buffered']
    #allocation11 [shape = 'u8[8192]{0}', space=vmem, size = 0x2000, scoped, tag = 'output window, operand 0, single buffered']
    %14 = vsyncpa [#allocation3], 0
    %15 = vsyncpa [#allocation6], 0
    %16 = vsyncpa [#allocation9], 0
    %17 = vsyncpa [#allocation4], 0
    // Predicated region
    $region2: #{tpu_custom_call.1} parent=1 // pred_check
      _
    $region3: #{tpu_custom_call.1} parent=1 // pred_check_branch
      %19 = sbr.rel (0) target = $region5
    $region4: #{tpu_custom_call.1} parent=1 // pred_region
      %s21 = ssub.s32 896, 896
      %22 = vsyncadd [#allocation3], %s21
      %s23 = sshll.u32 [#allocation2], 4
      %s24 = int_to_ptr.vmem [resolvable:$true] %s23
      %29 = dma.hbm_to_vmem [thread:$0]  %s0, 896, %s24, [#allocation3], 448, 448, 28
    $region5: #{tpu_custom_call.1} parent=1 // pred_fallthru
      _
    // Predicated region
    $region6: #{tpu_custom_call.1} parent=1 // pred_check
      _
    $region7: #{tpu_custom_call.1} parent=1 // pred_check_branch
      %31 = sbr.rel (0) target = $region9
    $region8: #{tpu_custom_call.1} parent=1 // pred_region
      %s33 = ssub.s32 28672, 28672
      %34 = vsyncadd [#allocation6], %s33
      %s35 = sshll.u32 [#allocation5], 4
      %s36 = int_to_ptr.vmem [resolvable:$true] %s35
      %41 = dma.hbm_to_vmem [thread:$0]  %s1, 28672, %s36, [#allocation6], 256, 256, 16
    $region9: #{tpu_custom_call.1} parent=1 // pred_fallthru
      _
    // Predicated region
    $region10: #{tpu_custom_call.1} parent=1 // pred_check
      _
    $region11: #{tpu_custom_call.1} parent=1 // pred_check_branch
      %43 = sbr.rel (0) target = $region13
    $region12: #{tpu_custom_call.1} parent=1 // pred_region
      _
    $region13: #{tpu_custom_call.1} parent=1 // pred_fallthru
      _
    // Predicated region
    $region14: #{tpu_custom_call.1} parent=1 // pred_check
      _
    $region15: #{tpu_custom_call.1} parent=1 // pred_check_branch
      %45 = sbr.rel (0) target = $region17
    $region16: #{tpu_custom_call.1} parent=1 // pred_region
      %s47 = ssub.s32 16384, 16384
      %48 = vsyncadd [#allocation6], %s47
      %s49 = sshll.u32 [#allocation7], 4
      %s50 = int_to_ptr.vmem [resolvable:$true] %s49
      %55 = dma.hbm_to_vmem [thread:$0]  %s3, 16384, %s50, [#allocation6], 256, 256, 16
    $region17: #{tpu_custom_call.1} parent=1 // pred_fallthru
      _
    // Predicated region
    $region18: #{tpu_custom_call.1} parent=1 // pred_check
      _
    $region19: #{tpu_custom_call.1} parent=1 // pred_check_branch
      %57 = sbr.rel (0) target = $region21
    $region20: #{tpu_custom_call.1} parent=1 // pred_region
      _
    $region21: #{tpu_custom_call.1} parent=1 // pred_fallthru
      _
    // Predicated region
    $region22: #{tpu_custom_call.1} parent=1 // pred_check
      _
    $region23: #{tpu_custom_call.1} parent=1 // pred_check_branch
      %59 = sbr.rel (0) target = $region25
    $region24: #{tpu_custom_call.1} parent=1 // pred_region
      %s61 = ssub.s32 4096, 4096
      %62 = vsyncadd [#allocation9], %s61
      %s63 = sshll.u32 [#allocation8], 4
      %s64 = int_to_ptr.vmem [resolvable:$true] %s63
      %69 = dma.hbm_to_vmem [thread:$0]  %s5, 4096, %s64, [#allocation9], 64, 64, 4
    $region25: #{tpu_custom_call.1} parent=1 // pred_fallthru
      _
    // Predicated region
    $region26: #{tpu_custom_call.1} parent=1 // pred_check
      _
    $region27: #{tpu_custom_call.1} parent=1 // pred_check_branch
      %71 = sbr.rel (0) target = $region29
    $region28: #{tpu_custom_call.1} parent=1 // pred_region
      _
    $region29: #{tpu_custom_call.1} parent=1 // pred_fallthru
      _
    // Predicated region
    $region30: #{tpu_custom_call.1} parent=1 // pred_check
      _
    $region31: #{tpu_custom_call.1} parent=1 // pred_check_branch
      %73 = sbr.rel (0) target = $region33
    $region32: #{tpu_custom_call.1} parent=1 // pred_region
      %s75 = ssub.s32 16384, 16384
      %76 = vsyncadd [#allocation9], %s75
      %s77 = sshll.u32 [#allocation10], 4
      %s78 = int_to_ptr.vmem [resolvable:$true] %s77
      %83 = dma.hbm_to_vmem [thread:$0]  %s7, 16384, %s78, [#allocation9], 256, 256, 16
    $region33: #{tpu_custom_call.1} parent=1 // pred_fallthru
      _
    // Predicated region
    $region34: #{tpu_custom_call.1} parent=1 // pred_check
      _
    $region35: #{tpu_custom_call.1} parent=1 // pred_check_branch
      %85 = sbr.rel (0) target = $region37
    $region36: #{tpu_custom_call.1} parent=1 // pred_region
      _
    $region37: #{tpu_custom_call.1} parent=1 // pred_fallthru
      _
    // Predicated region
    $region38: #{tpu_custom_call.1} parent=1 // pred_check
      _
    $region39: #{tpu_custom_call.1} parent=1 // pred_check_branch
      %87 = sbr.rel (0) target = $region41
    $region40: #{tpu_custom_call.1} parent=1 // pred_region
      %88 = dma.done [#allocation3], 896
    $region41: #{tpu_custom_call.1} parent=1 // pred_fallthru
      _
    // Predicated region
    $region42: #{tpu_custom_call.1} parent=1 // pred_check
      _
    $region43: #{tpu_custom_call.1} parent=1 // pred_check_branch
      %90 = sbr.rel (0) target = $region45
    $region44: #{tpu_custom_call.1} parent=1 // pred_region
      %91 = dma.done [#allocation6], 28672
    $region45: #{tpu_custom_call.1} parent=1 // pred_fallthru
      _
    // Predicated region
    $region46: #{tpu_custom_call.1} parent=1 // pred_check
      _
    $region47: #{tpu_custom_call.1} parent=1 // pred_check_branch
      %93 = sbr.rel (0) target = $region49
    $region48: #{tpu_custom_call.1} parent=1 // pred_region
      %94 = dma.done [#allocation6], 16384
    $region49: #{tpu_custom_call.1} parent=1 // pred_fallthru
      _
    // Predicated region
    $region50: #{tpu_custom_call.1} parent=1 // pred_check
      _
    $region51: #{tpu_custom_call.1} parent=1 // pred_check_branch
      %96 = sbr.rel (0) target = $region53
    $region52: #{tpu_custom_call.1} parent=1 // pred_region
      %97 = dma.done [#allocation9], 4096
    $region53: #{tpu_custom_call.1} parent=1 // pred_fallthru
      _
    // Predicated region
    $region54: #{tpu_custom_call.1} parent=1 // pred_check
      _
    $region55: #{tpu_custom_call.1} parent=1 // pred_check_branch
      %99 = sbr.rel (0) target = $region57
    $region56: #{tpu_custom_call.1} parent=1 // pred_region
      %100 = dma.done [#allocation9], 16384
    $region57: #{tpu_custom_call.1} parent=1 // pred_fallthru
      _
    %v102 = vld [vmem:[#allocation2] sm:$0xff]
    %v103 = vld [vmem:[#allocation2 + $0x8] sm:$0xff]
    %v104 = vld [vmem:[#allocation2 + $0x10] sm:$0xff]
    %v105 = vld [vmem:[#allocation2 + $0x18] sm:$0xf]
    %v106 = vld [vmem:[#allocation2 + $0x1c] sm:$0xff]
    %v107 = vld [vmem:[#allocation2 + $0x24] sm:$0xff]
    %v108 = vld [vmem:[#allocation2 + $0x2c] sm:$0xff]
    %v109 = vld [vmem:[#allocation2 + $0x34] sm:$0xf]
    %v110 = vld [vmem:[%s2] sm:$0xf]
    %v111 = vld [vmem:[%s4] sm:$0xf]
    %v112 = vld [vmem:[%s6] sm:$0x1]
    %v113 = vld [vmem:[%s8] sm:$0xf]
    %v114 = vld [vmem:[#allocation5] sm:$0xff]
    %v115 = vld [vmem:[#allocation5 + $0x8] sm:$0xff]
    %v116 = vld [vmem:[#allocation5 + $0x10] sm:$0xff]
    %v117 = vld [vmem:[#allocation5 + $0x18] sm:$0xff]
    %v118 = vld [vmem:[#allocation5 + $0x20] sm:$0xff]
    %v119 = vld [vmem:[#allocation5 + $0x28] sm:$0xff]
    %v120 = vld [vmem:[#allocation5 + $0x30] sm:$0xff]
    %v121 = vld [vmem:[#allocation5 + $0x38] sm:$0xff]
    %v122 = vld [vmem:[#allocation5 + $0x40] sm:$0xff]
    %v123 = vld [vmem:[#allocation5 + $0x48] sm:$0xff]
    %v124 = vld [vmem:[#allocation5 + $0x50] sm:$0xff]
    %v125 = vld [vmem:[#allocation5 + $0x58] sm:$0xff]
    %v126 = vld [vmem:[#allocation5 + $0x60] sm:$0xff]
    %v127 = vld [vmem:[#allocation5 + $0x68] sm:$0xff]
    %v128 = vld [vmem:[#allocation5 + $0x70] sm:$0xff]
    %v129 = vld [vmem:[#allocation5 + $0x78] sm:$0xff]
    %v130 = vld [vmem:[#allocation5 + $0x80] sm:$0xff]
    %v131 = vld [vmem:[#allocation5 + $0x88] sm:$0xff]
    %v132 = vld [vmem:[#allocation5 + $0x90] sm:$0xff]
    %v133 = vld [vmem:[#allocation5 + $0x98] sm:$0xff]
    %v134 = vld [vmem:[#allocation5 + $0xa0] sm:$0xff]
    %v135 = vld [vmem:[#allocation5 + $0xa8] sm:$0xff]
    %v136 = vld [vmem:[#allocation5 + $0xb0] sm:$0xff]
    %v137 = vld [vmem:[#allocation5 + $0xb8] sm:$0xff]
    %v138 = vld [vmem:[#allocation5 + $0xc0] sm:$0xff]
    %v139 = vld [vmem:[#allocation5 + $0xc8] sm:$0xff]
    %v140 = vld [vmem:[#allocation5 + $0xd0] sm:$0xff]
    %v141 = vld [vmem:[#allocation5 + $0xd8] sm:$0xff]
    %v142 = vld [vmem:[#allocation5 + $0xe0] sm:$0xff]
    %v143 = vld [vmem:[#allocation5 + $0xe8] sm:$0xff]
    %v144 = vld [vmem:[#allocation5 + $0xf0] sm:$0xff]
    %v145 = vld [vmem:[#allocation5 + $0xf8] sm:$0xff]
    %v146 = vld [vmem:[#allocation5 + $0x100] sm:$0xff]
    %v147 = vld [vmem:[#allocation5 + $0x108] sm:$0xff]
    %v148 = vld [vmem:[#allocation5 + $0x110] sm:$0xff]
    %v149 = vld [vmem:[#allocation5 + $0x118] sm:$0xff]
    %v150 = vld [vmem:[#allocation5 + $0x120] sm:$0xff]
    %v151 = vld [vmem:[#allocation5 + $0x128] sm:$0xff]
    %v152 = vld [vmem:[#allocation5 + $0x130] sm:$0xff]
    %v153 = vld [vmem:[#allocation5 + $0x138] sm:$0xff]
    %v154 = vld [vmem:[#allocation5 + $0x140] sm:$0xff]
    %v155 = vld [vmem:[#allocation5 + $0x148] sm:$0xff]
    %v156 = vld [vmem:[#allocation5 + $0x150] sm:$0xff]
    %v157 = vld [vmem:[#allocation5 + $0x158] sm:$0xff]
    %v158 = vld [vmem:[#allocation5 + $0x160] sm:$0xff]
    %v159 = vld [vmem:[#allocation5 + $0x168] sm:$0xff]
    %v160 = vld [vmem:[#allocation5 + $0x170] sm:$0xff]
    %v161 = vld [vmem:[#allocation5 + $0x178] sm:$0xff]
    %v162 = vld [vmem:[#allocation5 + $0x180] sm:$0xff]
    %v163 = vld [vmem:[#allocation5 + $0x188] sm:$0xff]
    %v164 = vld [vmem:[#allocation5 + $0x190] sm:$0xff]
    %v165 = vld [vmem:[#allocation5 + $0x198] sm:$0xff]
    %v166 = vld [vmem:[#allocation5 + $0x1a0] sm:$0xff]
    %v167 = vld [vmem:[#allocation5 + $0x1a8] sm:$0xff]
    %v168 = vld [vmem:[#allocation5 + $0x1b0] sm:$0xff]
    %v169 = vld [vmem:[#allocation5 + $0x1b8] sm:$0xff]
    %v170 = vld [vmem:[#allocation5 + $0x1c0] sm:$0xff]
    %v171 = vld [vmem:[#allocation5 + $0x1c8] sm:$0xff]
    %v172 = vld [vmem:[#allocation5 + $0x1d0] sm:$0xff]
    %v173 = vld [vmem:[#allocation5 + $0x1d8] sm:$0xff]
    %v174 = vld [vmem:[#allocation5 + $0x1e0] sm:$0xff]
    %v175 = vld [vmem:[#allocation5 + $0x1e8] sm:$0xff]
    %v176 = vld [vmem:[#allocation5 + $0x1f0] sm:$0xff]
    %v177 = vld [vmem:[#allocation5 + $0x1f8] sm:$0xff]
    %v178 = vld [vmem:[#allocation5 + $0x200] sm:$0xff]
    %v179 = vld [vmem:[#allocation5 + $0x208] sm:$0xff]
    %v180 = vld [vmem:[#allocation5 + $0x210] sm:$0xff]
    %v181 = vld [vmem:[#allocation5 + $0x218] sm:$0xff]
    %v182 = vld [vmem:[#allocation5 + $0x220] sm:$0xff]
    %v183 = vld [vmem:[#allocation5 + $0x228] sm:$0xff]
    %v184 = vld [vmem:[#allocation5 + $0x230] sm:$0xff]
    %v185 = vld [vmem:[#allocation5 + $0x238] sm:$0xff]
    %v186 = vld [vmem:[#allocation5 + $0x240] sm:$0xff]
    %v187 = vld [vmem:[#allocation5 + $0x248] sm:$0xff]
    %v188 = vld [vmem:[#allocation5 + $0x250] sm:$0xff]
    %v189 = vld [vmem:[#allocation5 + $0x258] sm:$0xff]
    %v190 = vld [vmem:[#allocation5 + $0x260] sm:$0xff]
    %v191 = vld [vmem:[#allocation5 + $0x268] sm:$0xff]
    %v192 = vld [vmem:[#allocation5 + $0x270] sm:$0xff]
    %v193 = vld [vmem:[#allocation5 + $0x278] sm:$0xff]
    %v194 = vld [vmem:[#allocation5 + $0x280] sm:$0xff]
    %v195 = vld [vmem:[#allocation5 + $0x288] sm:$0xff]
    %v196 = vld [vmem:[#allocation5 + $0x290] sm:$0xff]
    %v197 = vld [vmem:[#allocation5 + $0x298] sm:$0xff]
    %v198 = vld [vmem:[#allocation5 + $0x2a0] sm:$0xff]
    %v199 = vld [vmem:[#allocation5 + $0x2a8] sm:$0xff]
    %v200 = vld [vmem:[#allocation5 + $0x2b0] sm:$0xff]
    %v201 = vld [vmem:[#allocation5 + $0x2b8] sm:$0xff]
    %v202 = vld [vmem:[#allocation5 + $0x2c0] sm:$0xff]
    %v203 = vld [vmem:[#allocation5 + $0x2c8] sm:$0xff]
    %v204 = vld [vmem:[#allocation5 + $0x2d0] sm:$0xff]
    %v205 = vld [vmem:[#allocation5 + $0x2d8] sm:$0xff]
    %v206 = vld [vmem:[#allocation5 + $0x2e0] sm:$0xff]
    %v207 = vld [vmem:[#allocation5 + $0x2e8] sm:$0xff]
    %v208 = vld [vmem:[#allocation5 + $0x2f0] sm:$0xff]
    %v209 = vld [vmem:[#allocation5 + $0x2f8] sm:$0xff]
    %v210 = vld [vmem:[#allocation5 + $0x300] sm:$0xff]
    %v211 = vld [vmem:[#allocation5 + $0x308] sm:$0xff]
    %v212 = vld [vmem:[#allocation5 + $0x310] sm:$0xff]
    %v213 = vld [vmem:[#allocation5 + $0x318] sm:$0xff]
    %v214 = vld [vmem:[#allocation5 + $0x320] sm:$0xff]
    %v215 = vld [vmem:[#allocation5 + $0x328] sm:$0xff]
    %v216 = vld [vmem:[#allocation5 + $0x330] sm:$0xff]
    %v217 = vld [vmem:[#allocation5 + $0x338] sm:$0xff]
    %v218 = vld [vmem:[#allocation5 + $0x340] sm:$0xff]
    %v219 = vld [vmem:[#allocation5 + $0x348] sm:$0xff]
    %v220 = vld [vmem:[#allocation5 + $0x350] sm:$0xff]
    %v221 = vld [vmem:[#allocation5 + $0x358] sm:$0xff]
    %v222 = vld [vmem:[#allocation5 + $0x360] sm:$0xff]
    %v223 = vld [vmem:[#allocation5 + $0x368] sm:$0xff]
    %v224 = vld [vmem:[#allocation5 + $0x370] sm:$0xff]
    %v225 = vld [vmem:[#allocation5 + $0x378] sm:$0xff]
    %v226 = vld [vmem:[#allocation5 + $0x380] sm:$0xff]
    %v227 = vld [vmem:[#allocation5 + $0x388] sm:$0xff]
    %v228 = vld [vmem:[#allocation5 + $0x390] sm:$0xff]
    %v229 = vld [vmem:[#allocation5 + $0x398] sm:$0xff]
    %v230 = vld [vmem:[#allocation5 + $0x3a0] sm:$0xff]
    %v231 = vld [vmem:[#allocation5 + $0x3a8] sm:$0xff]
    %v232 = vld [vmem:[#allocation5 + $0x3b0] sm:$0xff]
    %v233 = vld [vmem:[#allocation5 + $0x3b8] sm:$0xff]
    %v234 = vld [vmem:[#allocation5 + $0x3c0] sm:$0xff]
    %v235 = vld [vmem:[#allocation5 + $0x3c8] sm:$0xff]
    %v236 = vld [vmem:[#allocation5 + $0x3d0] sm:$0xff]
    %v237 = vld [vmem:[#allocation5 + $0x3d8] sm:$0xff]
    %v238 = vld [vmem:[#allocation5 + $0x3e0] sm:$0xff]
    %v239 = vld [vmem:[#allocation5 + $0x3e8] sm:$0xff]
    %v240 = vld [vmem:[#allocation5 + $0x3f0] sm:$0xff]
    %v241 = vld [vmem:[#allocation5 + $0x3f8] sm:$0xff]
    %v242 = vld [vmem:[#allocation5 + $0x400] sm:$0xff]
    %v243 = vld [vmem:[#allocation5 + $0x408] sm:$0xff]
    %v244 = vld [vmem:[#allocation5 + $0x410] sm:$0xff]
    %v245 = vld [vmem:[#allocation5 + $0x418] sm:$0xff]
    %v246 = vld [vmem:[#allocation5 + $0x420] sm:$0xff]
    %v247 = vld [vmem:[#allocation5 + $0x428] sm:$0xff]
    %v248 = vld [vmem:[#allocation5 + $0x430] sm:$0xff]
    %v249 = vld [vmem:[#allocation5 + $0x438] sm:$0xff]
    %v250 = vld [vmem:[#allocation5 + $0x440] sm:$0xff]
    %v251 = vld [vmem:[#allocation5 + $0x448] sm:$0xff]
    %v252 = vld [vmem:[#allocation5 + $0x450] sm:$0xff]
    %v253 = vld [vmem:[#allocation5 + $0x458] sm:$0xff]
    %v254 = vld [vmem:[#allocation5 + $0x460] sm:$0xff]
    %v255 = vld [vmem:[#allocation5 + $0x468] sm:$0xff]
    %v256 = vld [vmem:[#allocation5 + $0x470] sm:$0xff]
    %v257 = vld [vmem:[#allocation5 + $0x478] sm:$0xff]
    %v258 = vld [vmem:[#allocation5 + $0x480] sm:$0xff]
    %v259 = vld [vmem:[#allocation5 + $0x488] sm:$0xff]
    %v260 = vld [vmem:[#allocation5 + $0x490] sm:$0xff]
    %v261 = vld [vmem:[#allocation5 + $0x498] sm:$0xff]
    %v262 = vld [vmem:[#allocation5 + $0x4a0] sm:$0xff]
    %v263 = vld [vmem:[#allocation5 + $0x4a8] sm:$0xff]
    %v264 = vld [vmem:[#allocation5 + $0x4b0] sm:$0xff]
    %v265 = vld [vmem:[#allocation5 + $0x4b8] sm:$0xff]
    %v266 = vld [vmem:[#allocation5 + $0x4c0] sm:$0xff]
    %v267 = vld [vmem:[#allocation5 + $0x4c8] sm:$0xff]
    %v268 = vld [vmem:[#allocation5 + $0x4d0] sm:$0xff]
    %v269 = vld [vmem:[#allocation5 + $0x4d8] sm:$0xff]
    %v270 = vld [vmem:[#allocation5 + $0x4e0] sm:$0xff]
    %v271 = vld [vmem:[#allocation5 + $0x4e8] sm:$0xff]
    %v272 = vld [vmem:[#allocation5 + $0x4f0] sm:$0xff]
    %v273 = vld [vmem:[#allocation5 + $0x4f8] sm:$0xff]
    %v274 = vld [vmem:[#allocation5 + $0x500] sm:$0xff]
    %v275 = vld [vmem:[#allocation5 + $0x508] sm:$0xff]
    %v276 = vld [vmem:[#allocation5 + $0x510] sm:$0xff]
    %v277 = vld [vmem:[#allocation5 + $0x518] sm:$0xff]
    %v278 = vld [vmem:[#allocation5 + $0x520] sm:$0xff]
    %v279 = vld [vmem:[#allocation5 + $0x528] sm:$0xff]
    %v280 = vld [vmem:[#allocation5 + $0x530] sm:$0xff]
    %v281 = vld [vmem:[#allocation5 + $0x538] sm:$0xff]
    %v282 = vld [vmem:[#allocation5 + $0x540] sm:$0xff]
    %v283 = vld [vmem:[#allocation5 + $0x548] sm:$0xff]
    %v284 = vld [vmem:[#allocation5 + $0x550] sm:$0xff]
    %v285 = vld [vmem:[#allocation5 + $0x558] sm:$0xff]
    %v286 = vld [vmem:[#allocation5 + $0x560] sm:$0xff]
    %v287 = vld [vmem:[#allocation5 + $0x568] sm:$0xff]
    %v288 = vld [vmem:[#allocation5 + $0x570] sm:$0xff]
    %v289 = vld [vmem:[#allocation5 + $0x578] sm:$0xff]
    %v290 = vld [vmem:[#allocation5 + $0x580] sm:$0xff]
    %v291 = vld [vmem:[#allocation5 + $0x588] sm:$0xff]
    %v292 = vld [vmem:[#allocation5 + $0x590] sm:$0xff]
    %v293 = vld [vmem:[#allocation5 + $0x598] sm:$0xff]
    %v294 = vld [vmem:[#allocation5 + $0x5a0] sm:$0xff]
    %v295 = vld [vmem:[#allocation5 + $0x5a8] sm:$0xff]
    %v296 = vld [vmem:[#allocation5 + $0x5b0] sm:$0xff]
    %v297 = vld [vmem:[#allocation5 + $0x5b8] sm:$0xff]
    %v298 = vld [vmem:[#allocation5 + $0x5c0] sm:$0xff]
    %v299 = vld [vmem:[#allocation5 + $0x5c8] sm:$0xff]
    %v300 = vld [vmem:[#allocation5 + $0x5d0] sm:$0xff]
    %v301 = vld [vmem:[#allocation5 + $0x5d8] sm:$0xff]
    %v302 = vld [vmem:[#allocation5 + $0x5e0] sm:$0xff]
    %v303 = vld [vmem:[#allocation5 + $0x5e8] sm:$0xff]
    %v304 = vld [vmem:[#allocation5 + $0x5f0] sm:$0xff]
    %v305 = vld [vmem:[#allocation5 + $0x5f8] sm:$0xff]
    %v306 = vld [vmem:[#allocation5 + $0x600] sm:$0xff]
    %v307 = vld [vmem:[#allocation5 + $0x608] sm:$0xff]
    %v308 = vld [vmem:[#allocation5 + $0x610] sm:$0xff]
    %v309 = vld [vmem:[#allocation5 + $0x618] sm:$0xff]
    %v310 = vld [vmem:[#allocation5 + $0x620] sm:$0xff]
    %v311 = vld [vmem:[#allocation5 + $0x628] sm:$0xff]
    %v312 = vld [vmem:[#allocation5 + $0x630] sm:$0xff]
    %v313 = vld [vmem:[#allocation5 + $0x638] sm:$0xff]
    %v314 = vld [vmem:[#allocation5 + $0x640] sm:$0xff]
    %v315 = vld [vmem:[#allocation5 + $0x648] sm:$0xff]
    %v316 = vld [vmem:[#allocation5 + $0x650] sm:$0xff]
    %v317 = vld [vmem:[#allocation5 + $0x658] sm:$0xff]
    %v318 = vld [vmem:[#allocation5 + $0x660] sm:$0xff]
    %v319 = vld [vmem:[#allocation5 + $0x668] sm:$0xff]
    %v320 = vld [vmem:[#allocation5 + $0x670] sm:$0xff]
    %v321 = vld [vmem:[#allocation5 + $0x678] sm:$0xff]
    %v322 = vld [vmem:[#allocation5 + $0x680] sm:$0xff]
    %v323 = vld [vmem:[#allocation5 + $0x688] sm:$0xff]
    %v324 = vld [vmem:[#allocation5 + $0x690] sm:$0xff]
    %v325 = vld [vmem:[#allocation5 + $0x698] sm:$0xff]
    %v326 = vld [vmem:[#allocation5 + $0x6a0] sm:$0xff]
    %v327 = vld [vmem:[#allocation5 + $0x6a8] sm:$0xff]
    %v328 = vld [vmem:[#allocation5 + $0x6b0] sm:$0xff]
    %v329 = vld [vmem:[#allocation5 + $0x6b8] sm:$0xff]
    %v330 = vld [vmem:[#allocation5 + $0x6c0] sm:$0xff]
    %v331 = vld [vmem:[#allocation5 + $0x6c8] sm:$0xff]
    %v332 = vld [vmem:[#allocation5 + $0x6d0] sm:$0xff]
    %v333 = vld [vmem:[#allocation5 + $0x6d8] sm:$0xff]
    %v334 = vld [vmem:[#allocation5 + $0x6e0] sm:$0xff]
    %v335 = vld [vmem:[#allocation5 + $0x6e8] sm:$0xff]
    %v336 = vld [vmem:[#allocation5 + $0x6f0] sm:$0xff]
    %v337 = vld [vmem:[#allocation5 + $0x6f8] sm:$0xff]
    %v339 = vlaneseq
    %v340 = vshrl.u32 %v339, 7
    %v341 = vsub.s32 0, %v340
    %v342 = vrot.slane %v110, %v341
    %v343 = vlaneseq
    %v344 = vshrl.u32 %v343, 7
    %v345 = vsub.s32 1, %v344
    %v346 = vrot.slane %v110, %v345
    %v347 = vlaneseq
    %v348 = vshrl.u32 %v347, 7
    %v349 = vsub.s32 2, %v348
    %v350 = vrot.slane %v110, %v349
    %v351 = vlaneseq
    %v352 = vshrl.u32 %v351, 7
    %v353 = vsub.s32 3, %v352
    %v354 = vrot.slane %v110, %v353
    %v367 = vunpack.c.l.b16 %v102
    %v368 = vunpack.c.h.b16 %v102
    %v369 = vunpack.c.l.b16 %v103
    %v370 = vunpack.c.h.b16 %v103
    %v371 = vunpack.c.l.b16 %v104
    %v372 = vunpack.c.h.b16 %v104
    %v373 = vunpack.c.l.b16 %v105
    %v374 = vunpack.c.l.b16 %v106
    %v375 = vunpack.c.h.b16 %v106
    %v376 = vunpack.c.l.b16 %v107
    %v377 = vunpack.c.h.b16 %v107
    %v378 = vunpack.c.l.b16 %v108
    %v379 = vunpack.c.h.b16 %v108
    %v380 = vunpack.c.l.b16 %v109
    %v381 = vpack.c.b16 %v374, %v367
    %v382 = vpack.c.b16 %v375, %v368
    %v383 = vpack.c.b16 %v376, %v369
    %v384 = vpack.c.b16 %v377, %v370
    %v385 = vpack.c.b16 %v378, %v371
    %v386 = vpack.c.b16 %v379, %v372
    %v387 = vpack.c.b16 %v380, %v373
    %v619 = vunpack.c.l.b16 %v114
    %v620 = vunpack.c.h.b16 %v114
    %v621 = vunpack.c.l.b16 %v115
    %v622 = vunpack.c.h.b16 %v115
    %v623 = vunpack.c.l.b16 %v116
    %v624 = vunpack.c.h.b16 %v116
    %v625 = vunpack.c.l.b16 %v117
    %v626 = vunpack.c.h.b16 %v117
    %v627 = vunpack.c.l.b16 %v118
    %v628 = vunpack.c.h.b16 %v118
    %v629 = vunpack.c.l.b16 %v119
    %v630 = vunpack.c.h.b16 %v119
    %v631 = vunpack.c.l.b16 %v120
    %v632 = vunpack.c.h.b16 %v120
    %v633 = vunpack.c.l.b16 %v121
    %v634 = vunpack.c.h.b16 %v121
    %v635 = vunpack.c.l.b16 %v122
    %v636 = vunpack.c.h.b16 %v122
    %v637 = vunpack.c.l.b16 %v123
    %v638 = vunpack.c.h.b16 %v123
    %v639 = vunpack.c.l.b16 %v124
    %v640 = vunpack.c.h.b16 %v124
    %v641 = vunpack.c.l.b16 %v125
    %v642 = vunpack.c.h.b16 %v125
    %v643 = vunpack.c.l.b16 %v126
    %v644 = vunpack.c.h.b16 %v126
    %v645 = vunpack.c.l.b16 %v127
    %v646 = vunpack.c.h.b16 %v127
    %v647 = vunpack.c.l.b16 %v128
    %v648 = vunpack.c.h.b16 %v128
    %v649 = vunpack.c.l.b16 %v129
    %v650 = vunpack.c.h.b16 %v129
    %v651 = vunpack.c.l.b16 %v130
    %v652 = vunpack.c.h.b16 %v130
    %v653 = vunpack.c.l.b16 %v131
    %v654 = vunpack.c.h.b16 %v131
    %v655 = vunpack.c.l.b16 %v132
    %v656 = vunpack.c.h.b16 %v132
    %v657 = vunpack.c.l.b16 %v133
    %v658 = vunpack.c.h.b16 %v133
    %v659 = vunpack.c.l.b16 %v134
    %v660 = vunpack.c.h.b16 %v134
    %v661 = vunpack.c.l.b16 %v135
    %v662 = vunpack.c.h.b16 %v135
    %v663 = vunpack.c.l.b16 %v136
    %v664 = vunpack.c.h.b16 %v136
    %v665 = vunpack.c.l.b16 %v137
    %v666 = vunpack.c.h.b16 %v137
    %v667 = vunpack.c.l.b16 %v138
    %v668 = vunpack.c.h.b16 %v138
    %v669 = vunpack.c.l.b16 %v139
    %v670 = vunpack.c.h.b16 %v139
    %v671 = vunpack.c.l.b16 %v140
    %v672 = vunpack.c.h.b16 %v140
    %v673 = vunpack.c.l.b16 %v141
    %v674 = vunpack.c.h.b16 %v141
    %v675 = vunpack.c.l.b16 %v142
    %v676 = vunpack.c.h.b16 %v142
    %v677 = vunpack.c.l.b16 %v143
    %v678 = vunpack.c.h.b16 %v143
    %v679 = vunpack.c.l.b16 %v144
    %v680 = vunpack.c.h.b16 %v144
    %v681 = vunpack.c.l.b16 %v145
    %v682 = vunpack.c.h.b16 %v145
    %v683 = vunpack.c.l.b16 %v146
    %v684 = vunpack.c.h.b16 %v146
    %v685 = vunpack.c.l.b16 %v147
    %v686 = vunpack.c.h.b16 %v147
    %v687 = vunpack.c.l.b16 %v148
    %v688 = vunpack.c.h.b16 %v148
    %v689 = vunpack.c.l.b16 %v149
    %v690 = vunpack.c.h.b16 %v149
    %v691 = vunpack.c.l.b16 %v150
    %v692 = vunpack.c.h.b16 %v150
    %v693 = vunpack.c.l.b16 %v151
    %v694 = vunpack.c.h.b16 %v151
    %v695 = vunpack.c.l.b16 %v152
    %v696 = vunpack.c.h.b16 %v152
    %v697 = vunpack.c.l.b16 %v153
    %v698 = vunpack.c.h.b16 %v153
    %v699 = vunpack.c.l.b16 %v154
    %v700 = vunpack.c.h.b16 %v154
    %v701 = vunpack.c.l.b16 %v155
    %v702 = vunpack.c.h.b16 %v155
    %v703 = vunpack.c.l.b16 %v156
    %v704 = vunpack.c.h.b16 %v156
    %v705 = vunpack.c.l.b16 %v157
    %v706 = vunpack.c.h.b16 %v157
    %v707 = vunpack.c.l.b16 %v158
    %v708 = vunpack.c.h.b16 %v158
    %v709 = vunpack.c.l.b16 %v159
    %v710 = vunpack.c.h.b16 %v159
    %v711 = vunpack.c.l.b16 %v160
    %v712 = vunpack.c.h.b16 %v160
    %v713 = vunpack.c.l.b16 %v161
    %v714 = vunpack.c.h.b16 %v161
    %v715 = vunpack.c.l.b16 %v162
    %v716 = vunpack.c.h.b16 %v162
    %v717 = vunpack.c.l.b16 %v163
    %v718 = vunpack.c.h.b16 %v163
    %v719 = vunpack.c.l.b16 %v164
    %v720 = vunpack.c.h.b16 %v164
    %v721 = vunpack.c.l.b16 %v165
    %v722 = vunpack.c.h.b16 %v165
    %v723 = vunpack.c.l.b16 %v166
    %v724 = vunpack.c.h.b16 %v166
    %v725 = vunpack.c.l.b16 %v167
    %v726 = vunpack.c.h.b16 %v167
    %v727 = vunpack.c.l.b16 %v168
    %v728 = vunpack.c.h.b16 %v168
    %v729 = vunpack.c.l.b16 %v169
    %v730 = vunpack.c.h.b16 %v169
    %v731 = vunpack.c.l.b16 %v170
    %v732 = vunpack.c.h.b16 %v170
    %v733 = vunpack.c.l.b16 %v171
    %v734 = vunpack.c.h.b16 %v171
    %v735 = vunpack.c.l.b16 %v172
    %v736 = vunpack.c.h.b16 %v172
    %v737 = vunpack.c.l.b16 %v173
    %v738 = vunpack.c.h.b16 %v173
    %v739 = vunpack.c.l.b16 %v174
    %v740 = vunpack.c.h.b16 %v174
    %v741 = vunpack.c.l.b16 %v175
    %v742 = vunpack.c.h.b16 %v175
    %v743 = vunpack.c.l.b16 %v176
    %v744 = vunpack.c.h.b16 %v176
    %v745 = vunpack.c.l.b16 %v177
    %v746 = vunpack.c.h.b16 %v177
    %v747 = vunpack.c.l.b16 %v178
    %v748 = vunpack.c.h.b16 %v178
    %v749 = vunpack.c.l.b16 %v179
    %v750 = vunpack.c.h.b16 %v179
    %v751 = vunpack.c.l.b16 %v180
    %v752 = vunpack.c.h.b16 %v180
    %v753 = vunpack.c.l.b16 %v181
    %v754 = vunpack.c.h.b16 %v181
    %v755 = vunpack.c.l.b16 %v182
    %v756 = vunpack.c.h.b16 %v182
    %v757 = vunpack.c.l.b16 %v183
    %v758 = vunpack.c.h.b16 %v183
    %v759 = vunpack.c.l.b16 %v184
    %v760 = vunpack.c.h.b16 %v184
    %v761 = vunpack.c.l.b16 %v185
    %v762 = vunpack.c.h.b16 %v185
    %v763 = vunpack.c.l.b16 %v186
    %v764 = vunpack.c.h.b16 %v186
    %v765 = vunpack.c.l.b16 %v187
    %v766 = vunpack.c.h.b16 %v187
    %v767 = vunpack.c.l.b16 %v188
    %v768 = vunpack.c.h.b16 %v188
    %v769 = vunpack.c.l.b16 %v189
    %v770 = vunpack.c.h.b16 %v189
    %v771 = vunpack.c.l.b16 %v190
    %v772 = vunpack.c.h.b16 %v190
    %v773 = vunpack.c.l.b16 %v191
    %v774 = vunpack.c.h.b16 %v191
    %v775 = vunpack.c.l.b16 %v192
    %v776 = vunpack.c.h.b16 %v192
    %v777 = vunpack.c.l.b16 %v193
    %v778 = vunpack.c.h.b16 %v193
    %v779 = vunpack.c.l.b16 %v194
    %v780 = vunpack.c.h.b16 %v194
    %v781 = vunpack.c.l.b16 %v195
    %v782 = vunpack.c.h.b16 %v195
    %v783 = vunpack.c.l.b16 %v196
    %v784 = vunpack.c.h.b16 %v196
    %v785 = vunpack.c.l.b16 %v197
    %v786 = vunpack.c.h.b16 %v197
    %v787 = vunpack.c.l.b16 %v198
    %v788 = vunpack.c.h.b16 %v198
    %v789 = vunpack.c.l.b16 %v199
    %v790 = vunpack.c.h.b16 %v199
    %v791 = vunpack.c.l.b16 %v200
    %v792 = vunpack.c.h.b16 %v200
    %v793 = vunpack.c.l.b16 %v201
    %v794 = vunpack.c.h.b16 %v201
    %v795 = vunpack.c.l.b16 %v202
    %v796 = vunpack.c.h.b16 %v202
    %v797 = vunpack.c.l.b16 %v203
    %v798 = vunpack.c.h.b16 %v203
    %v799 = vunpack.c.l.b16 %v204
    %v800 = vunpack.c.h.b16 %v204
    %v801 = vunpack.c.l.b16 %v205
    %v802 = vunpack.c.h.b16 %v205
    %v803 = vunpack.c.l.b16 %v206
    %v804 = vunpack.c.h.b16 %v206
    %v805 = vunpack.c.l.b16 %v207
    %v806 = vunpack.c.h.b16 %v207
    %v807 = vunpack.c.l.b16 %v208
    %v808 = vunpack.c.h.b16 %v208
    %v809 = vunpack.c.l.b16 %v209
    %v810 = vunpack.c.h.b16 %v209
    %v811 = vunpack.c.l.b16 %v210
    %v812 = vunpack.c.h.b16 %v210
    %v813 = vunpack.c.l.b16 %v211
    %v814 = vunpack.c.h.b16 %v211
    %v815 = vunpack.c.l.b16 %v212
    %v816 = vunpack.c.h.b16 %v212
    %v817 = vunpack.c.l.b16 %v213
    %v818 = vunpack.c.h.b16 %v213
    %v819 = vunpack.c.l.b16 %v214
    %v820 = vunpack.c.h.b16 %v214
    %v821 = vunpack.c.l.b16 %v215
    %v822 = vunpack.c.h.b16 %v215
    %v823 = vunpack.c.l.b16 %v216
    %v824 = vunpack.c.h.b16 %v216
    %v825 = vunpack.c.l.b16 %v217
    %v826 = vunpack.c.h.b16 %v217
    %v827 = vunpack.c.l.b16 %v218
    %v828 = vunpack.c.h.b16 %v218
    %v829 = vunpack.c.l.b16 %v219
    %v830 = vunpack.c.h.b16 %v219
    %v831 = vunpack.c.l.b16 %v220
    %v832 = vunpack.c.h.b16 %v220
    %v833 = vunpack.c.l.b16 %v221
    %v834 = vunpack.c.h.b16 %v221
    %v835 = vunpack.c.l.b16 %v222
    %v836 = vunpack.c.h.b16 %v222
    %v837 = vunpack.c.l.b16 %v223
    %v838 = vunpack.c.h.b16 %v223
    %v839 = vunpack.c.l.b16 %v224
    %v840 = vunpack.c.h.b16 %v224
    %v841 = vunpack.c.l.b16 %v225
    %v842 = vunpack.c.h.b16 %v225
    %v843 = vunpack.c.l.b16 %v226
    %v844 = vunpack.c.h.b16 %v226
    %v845 = vunpack.c.l.b16 %v227
    %v846 = vunpack.c.h.b16 %v227
    %v847 = vunpack.c.l.b16 %v228
    %v848 = vunpack.c.h.b16 %v228
    %v849 = vunpack.c.l.b16 %v229
    %v850 = vunpack.c.h.b16 %v229
    %v851 = vunpack.c.l.b16 %v230
    %v852 = vunpack.c.h.b16 %v230
    %v853 = vunpack.c.l.b16 %v231
    %v854 = vunpack.c.h.b16 %v231
    %v855 = vunpack.c.l.b16 %v232
    %v856 = vunpack.c.h.b16 %v232
    %v857 = vunpack.c.l.b16 %v233
    %v858 = vunpack.c.h.b16 %v233
    %v859 = vunpack.c.l.b16 %v234
    %v860 = vunpack.c.h.b16 %v234
    %v861 = vunpack.c.l.b16 %v235
    %v862 = vunpack.c.h.b16 %v235
    %v863 = vunpack.c.l.b16 %v236
    %v864 = vunpack.c.h.b16 %v236
    %v865 = vunpack.c.l.b16 %v237
    %v866 = vunpack.c.h.b16 %v237
    %v867 = vunpack.c.l.b16 %v238
    %v868 = vunpack.c.h.b16 %v238
    %v869 = vunpack.c.l.b16 %v239
    %v870 = vunpack.c.h.b16 %v239
    %v871 = vunpack.c.l.b16 %v240
    %v872 = vunpack.c.h.b16 %v240
    %v873 = vunpack.c.l.b16 %v241
    %v874 = vunpack.c.h.b16 %v241
    %v875 = vunpack.c.l.b16 %v242
    %v876 = vunpack.c.h.b16 %v242
    %v877 = vunpack.c.l.b16 %v243
    %v878 = vunpack.c.h.b16 %v243
    %v879 = vunpack.c.l.b16 %v244
    %v880 = vunpack.c.h.b16 %v244
    %v881 = vunpack.c.l.b16 %v245
    %v882 = vunpack.c.h.b16 %v245
    %v883 = vunpack.c.l.b16 %v246
    %v884 = vunpack.c.h.b16 %v246
    %v885 = vunpack.c.l.b16 %v247
    %v886 = vunpack.c.h.b16 %v247
    %v887 = vunpack.c.l.b16 %v248
    %v888 = vunpack.c.h.b16 %v248
    %v889 = vunpack.c.l.b16 %v249
    %v890 = vunpack.c.h.b16 %v249
    %v891 = vunpack.c.l.b16 %v250
    %v892 = vunpack.c.h.b16 %v250
    %v893 = vunpack.c.l.b16 %v251
    %v894 = vunpack.c.h.b16 %v251
    %v895 = vunpack.c.l.b16 %v252
    %v896 = vunpack.c.h.b16 %v252
    %v897 = vunpack.c.l.b16 %v253
    %v898 = vunpack.c.h.b16 %v253
    %v899 = vunpack.c.l.b16 %v254
    %v900 = vunpack.c.h.b16 %v254
    %v901 = vunpack.c.l.b16 %v255
    %v902 = vunpack.c.h.b16 %v255
    %v903 = vunpack.c.l.b16 %v256
    %v904 = vunpack.c.h.b16 %v256
    %v905 = vunpack.c.l.b16 %v257
    %v906 = vunpack.c.h.b16 %v257
    %v907 = vunpack.c.l.b16 %v258
    %v908 = vunpack.c.h.b16 %v258
    %v909 = vunpack.c.l.b16 %v259
    %v910 = vunpack.c.h.b16 %v259
    %v911 = vunpack.c.l.b16 %v260
    %v912 = vunpack.c.h.b16 %v260
    %v913 = vunpack.c.l.b16 %v261
    %v914 = vunpack.c.h.b16 %v261
    %v915 = vunpack.c.l.b16 %v262
    %v916 = vunpack.c.h.b16 %v262
    %v917 = vunpack.c.l.b16 %v263
    %v918 = vunpack.c.h.b16 %v263
    %v919 = vunpack.c.l.b16 %v264
    %v920 = vunpack.c.h.b16 %v264
    %v921 = vunpack.c.l.b16 %v265
    %v922 = vunpack.c.h.b16 %v265
    %v923 = vunpack.c.l.b16 %v266
    %v924 = vunpack.c.h.b16 %v266
    %v925 = vunpack.c.l.b16 %v267
    %v926 = vunpack.c.h.b16 %v267
    %v927 = vunpack.c.l.b16 %v268
    %v928 = vunpack.c.h.b16 %v268
    %v929 = vunpack.c.l.b16 %v269
    %v930 = vunpack.c.h.b16 %v269
    %v931 = vunpack.c.l.b16 %v270
    %v932 = vunpack.c.h.b16 %v270
    %v933 = vunpack.c.l.b16 %v271
    %v934 = vunpack.c.h.b16 %v271
    %v935 = vunpack.c.l.b16 %v272
    %v936 = vunpack.c.h.b16 %v272
    %v937 = vunpack.c.l.b16 %v273
    %v938 = vunpack.c.h.b16 %v273
    %v939 = vunpack.c.l.b16 %v274
    %v940 = vunpack.c.h.b16 %v274
    %v941 = vunpack.c.l.b16 %v275
    %v942 = vunpack.c.h.b16 %v275
    %v943 = vunpack.c.l.b16 %v276
    %v944 = vunpack.c.h.b16 %v276
    %v945 = vunpack.c.l.b16 %v277
    %v946 = vunpack.c.h.b16 %v277
    %v947 = vunpack.c.l.b16 %v278
    %v948 = vunpack.c.h.b16 %v278
    %v949 = vunpack.c.l.b16 %v279
    %v950 = vunpack.c.h.b16 %v279
    %v951 = vunpack.c.l.b16 %v280
    %v952 = vunpack.c.h.b16 %v280
    %v953 = vunpack.c.l.b16 %v281
    %v954 = vunpack.c.h.b16 %v281
    %v955 = vunpack.c.l.b16 %v282
    %v956 = vunpack.c.h.b16 %v282
    %v957 = vunpack.c.l.b16 %v283
    %v958 = vunpack.c.h.b16 %v283
    %v959 = vunpack.c.l.b16 %v284
    %v960 = vunpack.c.h.b16 %v284
    %v961 = vunpack.c.l.b16 %v285
    %v962 = vunpack.c.h.b16 %v285
    %v963 = vunpack.c.l.b16 %v286
    %v964 = vunpack.c.h.b16 %v286
    %v965 = vunpack.c.l.b16 %v287
    %v966 = vunpack.c.h.b16 %v287
    %v967 = vunpack.c.l.b16 %v288
    %v968 = vunpack.c.h.b16 %v288
    %v969 = vunpack.c.l.b16 %v289
    %v970 = vunpack.c.h.b16 %v289
    %v971 = vunpack.c.l.b16 %v290
    %v972 = vunpack.c.h.b16 %v290
    %v973 = vunpack.c.l.b16 %v291
    %v974 = vunpack.c.h.b16 %v291
    %v975 = vunpack.c.l.b16 %v292
    %v976 = vunpack.c.h.b16 %v292
    %v977 = vunpack.c.l.b16 %v293
    %v978 = vunpack.c.h.b16 %v293
    %v979 = vunpack.c.l.b16 %v294
    %v980 = vunpack.c.h.b16 %v294
    %v981 = vunpack.c.l.b16 %v295
    %v982 = vunpack.c.h.b16 %v295
    %v983 = vunpack.c.l.b16 %v296
    %v984 = vunpack.c.h.b16 %v296
    %v985 = vunpack.c.l.b16 %v297
    %v986 = vunpack.c.h.b16 %v297
    %v987 = vunpack.c.l.b16 %v298
    %v988 = vunpack.c.h.b16 %v298
    %v989 = vunpack.c.l.b16 %v299
    %v990 = vunpack.c.h.b16 %v299
    %v991 = vunpack.c.l.b16 %v300
    %v992 = vunpack.c.h.b16 %v300
    %v993 = vunpack.c.l.b16 %v301
    %v994 = vunpack.c.h.b16 %v301
    %v995 = vunpack.c.l.b16 %v302
    %v996 = vunpack.c.h.b16 %v302
    %v997 = vunpack.c.l.b16 %v303
    %v998 = vunpack.c.h.b16 %v303
    %v999 = vunpack.c.l.b16 %v304
    %v1000 = vunpack.c.h.b16 %v304
    %v1001 = vunpack.c.l.b16 %v305
    %v1002 = vunpack.c.h.b16 %v305
    %v1003 = vunpack.c.l.b16 %v306
    %v1004 = vunpack.c.h.b16 %v306
    %v1005 = vunpack.c.l.b16 %v307
    %v1006 = vunpack.c.h.b16 %v307
    %v1007 = vunpack.c.l.b16 %v308
    %v1008 = vunpack.c.h.b16 %v308
    %v1009 = vunpack.c.l.b16 %v309
    %v1010 = vunpack.c.h.b16 %v309
    %v1011 = vunpack.c.l.b16 %v310
    %v1012 = vunpack.c.h.b16 %v310
    %v1013 = vunpack.c.l.b16 %v311
    %v1014 = vunpack.c.h.b16 %v311
    %v1015 = vunpack.c.l.b16 %v312
    %v1016 = vunpack.c.h.b16 %v312
    %v1017 = vunpack.c.l.b16 %v313
    %v1018 = vunpack.c.h.b16 %v313
    %v1019 = vunpack.c.l.b16 %v314
    %v1020 = vunpack.c.h.b16 %v314
    %v1021 = vunpack.c.l.b16 %v315
    %v1022 = vunpack.c.h.b16 %v315
    %v1023 = vunpack.c.l.b16 %v316
    %v1024 = vunpack.c.h.b16 %v316
    %v1025 = vunpack.c.l.b16 %v317
    %v1026 = vunpack.c.h.b16 %v317
    %v1027 = vunpack.c.l.b16 %v318
    %v1028 = vunpack.c.h.b16 %v318
    %v1029 = vunpack.c.l.b16 %v319
    %v1030 = vunpack.c.h.b16 %v319
    %v1031 = vunpack.c.l.b16 %v320
    %v1032 = vunpack.c.h.b16 %v320
    %v1033 = vunpack.c.l.b16 %v321
    %v1034 = vunpack.c.h.b16 %v321
    %v1035 = vunpack.c.l.b16 %v322
    %v1036 = vunpack.c.h.b16 %v322
    %v1037 = vunpack.c.l.b16 %v323
    %v1038 = vunpack.c.h.b16 %v323
    %v1039 = vunpack.c.l.b16 %v324
    %v1040 = vunpack.c.h.b16 %v324
    %v1041 = vunpack.c.l.b16 %v325
    %v1042 = vunpack.c.h.b16 %v325
    %v1043 = vunpack.c.l.b16 %v326
    %v1044 = vunpack.c.h.b16 %v326
    %v1045 = vunpack.c.l.b16 %v327
    %v1046 = vunpack.c.h.b16 %v327
    %v1047 = vunpack.c.l.b16 %v328
    %v1048 = vunpack.c.h.b16 %v328
    %v1049 = vunpack.c.l.b16 %v329
    %v1050 = vunpack.c.h.b16 %v329
    %v1051 = vunpack.c.l.b16 %v330
    %v1052 = vunpack.c.h.b16 %v330
    %v1053 = vunpack.c.l.b16 %v331
    %v1054 = vunpack.c.h.b16 %v331
    %v1055 = vunpack.c.l.b16 %v332
    %v1056 = vunpack.c.h.b16 %v332
    %v1057 = vunpack.c.l.b16 %v333
    %v1058 = vunpack.c.h.b16 %v333
    %v1059 = vunpack.c.l.b16 %v334
    %v1060 = vunpack.c.h.b16 %v334
    %v1061 = vunpack.c.l.b16 %v335
    %v1062 = vunpack.c.h.b16 %v335
    %v1063 = vunpack.c.l.b16 %v336
    %v1064 = vunpack.c.h.b16 %v336
    %v1065 = vunpack.c.l.b16 %v337
    %v1066 = vunpack.c.h.b16 %v337
    %v1067 = vpack.c.b16 %v623, %v619
    %v1068 = vpack.c.b16 %v624, %v620
    %v1069 = vpack.c.b16 %v625, %v621
    %v1070 = vpack.c.b16 %v626, %v622
    %v1071 = vpack.c.b16 %v631, %v627
    %v1072 = vpack.c.b16 %v632, %v628
    %v1073 = vpack.c.b16 %v633, %v629
    %v1074 = vpack.c.b16 %v634, %v630
    %v1075 = vpack.c.b16 %v639, %v635
    %v1076 = vpack.c.b16 %v640, %v636
    %v1077 = vpack.c.b16 %v641, %v637
    %v1078 = vpack.c.b16 %v642, %v638
    %v1079 = vpack.c.b16 %v647, %v643
    %v1080 = vpack.c.b16 %v648, %v644
    %v1081 = vpack.c.b16 %v649, %v645
    %v1082 = vpack.c.b16 %v650, %v646
    %v1083 = vpack.c.b16 %v655, %v651
    %v1084 = vpack.c.b16 %v656, %v652
    %v1085 = vpack.c.b16 %v657, %v653
    %v1086 = vpack.c.b16 %v658, %v654
    %v1087 = vpack.c.b16 %v663, %v659
    %v1088 = vpack.c.b16 %v664, %v660
    %v1089 = vpack.c.b16 %v665, %v661
    %v1090 = vpack.c.b16 %v666, %v662
    %v1091 = vpack.c.b16 %v671, %v667
    %v1092 = vpack.c.b16 %v672, %v668
    %v1093 = vpack.c.b16 %v673, %v669
    %v1094 = vpack.c.b16 %v674, %v670
    %v1095 = vpack.c.b16 %v679, %v675
    %v1096 = vpack.c.b16 %v680, %v676
    %v1097 = vpack.c.b16 %v681, %v677
    %v1098 = vpack.c.b16 %v682, %v678
    %v1099 = vpack.c.b16 %v687, %v683
    %v1100 = vpack.c.b16 %v688, %v684
    %v1101 = vpack.c.b16 %v689, %v685
    %v1102 = vpack.c.b16 %v690, %v686
    %v1103 = vpack.c.b16 %v695, %v691
    %v1104 = vpack.c.b16 %v696, %v692
    %v1105 = vpack.c.b16 %v697, %v693
    %v1106 = vpack.c.b16 %v698, %v694
    %v1107 = vpack.c.b16 %v703, %v699
    %v1108 = vpack.c.b16 %v704, %v700
    %v1109 = vpack.c.b16 %v705, %v701
    %v1110 = vpack.c.b16 %v706, %v702
    %v1111 = vpack.c.b16 %v711, %v707
    %v1112 = vpack.c.b16 %v712, %v708
    %v1113 = vpack.c.b16 %v713, %v709
    %v1114 = vpack.c.b16 %v714, %v710
    %v1115 = vpack.c.b16 %v719, %v715
    %v1116 = vpack.c.b16 %v720, %v716
    %v1117 = vpack.c.b16 %v721, %v717
    %v1118 = vpack.c.b16 %v722, %v718
    %v1119 = vpack.c.b16 %v727, %v723
    %v1120 = vpack.c.b16 %v728, %v724
    %v1121 = vpack.c.b16 %v729, %v725
    %v1122 = vpack.c.b16 %v730, %v726
    %v1123 = vpack.c.b16 %v735, %v731
    %v1124 = vpack.c.b16 %v736, %v732
    %v1125 = vpack.c.b16 %v737, %v733
    %v1126 = vpack.c.b16 %v738, %v734
    %v1127 = vpack.c.b16 %v743, %v739
    %v1128 = vpack.c.b16 %v744, %v740
    %v1129 = vpack.c.b16 %v745, %v741
    %v1130 = vpack.c.b16 %v746, %v742
    %v1131 = vpack.c.b16 %v751, %v747
    %v1132 = vpack.c.b16 %v752, %v748
    %v1133 = vpack.c.b16 %v753, %v749
    %v1134 = vpack.c.b16 %v754, %v750
    %v1135 = vpack.c.b16 %v759, %v755
    %v1136 = vpack.c.b16 %v760, %v756
    %v1137 = vpack.c.b16 %v761, %v757
    %v1138 = vpack.c.b16 %v762, %v758
    %v1139 = vpack.c.b16 %v767, %v763
    %v1140 = vpack.c.b16 %v768, %v764
    %v1141 = vpack.c.b16 %v769, %v765
    %v1142 = vpack.c.b16 %v770, %v766
    %v1143 = vpack.c.b16 %v775, %v771
    %v1144 = vpack.c.b16 %v776, %v772
    %v1145 = vpack.c.b16 %v777, %v773
    %v1146 = vpack.c.b16 %v778, %v774
    %v1147 = vpack.c.b16 %v783, %v779
    %v1148 = vpack.c.b16 %v784, %v780
    %v1149 = vpack.c.b16 %v785, %v781
    %v1150 = vpack.c.b16 %v786, %v782
    %v1151 = vpack.c.b16 %v791, %v787
    %v1152 = vpack.c.b16 %v792, %v788
    %v1153 = vpack.c.b16 %v793, %v789
    %v1154 = vpack.c.b16 %v794, %v790
    %v1155 = vpack.c.b16 %v799, %v795
    %v1156 = vpack.c.b16 %v800, %v796
    %v1157 = vpack.c.b16 %v801, %v797
    %v1158 = vpack.c.b16 %v802, %v798
    %v1159 = vpack.c.b16 %v807, %v803
    %v1160 = vpack.c.b16 %v808, %v804
    %v1161 = vpack.c.b16 %v809, %v805
    %v1162 = vpack.c.b16 %v810, %v806
    %v1163 = vpack.c.b16 %v815, %v811
    %v1164 = vpack.c.b16 %v816, %v812
    %v1165 = vpack.c.b16 %v817, %v813
    %v1166 = vpack.c.b16 %v818, %v814
    %v1167 = vpack.c.b16 %v823, %v819
    %v1168 = vpack.c.b16 %v824, %v820
    %v1169 = vpack.c.b16 %v825, %v821
    %v1170 = vpack.c.b16 %v826, %v822
    %v1171 = vpack.c.b16 %v831, %v827
    %v1172 = vpack.c.b16 %v832, %v828
    %v1173 = vpack.c.b16 %v833, %v829
    %v1174 = vpack.c.b16 %v834, %v830
    %v1175 = vpack.c.b16 %v839, %v835
    %v1176 = vpack.c.b16 %v840, %v836
    %v1177 = vpack.c.b16 %v841, %v837
    %v1178 = vpack.c.b16 %v842, %v838
    %v1179 = vpack.c.b16 %v847, %v843
    %v1180 = vpack.c.b16 %v848, %v844
    %v1181 = vpack.c.b16 %v849, %v845
    %v1182 = vpack.c.b16 %v850, %v846
    %v1183 = vpack.c.b16 %v855, %v851
    %v1184 = vpack.c.b16 %v856, %v852
    %v1185 = vpack.c.b16 %v857, %v853
    %v1186 = vpack.c.b16 %v858, %v854
    %v1187 = vpack.c.b16 %v863, %v859
    %v1188 = vpack.c.b16 %v864, %v860
    %v1189 = vpack.c.b16 %v865, %v861
    %v1190 = vpack.c.b16 %v866, %v862
    %v1191 = vpack.c.b16 %v871, %v867
    %v1192 = vpack.c.b16 %v872, %v868
    %v1193 = vpack.c.b16 %v873, %v869
    %v1194 = vpack.c.b16 %v874, %v870
    %v1195 = vpack.c.b16 %v879, %v875
    %v1196 = vpack.c.b16 %v880, %v876
    %v1197 = vpack.c.b16 %v881, %v877
    %v1198 = vpack.c.b16 %v882, %v878
    %v1199 = vpack.c.b16 %v887, %v883
    %v1200 = vpack.c.b16 %v888, %v884
    %v1201 = vpack.c.b16 %v889, %v885
    %v1202 = vpack.c.b16 %v890, %v886
    %v1203 = vpack.c.b16 %v895, %v891
    %v1204 = vpack.c.b16 %v896, %v892
    %v1205 = vpack.c.b16 %v897, %v893
    %v1206 = vpack.c.b16 %v898, %v894
    %v1207 = vpack.c.b16 %v903, %v899
    %v1208 = vpack.c.b16 %v904, %v900
    %v1209 = vpack.c.b16 %v905, %v901
    %v1210 = vpack.c.b16 %v906, %v902
    %v1211 = vpack.c.b16 %v911, %v907
    %v1212 = vpack.c.b16 %v912, %v908
    %v1213 = vpack.c.b16 %v913, %v909
    %v1214 = vpack.c.b16 %v914, %v910
    %v1215 = vpack.c.b16 %v919, %v915
    %v1216 = vpack.c.b16 %v920, %v916
    %v1217 = vpack.c.b16 %v921, %v917
    %v1218 = vpack.c.b16 %v922, %v918
    %v1219 = vpack.c.b16 %v927, %v923
    %v1220 = vpack.c.b16 %v928, %v924
    %v1221 = vpack.c.b16 %v929, %v925
    %v1222 = vpack.c.b16 %v930, %v926
    %v1223 = vpack.c.b16 %v935, %v931
    %v1224 = vpack.c.b16 %v936, %v932
    %v1225 = vpack.c.b16 %v937, %v933
    %v1226 = vpack.c.b16 %v938, %v934
    %v1227 = vpack.c.b16 %v943, %v939
    %v1228 = vpack.c.b16 %v944, %v940
    %v1229 = vpack.c.b16 %v945, %v941
    %v1230 = vpack.c.b16 %v946, %v942
    %v1231 = vpack.c.b16 %v951, %v947
    %v1232 = vpack.c.b16 %v952, %v948
    %v1233 = vpack.c.b16 %v953, %v949
    %v1234 = vpack.c.b16 %v954, %v950
    %v1235 = vpack.c.b16 %v959, %v955
    %v1236 = vpack.c.b16 %v960, %v956
    %v1237 = vpack.c.b16 %v961, %v957
    %v1238 = vpack.c.b16 %v962, %v958
    %v1239 = vpack.c.b16 %v967, %v963
    %v1240 = vpack.c.b16 %v968, %v964
    %v1241 = vpack.c.b16 %v969, %v965
    %v1242 = vpack.c.b16 %v970, %v966
    %v1243 = vpack.c.b16 %v975, %v971
    %v1244 = vpack.c.b16 %v976, %v972
    %v1245 = vpack.c.b16 %v977, %v973
    %v1246 = vpack.c.b16 %v978, %v974
    %v1247 = vpack.c.b16 %v983, %v979
    %v1248 = vpack.c.b16 %v984, %v980
    %v1249 = vpack.c.b16 %v985, %v981
    %v1250 = vpack.c.b16 %v986, %v982
    %v1251 = vpack.c.b16 %v991, %v987
    %v1252 = vpack.c.b16 %v992, %v988
    %v1253 = vpack.c.b16 %v993, %v989
    %v1254 = vpack.c.b16 %v994, %v990
    %v1255 = vpack.c.b16 %v999, %v995
    %v1256 = vpack.c.b16 %v1000, %v996
    %v1257 = vpack.c.b16 %v1001, %v997
    %v1258 = vpack.c.b16 %v1002, %v998
    %v1259 = vpack.c.b16 %v1007, %v1003
    %v1260 = vpack.c.b16 %v1008, %v1004
    %v1261 = vpack.c.b16 %v1009, %v1005
    %v1262 = vpack.c.b16 %v1010, %v1006
    %v1263 = vpack.c.b16 %v1015, %v1011
    %v1264 = vpack.c.b16 %v1016, %v1012
    %v1265 = vpack.c.b16 %v1017, %v1013
    %v1266 = vpack.c.b16 %v1018, %v1014
    %v1267 = vpack.c.b16 %v1023, %v1019
    %v1268 = vpack.c.b16 %v1024, %v1020
    %v1269 = vpack.c.b16 %v1025, %v1021
    %v1270 = vpack.c.b16 %v1026, %v1022
    %v1271 = vpack.c.b16 %v1031, %v1027
    %v1272 = vpack.c.b16 %v1032, %v1028
    %v1273 = vpack.c.b16 %v1033, %v1029
    %v1274 = vpack.c.b16 %v1034, %v1030
    %v1275 = vpack.c.b16 %v1039, %v1035
    %v1276 = vpack.c.b16 %v1040, %v1036
    %v1277 = vpack.c.b16 %v1041, %v1037
    %v1278 = vpack.c.b16 %v1042, %v1038
    %v1279 = vpack.c.b16 %v1047, %v1043
    %v1280 = vpack.c.b16 %v1048, %v1044
    %v1281 = vpack.c.b16 %v1049, %v1045
    %v1282 = vpack.c.b16 %v1050, %v1046
    %v1283 = vpack.c.b16 %v1055, %v1051
    %v1284 = vpack.c.b16 %v1056, %v1052
    %v1285 = vpack.c.b16 %v1057, %v1053
    %v1286 = vpack.c.b16 %v1058, %v1054
    %v1287 = vpack.c.b16 %v1063, %v1059
    %v1288 = vpack.c.b16 %v1064, %v1060
    %v1289 = vpack.c.b16 %v1065, %v1061
    %v1290 = vpack.c.b16 %v1066, %v1062
    %1515 = vmatprep.subr.bf16.mxu0 %v1068
    %1516 = vmatpush1.bf16.msra.mxu0 %v1067
    %1517 = vmatprep.subr.bf16.mxu0 %v1072
    %1518 = vmatpush1.bf16.msra.mxu0 %v1071
    %1519 = vmatprep.subr.bf16.mxu0 %v1076
    %1520 = vmatpush1.bf16.msra.mxu0 %v1075
    %1521 = vmatprep.subr.bf16.mxu0 %v1080
    %1522 = vmatpush1.bf16.msra.mxu0 %v1079
    %1523 = vmatprep.subr.bf16.mxu0 %v1084
    %1524 = vmatpush1.bf16.msra.mxu0 %v1083
    %1525 = vmatprep.subr.bf16.mxu0 %v1088
    %1526 = vmatpush1.bf16.msra.mxu0 %v1087
    %1527 = vmatprep.subr.bf16.mxu0 %v1092
    %1528 = vmatpush1.bf16.msra.mxu0 %v1091
    %1529 = vmatprep.subr.bf16.mxu0 %v1096
    %1530 = vmatpush1.bf16.msra.mxu0 %v1095
    %1531 = vmatprep.subr.bf16.mxu0 %v1100
    %1532 = vmatpush1.bf16.msra.mxu0 %v1099
    %1533 = vmatprep.subr.bf16.mxu0 %v1104
    %1534 = vmatpush1.bf16.msra.mxu0 %v1103
    %1535 = vmatprep.subr.bf16.mxu0 %v1108
    %1536 = vmatpush1.bf16.msra.mxu0 %v1107
    %1537 = vmatprep.subr.bf16.mxu0 %v1112
    %1538 = vmatpush1.bf16.msra.mxu0 %v1111
    %1539 = vmatprep.subr.bf16.mxu0 %v1116
    %1540 = vmatpush1.bf16.msra.mxu0 %v1115
    %1541 = vmatprep.subr.bf16.mxu0 %v1120
    %1542 = vmatpush1.bf16.msra.mxu0 %v1119
    %1543 = vmatprep.subr.bf16.mxu0 %v1124
    %1544 = vmatpush1.bf16.msra.mxu0 %v1123
    %1545 = vmatprep.subr.bf16.mxu0 %v1128
    %1546 = vmatpush1.bf16.msra.mxu0 %v1127
    %1547 = vmatprep.mubr.bf16.mxu0 %v382
    %1548 = vmatmul.mubr.bf16.gmra.mrb[0].mxu0 %v381
    %v1549 = vpop.f32.mrb[0].mxu0
    %v1550 = vadd.f32 %v342, %v1549
    %v1551 = vpop.f32.mrb[0].mxu0
    %v1552 = vadd.f32 %v346, %v1551
    %v1553 = vpop.f32.mrb[0].mxu0
    %v1554 = vadd.f32 %v342, %v1553
    %v1555 = vpop.f32.mrb[0].mxu0
    %v1556 = vadd.f32 %v346, %v1555
    %1557 = vdwg.mxu0
    %1558 = vmatprep.subr.bf16.mxu0 %v1132
    %1559 = vmatpush1.bf16.msra.mxu0 %v1131
    %1560 = vmatprep.subr.bf16.mxu0 %v1136
    %1561 = vmatpush1.bf16.msra.mxu0 %v1135
    %1562 = vmatprep.subr.bf16.mxu0 %v1140
    %1563 = vmatpush1.bf16.msra.mxu0 %v1139
    %1564 = vmatprep.subr.bf16.mxu0 %v1144
    %1565 = vmatpush1.bf16.msra.mxu0 %v1143
    %1566 = vmatprep.subr.bf16.mxu0 %v1148
    %1567 = vmatpush1.bf16.msra.mxu0 %v1147
    %1568 = vmatprep.subr.bf16.mxu0 %v1152
    %1569 = vmatpush1.bf16.msra.mxu0 %v1151
    %1570 = vmatprep.subr.bf16.mxu0 %v1156
    %1571 = vmatpush1.bf16.msra.mxu0 %v1155
    %1572 = vmatprep.subr.bf16.mxu0 %v1160
    %1573 = vmatpush1.bf16.msra.mxu0 %v1159
    %1574 = vmatprep.subr.bf16.mxu0 %v1164
    %1575 = vmatpush1.bf16.msra.mxu0 %v1163
    %1576 = vmatprep.subr.bf16.mxu0 %v1168
    %1577 = vmatpush1.bf16.msra.mxu0 %v1167
    %1578 = vmatprep.subr.bf16.mxu0 %v1172
    %1579 = vmatpush1.bf16.msra.mxu0 %v1171
    %1580 = vmatprep.subr.bf16.mxu0 %v1176
    %1581 = vmatpush1.bf16.msra.mxu0 %v1175
    %1582 = vmatprep.subr.bf16.mxu0 %v1180
    %1583 = vmatpush1.bf16.msra.mxu0 %v1179
    %1584 = vmatprep.subr.bf16.mxu0 %v1184
    %1585 = vmatpush1.bf16.msra.mxu0 %v1183
    %1586 = vmatprep.subr.bf16.mxu0 %v1188
    %1587 = vmatpush1.bf16.msra.mxu0 %v1187
    %1588 = vmatprep.subr.bf16.mxu0 %v1192
    %1589 = vmatpush1.bf16.msra.mxu0 %v1191
    %1590 = vmatprep.mubr.bf16.mxu0 %v384
    %1591 = vmatmul.mubr.bf16.gmra.mrb[0].mxu0 %v383
    %v1592 = vpop.f32.mrb[0].mxu0
    %v1593 = vadd.f32 %v1550, %v1592
    %v1594 = vpop.f32.mrb[0].mxu0
    %v1595 = vadd.f32 %v1552, %v1594
    %v1596 = vpop.f32.mrb[0].mxu0
    %v1597 = vadd.f32 %v1554, %v1596
    %v1598 = vpop.f32.mrb[0].mxu0
    %v1599 = vadd.f32 %v1556, %v1598
    %1600 = vdwg.mxu0
    %1601 = vmatprep.subr.bf16.mxu0 %v1196
    %1602 = vmatpush1.bf16.msra.mxu0 %v1195
    %1603 = vmatprep.subr.bf16.mxu0 %v1200
    %1604 = vmatpush1.bf16.msra.mxu0 %v1199
    %1605 = vmatprep.subr.bf16.mxu0 %v1204
    %1606 = vmatpush1.bf16.msra.mxu0 %v1203
    %1607 = vmatprep.subr.bf16.mxu0 %v1208
    %1608 = vmatpush1.bf16.msra.mxu0 %v1207
    %1609 = vmatprep.subr.bf16.mxu0 %v1212
    %1610 = vmatpush1.bf16.msra.mxu0 %v1211
    %1611 = vmatprep.subr.bf16.mxu0 %v1216
    %1612 = vmatpush1.bf16.msra.mxu0 %v1215
    %1613 = vmatprep.subr.bf16.mxu0 %v1220
    %1614 = vmatpush1.bf16.msra.mxu0 %v1219
    %1615 = vmatprep.subr.bf16.mxu0 %v1224
    %1616 = vmatpush1.bf16.msra.mxu0 %v1223
    %1617 = vmatprep.subr.bf16.mxu0 %v1228
    %1618 = vmatpush1.bf16.msra.mxu0 %v1227
    %1619 = vmatprep.subr.bf16.mxu0 %v1232
    %1620 = vmatpush1.bf16.msra.mxu0 %v1231
    %1621 = vmatprep.subr.bf16.mxu0 %v1236
    %1622 = vmatpush1.bf16.msra.mxu0 %v1235
    %1623 = vmatprep.subr.bf16.mxu0 %v1240
    %1624 = vmatpush1.bf16.msra.mxu0 %v1239
    %1625 = vmatprep.subr.bf16.mxu0 %v1244
    %1626 = vmatpush1.bf16.msra.mxu0 %v1243
    %1627 = vmatprep.subr.bf16.mxu0 %v1248
    %1628 = vmatpush1.bf16.msra.mxu0 %v1247
    %1629 = vmatprep.subr.bf16.mxu0 %v1252
    %1630 = vmatpush1.bf16.msra.mxu0 %v1251
    %1631 = vmatprep.subr.bf16.mxu0 %v1256
    %1632 = vmatpush1.bf16.msra.mxu0 %v1255
    %1633 = vmatprep.mubr.bf16.mxu0 %v386
    %1634 = vmatmul.mubr.bf16.gmra.mrb[0].mxu0 %v385
    %v1635 = vpop.f32.mrb[0].mxu0
    %v1636 = vadd.f32 %v1593, %v1635
    %v1637 = vpop.f32.mrb[0].mxu0
    %v1638 = vadd.f32 %v1595, %v1637
    %v1639 = vpop.f32.mrb[0].mxu0
    %v1640 = vadd.f32 %v1597, %v1639
    %v1641 = vpop.f32.mrb[0].mxu0
    %v1642 = vadd.f32 %v1599, %v1641
    %1643 = vdwg.mxu0
    %1644 = vmatprep.subr.bf16.mxu0 %v1260
    %1645 = vmatpush1.bf16.msra.mxu0 %v1259
    %1646 = vmatprep.subr.bf16.mxu0 %v1264
    %1647 = vmatpush1.bf16.msra.mxu0 %v1263
    %1648 = vmatprep.subr.bf16.mxu0 %v1268
    %1649 = vmatpush1.bf16.msra.mxu0 %v1267
    %1650 = vmatprep.subr.bf16.mxu0 %v1272
    %1651 = vmatpush1.bf16.msra.mxu0 %v1271
    %1652 = vmatprep.subr.bf16.mxu0 %v1276
    %1653 = vmatpush1.bf16.msra.mxu0 %v1275
    %1654 = vmatprep.subr.bf16.mxu0 %v1280
    %1655 = vmatpush1.bf16.msra.mxu0 %v1279
    %1656 = vmatprep.subr.bf16.mxu0 %v1284
    %1657 = vmatpush1.bf16.msra.mxu0 %v1283
    %1658 = vmatprep.subr.bf16.mxu0 %v1288
    %1659 = vmatpush1.bf16.msra.mxu0 %v1287
    %1660 = vmatprep.subr.bf16.mxu0 0
    %1661 = vmatpush1.bf16.msra.mxu0 0
    %1662 = vmatprep.subr.bf16.mxu0 0
    %1663 = vmatpush1.bf16.msra.mxu0 0
    %1664 = vmatprep.subr.bf16.mxu0 0
    %1665 = vmatpush1.bf16.msra.mxu0 0
    %1666 = vmatprep.subr.bf16.mxu0 0
    %1667 = vmatpush1.bf16.msra.mxu0 0
    %1668 = vmatprep.subr.bf16.mxu0 0
    %1669 = vmatpush1.bf16.msra.mxu0 0
    %1670 = vmatprep.subr.bf16.mxu0 0
    %1671 = vmatpush1.bf16.msra.mxu0 0
    %1672 = vmatprep.subr.bf16.mxu0 0
    %1673 = vmatpush1.bf16.msra.mxu0 0
    %1674 = vmatprep.subr.bf16.mxu0 0
    %1675 = vmatpush1.bf16.msra.mxu0 0
    %1676 = vmatprep.mubr.bf16.mxu0 0
    %1677 = vmatmul.mubr.bf16.gmra.mrb[0].mxu0 %v387
    %v1678 = vpop.f32.mrb[0].mxu0
    %v1679 = vadd.f32 %v1636, %v1678
    %v1680 = vpop.f32.mrb[0].mxu0
    %v1681 = vadd.f32 %v1638, %v1680
    %v1682 = vpop.f32.mrb[0].mxu0
    %v1683 = vadd.f32 %v1640, %v1682
    %v1684 = vpop.f32.mrb[0].mxu0
    %v1685 = vadd.f32 %v1642, %v1684
    %1686 = vdwg.mxu0
    %1687 = vmatprep.subr.bf16.mxu0 %v1070
    %1688 = vmatpush1.bf16.msra.mxu0 %v1069
    %1689 = vmatprep.subr.bf16.mxu0 %v1074
    %1690 = vmatpush1.bf16.msra.mxu0 %v1073
    %1691 = vmatprep.subr.bf16.mxu0 %v1078
    %1692 = vmatpush1.bf16.msra.mxu0 %v1077
    %1693 = vmatprep.subr.bf16.mxu0 %v1082
    %1694 = vmatpush1.bf16.msra.mxu0 %v1081
    %1695 = vmatprep.subr.bf16.mxu0 %v1086
    %1696 = vmatpush1.bf16.msra.mxu0 %v1085
    %1697 = vmatprep.subr.bf16.mxu0 %v1090
    %1698 = vmatpush1.bf16.msra.mxu0 %v1089
    %1699 = vmatprep.subr.bf16.mxu0 %v1094
    %1700 = vmatpush1.bf16.msra.mxu0 %v1093
    %1701 = vmatprep.subr.bf16.mxu0 %v1098
    %1702 = vmatpush1.bf16.msra.mxu0 %v1097
    %1703 = vmatprep.subr.bf16.mxu0 %v1102
    %1704 = vmatpush1.bf16.msra.mxu0 %v1101
    %1705 = vmatprep.subr.bf16.mxu0 %v1106
    %1706 = vmatpush1.bf16.msra.mxu0 %v1105
    %1707 = vmatprep.subr.bf16.mxu0 %v1110
    %1708 = vmatpush1.bf16.msra.mxu0 %v1109
    %1709 = vmatprep.subr.bf16.mxu0 %v1114
    %1710 = vmatpush1.bf16.msra.mxu0 %v1113
    %1711 = vmatprep.subr.bf16.mxu0 %v1118
    %1712 = vmatpush1.bf16.msra.mxu0 %v1117
    %1713 = vmatprep.subr.bf16.mxu0 %v1122
    %1714 = vmatpush1.bf16.msra.mxu0 %v1121
    %1715 = vmatprep.subr.bf16.mxu0 %v1126
    %1716 = vmatpush1.bf16.msra.mxu0 %v1125
    %1717 = vmatprep.subr.bf16.mxu0 %v1130
    %1718 = vmatpush1.bf16.msra.mxu0 %v1129
    %1719 = vmatprep.mubr.bf16.mxu0 %v382
    %1720 = vmatmul.mubr.bf16.gmra.mrb[0].mxu0 %v381
    %v1721 = vpop.f32.mrb[0].mxu0
    %v1722 = vadd.f32 %v350, %v1721
    %v1723 = vpop.f32.mrb[0].mxu0
    %v1724 = vadd.f32 %v354, %v1723
    %v1725 = vpop.f32.mrb[0].mxu0
    %v1726 = vadd.f32 %v350, %v1725
    %v1727 = vpop.f32.mrb[0].mxu0
    %v1728 = vadd.f32 %v354, %v1727
    %1729 = vdwg.mxu0
    %1730 = vmatprep.subr.bf16.mxu0 %v1134
    %1731 = vmatpush1.bf16.msra.mxu0 %v1133
    %1732 = vmatprep.subr.bf16.mxu0 %v1138
    %1733 = vmatpush1.bf16.msra.mxu0 %v1137
    %1734 = vmatprep.subr.bf16.mxu0 %v1142
    %1735 = vmatpush1.bf16.msra.mxu0 %v1141
    %1736 = vmatprep.subr.bf16.mxu0 %v1146
    %1737 = vmatpush1.bf16.msra.mxu0 %v1145
    %1738 = vmatprep.subr.bf16.mxu0 %v1150
    %1739 = vmatpush1.bf16.msra.mxu0 %v1149
    %1740 = vmatprep.subr.bf16.mxu0 %v1154
    %1741 = vmatpush1.bf16.msra.mxu0 %v1153
    %1742 = vmatprep.subr.bf16.mxu0 %v1158
    %1743 = vmatpush1.bf16.msra.mxu0 %v1157
    %1744 = vmatprep.subr.bf16.mxu0 %v1162
    %1745 = vmatpush1.bf16.msra.mxu0 %v1161
    %1746 = vmatprep.subr.bf16.mxu0 %v1166
    %1747 = vmatpush1.bf16.msra.mxu0 %v1165
    %1748 = vmatprep.subr.bf16.mxu0 %v1170
    %1749 = vmatpush1.bf16.msra.mxu0 %v1169
    %1750 = vmatprep.subr.bf16.mxu0 %v1174
    %1751 = vmatpush1.bf16.msra.mxu0 %v1173
    %1752 = vmatprep.subr.bf16.mxu0 %v1178
    %1753 = vmatpush1.bf16.msra.mxu0 %v1177
    %1754 = vmatprep.subr.bf16.mxu0 %v1182
    %1755 = vmatpush1.bf16.msra.mxu0 %v1181
    %1756 = vmatprep.subr.bf16.mxu0 %v1186
    %1757 = vmatpush1.bf16.msra.mxu0 %v1185
    %1758 = vmatprep.subr.bf16.mxu0 %v1190
    %1759 = vmatpush1.bf16.msra.mxu0 %v1189
    %1760 = vmatprep.subr.bf16.mxu0 %v1194
    %1761 = vmatpush1.bf16.msra.mxu0 %v1193
    %1762 = vmatprep.mubr.bf16.mxu0 %v384
    %1763 = vmatmul.mubr.bf16.gmra.mrb[0].mxu0 %v383
    %v1764 = vpop.f32.mrb[0].mxu0
    %v1765 = vadd.f32 %v1722, %v1764
    %v1766 = vpop.f32.mrb[0].mxu0
    %v1767 = vadd.f32 %v1724, %v1766
    %v1768 = vpop.f32.mrb[0].mxu0
    %v1769 = vadd.f32 %v1726, %v1768
    %v1770 = vpop.f32.mrb[0].mxu0
    %v1771 = vadd.f32 %v1728, %v1770
    %1772 = vdwg.mxu0
    %1773 = vmatprep.subr.bf16.mxu0 %v1198
    %1774 = vmatpush1.bf16.msra.mxu0 %v1197
    %1775 = vmatprep.subr.bf16.mxu0 %v1202
    %1776 = vmatpush1.bf16.msra.mxu0 %v1201
    %1777 = vmatprep.subr.bf16.mxu0 %v1206
    %1778 = vmatpush1.bf16.msra.mxu0 %v1205
    %1779 = vmatprep.subr.bf16.mxu0 %v1210
    %1780 = vmatpush1.bf16.msra.mxu0 %v1209
    %1781 = vmatprep.subr.bf16.mxu0 %v1214
    %1782 = vmatpush1.bf16.msra.mxu0 %v1213
    %1783 = vmatprep.subr.bf16.mxu0 %v1218
    %1784 = vmatpush1.bf16.msra.mxu0 %v1217
    %1785 = vmatprep.subr.bf16.mxu0 %v1222
    %1786 = vmatpush1.bf16.msra.mxu0 %v1221
    %1787 = vmatprep.subr.bf16.mxu0 %v1226
    %1788 = vmatpush1.bf16.msra.mxu0 %v1225
    %1789 = vmatprep.subr.bf16.mxu0 %v1230
    %1790 = vmatpush1.bf16.msra.mxu0 %v1229
    %1791 = vmatprep.subr.bf16.mxu0 %v1234
    %1792 = vmatpush1.bf16.msra.mxu0 %v1233
    %1793 = vmatprep.subr.bf16.mxu0 %v1238
    %1794 = vmatpush1.bf16.msra.mxu0 %v1237
    %1795 = vmatprep.subr.bf16.mxu0 %v1242
    %1796 = vmatpush1.bf16.msra.mxu0 %v1241
    %1797 = vmatprep.subr.bf16.mxu0 %v1246
    %1798 = vmatpush1.bf16.msra.mxu0 %v1245
    %1799 = vmatprep.subr.bf16.mxu0 %v1250
    %1800 = vmatpush1.bf16.msra.mxu0 %v1249
    %1801 = vmatprep.subr.bf16.mxu0 %v1254
    %1802 = vmatpush1.bf16.msra.mxu0 %v1253
    %1803 = vmatprep.subr.bf16.mxu0 %v1258
    %1804 = vmatpush1.bf16.msra.mxu0 %v1257
    %1805 = vmatprep.mubr.bf16.mxu0 %v386
    %1806 = vmatmul.mubr.bf16.gmra.mrb[0].mxu0 %v385
    %v1807 = vpop.f32.mrb[0].mxu0
    %v1808 = vadd.f32 %v1765, %v1807
    %v1809 = vpop.f32.mrb[0].mxu0
    %v1810 = vadd.f32 %v1767, %v1809
    %v1811 = vpop.f32.mrb[0].mxu0
    %v1812 = vadd.f32 %v1769, %v1811
    %v1813 = vpop.f32.mrb[0].mxu0
    %v1814 = vadd.f32 %v1771, %v1813
    %1815 = vdwg.mxu0
    %1816 = vmatprep.subr.bf16.mxu0 %v1262
    %1817 = vmatpush1.bf16.msra.mxu0 %v1261
    %1818 = vmatprep.subr.bf16.mxu0 %v1266
    %1819 = vmatpush1.bf16.msra.mxu0 %v1265
    %1820 = vmatprep.subr.bf16.mxu0 %v1270
    %1821 = vmatpush1.bf16.msra.mxu0 %v1269
    %1822 = vmatprep.subr.bf16.mxu0 %v1274
    %1823 = vmatpush1.bf16.msra.mxu0 %v1273
    %1824 = vmatprep.subr.bf16.mxu0 %v1278
    %1825 = vmatpush1.bf16.msra.mxu0 %v1277
    %1826 = vmatprep.subr.bf16.mxu0 %v1282
    %1827 = vmatpush1.bf16.msra.mxu0 %v1281
    %1828 = vmatprep.subr.bf16.mxu0 %v1286
    %1829 = vmatpush1.bf16.msra.mxu0 %v1285
    %1830 = vmatprep.subr.bf16.mxu0 %v1290
    %1831 = vmatpush1.bf16.msra.mxu0 %v1289
    %1832 = vmatprep.subr.bf16.mxu0 0
    %1833 = vmatpush1.bf16.msra.mxu0 0
    %1834 = vmatprep.subr.bf16.mxu0 0
    %1835 = vmatpush1.bf16.msra.mxu0 0
    %1836 = vmatprep.subr.bf16.mxu0 0
    %1837 = vmatpush1.bf16.msra.mxu0 0
    %1838 = vmatprep.subr.bf16.mxu0 0
    %1839 = vmatpush1.bf16.msra.mxu0 0
    %1840 = vmatprep.subr.bf16.mxu0 0
    %1841 = vmatpush1.bf16.msra.mxu0 0
    %1842 = vmatprep.subr.bf16.mxu0 0
    %1843 = vmatpush1.bf16.msra.mxu0 0
    %1844 = vmatprep.subr.bf16.mxu0 0
    %1845 = vmatpush1.bf16.msra.mxu0 0
    %1846 = vmatprep.subr.bf16.mxu0 0
    %1847 = vmatpush1.bf16.msra.mxu0 0
    %1848 = vmatprep.mubr.bf16.mxu0 0
    %1849 = vmatmul.mubr.bf16.gmra.mrb[0].mxu0 %v387
    %v1850 = vpop.f32.mrb[0].mxu0
    %v1851 = vadd.f32 %v1808, %v1850
    %v1852 = vpop.f32.mrb[0].mxu0
    %v1853 = vadd.f32 %v1810, %v1852
    %v1854 = vpop.f32.mrb[0].mxu0
    %v1855 = vadd.f32 %v1812, %v1854
    %v1856 = vpop.f32.mrb[0].mxu0
    %v1857 = vadd.f32 %v1814, %v1856
    %1858 = vdwg.mxu0
    %v1859 = vmax.f32 %v1679, 0.0
    %v1860 = vmax.f32 %v1681, 0.0
    %v1861 = vmax.f32 %v1851, 0.0
    %v1862 = vmax.f32 %v1853, 0.0
    %v1863 = vmax.f32 %v1683, 0.0
    %v1864 = vmax.f32 %v1685, 0.0
    %v1865 = vmax.f32 %v1855, 0.0
    %v1866 = vmax.f32 %v1857, 0.0
    %v1867 = vpack.c.bf16 %v1863, %v1859
    %v1868 = vpack.c.bf16 %v1864, %v1860
    %v1869 = vpack.c.bf16 %v1865, %v1861
    %v1870 = vpack.c.bf16 %v1866, %v1862
    %v1871 = vld [vmem:[#allocation7] sm:$0xff]
    %v1872 = vld [vmem:[#allocation7 + $0x8] sm:$0xff]
    %v1873 = vld [vmem:[#allocation7 + $0x10] sm:$0xff]
    %v1874 = vld [vmem:[#allocation7 + $0x18] sm:$0xff]
    %v1875 = vld [vmem:[#allocation7 + $0x20] sm:$0xff]
    %v1876 = vld [vmem:[#allocation7 + $0x28] sm:$0xff]
    %v1877 = vld [vmem:[#allocation7 + $0x30] sm:$0xff]
    %v1878 = vld [vmem:[#allocation7 + $0x38] sm:$0xff]
    %v1879 = vld [vmem:[#allocation7 + $0x40] sm:$0xff]
    %v1880 = vld [vmem:[#allocation7 + $0x48] sm:$0xff]
    %v1881 = vld [vmem:[#allocation7 + $0x50] sm:$0xff]
    %v1882 = vld [vmem:[#allocation7 + $0x58] sm:$0xff]
    %v1883 = vld [vmem:[#allocation7 + $0x60] sm:$0xff]
    %v1884 = vld [vmem:[#allocation7 + $0x68] sm:$0xff]
    %v1885 = vld [vmem:[#allocation7 + $0x70] sm:$0xff]
    %v1886 = vld [vmem:[#allocation7 + $0x78] sm:$0xff]
    %v1887 = vld [vmem:[#allocation7 + $0x80] sm:$0xff]
    %v1888 = vld [vmem:[#allocation7 + $0x88] sm:$0xff]
    %v1889 = vld [vmem:[#allocation7 + $0x90] sm:$0xff]
    %v1890 = vld [vmem:[#allocation7 + $0x98] sm:$0xff]
    %v1891 = vld [vmem:[#allocation7 + $0xa0] sm:$0xff]
    %v1892 = vld [vmem:[#allocation7 + $0xa8] sm:$0xff]
    %v1893 = vld [vmem:[#allocation7 + $0xb0] sm:$0xff]
    %v1894 = vld [vmem:[#allocation7 + $0xb8] sm:$0xff]
    %v1895 = vld [vmem:[#allocation7 + $0xc0] sm:$0xff]
    %v1896 = vld [vmem:[#allocation7 + $0xc8] sm:$0xff]
    %v1897 = vld [vmem:[#allocation7 + $0xd0] sm:$0xff]
    %v1898 = vld [vmem:[#allocation7 + $0xd8] sm:$0xff]
    %v1899 = vld [vmem:[#allocation7 + $0xe0] sm:$0xff]
    %v1900 = vld [vmem:[#allocation7 + $0xe8] sm:$0xff]
    %v1901 = vld [vmem:[#allocation7 + $0xf0] sm:$0xff]
    %v1902 = vld [vmem:[#allocation7 + $0xf8] sm:$0xff]
    %v1903 = vld [vmem:[#allocation7 + $0x100] sm:$0xff]
    %v1904 = vld [vmem:[#allocation7 + $0x108] sm:$0xff]
    %v1905 = vld [vmem:[#allocation7 + $0x110] sm:$0xff]
    %v1906 = vld [vmem:[#allocation7 + $0x118] sm:$0xff]
    %v1907 = vld [vmem:[#allocation7 + $0x120] sm:$0xff]
    %v1908 = vld [vmem:[#allocation7 + $0x128] sm:$0xff]
    %v1909 = vld [vmem:[#allocation7 + $0x130] sm:$0xff]
    %v1910 = vld [vmem:[#allocation7 + $0x138] sm:$0xff]
    %v1911 = vld [vmem:[#allocation7 + $0x140] sm:$0xff]
    %v1912 = vld [vmem:[#allocation7 + $0x148] sm:$0xff]
    %v1913 = vld [vmem:[#allocation7 + $0x150] sm:$0xff]
    %v1914 = vld [vmem:[#allocation7 + $0x158] sm:$0xff]
    %v1915 = vld [vmem:[#allocation7 + $0x160] sm:$0xff]
    %v1916 = vld [vmem:[#allocation7 + $0x168] sm:$0xff]
    %v1917 = vld [vmem:[#allocation7 + $0x170] sm:$0xff]
    %v1918 = vld [vmem:[#allocation7 + $0x178] sm:$0xff]
    %v1919 = vld [vmem:[#allocation7 + $0x180] sm:$0xff]
    %v1920 = vld [vmem:[#allocation7 + $0x188] sm:$0xff]
    %v1921 = vld [vmem:[#allocation7 + $0x190] sm:$0xff]
    %v1922 = vld [vmem:[#allocation7 + $0x198] sm:$0xff]
    %v1923 = vld [vmem:[#allocation7 + $0x1a0] sm:$0xff]
    %v1924 = vld [vmem:[#allocation7 + $0x1a8] sm:$0xff]
    %v1925 = vld [vmem:[#allocation7 + $0x1b0] sm:$0xff]
    %v1926 = vld [vmem:[#allocation7 + $0x1b8] sm:$0xff]
    %v1927 = vld [vmem:[#allocation7 + $0x1c0] sm:$0xff]
    %v1928 = vld [vmem:[#allocation7 + $0x1c8] sm:$0xff]
    %v1929 = vld [vmem:[#allocation7 + $0x1d0] sm:$0xff]
    %v1930 = vld [vmem:[#allocation7 + $0x1d8] sm:$0xff]
    %v1931 = vld [vmem:[#allocation7 + $0x1e0] sm:$0xff]
    %v1932 = vld [vmem:[#allocation7 + $0x1e8] sm:$0xff]
    %v1933 = vld [vmem:[#allocation7 + $0x1f0] sm:$0xff]
    %v1934 = vld [vmem:[#allocation7 + $0x1f8] sm:$0xff]
    %v1935 = vld [vmem:[#allocation7 + $0x200] sm:$0xff]
    %v1936 = vld [vmem:[#allocation7 + $0x208] sm:$0xff]
    %v1937 = vld [vmem:[#allocation7 + $0x210] sm:$0xff]
    %v1938 = vld [vmem:[#allocation7 + $0x218] sm:$0xff]
    %v1939 = vld [vmem:[#allocation7 + $0x220] sm:$0xff]
    %v1940 = vld [vmem:[#allocation7 + $0x228] sm:$0xff]
    %v1941 = vld [vmem:[#allocation7 + $0x230] sm:$0xff]
    %v1942 = vld [vmem:[#allocation7 + $0x238] sm:$0xff]
    %v1943 = vld [vmem:[#allocation7 + $0x240] sm:$0xff]
    %v1944 = vld [vmem:[#allocation7 + $0x248] sm:$0xff]
    %v1945 = vld [vmem:[#allocation7 + $0x250] sm:$0xff]
    %v1946 = vld [vmem:[#allocation7 + $0x258] sm:$0xff]
    %v1947 = vld [vmem:[#allocation7 + $0x260] sm:$0xff]
    %v1948 = vld [vmem:[#allocation7 + $0x268] sm:$0xff]
    %v1949 = vld [vmem:[#allocation7 + $0x270] sm:$0xff]
    %v1950 = vld [vmem:[#allocation7 + $0x278] sm:$0xff]
    %v1951 = vld [vmem:[#allocation7 + $0x280] sm:$0xff]
    %v1952 = vld [vmem:[#allocation7 + $0x288] sm:$0xff]
    %v1953 = vld [vmem:[#allocation7 + $0x290] sm:$0xff]
    %v1954 = vld [vmem:[#allocation7 + $0x298] sm:$0xff]
    %v1955 = vld [vmem:[#allocation7 + $0x2a0] sm:$0xff]
    %v1956 = vld [vmem:[#allocation7 + $0x2a8] sm:$0xff]
    %v1957 = vld [vmem:[#allocation7 + $0x2b0] sm:$0xff]
    %v1958 = vld [vmem:[#allocation7 + $0x2b8] sm:$0xff]
    %v1959 = vld [vmem:[#allocation7 + $0x2c0] sm:$0xff]
    %v1960 = vld [vmem:[#allocation7 + $0x2c8] sm:$0xff]
    %v1961 = vld [vmem:[#allocation7 + $0x2d0] sm:$0xff]
    %v1962 = vld [vmem:[#allocation7 + $0x2d8] sm:$0xff]
    %v1963 = vld [vmem:[#allocation7 + $0x2e0] sm:$0xff]
    %v1964 = vld [vmem:[#allocation7 + $0x2e8] sm:$0xff]
    %v1965 = vld [vmem:[#allocation7 + $0x2f0] sm:$0xff]
    %v1966 = vld [vmem:[#allocation7 + $0x2f8] sm:$0xff]
    %v1967 = vld [vmem:[#allocation7 + $0x300] sm:$0xff]
    %v1968 = vld [vmem:[#allocation7 + $0x308] sm:$0xff]
    %v1969 = vld [vmem:[#allocation7 + $0x310] sm:$0xff]
    %v1970 = vld [vmem:[#allocation7 + $0x318] sm:$0xff]
    %v1971 = vld [vmem:[#allocation7 + $0x320] sm:$0xff]
    %v1972 = vld [vmem:[#allocation7 + $0x328] sm:$0xff]
    %v1973 = vld [vmem:[#allocation7 + $0x330] sm:$0xff]
    %v1974 = vld [vmem:[#allocation7 + $0x338] sm:$0xff]
    %v1975 = vld [vmem:[#allocation7 + $0x340] sm:$0xff]
    %v1976 = vld [vmem:[#allocation7 + $0x348] sm:$0xff]
    %v1977 = vld [vmem:[#allocation7 + $0x350] sm:$0xff]
    %v1978 = vld [vmem:[#allocation7 + $0x358] sm:$0xff]
    %v1979 = vld [vmem:[#allocation7 + $0x360] sm:$0xff]
    %v1980 = vld [vmem:[#allocation7 + $0x368] sm:$0xff]
    %v1981 = vld [vmem:[#allocation7 + $0x370] sm:$0xff]
    %v1982 = vld [vmem:[#allocation7 + $0x378] sm:$0xff]
    %v1983 = vld [vmem:[#allocation7 + $0x380] sm:$0xff]
    %v1984 = vld [vmem:[#allocation7 + $0x388] sm:$0xff]
    %v1985 = vld [vmem:[#allocation7 + $0x390] sm:$0xff]
    %v1986 = vld [vmem:[#allocation7 + $0x398] sm:$0xff]
    %v1987 = vld [vmem:[#allocation7 + $0x3a0] sm:$0xff]
    %v1988 = vld [vmem:[#allocation7 + $0x3a8] sm:$0xff]
    %v1989 = vld [vmem:[#allocation7 + $0x3b0] sm:$0xff]
    %v1990 = vld [vmem:[#allocation7 + $0x3b8] sm:$0xff]
    %v1991 = vld [vmem:[#allocation7 + $0x3c0] sm:$0xff]
    %v1992 = vld [vmem:[#allocation7 + $0x3c8] sm:$0xff]
    %v1993 = vld [vmem:[#allocation7 + $0x3d0] sm:$0xff]
    %v1994 = vld [vmem:[#allocation7 + $0x3d8] sm:$0xff]
    %v1995 = vld [vmem:[#allocation7 + $0x3e0] sm:$0xff]
    %v1996 = vld [vmem:[#allocation7 + $0x3e8] sm:$0xff]
    %v1997 = vld [vmem:[#allocation7 + $0x3f0] sm:$0xff]
    %v1998 = vld [vmem:[#allocation7 + $0x3f8] sm:$0xff]
    %v2000 = vlaneseq
    %v2001 = vshrl.u32 %v2000, 7
    %v2002 = vsub.s32 0, %v2001
    %v2003 = vrot.slane %v111, %v2002
    %v2004 = vlaneseq
    %v2005 = vshrl.u32 %v2004, 7
    %v2006 = vsub.s32 1, %v2005
    %v2007 = vrot.slane %v111, %v2006
    %v2008 = vlaneseq
    %v2009 = vshrl.u32 %v2008, 7
    %v2010 = vsub.s32 2, %v2009
    %v2011 = vrot.slane %v111, %v2010
    %v2012 = vlaneseq
    %v2013 = vshrl.u32 %v2012, 7
    %v2014 = vsub.s32 3, %v2013
    %v2015 = vrot.slane %v111, %v2014
    %v2148 = vunpack.c.l.b16 %v1871
    %v2149 = vunpack.c.h.b16 %v1871
    %v2150 = vunpack.c.l.b16 %v1872
    %v2151 = vunpack.c.h.b16 %v1872
    %v2152 = vunpack.c.l.b16 %v1873
    %v2153 = vunpack.c.h.b16 %v1873
    %v2154 = vunpack.c.l.b16 %v1874
    %v2155 = vunpack.c.h.b16 %v1874
    %v2156 = vunpack.c.l.b16 %v1875
    %v2157 = vunpack.c.h.b16 %v1875
    %v2158 = vunpack.c.l.b16 %v1876
    %v2159 = vunpack.c.h.b16 %v1876
    %v2160 = vunpack.c.l.b16 %v1877
    %v2161 = vunpack.c.h.b16 %v1877
    %v2162 = vunpack.c.l.b16 %v1878
    %v2163 = vunpack.c.h.b16 %v1878
    %v2164 = vunpack.c.l.b16 %v1879
    %v2165 = vunpack.c.h.b16 %v1879
    %v2166 = vunpack.c.l.b16 %v1880
    %v2167 = vunpack.c.h.b16 %v1880
    %v2168 = vunpack.c.l.b16 %v1881
    %v2169 = vunpack.c.h.b16 %v1881
    %v2170 = vunpack.c.l.b16 %v1882
    %v2171 = vunpack.c.h.b16 %v1882
    %v2172 = vunpack.c.l.b16 %v1883
    %v2173 = vunpack.c.h.b16 %v1883
    %v2174 = vunpack.c.l.b16 %v1884
    %v2175 = vunpack.c.h.b16 %v1884
    %v2176 = vunpack.c.l.b16 %v1885
    %v2177 = vunpack.c.h.b16 %v1885
    %v2178 = vunpack.c.l.b16 %v1886
    %v2179 = vunpack.c.h.b16 %v1886
    %v2180 = vunpack.c.l.b16 %v1887
    %v2181 = vunpack.c.h.b16 %v1887
    %v2182 = vunpack.c.l.b16 %v1888
    %v2183 = vunpack.c.h.b16 %v1888
    %v2184 = vunpack.c.l.b16 %v1889
    %v2185 = vunpack.c.h.b16 %v1889
    %v2186 = vunpack.c.l.b16 %v1890
    %v2187 = vunpack.c.h.b16 %v1890
    %v2188 = vunpack.c.l.b16 %v1891
    %v2189 = vunpack.c.h.b16 %v1891
    %v2190 = vunpack.c.l.b16 %v1892
    %v2191 = vunpack.c.h.b16 %v1892
    %v2192 = vunpack.c.l.b16 %v1893
    %v2193 = vunpack.c.h.b16 %v1893
    %v2194 = vunpack.c.l.b16 %v1894
    %v2195 = vunpack.c.h.b16 %v1894
    %v2196 = vunpack.c.l.b16 %v1895
    %v2197 = vunpack.c.h.b16 %v1895
    %v2198 = vunpack.c.l.b16 %v1896
    %v2199 = vunpack.c.h.b16 %v1896
    %v2200 = vunpack.c.l.b16 %v1897
    %v2201 = vunpack.c.h.b16 %v1897
    %v2202 = vunpack.c.l.b16 %v1898
    %v2203 = vunpack.c.h.b16 %v1898
    %v2204 = vunpack.c.l.b16 %v1899
    %v2205 = vunpack.c.h.b16 %v1899
    %v2206 = vunpack.c.l.b16 %v1900
    %v2207 = vunpack.c.h.b16 %v1900
    %v2208 = vunpack.c.l.b16 %v1901
    %v2209 = vunpack.c.h.b16 %v1901
    %v2210 = vunpack.c.l.b16 %v1902
    %v2211 = vunpack.c.h.b16 %v1902
    %v2212 = vunpack.c.l.b16 %v1903
    %v2213 = vunpack.c.h.b16 %v1903
    %v2214 = vunpack.c.l.b16 %v1904
    %v2215 = vunpack.c.h.b16 %v1904
    %v2216 = vunpack.c.l.b16 %v1905
    %v2217 = vunpack.c.h.b16 %v1905
    %v2218 = vunpack.c.l.b16 %v1906
    %v2219 = vunpack.c.h.b16 %v1906
    %v2220 = vunpack.c.l.b16 %v1907
    %v2221 = vunpack.c.h.b16 %v1907
    %v2222 = vunpack.c.l.b16 %v1908
    %v2223 = vunpack.c.h.b16 %v1908
    %v2224 = vunpack.c.l.b16 %v1909
    %v2225 = vunpack.c.h.b16 %v1909
    %v2226 = vunpack.c.l.b16 %v1910
    %v2227 = vunpack.c.h.b16 %v1910
    %v2228 = vunpack.c.l.b16 %v1911
    %v2229 = vunpack.c.h.b16 %v1911
    %v2230 = vunpack.c.l.b16 %v1912
    %v2231 = vunpack.c.h.b16 %v1912
    %v2232 = vunpack.c.l.b16 %v1913
    %v2233 = vunpack.c.h.b16 %v1913
    %v2234 = vunpack.c.l.b16 %v1914
    %v2235 = vunpack.c.h.b16 %v1914
    %v2236 = vunpack.c.l.b16 %v1915
    %v2237 = vunpack.c.h.b16 %v1915
    %v2238 = vunpack.c.l.b16 %v1916
    %v2239 = vunpack.c.h.b16 %v1916
    %v2240 = vunpack.c.l.b16 %v1917
    %v2241 = vunpack.c.h.b16 %v1917
    %v2242 = vunpack.c.l.b16 %v1918
    %v2243 = vunpack.c.h.b16 %v1918
    %v2244 = vunpack.c.l.b16 %v1919
    %v2245 = vunpack.c.h.b16 %v1919
    %v2246 = vunpack.c.l.b16 %v1920
    %v2247 = vunpack.c.h.b16 %v1920
    %v2248 = vunpack.c.l.b16 %v1921
    %v2249 = vunpack.c.h.b16 %v1921
    %v2250 = vunpack.c.l.b16 %v1922
    %v2251 = vunpack.c.h.b16 %v1922
    %v2252 = vunpack.c.l.b16 %v1923
    %v2253 = vunpack.c.h.b16 %v1923
    %v2254 = vunpack.c.l.b16 %v1924
    %v2255 = vunpack.c.h.b16 %v1924
    %v2256 = vunpack.c.l.b16 %v1925
    %v2257 = vunpack.c.h.b16 %v1925
    %v2258 = vunpack.c.l.b16 %v1926
    %v2259 = vunpack.c.h.b16 %v1926
    %v2260 = vunpack.c.l.b16 %v1927
    %v2261 = vunpack.c.h.b16 %v1927
    %v2262 = vunpack.c.l.b16 %v1928
    %v2263 = vunpack.c.h.b16 %v1928
    %v2264 = vunpack.c.l.b16 %v1929
    %v2265 = vunpack.c.h.b16 %v1929
    %v2266 = vunpack.c.l.b16 %v1930
    %v2267 = vunpack.c.h.b16 %v1930
    %v2268 = vunpack.c.l.b16 %v1931
    %v2269 = vunpack.c.h.b16 %v1931
    %v2270 = vunpack.c.l.b16 %v1932
    %v2271 = vunpack.c.h.b16 %v1932
    %v2272 = vunpack.c.l.b16 %v1933
    %v2273 = vunpack.c.h.b16 %v1933
    %v2274 = vunpack.c.l.b16 %v1934
    %v2275 = vunpack.c.h.b16 %v1934
    %v2276 = vunpack.c.l.b16 %v1935
    %v2277 = vunpack.c.h.b16 %v1935
    %v2278 = vunpack.c.l.b16 %v1936
    %v2279 = vunpack.c.h.b16 %v1936
    %v2280 = vunpack.c.l.b16 %v1937
    %v2281 = vunpack.c.h.b16 %v1937
    %v2282 = vunpack.c.l.b16 %v1938
    %v2283 = vunpack.c.h.b16 %v1938
    %v2284 = vunpack.c.l.b16 %v1939
    %v2285 = vunpack.c.h.b16 %v1939
    %v2286 = vunpack.c.l.b16 %v1940
    %v2287 = vunpack.c.h.b16 %v1940
    %v2288 = vunpack.c.l.b16 %v1941
    %v2289 = vunpack.c.h.b16 %v1941
    %v2290 = vunpack.c.l.b16 %v1942
    %v2291 = vunpack.c.h.b16 %v1942
    %v2292 = vunpack.c.l.b16 %v1943
    %v2293 = vunpack.c.h.b16 %v1943
    %v2294 = vunpack.c.l.b16 %v1944
    %v2295 = vunpack.c.h.b16 %v1944
    %v2296 = vunpack.c.l.b16 %v1945
    %v2297 = vunpack.c.h.b16 %v1945
    %v2298 = vunpack.c.l.b16 %v1946
    %v2299 = vunpack.c.h.b16 %v1946
    %v2300 = vunpack.c.l.b16 %v1947
    %v2301 = vunpack.c.h.b16 %v1947
    %v2302 = vunpack.c.l.b16 %v1948
    %v2303 = vunpack.c.h.b16 %v1948
    %v2304 = vunpack.c.l.b16 %v1949
    %v2305 = vunpack.c.h.b16 %v1949
    %v2306 = vunpack.c.l.b16 %v1950
    %v2307 = vunpack.c.h.b16 %v1950
    %v2308 = vunpack.c.l.b16 %v1951
    %v2309 = vunpack.c.h.b16 %v1951
    %v2310 = vunpack.c.l.b16 %v1952
    %v2311 = vunpack.c.h.b16 %v1952
    %v2312 = vunpack.c.l.b16 %v1953
    %v2313 = vunpack.c.h.b16 %v1953
    %v2314 = vunpack.c.l.b16 %v1954
    %v2315 = vunpack.c.h.b16 %v1954
    %v2316 = vunpack.c.l.b16 %v1955
    %v2317 = vunpack.c.h.b16 %v1955
    %v2318 = vunpack.c.l.b16 %v1956
    %v2319 = vunpack.c.h.b16 %v1956
    %v2320 = vunpack.c.l.b16 %v1957
    %v2321 = vunpack.c.h.b16 %v1957
    %v2322 = vunpack.c.l.b16 %v1958
    %v2323 = vunpack.c.h.b16 %v1958
    %v2324 = vunpack.c.l.b16 %v1959
    %v2325 = vunpack.c.h.b16 %v1959
    %v2326 = vunpack.c.l.b16 %v1960
    %v2327 = vunpack.c.h.b16 %v1960
    %v2328 = vunpack.c.l.b16 %v1961
    %v2329 = vunpack.c.h.b16 %v1961
    %v2330 = vunpack.c.l.b16 %v1962
    %v2331 = vunpack.c.h.b16 %v1962
    %v2332 = vunpack.c.l.b16 %v1963
    %v2333 = vunpack.c.h.b16 %v1963
    %v2334 = vunpack.c.l.b16 %v1964
    %v2335 = vunpack.c.h.b16 %v1964
    %v2336 = vunpack.c.l.b16 %v1965
    %v2337 = vunpack.c.h.b16 %v1965
    %v2338 = vunpack.c.l.b16 %v1966
    %v2339 = vunpack.c.h.b16 %v1966
    %v2340 = vunpack.c.l.b16 %v1967
    %v2341 = vunpack.c.h.b16 %v1967
    %v2342 = vunpack.c.l.b16 %v1968
    %v2343 = vunpack.c.h.b16 %v1968
    %v2344 = vunpack.c.l.b16 %v1969
    %v2345 = vunpack.c.h.b16 %v1969
    %v2346 = vunpack.c.l.b16 %v1970
    %v2347 = vunpack.c.h.b16 %v1970
    %v2348 = vunpack.c.l.b16 %v1971
    %v2349 = vunpack.c.h.b16 %v1971
    %v2350 = vunpack.c.l.b16 %v1972
    %v2351 = vunpack.c.h.b16 %v1972
    %v2352 = vunpack.c.l.b16 %v1973
    %v2353 = vunpack.c.h.b16 %v1973
    %v2354 = vunpack.c.l.b16 %v1974
    %v2355 = vunpack.c.h.b16 %v1974
    %v2356 = vunpack.c.l.b16 %v1975
    %v2357 = vunpack.c.h.b16 %v1975
    %v2358 = vunpack.c.l.b16 %v1976
    %v2359 = vunpack.c.h.b16 %v1976
    %v2360 = vunpack.c.l.b16 %v1977
    %v2361 = vunpack.c.h.b16 %v1977
    %v2362 = vunpack.c.l.b16 %v1978
    %v2363 = vunpack.c.h.b16 %v1978
    %v2364 = vunpack.c.l.b16 %v1979
    %v2365 = vunpack.c.h.b16 %v1979
    %v2366 = vunpack.c.l.b16 %v1980
    %v2367 = vunpack.c.h.b16 %v1980
    %v2368 = vunpack.c.l.b16 %v1981
    %v2369 = vunpack.c.h.b16 %v1981
    %v2370 = vunpack.c.l.b16 %v1982
    %v2371 = vunpack.c.h.b16 %v1982
    %v2372 = vunpack.c.l.b16 %v1983
    %v2373 = vunpack.c.h.b16 %v1983
    %v2374 = vunpack.c.l.b16 %v1984
    %v2375 = vunpack.c.h.b16 %v1984
    %v2376 = vunpack.c.l.b16 %v1985
    %v2377 = vunpack.c.h.b16 %v1985
    %v2378 = vunpack.c.l.b16 %v1986
    %v2379 = vunpack.c.h.b16 %v1986
    %v2380 = vunpack.c.l.b16 %v1987
    %v2381 = vunpack.c.h.b16 %v1987
    %v2382 = vunpack.c.l.b16 %v1988
    %v2383 = vunpack.c.h.b16 %v1988
    %v2384 = vunpack.c.l.b16 %v1989
    %v2385 = vunpack.c.h.b16 %v1989
    %v2386 = vunpack.c.l.b16 %v1990
    %v2387 = vunpack.c.h.b16 %v1990
    %v2388 = vunpack.c.l.b16 %v1991
    %v2389 = vunpack.c.h.b16 %v1991
    %v2390 = vunpack.c.l.b16 %v1992
    %v2391 = vunpack.c.h.b16 %v1992
    %v2392 = vunpack.c.l.b16 %v1993
    %v2393 = vunpack.c.h.b16 %v1993
    %v2394 = vunpack.c.l.b16 %v1994
    %v2395 = vunpack.c.h.b16 %v1994
    %v2396 = vunpack.c.l.b16 %v1995
    %v2397 = vunpack.c.h.b16 %v1995
    %v2398 = vunpack.c.l.b16 %v1996
    %v2399 = vunpack.c.h.b16 %v1996
    %v2400 = vunpack.c.l.b16 %v1997
    %v2401 = vunpack.c.h.b16 %v1997
    %v2402 = vunpack.c.l.b16 %v1998
    %v2403 = vunpack.c.h.b16 %v1998
    %v2404 = vpack.c.b16 %v2152, %v2148
    %v2405 = vpack.c.b16 %v2153, %v2149
    %v2406 = vpack.c.b16 %v2154, %v2150
    %v2407 = vpack.c.b16 %v2155, %v2151
    %v2408 = vpack.c.b16 %v2160, %v2156
    %v2409 = vpack.c.b16 %v2161, %v2157
    %v2410 = vpack.c.b16 %v2162, %v2158
    %v2411 = vpack.c.b16 %v2163, %v2159
    %v2412 = vpack.c.b16 %v2168, %v2164
    %v2413 = vpack.c.b16 %v2169, %v2165
    %v2414 = vpack.c.b16 %v2170, %v2166
    %v2415 = vpack.c.b16 %v2171, %v2167
    %v2416 = vpack.c.b16 %v2176, %v2172
    %v2417 = vpack.c.b16 %v2177, %v2173
    %v2418 = vpack.c.b16 %v2178, %v2174
    %v2419 = vpack.c.b16 %v2179, %v2175
    %v2420 = vpack.c.b16 %v2184, %v2180
    %v2421 = vpack.c.b16 %v2185, %v2181
    %v2422 = vpack.c.b16 %v2186, %v2182
    %v2423 = vpack.c.b16 %v2187, %v2183
    %v2424 = vpack.c.b16 %v2192, %v2188
    %v2425 = vpack.c.b16 %v2193, %v2189
    %v2426 = vpack.c.b16 %v2194, %v2190
    %v2427 = vpack.c.b16 %v2195, %v2191
    %v2428 = vpack.c.b16 %v2200, %v2196
    %v2429 = vpack.c.b16 %v2201, %v2197
    %v2430 = vpack.c.b16 %v2202, %v2198
    %v2431 = vpack.c.b16 %v2203, %v2199
    %v2432 = vpack.c.b16 %v2208, %v2204
    %v2433 = vpack.c.b16 %v2209, %v2205
    %v2434 = vpack.c.b16 %v2210, %v2206
    %v2435 = vpack.c.b16 %v2211, %v2207
    %v2436 = vpack.c.b16 %v2216, %v2212
    %v2437 = vpack.c.b16 %v2217, %v2213
    %v2438 = vpack.c.b16 %v2218, %v2214
    %v2439 = vpack.c.b16 %v2219, %v2215
    %v2440 = vpack.c.b16 %v2224, %v2220
    %v2441 = vpack.c.b16 %v2225, %v2221
    %v2442 = vpack.c.b16 %v2226, %v2222
    %v2443 = vpack.c.b16 %v2227, %v2223
    %v2444 = vpack.c.b16 %v2232, %v2228
    %v2445 = vpack.c.b16 %v2233, %v2229
    %v2446 = vpack.c.b16 %v2234, %v2230
    %v2447 = vpack.c.b16 %v2235, %v2231
    %v2448 = vpack.c.b16 %v2240, %v2236
    %v2449 = vpack.c.b16 %v2241, %v2237
    %v2450 = vpack.c.b16 %v2242, %v2238
    %v2451 = vpack.c.b16 %v2243, %v2239
    %v2452 = vpack.c.b16 %v2248, %v2244
    %v2453 = vpack.c.b16 %v2249, %v2245
    %v2454 = vpack.c.b16 %v2250, %v2246
    %v2455 = vpack.c.b16 %v2251, %v2247
    %v2456 = vpack.c.b16 %v2256, %v2252
    %v2457 = vpack.c.b16 %v2257, %v2253
    %v2458 = vpack.c.b16 %v2258, %v2254
    %v2459 = vpack.c.b16 %v2259, %v2255
    %v2460 = vpack.c.b16 %v2264, %v2260
    %v2461 = vpack.c.b16 %v2265, %v2261
    %v2462 = vpack.c.b16 %v2266, %v2262
    %v2463 = vpack.c.b16 %v2267, %v2263
    %v2464 = vpack.c.b16 %v2272, %v2268
    %v2465 = vpack.c.b16 %v2273, %v2269
    %v2466 = vpack.c.b16 %v2274, %v2270
    %v2467 = vpack.c.b16 %v2275, %v2271
    %v2468 = vpack.c.b16 %v2280, %v2276
    %v2469 = vpack.c.b16 %v2281, %v2277
    %v2470 = vpack.c.b16 %v2282, %v2278
    %v2471 = vpack.c.b16 %v2283, %v2279
    %v2472 = vpack.c.b16 %v2288, %v2284
    %v2473 = vpack.c.b16 %v2289, %v2285
    %v2474 = vpack.c.b16 %v2290, %v2286
    %v2475 = vpack.c.b16 %v2291, %v2287
    %v2476 = vpack.c.b16 %v2296, %v2292
    %v2477 = vpack.c.b16 %v2297, %v2293
    %v2478 = vpack.c.b16 %v2298, %v2294
    %v2479 = vpack.c.b16 %v2299, %v2295
    %v2480 = vpack.c.b16 %v2304, %v2300
    %v2481 = vpack.c.b16 %v2305, %v2301
    %v2482 = vpack.c.b16 %v2306, %v2302
    %v2483 = vpack.c.b16 %v2307, %v2303
    %v2484 = vpack.c.b16 %v2312, %v2308
    %v2485 = vpack.c.b16 %v2313, %v2309
    %v2486 = vpack.c.b16 %v2314, %v2310
    %v2487 = vpack.c.b16 %v2315, %v2311
    %v2488 = vpack.c.b16 %v2320, %v2316
    %v2489 = vpack.c.b16 %v2321, %v2317
    %v2490 = vpack.c.b16 %v2322, %v2318
    %v2491 = vpack.c.b16 %v2323, %v2319
    %v2492 = vpack.c.b16 %v2328, %v2324
    %v2493 = vpack.c.b16 %v2329, %v2325
    %v2494 = vpack.c.b16 %v2330, %v2326
    %v2495 = vpack.c.b16 %v2331, %v2327
    %v2496 = vpack.c.b16 %v2336, %v2332
    %v2497 = vpack.c.b16 %v2337, %v2333
    %v2498 = vpack.c.b16 %v2338, %v2334
    %v2499 = vpack.c.b16 %v2339, %v2335
    %v2500 = vpack.c.b16 %v2344, %v2340
    %v2501 = vpack.c.b16 %v2345, %v2341
    %v2502 = vpack.c.b16 %v2346, %v2342
    %v2503 = vpack.c.b16 %v2347, %v2343
    %v2504 = vpack.c.b16 %v2352, %v2348
    %v2505 = vpack.c.b16 %v2353, %v2349
    %v2506 = vpack.c.b16 %v2354, %v2350
    %v2507 = vpack.c.b16 %v2355, %v2351
    %v2508 = vpack.c.b16 %v2360, %v2356
    %v2509 = vpack.c.b16 %v2361, %v2357
    %v2510 = vpack.c.b16 %v2362, %v2358
    %v2511 = vpack.c.b16 %v2363, %v2359
    %v2512 = vpack.c.b16 %v2368, %v2364
    %v2513 = vpack.c.b16 %v2369, %v2365
    %v2514 = vpack.c.b16 %v2370, %v2366
    %v2515 = vpack.c.b16 %v2371, %v2367
    %v2516 = vpack.c.b16 %v2376, %v2372
    %v2517 = vpack.c.b16 %v2377, %v2373
    %v2518 = vpack.c.b16 %v2378, %v2374
    %v2519 = vpack.c.b16 %v2379, %v2375
    %v2520 = vpack.c.b16 %v2384, %v2380
    %v2521 = vpack.c.b16 %v2385, %v2381
    %v2522 = vpack.c.b16 %v2386, %v2382
    %v2523 = vpack.c.b16 %v2387, %v2383
    %v2524 = vpack.c.b16 %v2392, %v2388
    %v2525 = vpack.c.b16 %v2393, %v2389
    %v2526 = vpack.c.b16 %v2394, %v2390
    %v2527 = vpack.c.b16 %v2395, %v2391
    %v2528 = vpack.c.b16 %v2400, %v2396
    %v2529 = vpack.c.b16 %v2401, %v2397
    %v2530 = vpack.c.b16 %v2402, %v2398
    %v2531 = vpack.c.b16 %v2403, %v2399
    %2660 = vmatprep.subr.bf16.mxu0 %v2405
    %2661 = vmatpush1.bf16.msra.mxu0 %v2404
    %2662 = vmatprep.subr.bf16.mxu0 %v2409
    %2663 = vmatpush1.bf16.msra.mxu0 %v2408
    %2664 = vmatprep.subr.bf16.mxu0 %v2413
    %2665 = vmatpush1.bf16.msra.mxu0 %v2412
    %2666 = vmatprep.subr.bf16.mxu0 %v2417
    %2667 = vmatpush1.bf16.msra.mxu0 %v2416
    %2668 = vmatprep.subr.bf16.mxu0 %v2421
    %2669 = vmatpush1.bf16.msra.mxu0 %v2420
    %2670 = vmatprep.subr.bf16.mxu0 %v2425
    %2671 = vmatpush1.bf16.msra.mxu0 %v2424
    %2672 = vmatprep.subr.bf16.mxu0 %v2429
    %2673 = vmatpush1.bf16.msra.mxu0 %v2428
    %2674 = vmatprep.subr.bf16.mxu0 %v2433
    %2675 = vmatpush1.bf16.msra.mxu0 %v2432
    %2676 = vmatprep.subr.bf16.mxu0 %v2437
    %2677 = vmatpush1.bf16.msra.mxu0 %v2436
    %2678 = vmatprep.subr.bf16.mxu0 %v2441
    %2679 = vmatpush1.bf16.msra.mxu0 %v2440
    %2680 = vmatprep.subr.bf16.mxu0 %v2445
    %2681 = vmatpush1.bf16.msra.mxu0 %v2444
    %2682 = vmatprep.subr.bf16.mxu0 %v2449
    %2683 = vmatpush1.bf16.msra.mxu0 %v2448
    %2684 = vmatprep.subr.bf16.mxu0 %v2453
    %2685 = vmatpush1.bf16.msra.mxu0 %v2452
    %2686 = vmatprep.subr.bf16.mxu0 %v2457
    %2687 = vmatpush1.bf16.msra.mxu0 %v2456
    %2688 = vmatprep.subr.bf16.mxu0 %v2461
    %2689 = vmatpush1.bf16.msra.mxu0 %v2460
    %2690 = vmatprep.subr.bf16.mxu0 %v2465
    %2691 = vmatpush1.bf16.msra.mxu0 %v2464
    %2692 = vmatprep.mubr.bf16.mxu0 %v1868
    %2693 = vmatmul.mubr.bf16.gmra.mrb[0].mxu0 %v1867
    %v2694 = vpop.f32.mrb[0].mxu0
    %v2695 = vadd.f32 %v2003, %v2694
    %v2696 = vpop.f32.mrb[0].mxu0
    %v2697 = vadd.f32 %v2007, %v2696
    %v2698 = vpop.f32.mrb[0].mxu0
    %v2699 = vadd.f32 %v2003, %v2698
    %v2700 = vpop.f32.mrb[0].mxu0
    %v2701 = vadd.f32 %v2007, %v2700
    %2702 = vdwg.mxu0
    %2703 = vmatprep.subr.bf16.mxu0 %v2469
    %2704 = vmatpush1.bf16.msra.mxu0 %v2468
    %2705 = vmatprep.subr.bf16.mxu0 %v2473
    %2706 = vmatpush1.bf16.msra.mxu0 %v2472
    %2707 = vmatprep.subr.bf16.mxu0 %v2477
    %2708 = vmatpush1.bf16.msra.mxu0 %v2476
    %2709 = vmatprep.subr.bf16.mxu0 %v2481
    %2710 = vmatpush1.bf16.msra.mxu0 %v2480
    %2711 = vmatprep.subr.bf16.mxu0 %v2485
    %2712 = vmatpush1.bf16.msra.mxu0 %v2484
    %2713 = vmatprep.subr.bf16.mxu0 %v2489
    %2714 = vmatpush1.bf16.msra.mxu0 %v2488
    %2715 = vmatprep.subr.bf16.mxu0 %v2493
    %2716 = vmatpush1.bf16.msra.mxu0 %v2492
    %2717 = vmatprep.subr.bf16.mxu0 %v2497
    %2718 = vmatpush1.bf16.msra.mxu0 %v2496
    %2719 = vmatprep.subr.bf16.mxu0 %v2501
    %2720 = vmatpush1.bf16.msra.mxu0 %v2500
    %2721 = vmatprep.subr.bf16.mxu0 %v2505
    %2722 = vmatpush1.bf16.msra.mxu0 %v2504
    %2723 = vmatprep.subr.bf16.mxu0 %v2509
    %2724 = vmatpush1.bf16.msra.mxu0 %v2508
    %2725 = vmatprep.subr.bf16.mxu0 %v2513
    %2726 = vmatpush1.bf16.msra.mxu0 %v2512
    %2727 = vmatprep.subr.bf16.mxu0 %v2517
    %2728 = vmatpush1.bf16.msra.mxu0 %v2516
    %2729 = vmatprep.subr.bf16.mxu0 %v2521
    %2730 = vmatpush1.bf16.msra.mxu0 %v2520
    %2731 = vmatprep.subr.bf16.mxu0 %v2525
    %2732 = vmatpush1.bf16.msra.mxu0 %v2524
    %2733 = vmatprep.subr.bf16.mxu0 %v2529
    %2734 = vmatpush1.bf16.msra.mxu0 %v2528
    %2735 = vmatprep.mubr.bf16.mxu0 %v1870
    %2736 = vmatmul.mubr.bf16.gmra.mrb[0].mxu0 %v1869
    %v2737 = vpop.f32.mrb[0].mxu0
    %v2738 = vadd.f32 %v2695, %v2737
    %v2739 = vpop.f32.mrb[0].mxu0
    %v2740 = vadd.f32 %v2697, %v2739
    %v2741 = vpop.f32.mrb[0].mxu0
    %v2742 = vadd.f32 %v2699, %v2741
    %v2743 = vpop.f32.mrb[0].mxu0
    %v2744 = vadd.f32 %v2701, %v2743
    %2745 = vdwg.mxu0
    %2746 = vmatprep.subr.bf16.mxu0 %v2407
    %2747 = vmatpush1.bf16.msra.mxu0 %v2406
    %2748 = vmatprep.subr.bf16.mxu0 %v2411
    %2749 = vmatpush1.bf16.msra.mxu0 %v2410
    %2750 = vmatprep.subr.bf16.mxu0 %v2415
    %2751 = vmatpush1.bf16.msra.mxu0 %v2414
    %2752 = vmatprep.subr.bf16.mxu0 %v2419
    %2753 = vmatpush1.bf16.msra.mxu0 %v2418
    %2754 = vmatprep.subr.bf16.mxu0 %v2423
    %2755 = vmatpush1.bf16.msra.mxu0 %v2422
    %2756 = vmatprep.subr.bf16.mxu0 %v2427
    %2757 = vmatpush1.bf16.msra.mxu0 %v2426
    %2758 = vmatprep.subr.bf16.mxu0 %v2431
    %2759 = vmatpush1.bf16.msra.mxu0 %v2430
    %2760 = vmatprep.subr.bf16.mxu0 %v2435
    %2761 = vmatpush1.bf16.msra.mxu0 %v2434
    %2762 = vmatprep.subr.bf16.mxu0 %v2439
    %2763 = vmatpush1.bf16.msra.mxu0 %v2438
    %2764 = vmatprep.subr.bf16.mxu0 %v2443
    %2765 = vmatpush1.bf16.msra.mxu0 %v2442
    %2766 = vmatprep.subr.bf16.mxu0 %v2447
    %2767 = vmatpush1.bf16.msra.mxu0 %v2446
    %2768 = vmatprep.subr.bf16.mxu0 %v2451
    %2769 = vmatpush1.bf16.msra.mxu0 %v2450
    %2770 = vmatprep.subr.bf16.mxu0 %v2455
    %2771 = vmatpush1.bf16.msra.mxu0 %v2454
    %2772 = vmatprep.subr.bf16.mxu0 %v2459
    %2773 = vmatpush1.bf16.msra.mxu0 %v2458
    %2774 = vmatprep.subr.bf16.mxu0 %v2463
    %2775 = vmatpush1.bf16.msra.mxu0 %v2462
    %2776 = vmatprep.subr.bf16.mxu0 %v2467
    %2777 = vmatpush1.bf16.msra.mxu0 %v2466
    %2778 = vmatprep.mubr.bf16.mxu0 %v1868
    %2779 = vmatmul.mubr.bf16.gmra.mrb[0].mxu0 %v1867
    %v2780 = vpop.f32.mrb[0].mxu0
    %v2781 = vadd.f32 %v2011, %v2780
    %v2782 = vpop.f32.mrb[0].mxu0
    %v2783 = vadd.f32 %v2015, %v2782
    %v2784 = vpop.f32.mrb[0].mxu0
    %v2785 = vadd.f32 %v2011, %v2784
    %v2786 = vpop.f32.mrb[0].mxu0
    %v2787 = vadd.f32 %v2015, %v2786
    %2788 = vdwg.mxu0
    %2789 = vmatprep.subr.bf16.mxu0 %v2471
    %2790 = vmatpush1.bf16.msra.mxu0 %v2470
    %2791 = vmatprep.subr.bf16.mxu0 %v2475
    %2792 = vmatpush1.bf16.msra.mxu0 %v2474
    %2793 = vmatprep.subr.bf16.mxu0 %v2479
    %2794 = vmatpush1.bf16.msra.mxu0 %v2478
    %2795 = vmatprep.subr.bf16.mxu0 %v2483
    %2796 = vmatpush1.bf16.msra.mxu0 %v2482
    %2797 = vmatprep.subr.bf16.mxu0 %v2487
    %2798 = vmatpush1.bf16.msra.mxu0 %v2486
    %2799 = vmatprep.subr.bf16.mxu0 %v2491
    %2800 = vmatpush1.bf16.msra.mxu0 %v2490
    %2801 = vmatprep.subr.bf16.mxu0 %v2495
    %2802 = vmatpush1.bf16.msra.mxu0 %v2494
    %2803 = vmatprep.subr.bf16.mxu0 %v2499
    %2804 = vmatpush1.bf16.msra.mxu0 %v2498
    %2805 = vmatprep.subr.bf16.mxu0 %v2503
    %2806 = vmatpush1.bf16.msra.mxu0 %v2502
    %2807 = vmatprep.subr.bf16.mxu0 %v2507
    %2808 = vmatpush1.bf16.msra.mxu0 %v2506
    %2809 = vmatprep.subr.bf16.mxu0 %v2511
    %2810 = vmatpush1.bf16.msra.mxu0 %v2510
    %2811 = vmatprep.subr.bf16.mxu0 %v2515
    %2812 = vmatpush1.bf16.msra.mxu0 %v2514
    %2813 = vmatprep.subr.bf16.mxu0 %v2519
    %2814 = vmatpush1.bf16.msra.mxu0 %v2518
    %2815 = vmatprep.subr.bf16.mxu0 %v2523
    %2816 = vmatpush1.bf16.msra.mxu0 %v2522
    %2817 = vmatprep.subr.bf16.mxu0 %v2527
    %2818 = vmatpush1.bf16.msra.mxu0 %v2526
    %2819 = vmatprep.subr.bf16.mxu0 %v2531
    %2820 = vmatpush1.bf16.msra.mxu0 %v2530
    %2821 = vmatprep.mubr.bf16.mxu0 %v1870
    %2822 = vmatmul.mubr.bf16.gmra.mrb[0].mxu0 %v1869
    %v2823 = vpop.f32.mrb[0].mxu0
    %v2824 = vadd.f32 %v2781, %v2823
    %v2825 = vpop.f32.mrb[0].mxu0
    %v2826 = vadd.f32 %v2783, %v2825
    %v2827 = vpop.f32.mrb[0].mxu0
    %v2828 = vadd.f32 %v2785, %v2827
    %v2829 = vpop.f32.mrb[0].mxu0
    %v2830 = vadd.f32 %v2787, %v2829
    %2831 = vdwg.mxu0
    %v2832 = vmax.f32 %v2738, 0.0
    %v2833 = vmax.f32 %v2740, 0.0
    %v2834 = vmax.f32 %v2824, 0.0
    %v2835 = vmax.f32 %v2826, 0.0
    %v2836 = vmax.f32 %v2742, 0.0
    %v2837 = vmax.f32 %v2744, 0.0
    %v2838 = vmax.f32 %v2828, 0.0
    %v2839 = vmax.f32 %v2830, 0.0
    %v2840 = vpack.c.bf16 %v2836, %v2832
    %v2841 = vpack.c.bf16 %v2837, %v2833
    %v2842 = vpack.c.bf16 %v2838, %v2834
    %v2843 = vpack.c.bf16 %v2839, %v2835
    %v2844 = vld [vmem:[#allocation10] sm:$0xff]
    %v2845 = vld [vmem:[#allocation10 + $0x8] sm:$0xff]
    %v2846 = vld [vmem:[#allocation10 + $0x10] sm:$0xff]
    %v2847 = vld [vmem:[#allocation10 + $0x18] sm:$0xff]
    %v2848 = vld [vmem:[#allocation10 + $0x20] sm:$0xff]
    %v2849 = vld [vmem:[#allocation10 + $0x28] sm:$0xff]
    %v2850 = vld [vmem:[#allocation10 + $0x30] sm:$0xff]
    %v2851 = vld [vmem:[#allocation10 + $0x38] sm:$0xff]
    %v2852 = vld [vmem:[#allocation10 + $0x40] sm:$0xff]
    %v2853 = vld [vmem:[#allocation10 + $0x48] sm:$0xff]
    %v2854 = vld [vmem:[#allocation10 + $0x50] sm:$0xff]
    %v2855 = vld [vmem:[#allocation10 + $0x58] sm:$0xff]
    %v2856 = vld [vmem:[#allocation10 + $0x60] sm:$0xff]
    %v2857 = vld [vmem:[#allocation10 + $0x68] sm:$0xff]
    %v2858 = vld [vmem:[#allocation10 + $0x70] sm:$0xff]
    %v2859 = vld [vmem:[#allocation10 + $0x78] sm:$0xff]
    %v2860 = vld [vmem:[#allocation10 + $0x80] sm:$0xff]
    %v2861 = vld [vmem:[#allocation10 + $0x88] sm:$0xff]
    %v2862 = vld [vmem:[#allocation10 + $0x90] sm:$0xff]
    %v2863 = vld [vmem:[#allocation10 + $0x98] sm:$0xff]
    %v2864 = vld [vmem:[#allocation10 + $0xa0] sm:$0xff]
    %v2865 = vld [vmem:[#allocation10 + $0xa8] sm:$0xff]
    %v2866 = vld [vmem:[#allocation10 + $0xb0] sm:$0xff]
    %v2867 = vld [vmem:[#allocation10 + $0xb8] sm:$0xff]
    %v2868 = vld [vmem:[#allocation10 + $0xc0] sm:$0xff]
    %v2869 = vld [vmem:[#allocation10 + $0xc8] sm:$0xff]
    %v2870 = vld [vmem:[#allocation10 + $0xd0] sm:$0xff]
    %v2871 = vld [vmem:[#allocation10 + $0xd8] sm:$0xff]
    %v2872 = vld [vmem:[#allocation10 + $0xe0] sm:$0xff]
    %v2873 = vld [vmem:[#allocation10 + $0xe8] sm:$0xff]
    %v2874 = vld [vmem:[#allocation10 + $0xf0] sm:$0xff]
    %v2875 = vld [vmem:[#allocation10 + $0xf8] sm:$0xff]
    %v2876 = vld [vmem:[#allocation10 + $0x100] sm:$0xff]
    %v2877 = vld [vmem:[#allocation10 + $0x108] sm:$0xff]
    %v2878 = vld [vmem:[#allocation10 + $0x110] sm:$0xff]
    %v2879 = vld [vmem:[#allocation10 + $0x118] sm:$0xff]
    %v2880 = vld [vmem:[#allocation10 + $0x120] sm:$0xff]
    %v2881 = vld [vmem:[#allocation10 + $0x128] sm:$0xff]
    %v2882 = vld [vmem:[#allocation10 + $0x130] sm:$0xff]
    %v2883 = vld [vmem:[#allocation10 + $0x138] sm:$0xff]
    %v2884 = vld [vmem:[#allocation10 + $0x140] sm:$0xff]
    %v2885 = vld [vmem:[#allocation10 + $0x148] sm:$0xff]
    %v2886 = vld [vmem:[#allocation10 + $0x150] sm:$0xff]
    %v2887 = vld [vmem:[#allocation10 + $0x158] sm:$0xff]
    %v2888 = vld [vmem:[#allocation10 + $0x160] sm:$0xff]
    %v2889 = vld [vmem:[#allocation10 + $0x168] sm:$0xff]
    %v2890 = vld [vmem:[#allocation10 + $0x170] sm:$0xff]
    %v2891 = vld [vmem:[#allocation10 + $0x178] sm:$0xff]
    %v2892 = vld [vmem:[#allocation10 + $0x180] sm:$0xff]
    %v2893 = vld [vmem:[#allocation10 + $0x188] sm:$0xff]
    %v2894 = vld [vmem:[#allocation10 + $0x190] sm:$0xff]
    %v2895 = vld [vmem:[#allocation10 + $0x198] sm:$0xff]
    %v2896 = vld [vmem:[#allocation10 + $0x1a0] sm:$0xff]
    %v2897 = vld [vmem:[#allocation10 + $0x1a8] sm:$0xff]
    %v2898 = vld [vmem:[#allocation10 + $0x1b0] sm:$0xff]
    %v2899 = vld [vmem:[#allocation10 + $0x1b8] sm:$0xff]
    %v2900 = vld [vmem:[#allocation10 + $0x1c0] sm:$0xff]
    %v2901 = vld [vmem:[#allocation10 + $0x1c8] sm:$0xff]
    %v2902 = vld [vmem:[#allocation10 + $0x1d0] sm:$0xff]
    %v2903 = vld [vmem:[#allocation10 + $0x1d8] sm:$0xff]
    %v2904 = vld [vmem:[#allocation10 + $0x1e0] sm:$0xff]
    %v2905 = vld [vmem:[#allocation10 + $0x1e8] sm:$0xff]
    %v2906 = vld [vmem:[#allocation10 + $0x1f0] sm:$0xff]
    %v2907 = vld [vmem:[#allocation10 + $0x1f8] sm:$0xff]
    %v2908 = vld [vmem:[#allocation10 + $0x200] sm:$0xff]
    %v2909 = vld [vmem:[#allocation10 + $0x208] sm:$0xff]
    %v2910 = vld [vmem:[#allocation10 + $0x210] sm:$0xff]
    %v2911 = vld [vmem:[#allocation10 + $0x218] sm:$0xff]
    %v2912 = vld [vmem:[#allocation10 + $0x220] sm:$0xff]
    %v2913 = vld [vmem:[#allocation10 + $0x228] sm:$0xff]
    %v2914 = vld [vmem:[#allocation10 + $0x230] sm:$0xff]
    %v2915 = vld [vmem:[#allocation10 + $0x238] sm:$0xff]
    %v2916 = vld [vmem:[#allocation10 + $0x240] sm:$0xff]
    %v2917 = vld [vmem:[#allocation10 + $0x248] sm:$0xff]
    %v2918 = vld [vmem:[#allocation10 + $0x250] sm:$0xff]
    %v2919 = vld [vmem:[#allocation10 + $0x258] sm:$0xff]
    %v2920 = vld [vmem:[#allocation10 + $0x260] sm:$0xff]
    %v2921 = vld [vmem:[#allocation10 + $0x268] sm:$0xff]
    %v2922 = vld [vmem:[#allocation10 + $0x270] sm:$0xff]
    %v2923 = vld [vmem:[#allocation10 + $0x278] sm:$0xff]
    %v2924 = vld [vmem:[#allocation10 + $0x280] sm:$0xff]
    %v2925 = vld [vmem:[#allocation10 + $0x288] sm:$0xff]
    %v2926 = vld [vmem:[#allocation10 + $0x290] sm:$0xff]
    %v2927 = vld [vmem:[#allocation10 + $0x298] sm:$0xff]
    %v2928 = vld [vmem:[#allocation10 + $0x2a0] sm:$0xff]
    %v2929 = vld [vmem:[#allocation10 + $0x2a8] sm:$0xff]
    %v2930 = vld [vmem:[#allocation10 + $0x2b0] sm:$0xff]
    %v2931 = vld [vmem:[#allocation10 + $0x2b8] sm:$0xff]
    %v2932 = vld [vmem:[#allocation10 + $0x2c0] sm:$0xff]
    %v2933 = vld [vmem:[#allocation10 + $0x2c8] sm:$0xff]
    %v2934 = vld [vmem:[#allocation10 + $0x2d0] sm:$0xff]
    %v2935 = vld [vmem:[#allocation10 + $0x2d8] sm:$0xff]
    %v2936 = vld [vmem:[#allocation10 + $0x2e0] sm:$0xff]
    %v2937 = vld [vmem:[#allocation10 + $0x2e8] sm:$0xff]
    %v2938 = vld [vmem:[#allocation10 + $0x2f0] sm:$0xff]
    %v2939 = vld [vmem:[#allocation10 + $0x2f8] sm:$0xff]
    %v2940 = vld [vmem:[#allocation10 + $0x300] sm:$0xff]
    %v2941 = vld [vmem:[#allocation10 + $0x308] sm:$0xff]
    %v2942 = vld [vmem:[#allocation10 + $0x310] sm:$0xff]
    %v2943 = vld [vmem:[#allocation10 + $0x318] sm:$0xff]
    %v2944 = vld [vmem:[#allocation10 + $0x320] sm:$0xff]
    %v2945 = vld [vmem:[#allocation10 + $0x328] sm:$0xff]
    %v2946 = vld [vmem:[#allocation10 + $0x330] sm:$0xff]
    %v2947 = vld [vmem:[#allocation10 + $0x338] sm:$0xff]
    %v2948 = vld [vmem:[#allocation10 + $0x340] sm:$0xff]
    %v2949 = vld [vmem:[#allocation10 + $0x348] sm:$0xff]
    %v2950 = vld [vmem:[#allocation10 + $0x350] sm:$0xff]
    %v2951 = vld [vmem:[#allocation10 + $0x358] sm:$0xff]
    %v2952 = vld [vmem:[#allocation10 + $0x360] sm:$0xff]
    %v2953 = vld [vmem:[#allocation10 + $0x368] sm:$0xff]
    %v2954 = vld [vmem:[#allocation10 + $0x370] sm:$0xff]
    %v2955 = vld [vmem:[#allocation10 + $0x378] sm:$0xff]
    %v2956 = vld [vmem:[#allocation10 + $0x380] sm:$0xff]
    %v2957 = vld [vmem:[#allocation10 + $0x388] sm:$0xff]
    %v2958 = vld [vmem:[#allocation10 + $0x390] sm:$0xff]
    %v2959 = vld [vmem:[#allocation10 + $0x398] sm:$0xff]
    %v2960 = vld [vmem:[#allocation10 + $0x3a0] sm:$0xff]
    %v2961 = vld [vmem:[#allocation10 + $0x3a8] sm:$0xff]
    %v2962 = vld [vmem:[#allocation10 + $0x3b0] sm:$0xff]
    %v2963 = vld [vmem:[#allocation10 + $0x3b8] sm:$0xff]
    %v2964 = vld [vmem:[#allocation10 + $0x3c0] sm:$0xff]
    %v2965 = vld [vmem:[#allocation10 + $0x3c8] sm:$0xff]
    %v2966 = vld [vmem:[#allocation10 + $0x3d0] sm:$0xff]
    %v2967 = vld [vmem:[#allocation10 + $0x3d8] sm:$0xff]
    %v2968 = vld [vmem:[#allocation10 + $0x3e0] sm:$0xff]
    %v2969 = vld [vmem:[#allocation10 + $0x3e8] sm:$0xff]
    %v2970 = vld [vmem:[#allocation10 + $0x3f0] sm:$0xff]
    %v2971 = vld [vmem:[#allocation10 + $0x3f8] sm:$0xff]
    %v2973 = vlaneseq
    %v2974 = vshrl.u32 %v2973, 7
    %v2975 = vsub.s32 0, %v2974
    %v2976 = vrot.slane %v113, %v2975
    %v2977 = vlaneseq
    %v2978 = vshrl.u32 %v2977, 7
    %v2979 = vsub.s32 1, %v2978
    %v2980 = vrot.slane %v113, %v2979
    %v2981 = vlaneseq
    %v2982 = vshrl.u32 %v2981, 7
    %v2983 = vsub.s32 2, %v2982
    %v2984 = vrot.slane %v113, %v2983
    %v2985 = vlaneseq
    %v2986 = vshrl.u32 %v2985, 7
    %v2987 = vsub.s32 3, %v2986
    %v2988 = vrot.slane %v113, %v2987
    %v3121 = vunpack.c.l.b16 %v2844
    %v3122 = vunpack.c.h.b16 %v2844
    %v3123 = vunpack.c.l.b16 %v2845
    %v3124 = vunpack.c.h.b16 %v2845
    %v3125 = vunpack.c.l.b16 %v2846
    %v3126 = vunpack.c.h.b16 %v2846
    %v3127 = vunpack.c.l.b16 %v2847
    %v3128 = vunpack.c.h.b16 %v2847
    %v3129 = vunpack.c.l.b16 %v2848
    %v3130 = vunpack.c.h.b16 %v2848
    %v3131 = vunpack.c.l.b16 %v2849
    %v3132 = vunpack.c.h.b16 %v2849
    %v3133 = vunpack.c.l.b16 %v2850
    %v3134 = vunpack.c.h.b16 %v2850
    %v3135 = vunpack.c.l.b16 %v2851
    %v3136 = vunpack.c.h.b16 %v2851
    %v3137 = vunpack.c.l.b16 %v2852
    %v3138 = vunpack.c.h.b16 %v2852
    %v3139 = vunpack.c.l.b16 %v2853
    %v3140 = vunpack.c.h.b16 %v2853
    %v3141 = vunpack.c.l.b16 %v2854
    %v3142 = vunpack.c.h.b16 %v2854
    %v3143 = vunpack.c.l.b16 %v2855
    %v3144 = vunpack.c.h.b16 %v2855
    %v3145 = vunpack.c.l.b16 %v2856
    %v3146 = vunpack.c.h.b16 %v2856
    %v3147 = vunpack.c.l.b16 %v2857
    %v3148 = vunpack.c.h.b16 %v2857
    %v3149 = vunpack.c.l.b16 %v2858
    %v3150 = vunpack.c.h.b16 %v2858
    %v3151 = vunpack.c.l.b16 %v2859
    %v3152 = vunpack.c.h.b16 %v2859
    %v3153 = vunpack.c.l.b16 %v2860
    %v3154 = vunpack.c.h.b16 %v2860
    %v3155 = vunpack.c.l.b16 %v2861
    %v3156 = vunpack.c.h.b16 %v2861
    %v3157 = vunpack.c.l.b16 %v2862
    %v3158 = vunpack.c.h.b16 %v2862
    %v3159 = vunpack.c.l.b16 %v2863
    %v3160 = vunpack.c.h.b16 %v2863
    %v3161 = vunpack.c.l.b16 %v2864
    %v3162 = vunpack.c.h.b16 %v2864
    %v3163 = vunpack.c.l.b16 %v2865
    %v3164 = vunpack.c.h.b16 %v2865
    %v3165 = vunpack.c.l.b16 %v2866
    %v3166 = vunpack.c.h.b16 %v2866
    %v3167 = vunpack.c.l.b16 %v2867
    %v3168 = vunpack.c.h.b16 %v2867
    %v3169 = vunpack.c.l.b16 %v2868
    %v3170 = vunpack.c.h.b16 %v2868
    %v3171 = vunpack.c.l.b16 %v2869
    %v3172 = vunpack.c.h.b16 %v2869
    %v3173 = vunpack.c.l.b16 %v2870
    %v3174 = vunpack.c.h.b16 %v2870
    %v3175 = vunpack.c.l.b16 %v2871
    %v3176 = vunpack.c.h.b16 %v2871
    %v3177 = vunpack.c.l.b16 %v2872
    %v3178 = vunpack.c.h.b16 %v2872
    %v3179 = vunpack.c.l.b16 %v2873
    %v3180 = vunpack.c.h.b16 %v2873
    %v3181 = vunpack.c.l.b16 %v2874
    %v3182 = vunpack.c.h.b16 %v2874
    %v3183 = vunpack.c.l.b16 %v2875
    %v3184 = vunpack.c.h.b16 %v2875
    %v3185 = vunpack.c.l.b16 %v2876
    %v3186 = vunpack.c.h.b16 %v2876
    %v3187 = vunpack.c.l.b16 %v2877
    %v3188 = vunpack.c.h.b16 %v2877
    %v3189 = vunpack.c.l.b16 %v2878
    %v3190 = vunpack.c.h.b16 %v2878
    %v3191 = vunpack.c.l.b16 %v2879
    %v3192 = vunpack.c.h.b16 %v2879
    %v3193 = vunpack.c.l.b16 %v2880
    %v3194 = vunpack.c.h.b16 %v2880
    %v3195 = vunpack.c.l.b16 %v2881
    %v3196 = vunpack.c.h.b16 %v2881
    %v3197 = vunpack.c.l.b16 %v2882
    %v3198 = vunpack.c.h.b16 %v2882
    %v3199 = vunpack.c.l.b16 %v2883
    %v3200 = vunpack.c.h.b16 %v2883
    %v3201 = vunpack.c.l.b16 %v2884
    %v3202 = vunpack.c.h.b16 %v2884
    %v3203 = vunpack.c.l.b16 %v2885
    %v3204 = vunpack.c.h.b16 %v2885
    %v3205 = vunpack.c.l.b16 %v2886
    %v3206 = vunpack.c.h.b16 %v2886
    %v3207 = vunpack.c.l.b16 %v2887
    %v3208 = vunpack.c.h.b16 %v2887
    %v3209 = vunpack.c.l.b16 %v2888
    %v3210 = vunpack.c.h.b16 %v2888
    %v3211 = vunpack.c.l.b16 %v2889
    %v3212 = vunpack.c.h.b16 %v2889
    %v3213 = vunpack.c.l.b16 %v2890
    %v3214 = vunpack.c.h.b16 %v2890
    %v3215 = vunpack.c.l.b16 %v2891
    %v3216 = vunpack.c.h.b16 %v2891
    %v3217 = vunpack.c.l.b16 %v2892
    %v3218 = vunpack.c.h.b16 %v2892
    %v3219 = vunpack.c.l.b16 %v2893
    %v3220 = vunpack.c.h.b16 %v2893
    %v3221 = vunpack.c.l.b16 %v2894
    %v3222 = vunpack.c.h.b16 %v2894
    %v3223 = vunpack.c.l.b16 %v2895
    %v3224 = vunpack.c.h.b16 %v2895
    %v3225 = vunpack.c.l.b16 %v2896
    %v3226 = vunpack.c.h.b16 %v2896
    %v3227 = vunpack.c.l.b16 %v2897
    %v3228 = vunpack.c.h.b16 %v2897
    %v3229 = vunpack.c.l.b16 %v2898
    %v3230 = vunpack.c.h.b16 %v2898
    %v3231 = vunpack.c.l.b16 %v2899
    %v3232 = vunpack.c.h.b16 %v2899
    %v3233 = vunpack.c.l.b16 %v2900
    %v3234 = vunpack.c.h.b16 %v2900
    %v3235 = vunpack.c.l.b16 %v2901
    %v3236 = vunpack.c.h.b16 %v2901
    %v3237 = vunpack.c.l.b16 %v2902
    %v3238 = vunpack.c.h.b16 %v2902
    %v3239 = vunpack.c.l.b16 %v2903
    %v3240 = vunpack.c.h.b16 %v2903
    %v3241 = vunpack.c.l.b16 %v2904
    %v3242 = vunpack.c.h.b16 %v2904
    %v3243 = vunpack.c.l.b16 %v2905
    %v3244 = vunpack.c.h.b16 %v2905
    %v3245 = vunpack.c.l.b16 %v2906
    %v3246 = vunpack.c.h.b16 %v2906
    %v3247 = vunpack.c.l.b16 %v2907
    %v3248 = vunpack.c.h.b16 %v2907
    %v3249 = vunpack.c.l.b16 %v2908
    %v3250 = vunpack.c.h.b16 %v2908
    %v3251 = vunpack.c.l.b16 %v2909
    %v3252 = vunpack.c.h.b16 %v2909
    %v3253 = vunpack.c.l.b16 %v2910
    %v3254 = vunpack.c.h.b16 %v2910
    %v3255 = vunpack.c.l.b16 %v2911
    %v3256 = vunpack.c.h.b16 %v2911
    %v3257 = vunpack.c.l.b16 %v2912
    %v3258 = vunpack.c.h.b16 %v2912
    %v3259 = vunpack.c.l.b16 %v2913
    %v3260 = vunpack.c.h.b16 %v2913
    %v3261 = vunpack.c.l.b16 %v2914
    %v3262 = vunpack.c.h.b16 %v2914
    %v3263 = vunpack.c.l.b16 %v2915
    %v3264 = vunpack.c.h.b16 %v2915
    %v3265 = vunpack.c.l.b16 %v2916
    %v3266 = vunpack.c.h.b16 %v2916
    %v3267 = vunpack.c.l.b16 %v2917
    %v3268 = vunpack.c.h.b16 %v2917
    %v3269 = vunpack.c.l.b16 %v2918
    %v3270 = vunpack.c.h.b16 %v2918
    %v3271 = vunpack.c.l.b16 %v2919
    %v3272 = vunpack.c.h.b16 %v2919
    %v3273 = vunpack.c.l.b16 %v2920
    %v3274 = vunpack.c.h.b16 %v2920
    %v3275 = vunpack.c.l.b16 %v2921
    %v3276 = vunpack.c.h.b16 %v2921
    %v3277 = vunpack.c.l.b16 %v2922
    %v3278 = vunpack.c.h.b16 %v2922
    %v3279 = vunpack.c.l.b16 %v2923
    %v3280 = vunpack.c.h.b16 %v2923
    %v3281 = vunpack.c.l.b16 %v2924
    %v3282 = vunpack.c.h.b16 %v2924
    %v3283 = vunpack.c.l.b16 %v2925
    %v3284 = vunpack.c.h.b16 %v2925
    %v3285 = vunpack.c.l.b16 %v2926
    %v3286 = vunpack.c.h.b16 %v2926
    %v3287 = vunpack.c.l.b16 %v2927
    %v3288 = vunpack.c.h.b16 %v2927
    %v3289 = vunpack.c.l.b16 %v2928
    %v3290 = vunpack.c.h.b16 %v2928
    %v3291 = vunpack.c.l.b16 %v2929
    %v3292 = vunpack.c.h.b16 %v2929
    %v3293 = vunpack.c.l.b16 %v2930
    %v3294 = vunpack.c.h.b16 %v2930
    %v3295 = vunpack.c.l.b16 %v2931
    %v3296 = vunpack.c.h.b16 %v2931
    %v3297 = vunpack.c.l.b16 %v2932
    %v3298 = vunpack.c.h.b16 %v2932
    %v3299 = vunpack.c.l.b16 %v2933
    %v3300 = vunpack.c.h.b16 %v2933
    %v3301 = vunpack.c.l.b16 %v2934
    %v3302 = vunpack.c.h.b16 %v2934
    %v3303 = vunpack.c.l.b16 %v2935
    %v3304 = vunpack.c.h.b16 %v2935
    %v3305 = vunpack.c.l.b16 %v2936
    %v3306 = vunpack.c.h.b16 %v2936
    %v3307 = vunpack.c.l.b16 %v2937
    %v3308 = vunpack.c.h.b16 %v2937
    %v3309 = vunpack.c.l.b16 %v2938
    %v3310 = vunpack.c.h.b16 %v2938
    %v3311 = vunpack.c.l.b16 %v2939
    %v3312 = vunpack.c.h.b16 %v2939
    %v3313 = vunpack.c.l.b16 %v2940
    %v3314 = vunpack.c.h.b16 %v2940
    %v3315 = vunpack.c.l.b16 %v2941
    %v3316 = vunpack.c.h.b16 %v2941
    %v3317 = vunpack.c.l.b16 %v2942
    %v3318 = vunpack.c.h.b16 %v2942
    %v3319 = vunpack.c.l.b16 %v2943
    %v3320 = vunpack.c.h.b16 %v2943
    %v3321 = vunpack.c.l.b16 %v2944
    %v3322 = vunpack.c.h.b16 %v2944
    %v3323 = vunpack.c.l.b16 %v2945
    %v3324 = vunpack.c.h.b16 %v2945
    %v3325 = vunpack.c.l.b16 %v2946
    %v3326 = vunpack.c.h.b16 %v2946
    %v3327 = vunpack.c.l.b16 %v2947
    %v3328 = vunpack.c.h.b16 %v2947
    %v3329 = vunpack.c.l.b16 %v2948
    %v3330 = vunpack.c.h.b16 %v2948
    %v3331 = vunpack.c.l.b16 %v2949
    %v3332 = vunpack.c.h.b16 %v2949
    %v3333 = vunpack.c.l.b16 %v2950
    %v3334 = vunpack.c.h.b16 %v2950
    %v3335 = vunpack.c.l.b16 %v2951
    %v3336 = vunpack.c.h.b16 %v2951
    %v3337 = vunpack.c.l.b16 %v2952
    %v3338 = vunpack.c.h.b16 %v2952
    %v3339 = vunpack.c.l.b16 %v2953
    %v3340 = vunpack.c.h.b16 %v2953
    %v3341 = vunpack.c.l.b16 %v2954
    %v3342 = vunpack.c.h.b16 %v2954
    %v3343 = vunpack.c.l.b16 %v2955
    %v3344 = vunpack.c.h.b16 %v2955
    %v3345 = vunpack.c.l.b16 %v2956
    %v3346 = vunpack.c.h.b16 %v2956
    %v3347 = vunpack.c.l.b16 %v2957
    %v3348 = vunpack.c.h.b16 %v2957
    %v3349 = vunpack.c.l.b16 %v2958
    %v3350 = vunpack.c.h.b16 %v2958
    %v3351 = vunpack.c.l.b16 %v2959
    %v3352 = vunpack.c.h.b16 %v2959
    %v3353 = vunpack.c.l.b16 %v2960
    %v3354 = vunpack.c.h.b16 %v2960
    %v3355 = vunpack.c.l.b16 %v2961
    %v3356 = vunpack.c.h.b16 %v2961
    %v3357 = vunpack.c.l.b16 %v2962
    %v3358 = vunpack.c.h.b16 %v2962
    %v3359 = vunpack.c.l.b16 %v2963
    %v3360 = vunpack.c.h.b16 %v2963
    %v3361 = vunpack.c.l.b16 %v2964
    %v3362 = vunpack.c.h.b16 %v2964
    %v3363 = vunpack.c.l.b16 %v2965
    %v3364 = vunpack.c.h.b16 %v2965
    %v3365 = vunpack.c.l.b16 %v2966
    %v3366 = vunpack.c.h.b16 %v2966
    %v3367 = vunpack.c.l.b16 %v2967
    %v3368 = vunpack.c.h.b16 %v2967
    %v3369 = vunpack.c.l.b16 %v2968
    %v3370 = vunpack.c.h.b16 %v2968
    %v3371 = vunpack.c.l.b16 %v2969
    %v3372 = vunpack.c.h.b16 %v2969
    %v3373 = vunpack.c.l.b16 %v2970
    %v3374 = vunpack.c.h.b16 %v2970
    %v3375 = vunpack.c.l.b16 %v2971
    %v3376 = vunpack.c.h.b16 %v2971
    %v3377 = vpack.c.b16 %v3125, %v3121
    %v3378 = vpack.c.b16 %v3126, %v3122
    %v3379 = vpack.c.b16 %v3127, %v3123
    %v3380 = vpack.c.b16 %v3128, %v3124
    %v3381 = vpack.c.b16 %v3133, %v3129
    %v3382 = vpack.c.b16 %v3134, %v3130
    %v3383 = vpack.c.b16 %v3135, %v3131
    %v3384 = vpack.c.b16 %v3136, %v3132
    %v3385 = vpack.c.b16 %v3141, %v3137
    %v3386 = vpack.c.b16 %v3142, %v3138
    %v3387 = vpack.c.b16 %v3143, %v3139
    %v3388 = vpack.c.b16 %v3144, %v3140
    %v3389 = vpack.c.b16 %v3149, %v3145
    %v3390 = vpack.c.b16 %v3150, %v3146
    %v3391 = vpack.c.b16 %v3151, %v3147
    %v3392 = vpack.c.b16 %v3152, %v3148
    %v3393 = vpack.c.b16 %v3157, %v3153
    %v3394 = vpack.c.b16 %v3158, %v3154
    %v3395 = vpack.c.b16 %v3159, %v3155
    %v3396 = vpack.c.b16 %v3160, %v3156
    %v3397 = vpack.c.b16 %v3165, %v3161
    %v3398 = vpack.c.b16 %v3166, %v3162
    %v3399 = vpack.c.b16 %v3167, %v3163
    %v3400 = vpack.c.b16 %v3168, %v3164
    %v3401 = vpack.c.b16 %v3173, %v3169
    %v3402 = vpack.c.b16 %v3174, %v3170
    %v3403 = vpack.c.b16 %v3175, %v3171
    %v3404 = vpack.c.b16 %v3176, %v3172
    %v3405 = vpack.c.b16 %v3181, %v3177
    %v3406 = vpack.c.b16 %v3182, %v3178
    %v3407 = vpack.c.b16 %v3183, %v3179
    %v3408 = vpack.c.b16 %v3184, %v3180
    %v3409 = vpack.c.b16 %v3189, %v3185
    %v3410 = vpack.c.b16 %v3190, %v3186
    %v3411 = vpack.c.b16 %v3191, %v3187
    %v3412 = vpack.c.b16 %v3192, %v3188
    %v3413 = vpack.c.b16 %v3197, %v3193
    %v3414 = vpack.c.b16 %v3198, %v3194
    %v3415 = vpack.c.b16 %v3199, %v3195
    %v3416 = vpack.c.b16 %v3200, %v3196
    %v3417 = vpack.c.b16 %v3205, %v3201
    %v3418 = vpack.c.b16 %v3206, %v3202
    %v3419 = vpack.c.b16 %v3207, %v3203
    %v3420 = vpack.c.b16 %v3208, %v3204
    %v3421 = vpack.c.b16 %v3213, %v3209
    %v3422 = vpack.c.b16 %v3214, %v3210
    %v3423 = vpack.c.b16 %v3215, %v3211
    %v3424 = vpack.c.b16 %v3216, %v3212
    %v3425 = vpack.c.b16 %v3221, %v3217
    %v3426 = vpack.c.b16 %v3222, %v3218
    %v3427 = vpack.c.b16 %v3223, %v3219
    %v3428 = vpack.c.b16 %v3224, %v3220
    %v3429 = vpack.c.b16 %v3229, %v3225
    %v3430 = vpack.c.b16 %v3230, %v3226
    %v3431 = vpack.c.b16 %v3231, %v3227
    %v3432 = vpack.c.b16 %v3232, %v3228
    %v3433 = vpack.c.b16 %v3237, %v3233
    %v3434 = vpack.c.b16 %v3238, %v3234
    %v3435 = vpack.c.b16 %v3239, %v3235
    %v3436 = vpack.c.b16 %v3240, %v3236
    %v3437 = vpack.c.b16 %v3245, %v3241
    %v3438 = vpack.c.b16 %v3246, %v3242
    %v3439 = vpack.c.b16 %v3247, %v3243
    %v3440 = vpack.c.b16 %v3248, %v3244
    %v3441 = vpack.c.b16 %v3253, %v3249
    %v3442 = vpack.c.b16 %v3254, %v3250
    %v3443 = vpack.c.b16 %v3255, %v3251
    %v3444 = vpack.c.b16 %v3256, %v3252
    %v3445 = vpack.c.b16 %v3261, %v3257
    %v3446 = vpack.c.b16 %v3262, %v3258
    %v3447 = vpack.c.b16 %v3263, %v3259
    %v3448 = vpack.c.b16 %v3264, %v3260
    %v3449 = vpack.c.b16 %v3269, %v3265
    %v3450 = vpack.c.b16 %v3270, %v3266
    %v3451 = vpack.c.b16 %v3271, %v3267
    %v3452 = vpack.c.b16 %v3272, %v3268
    %v3453 = vpack.c.b16 %v3277, %v3273
    %v3454 = vpack.c.b16 %v3278, %v3274
    %v3455 = vpack.c.b16 %v3279, %v3275
    %v3456 = vpack.c.b16 %v3280, %v3276
    %v3457 = vpack.c.b16 %v3285, %v3281
    %v3458 = vpack.c.b16 %v3286, %v3282
    %v3459 = vpack.c.b16 %v3287, %v3283
    %v3460 = vpack.c.b16 %v3288, %v3284
    %v3461 = vpack.c.b16 %v3293, %v3289
    %v3462 = vpack.c.b16 %v3294, %v3290
    %v3463 = vpack.c.b16 %v3295, %v3291
    %v3464 = vpack.c.b16 %v3296, %v3292
    %v3465 = vpack.c.b16 %v3301, %v3297
    %v3466 = vpack.c.b16 %v3302, %v3298
    %v3467 = vpack.c.b16 %v3303, %v3299
    %v3468 = vpack.c.b16 %v3304, %v3300
    %v3469 = vpack.c.b16 %v3309, %v3305
    %v3470 = vpack.c.b16 %v3310, %v3306
    %v3471 = vpack.c.b16 %v3311, %v3307
    %v3472 = vpack.c.b16 %v3312, %v3308
    %v3473 = vpack.c.b16 %v3317, %v3313
    %v3474 = vpack.c.b16 %v3318, %v3314
    %v3475 = vpack.c.b16 %v3319, %v3315
    %v3476 = vpack.c.b16 %v3320, %v3316
    %v3477 = vpack.c.b16 %v3325, %v3321
    %v3478 = vpack.c.b16 %v3326, %v3322
    %v3479 = vpack.c.b16 %v3327, %v3323
    %v3480 = vpack.c.b16 %v3328, %v3324
    %v3481 = vpack.c.b16 %v3333, %v3329
    %v3482 = vpack.c.b16 %v3334, %v3330
    %v3483 = vpack.c.b16 %v3335, %v3331
    %v3484 = vpack.c.b16 %v3336, %v3332
    %v3485 = vpack.c.b16 %v3341, %v3337
    %v3486 = vpack.c.b16 %v3342, %v3338
    %v3487 = vpack.c.b16 %v3343, %v3339
    %v3488 = vpack.c.b16 %v3344, %v3340
    %v3489 = vpack.c.b16 %v3349, %v3345
    %v3490 = vpack.c.b16 %v3350, %v3346
    %v3491 = vpack.c.b16 %v3351, %v3347
    %v3492 = vpack.c.b16 %v3352, %v3348
    %v3493 = vpack.c.b16 %v3357, %v3353
    %v3494 = vpack.c.b16 %v3358, %v3354
    %v3495 = vpack.c.b16 %v3359, %v3355
    %v3496 = vpack.c.b16 %v3360, %v3356
    %v3497 = vpack.c.b16 %v3365, %v3361
    %v3498 = vpack.c.b16 %v3366, %v3362
    %v3499 = vpack.c.b16 %v3367, %v3363
    %v3500 = vpack.c.b16 %v3368, %v3364
    %v3501 = vpack.c.b16 %v3373, %v3369
    %v3502 = vpack.c.b16 %v3374, %v3370
    %v3503 = vpack.c.b16 %v3375, %v3371
    %v3504 = vpack.c.b16 %v3376, %v3372
    %3633 = vmatprep.subr.bf16.mxu0 %v3378
    %3634 = vmatpush1.bf16.msra.mxu0 %v3377
    %3635 = vmatprep.subr.bf16.mxu0 %v3382
    %3636 = vmatpush1.bf16.msra.mxu0 %v3381
    %3637 = vmatprep.subr.bf16.mxu0 %v3386
    %3638 = vmatpush1.bf16.msra.mxu0 %v3385
    %3639 = vmatprep.subr.bf16.mxu0 %v3390
    %3640 = vmatpush1.bf16.msra.mxu0 %v3389
    %3641 = vmatprep.subr.bf16.mxu0 %v3394
    %3642 = vmatpush1.bf16.msra.mxu0 %v3393
    %3643 = vmatprep.subr.bf16.mxu0 %v3398
    %3644 = vmatpush1.bf16.msra.mxu0 %v3397
    %3645 = vmatprep.subr.bf16.mxu0 %v3402
    %3646 = vmatpush1.bf16.msra.mxu0 %v3401
    %3647 = vmatprep.subr.bf16.mxu0 %v3406
    %3648 = vmatpush1.bf16.msra.mxu0 %v3405
    %3649 = vmatprep.subr.bf16.mxu0 %v3410
    %3650 = vmatpush1.bf16.msra.mxu0 %v3409
    %3651 = vmatprep.subr.bf16.mxu0 %v3414
    %3652 = vmatpush1.bf16.msra.mxu0 %v3413
    %3653 = vmatprep.subr.bf16.mxu0 %v3418
    %3654 = vmatpush1.bf16.msra.mxu0 %v3417
    %3655 = vmatprep.subr.bf16.mxu0 %v3422
    %3656 = vmatpush1.bf16.msra.mxu0 %v3421
    %3657 = vmatprep.subr.bf16.mxu0 %v3426
    %3658 = vmatpush1.bf16.msra.mxu0 %v3425
    %3659 = vmatprep.subr.bf16.mxu0 %v3430
    %3660 = vmatpush1.bf16.msra.mxu0 %v3429
    %3661 = vmatprep.subr.bf16.mxu0 %v3434
    %3662 = vmatpush1.bf16.msra.mxu0 %v3433
    %3663 = vmatprep.subr.bf16.mxu0 %v3438
    %3664 = vmatpush1.bf16.msra.mxu0 %v3437
    %3665 = vmatprep.mubr.bf16.mxu0 %v2841
    %3666 = vmatmul.mubr.bf16.gmra.mrb[0].mxu0 %v2840
    %v3667 = vpop.f32.mrb[0].mxu0
    %v3668 = vadd.f32 %v2976, %v3667
    %v3669 = vpop.f32.mrb[0].mxu0
    %v3670 = vadd.f32 %v2980, %v3669
    %v3671 = vpop.f32.mrb[0].mxu0
    %v3672 = vadd.f32 %v2976, %v3671
    %v3673 = vpop.f32.mrb[0].mxu0
    %v3674 = vadd.f32 %v2980, %v3673
    %3675 = vdwg.mxu0
    %3676 = vmatprep.subr.bf16.mxu0 %v3442
    %3677 = vmatpush1.bf16.msra.mxu0 %v3441
    %3678 = vmatprep.subr.bf16.mxu0 %v3446
    %3679 = vmatpush1.bf16.msra.mxu0 %v3445
    %3680 = vmatprep.subr.bf16.mxu0 %v3450
    %3681 = vmatpush1.bf16.msra.mxu0 %v3449
    %3682 = vmatprep.subr.bf16.mxu0 %v3454
    %3683 = vmatpush1.bf16.msra.mxu0 %v3453
    %3684 = vmatprep.subr.bf16.mxu0 %v3458
    %3685 = vmatpush1.bf16.msra.mxu0 %v3457
    %3686 = vmatprep.subr.bf16.mxu0 %v3462
    %3687 = vmatpush1.bf16.msra.mxu0 %v3461
    %3688 = vmatprep.subr.bf16.mxu0 %v3466
    %3689 = vmatpush1.bf16.msra.mxu0 %v3465
    %3690 = vmatprep.subr.bf16.mxu0 %v3470
    %3691 = vmatpush1.bf16.msra.mxu0 %v3469
    %3692 = vmatprep.subr.bf16.mxu0 %v3474
    %3693 = vmatpush1.bf16.msra.mxu0 %v3473
    %3694 = vmatprep.subr.bf16.mxu0 %v3478
    %3695 = vmatpush1.bf16.msra.mxu0 %v3477
    %3696 = vmatprep.subr.bf16.mxu0 %v3482
    %3697 = vmatpush1.bf16.msra.mxu0 %v3481
    %3698 = vmatprep.subr.bf16.mxu0 %v3486
    %3699 = vmatpush1.bf16.msra.mxu0 %v3485
    %3700 = vmatprep.subr.bf16.mxu0 %v3490
    %3701 = vmatpush1.bf16.msra.mxu0 %v3489
    %3702 = vmatprep.subr.bf16.mxu0 %v3494
    %3703 = vmatpush1.bf16.msra.mxu0 %v3493
    %3704 = vmatprep.subr.bf16.mxu0 %v3498
    %3705 = vmatpush1.bf16.msra.mxu0 %v3497
    %3706 = vmatprep.subr.bf16.mxu0 %v3502
    %3707 = vmatpush1.bf16.msra.mxu0 %v3501
    %3708 = vmatprep.mubr.bf16.mxu0 %v2843
    %3709 = vmatmul.mubr.bf16.gmra.mrb[0].mxu0 %v2842
    %v3710 = vpop.f32.mrb[0].mxu0
    %v3711 = vadd.f32 %v3668, %v3710
    %v3712 = vpop.f32.mrb[0].mxu0
    %v3713 = vadd.f32 %v3670, %v3712
    %v3714 = vpop.f32.mrb[0].mxu0
    %v3715 = vadd.f32 %v3672, %v3714
    %v3716 = vpop.f32.mrb[0].mxu0
    %v3717 = vadd.f32 %v3674, %v3716
    %3718 = vdwg.mxu0
    %3719 = vmatprep.subr.bf16.mxu0 %v3380
    %3720 = vmatpush1.bf16.msra.mxu0 %v3379
    %3721 = vmatprep.subr.bf16.mxu0 %v3384
    %3722 = vmatpush1.bf16.msra.mxu0 %v3383
    %3723 = vmatprep.subr.bf16.mxu0 %v3388
    %3724 = vmatpush1.bf16.msra.mxu0 %v3387
    %3725 = vmatprep.subr.bf16.mxu0 %v3392
    %3726 = vmatpush1.bf16.msra.mxu0 %v3391
    %3727 = vmatprep.subr.bf16.mxu0 %v3396
    %3728 = vmatpush1.bf16.msra.mxu0 %v3395
    %3729 = vmatprep.subr.bf16.mxu0 %v3400
    %3730 = vmatpush1.bf16.msra.mxu0 %v3399
    %3731 = vmatprep.subr.bf16.mxu0 %v3404
    %3732 = vmatpush1.bf16.msra.mxu0 %v3403
    %3733 = vmatprep.subr.bf16.mxu0 %v3408
    %3734 = vmatpush1.bf16.msra.mxu0 %v3407
    %3735 = vmatprep.subr.bf16.mxu0 %v3412
    %3736 = vmatpush1.bf16.msra.mxu0 %v3411
    %3737 = vmatprep.subr.bf16.mxu0 %v3416
    %3738 = vmatpush1.bf16.msra.mxu0 %v3415
    %3739 = vmatprep.subr.bf16.mxu0 %v3420
    %3740 = vmatpush1.bf16.msra.mxu0 %v3419
    %3741 = vmatprep.subr.bf16.mxu0 %v3424
    %3742 = vmatpush1.bf16.msra.mxu0 %v3423
    %3743 = vmatprep.subr.bf16.mxu0 %v3428
    %3744 = vmatpush1.bf16.msra.mxu0 %v3427
    %3745 = vmatprep.subr.bf16.mxu0 %v3432
    %3746 = vmatpush1.bf16.msra.mxu0 %v3431
    %3747 = vmatprep.subr.bf16.mxu0 %v3436
    %3748 = vmatpush1.bf16.msra.mxu0 %v3435
    %3749 = vmatprep.subr.bf16.mxu0 %v3440
    %3750 = vmatpush1.bf16.msra.mxu0 %v3439
    %3751 = vmatprep.mubr.bf16.mxu0 %v2841
    %3752 = vmatmul.mubr.bf16.gmra.mrb[0].mxu0 %v2840
    %v3753 = vpop.f32.mrb[0].mxu0
    %v3754 = vadd.f32 %v2984, %v3753
    %v3755 = vpop.f32.mrb[0].mxu0
    %v3756 = vadd.f32 %v2988, %v3755
    %v3757 = vpop.f32.mrb[0].mxu0
    %v3758 = vadd.f32 %v2984, %v3757
    %v3759 = vpop.f32.mrb[0].mxu0
    %v3760 = vadd.f32 %v2988, %v3759
    %3761 = vdwg.mxu0
    %3762 = vmatprep.subr.bf16.mxu0 %v3444
    %3763 = vmatpush1.bf16.msra.mxu0 %v3443
    %3764 = vmatprep.subr.bf16.mxu0 %v3448
    %3765 = vmatpush1.bf16.msra.mxu0 %v3447
    %3766 = vmatprep.subr.bf16.mxu0 %v3452
    %3767 = vmatpush1.bf16.msra.mxu0 %v3451
    %3768 = vmatprep.subr.bf16.mxu0 %v3456
    %3769 = vmatpush1.bf16.msra.mxu0 %v3455
    %3770 = vmatprep.subr.bf16.mxu0 %v3460
    %3771 = vmatpush1.bf16.msra.mxu0 %v3459
    %3772 = vmatprep.subr.bf16.mxu0 %v3464
    %3773 = vmatpush1.bf16.msra.mxu0 %v3463
    %3774 = vmatprep.subr.bf16.mxu0 %v3468
    %3775 = vmatpush1.bf16.msra.mxu0 %v3467
    %3776 = vmatprep.subr.bf16.mxu0 %v3472
    %3777 = vmatpush1.bf16.msra.mxu0 %v3471
    %3778 = vmatprep.subr.bf16.mxu0 %v3476
    %3779 = vmatpush1.bf16.msra.mxu0 %v3475
    %3780 = vmatprep.subr.bf16.mxu0 %v3480
    %3781 = vmatpush1.bf16.msra.mxu0 %v3479
    %3782 = vmatprep.subr.bf16.mxu0 %v3484
    %3783 = vmatpush1.bf16.msra.mxu0 %v3483
    %3784 = vmatprep.subr.bf16.mxu0 %v3488
    %3785 = vmatpush1.bf16.msra.mxu0 %v3487
    %3786 = vmatprep.subr.bf16.mxu0 %v3492
    %3787 = vmatpush1.bf16.msra.mxu0 %v3491
    %3788 = vmatprep.subr.bf16.mxu0 %v3496
    %3789 = vmatpush1.bf16.msra.mxu0 %v3495
    %3790 = vmatprep.subr.bf16.mxu0 %v3500
    %3791 = vmatpush1.bf16.msra.mxu0 %v3499
    %3792 = vmatprep.subr.bf16.mxu0 %v3504
    %3793 = vmatpush1.bf16.msra.mxu0 %v3503
    %3794 = vmatprep.mubr.bf16.mxu0 %v2843
    %3795 = vmatmul.mubr.bf16.gmra.mrb[0].mxu0 %v2842
    %v3796 = vpop.f32.mrb[0].mxu0
    %v3797 = vadd.f32 %v3754, %v3796
    %v3798 = vpop.f32.mrb[0].mxu0
    %v3799 = vadd.f32 %v3756, %v3798
    %v3800 = vpop.f32.mrb[0].mxu0
    %v3801 = vadd.f32 %v3758, %v3800
    %v3802 = vpop.f32.mrb[0].mxu0
    %v3803 = vadd.f32 %v3760, %v3802
    %3804 = vdwg.mxu0
    %v3805 = vsub.f32 %v1679, %v3711
    %v3806 = vsub.f32 %v1681, %v3713
    %v3807 = vsub.f32 %v1851, %v3797
    %v3808 = vsub.f32 %v1853, %v3799
    %v3809 = vsub.f32 %v1683, %v3715
    %v3810 = vsub.f32 %v1685, %v3717
    %v3811 = vsub.f32 %v1855, %v3801
    %v3812 = vsub.f32 %v1857, %v3803
    %v3813 = vmax.f32 %v3805, 0.0
    %v3814 = vmax.f32 %v3806, 0.0
    %v3815 = vmax.f32 %v3807, 0.0
    %v3816 = vmax.f32 %v3808, 0.0
    %v3817 = vmax.f32 %v3809, 0.0
    %v3818 = vmax.f32 %v3810, 0.0
    %v3819 = vmax.f32 %v3811, 0.0
    %v3820 = vmax.f32 %v3812, 0.0
    %v3821 = vpack.c.bf16 %v3817, %v3813
    %v3822 = vpack.c.bf16 %v3818, %v3814
    %v3823 = vpack.c.bf16 %v3819, %v3815
    %v3824 = vpack.c.bf16 %v3820, %v3816
    %3825 = vmatprep.subr.bf16.mxu0 %v2405
    %3826 = vmatpush1.bf16.msra.mxu0 %v2404
    %3827 = vmatprep.subr.bf16.mxu0 %v2409
    %3828 = vmatpush1.bf16.msra.mxu0 %v2408
    %3829 = vmatprep.subr.bf16.mxu0 %v2413
    %3830 = vmatpush1.bf16.msra.mxu0 %v2412
    %3831 = vmatprep.subr.bf16.mxu0 %v2417
    %3832 = vmatpush1.bf16.msra.mxu0 %v2416
    %3833 = vmatprep.subr.bf16.mxu0 %v2421
    %3834 = vmatpush1.bf16.msra.mxu0 %v2420
    %3835 = vmatprep.subr.bf16.mxu0 %v2425
    %3836 = vmatpush1.bf16.msra.mxu0 %v2424
    %3837 = vmatprep.subr.bf16.mxu0 %v2429
    %3838 = vmatpush1.bf16.msra.mxu0 %v2428
    %3839 = vmatprep.subr.bf16.mxu0 %v2433
    %3840 = vmatpush1.bf16.msra.mxu0 %v2432
    %3841 = vmatprep.subr.bf16.mxu0 %v2437
    %3842 = vmatpush1.bf16.msra.mxu0 %v2436
    %3843 = vmatprep.subr.bf16.mxu0 %v2441
    %3844 = vmatpush1.bf16.msra.mxu0 %v2440
    %3845 = vmatprep.subr.bf16.mxu0 %v2445
    %3846 = vmatpush1.bf16.msra.mxu0 %v2444
    %3847 = vmatprep.subr.bf16.mxu0 %v2449
    %3848 = vmatpush1.bf16.msra.mxu0 %v2448
    %3849 = vmatprep.subr.bf16.mxu0 %v2453
    %3850 = vmatpush1.bf16.msra.mxu0 %v2452
    %3851 = vmatprep.subr.bf16.mxu0 %v2457
    %3852 = vmatpush1.bf16.msra.mxu0 %v2456
    %3853 = vmatprep.subr.bf16.mxu0 %v2461
    %3854 = vmatpush1.bf16.msra.mxu0 %v2460
    %3855 = vmatprep.subr.bf16.mxu0 %v2465
    %3856 = vmatpush1.bf16.msra.mxu0 %v2464
    %3857 = vmatprep.mubr.bf16.mxu0 %v3822
    %3858 = vmatmul.mubr.bf16.gmra.mrb[0].mxu0 %v3821
    %v3859 = vpop.f32.mrb[0].mxu0
    %v3860 = vadd.f32 %v2003, %v3859
    %v3861 = vpop.f32.mrb[0].mxu0
    %v3862 = vadd.f32 %v2007, %v3861
    %v3863 = vpop.f32.mrb[0].mxu0
    %v3864 = vadd.f32 %v2003, %v3863
    %v3865 = vpop.f32.mrb[0].mxu0
    %v3866 = vadd.f32 %v2007, %v3865
    %3867 = vdwg.mxu0
    %3868 = vmatprep.subr.bf16.mxu0 %v2469
    %3869 = vmatpush1.bf16.msra.mxu0 %v2468
    %3870 = vmatprep.subr.bf16.mxu0 %v2473
    %3871 = vmatpush1.bf16.msra.mxu0 %v2472
    %3872 = vmatprep.subr.bf16.mxu0 %v2477
    %3873 = vmatpush1.bf16.msra.mxu0 %v2476
    %3874 = vmatprep.subr.bf16.mxu0 %v2481
    %3875 = vmatpush1.bf16.msra.mxu0 %v2480
    %3876 = vmatprep.subr.bf16.mxu0 %v2485
    %3877 = vmatpush1.bf16.msra.mxu0 %v2484
    %3878 = vmatprep.subr.bf16.mxu0 %v2489
    %3879 = vmatpush1.bf16.msra.mxu0 %v2488
    %3880 = vmatprep.subr.bf16.mxu0 %v2493
    %3881 = vmatpush1.bf16.msra.mxu0 %v2492
    %3882 = vmatprep.subr.bf16.mxu0 %v2497
    %3883 = vmatpush1.bf16.msra.mxu0 %v2496
    %3884 = vmatprep.subr.bf16.mxu0 %v2501
    %3885 = vmatpush1.bf16.msra.mxu0 %v2500
    %3886 = vmatprep.subr.bf16.mxu0 %v2505
    %3887 = vmatpush1.bf16.msra.mxu0 %v2504
    %3888 = vmatprep.subr.bf16.mxu0 %v2509
    %3889 = vmatpush1.bf16.msra.mxu0 %v2508
    %3890 = vmatprep.subr.bf16.mxu0 %v2513
    %3891 = vmatpush1.bf16.msra.mxu0 %v2512
    %3892 = vmatprep.subr.bf16.mxu0 %v2517
    %3893 = vmatpush1.bf16.msra.mxu0 %v2516
    %3894 = vmatprep.subr.bf16.mxu0 %v2521
    %3895 = vmatpush1.bf16.msra.mxu0 %v2520
    %3896 = vmatprep.subr.bf16.mxu0 %v2525
    %3897 = vmatpush1.bf16.msra.mxu0 %v2524
    %3898 = vmatprep.subr.bf16.mxu0 %v2529
    %3899 = vmatpush1.bf16.msra.mxu0 %v2528
    %3900 = vmatprep.mubr.bf16.mxu0 %v3824
    %3901 = vmatmul.mubr.bf16.gmra.mrb[0].mxu0 %v3823
    %v3902 = vpop.f32.mrb[0].mxu0
    %v3903 = vadd.f32 %v3860, %v3902
    %v3904 = vpop.f32.mrb[0].mxu0
    %v3905 = vadd.f32 %v3862, %v3904
    %v3906 = vpop.f32.mrb[0].mxu0
    %v3907 = vadd.f32 %v3864, %v3906
    %v3908 = vpop.f32.mrb[0].mxu0
    %v3909 = vadd.f32 %v3866, %v3908
    %3910 = vdwg.mxu0
    %3911 = vmatprep.subr.bf16.mxu0 %v2407
    %3912 = vmatpush1.bf16.msra.mxu0 %v2406
    %3913 = vmatprep.subr.bf16.mxu0 %v2411
    %3914 = vmatpush1.bf16.msra.mxu0 %v2410
    %3915 = vmatprep.subr.bf16.mxu0 %v2415
    %3916 = vmatpush1.bf16.msra.mxu0 %v2414
    %3917 = vmatprep.subr.bf16.mxu0 %v2419
    %3918 = vmatpush1.bf16.msra.mxu0 %v2418
    %3919 = vmatprep.subr.bf16.mxu0 %v2423
    %3920 = vmatpush1.bf16.msra.mxu0 %v2422
    %3921 = vmatprep.subr.bf16.mxu0 %v2427
    %3922 = vmatpush1.bf16.msra.mxu0 %v2426
    %3923 = vmatprep.subr.bf16.mxu0 %v2431
    %3924 = vmatpush1.bf16.msra.mxu0 %v2430
    %3925 = vmatprep.subr.bf16.mxu0 %v2435
    %3926 = vmatpush1.bf16.msra.mxu0 %v2434
    %3927 = vmatprep.subr.bf16.mxu0 %v2439
    %3928 = vmatpush1.bf16.msra.mxu0 %v2438
    %3929 = vmatprep.subr.bf16.mxu0 %v2443
    %3930 = vmatpush1.bf16.msra.mxu0 %v2442
    %3931 = vmatprep.subr.bf16.mxu0 %v2447
    %3932 = vmatpush1.bf16.msra.mxu0 %v2446
    %3933 = vmatprep.subr.bf16.mxu0 %v2451
    %3934 = vmatpush1.bf16.msra.mxu0 %v2450
    %3935 = vmatprep.subr.bf16.mxu0 %v2455
    %3936 = vmatpush1.bf16.msra.mxu0 %v2454
    %3937 = vmatprep.subr.bf16.mxu0 %v2459
    %3938 = vmatpush1.bf16.msra.mxu0 %v2458
    %3939 = vmatprep.subr.bf16.mxu0 %v2463
    %3940 = vmatpush1.bf16.msra.mxu0 %v2462
    %3941 = vmatprep.subr.bf16.mxu0 %v2467
    %3942 = vmatpush1.bf16.msra.mxu0 %v2466
    %3943 = vmatprep.mubr.bf16.mxu0 %v3822
    %3944 = vmatmul.mubr.bf16.gmra.mrb[0].mxu0 %v3821
    %v3945 = vpop.f32.mrb[0].mxu0
    %v3946 = vadd.f32 %v2011, %v3945
    %v3947 = vpop.f32.mrb[0].mxu0
    %v3948 = vadd.f32 %v2015, %v3947
    %v3949 = vpop.f32.mrb[0].mxu0
    %v3950 = vadd.f32 %v2011, %v3949
    %v3951 = vpop.f32.mrb[0].mxu0
    %v3952 = vadd.f32 %v2015, %v3951
    %3953 = vdwg.mxu0
    %3954 = vmatprep.subr.bf16.mxu0 %v2471
    %3955 = vmatpush1.bf16.msra.mxu0 %v2470
    %3956 = vmatprep.subr.bf16.mxu0 %v2475
    %3957 = vmatpush1.bf16.msra.mxu0 %v2474
    %3958 = vmatprep.subr.bf16.mxu0 %v2479
    %3959 = vmatpush1.bf16.msra.mxu0 %v2478
    %3960 = vmatprep.subr.bf16.mxu0 %v2483
    %3961 = vmatpush1.bf16.msra.mxu0 %v2482
    %3962 = vmatprep.subr.bf16.mxu0 %v2487
    %3963 = vmatpush1.bf16.msra.mxu0 %v2486
    %3964 = vmatprep.subr.bf16.mxu0 %v2491
    %3965 = vmatpush1.bf16.msra.mxu0 %v2490
    %3966 = vmatprep.subr.bf16.mxu0 %v2495
    %3967 = vmatpush1.bf16.msra.mxu0 %v2494
    %3968 = vmatprep.subr.bf16.mxu0 %v2499
    %3969 = vmatpush1.bf16.msra.mxu0 %v2498
    %3970 = vmatprep.subr.bf16.mxu0 %v2503
    %3971 = vmatpush1.bf16.msra.mxu0 %v2502
    %3972 = vmatprep.subr.bf16.mxu0 %v2507
    %3973 = vmatpush1.bf16.msra.mxu0 %v2506
    %3974 = vmatprep.subr.bf16.mxu0 %v2511
    %3975 = vmatpush1.bf16.msra.mxu0 %v2510
    %3976 = vmatprep.subr.bf16.mxu0 %v2515
    %3977 = vmatpush1.bf16.msra.mxu0 %v2514
    %3978 = vmatprep.subr.bf16.mxu0 %v2519
    %3979 = vmatpush1.bf16.msra.mxu0 %v2518
    %3980 = vmatprep.subr.bf16.mxu0 %v2523
    %3981 = vmatpush1.bf16.msra.mxu0 %v2522
    %3982 = vmatprep.subr.bf16.mxu0 %v2527
    %3983 = vmatpush1.bf16.msra.mxu0 %v2526
    %3984 = vmatprep.subr.bf16.mxu0 %v2531
    %3985 = vmatpush1.bf16.msra.mxu0 %v2530
    %3986 = vmatprep.mubr.bf16.mxu0 %v3824
    %3987 = vmatmul.mubr.bf16.gmra.mrb[0].mxu0 %v3823
    %v3988 = vpop.f32.mrb[0].mxu0
    %v3989 = vadd.f32 %v3946, %v3988
    %v3990 = vpop.f32.mrb[0].mxu0
    %v3991 = vadd.f32 %v3948, %v3990
    %v3992 = vpop.f32.mrb[0].mxu0
    %v3993 = vadd.f32 %v3950, %v3992
    %v3994 = vpop.f32.mrb[0].mxu0
    %v3995 = vadd.f32 %v3952, %v3994
    %3996 = vdwg.mxu0
    %v3997 = vmax.f32 %v3903, 0.0
    %v3998 = vmax.f32 %v3905, 0.0
    %v3999 = vmax.f32 %v3989, 0.0
    %v4000 = vmax.f32 %v3991, 0.0
    %v4001 = vmax.f32 %v3907, 0.0
    %v4002 = vmax.f32 %v3909, 0.0
    %v4003 = vmax.f32 %v3993, 0.0
    %v4004 = vmax.f32 %v3995, 0.0
    %v4005 = vpack.c.bf16 %v4001, %v3997
    %v4006 = vpack.c.bf16 %v4002, %v3998
    %v4007 = vpack.c.bf16 %v4003, %v3999
    %v4008 = vpack.c.bf16 %v4004, %v4000
    %v4009 = vld [vmem:[#allocation8] sm:$0xf]
    %v4010 = vld [vmem:[#allocation8 + $0x4] sm:$0xf]
    %v4011 = vld [vmem:[#allocation8 + $0x8] sm:$0xf]
    %v4012 = vld [vmem:[#allocation8 + $0xc] sm:$0xf]
    %v4013 = vld [vmem:[#allocation8 + $0x10] sm:$0xf]
    %v4014 = vld [vmem:[#allocation8 + $0x14] sm:$0xf]
    %v4015 = vld [vmem:[#allocation8 + $0x18] sm:$0xf]
    %v4016 = vld [vmem:[#allocation8 + $0x1c] sm:$0xf]
    %v4017 = vld [vmem:[#allocation8 + $0x20] sm:$0xf]
    %v4018 = vld [vmem:[#allocation8 + $0x24] sm:$0xf]
    %v4019 = vld [vmem:[#allocation8 + $0x28] sm:$0xf]
    %v4020 = vld [vmem:[#allocation8 + $0x2c] sm:$0xf]
    %v4021 = vld [vmem:[#allocation8 + $0x30] sm:$0xf]
    %v4022 = vld [vmem:[#allocation8 + $0x34] sm:$0xf]
    %v4023 = vld [vmem:[#allocation8 + $0x38] sm:$0xf]
    %v4024 = vld [vmem:[#allocation8 + $0x3c] sm:$0xf]
    %v4025 = vld [vmem:[#allocation8 + $0x40] sm:$0xf]
    %v4026 = vld [vmem:[#allocation8 + $0x44] sm:$0xf]
    %v4027 = vld [vmem:[#allocation8 + $0x48] sm:$0xf]
    %v4028 = vld [vmem:[#allocation8 + $0x4c] sm:$0xf]
    %v4029 = vld [vmem:[#allocation8 + $0x50] sm:$0xf]
    %v4030 = vld [vmem:[#allocation8 + $0x54] sm:$0xf]
    %v4031 = vld [vmem:[#allocation8 + $0x58] sm:$0xf]
    %v4032 = vld [vmem:[#allocation8 + $0x5c] sm:$0xf]
    %v4033 = vld [vmem:[#allocation8 + $0x60] sm:$0xf]
    %v4034 = vld [vmem:[#allocation8 + $0x64] sm:$0xf]
    %v4035 = vld [vmem:[#allocation8 + $0x68] sm:$0xf]
    %v4036 = vld [vmem:[#allocation8 + $0x6c] sm:$0xf]
    %v4037 = vld [vmem:[#allocation8 + $0x70] sm:$0xf]
    %v4038 = vld [vmem:[#allocation8 + $0x74] sm:$0xf]
    %v4039 = vld [vmem:[#allocation8 + $0x78] sm:$0xf]
    %v4040 = vld [vmem:[#allocation8 + $0x7c] sm:$0xf]
    %v4041 = vld [vmem:[#allocation8 + $0x80] sm:$0xf]
    %v4042 = vld [vmem:[#allocation8 + $0x84] sm:$0xf]
    %v4043 = vld [vmem:[#allocation8 + $0x88] sm:$0xf]
    %v4044 = vld [vmem:[#allocation8 + $0x8c] sm:$0xf]
    %v4045 = vld [vmem:[#allocation8 + $0x90] sm:$0xf]
    %v4046 = vld [vmem:[#allocation8 + $0x94] sm:$0xf]
    %v4047 = vld [vmem:[#allocation8 + $0x98] sm:$0xf]
    %v4048 = vld [vmem:[#allocation8 + $0x9c] sm:$0xf]
    %v4049 = vld [vmem:[#allocation8 + $0xa0] sm:$0xf]
    %v4050 = vld [vmem:[#allocation8 + $0xa4] sm:$0xf]
    %v4051 = vld [vmem:[#allocation8 + $0xa8] sm:$0xf]
    %v4052 = vld [vmem:[#allocation8 + $0xac] sm:$0xf]
    %v4053 = vld [vmem:[#allocation8 + $0xb0] sm:$0xf]
    %v4054 = vld [vmem:[#allocation8 + $0xb4] sm:$0xf]
    %v4055 = vld [vmem:[#allocation8 + $0xb8] sm:$0xf]
    %v4056 = vld [vmem:[#allocation8 + $0xbc] sm:$0xf]
    %v4057 = vld [vmem:[#allocation8 + $0xc0] sm:$0xf]
    %v4058 = vld [vmem:[#allocation8 + $0xc4] sm:$0xf]
    %v4059 = vld [vmem:[#allocation8 + $0xc8] sm:$0xf]
    %v4060 = vld [vmem:[#allocation8 + $0xcc] sm:$0xf]
    %v4061 = vld [vmem:[#allocation8 + $0xd0] sm:$0xf]
    %v4062 = vld [vmem:[#allocation8 + $0xd4] sm:$0xf]
    %v4063 = vld [vmem:[#allocation8 + $0xd8] sm:$0xf]
    %v4064 = vld [vmem:[#allocation8 + $0xdc] sm:$0xf]
    %v4065 = vld [vmem:[#allocation8 + $0xe0] sm:$0xf]
    %v4066 = vld [vmem:[#allocation8 + $0xe4] sm:$0xf]
    %v4067 = vld [vmem:[#allocation8 + $0xe8] sm:$0xf]
    %v4068 = vld [vmem:[#allocation8 + $0xec] sm:$0xf]
    %v4069 = vld [vmem:[#allocation8 + $0xf0] sm:$0xf]
    %v4070 = vld [vmem:[#allocation8 + $0xf4] sm:$0xf]
    %v4071 = vld [vmem:[#allocation8 + $0xf8] sm:$0xf]
    %v4072 = vld [vmem:[#allocation8 + $0xfc] sm:$0xf]
    %v4074 = vlaneseq
    %v4075 = vshrl.u32 %v4074, 7
    %v4076 = vsub.s32 0, %v4075
    %v4077 = vrot.slane %v112, %v4076
    %v4143 = vunpack.c.l.b16 %v4009
    %v4144 = vunpack.c.l.b16 %v4010
    %v4145 = vunpack.c.l.b16 %v4011
    %v4146 = vunpack.c.l.b16 %v4012
    %v4147 = vunpack.c.l.b16 %v4013
    %v4148 = vunpack.c.l.b16 %v4014
    %v4149 = vunpack.c.l.b16 %v4015
    %v4150 = vunpack.c.l.b16 %v4016
    %v4151 = vunpack.c.l.b16 %v4017
    %v4152 = vunpack.c.l.b16 %v4018
    %v4153 = vunpack.c.l.b16 %v4019
    %v4154 = vunpack.c.l.b16 %v4020
    %v4155 = vunpack.c.l.b16 %v4021
    %v4156 = vunpack.c.l.b16 %v4022
    %v4157 = vunpack.c.l.b16 %v4023
    %v4158 = vunpack.c.l.b16 %v4024
    %v4159 = vunpack.c.l.b16 %v4025
    %v4160 = vunpack.c.l.b16 %v4026
    %v4161 = vunpack.c.l.b16 %v4027
    %v4162 = vunpack.c.l.b16 %v4028
    %v4163 = vunpack.c.l.b16 %v4029
    %v4164 = vunpack.c.l.b16 %v4030
    %v4165 = vunpack.c.l.b16 %v4031
    %v4166 = vunpack.c.l.b16 %v4032
    %v4167 = vunpack.c.l.b16 %v4033
    %v4168 = vunpack.c.l.b16 %v4034
    %v4169 = vunpack.c.l.b16 %v4035
    %v4170 = vunpack.c.l.b16 %v4036
    %v4171 = vunpack.c.l.b16 %v4037
    %v4172 = vunpack.c.l.b16 %v4038
    %v4173 = vunpack.c.l.b16 %v4039
    %v4174 = vunpack.c.l.b16 %v4040
    %v4175 = vunpack.c.l.b16 %v4041
    %v4176 = vunpack.c.l.b16 %v4042
    %v4177 = vunpack.c.l.b16 %v4043
    %v4178 = vunpack.c.l.b16 %v4044
    %v4179 = vunpack.c.l.b16 %v4045
    %v4180 = vunpack.c.l.b16 %v4046
    %v4181 = vunpack.c.l.b16 %v4047
    %v4182 = vunpack.c.l.b16 %v4048
    %v4183 = vunpack.c.l.b16 %v4049
    %v4184 = vunpack.c.l.b16 %v4050
    %v4185 = vunpack.c.l.b16 %v4051
    %v4186 = vunpack.c.l.b16 %v4052
    %v4187 = vunpack.c.l.b16 %v4053
    %v4188 = vunpack.c.l.b16 %v4054
    %v4189 = vunpack.c.l.b16 %v4055
    %v4190 = vunpack.c.l.b16 %v4056
    %v4191 = vunpack.c.l.b16 %v4057
    %v4192 = vunpack.c.l.b16 %v4058
    %v4193 = vunpack.c.l.b16 %v4059
    %v4194 = vunpack.c.l.b16 %v4060
    %v4195 = vunpack.c.l.b16 %v4061
    %v4196 = vunpack.c.l.b16 %v4062
    %v4197 = vunpack.c.l.b16 %v4063
    %v4198 = vunpack.c.l.b16 %v4064
    %v4199 = vunpack.c.l.b16 %v4065
    %v4200 = vunpack.c.l.b16 %v4066
    %v4201 = vunpack.c.l.b16 %v4067
    %v4202 = vunpack.c.l.b16 %v4068
    %v4203 = vunpack.c.l.b16 %v4069
    %v4204 = vunpack.c.l.b16 %v4070
    %v4205 = vunpack.c.l.b16 %v4071
    %v4206 = vunpack.c.l.b16 %v4072
    %v4207 = vpack.c.b16 %v4144, %v4143
    %v4208 = vpack.c.b16 %v4146, %v4145
    %v4209 = vpack.c.b16 %v4148, %v4147
    %v4210 = vpack.c.b16 %v4150, %v4149
    %v4211 = vpack.c.b16 %v4152, %v4151
    %v4212 = vpack.c.b16 %v4154, %v4153
    %v4213 = vpack.c.b16 %v4156, %v4155
    %v4214 = vpack.c.b16 %v4158, %v4157
    %v4215 = vpack.c.b16 %v4160, %v4159
    %v4216 = vpack.c.b16 %v4162, %v4161
    %v4217 = vpack.c.b16 %v4164, %v4163
    %v4218 = vpack.c.b16 %v4166, %v4165
    %v4219 = vpack.c.b16 %v4168, %v4167
    %v4220 = vpack.c.b16 %v4170, %v4169
    %v4221 = vpack.c.b16 %v4172, %v4171
    %v4222 = vpack.c.b16 %v4174, %v4173
    %v4223 = vpack.c.b16 %v4176, %v4175
    %v4224 = vpack.c.b16 %v4178, %v4177
    %v4225 = vpack.c.b16 %v4180, %v4179
    %v4226 = vpack.c.b16 %v4182, %v4181
    %v4227 = vpack.c.b16 %v4184, %v4183
    %v4228 = vpack.c.b16 %v4186, %v4185
    %v4229 = vpack.c.b16 %v4188, %v4187
    %v4230 = vpack.c.b16 %v4190, %v4189
    %v4231 = vpack.c.b16 %v4192, %v4191
    %v4232 = vpack.c.b16 %v4194, %v4193
    %v4233 = vpack.c.b16 %v4196, %v4195
    %v4234 = vpack.c.b16 %v4198, %v4197
    %v4235 = vpack.c.b16 %v4200, %v4199
    %v4236 = vpack.c.b16 %v4202, %v4201
    %v4237 = vpack.c.b16 %v4204, %v4203
    %v4238 = vpack.c.b16 %v4206, %v4205
    %4271 = vmatprep.subr.bf16.mxu0 0
    %4272 = vmatpush1.bf16.msra.mxu0 %v4207
    %4273 = vmatprep.subr.bf16.mxu0 0
    %4274 = vmatpush1.bf16.msra.mxu0 %v4208
    %4275 = vmatprep.subr.bf16.mxu0 0
    %4276 = vmatpush1.bf16.msra.mxu0 %v4209
    %4277 = vmatprep.subr.bf16.mxu0 0
    %4278 = vmatpush1.bf16.msra.mxu0 %v4210
    %4279 = vmatprep.subr.bf16.mxu0 0
    %4280 = vmatpush1.bf16.msra.mxu0 %v4211
    %4281 = vmatprep.subr.bf16.mxu0 0
    %4282 = vmatpush1.bf16.msra.mxu0 %v4212
    %4283 = vmatprep.subr.bf16.mxu0 0
    %4284 = vmatpush1.bf16.msra.mxu0 %v4213
    %4285 = vmatprep.subr.bf16.mxu0 0
    %4286 = vmatpush1.bf16.msra.mxu0 %v4214
    %4287 = vmatprep.subr.bf16.mxu0 0
    %4288 = vmatpush1.bf16.msra.mxu0 %v4215
    %4289 = vmatprep.subr.bf16.mxu0 0
    %4290 = vmatpush1.bf16.msra.mxu0 %v4216
    %4291 = vmatprep.subr.bf16.mxu0 0
    %4292 = vmatpush1.bf16.msra.mxu0 %v4217
    %4293 = vmatprep.subr.bf16.mxu0 0
    %4294 = vmatpush1.bf16.msra.mxu0 %v4218
    %4295 = vmatprep.subr.bf16.mxu0 0
    %4296 = vmatpush1.bf16.msra.mxu0 %v4219
    %4297 = vmatprep.subr.bf16.mxu0 0
    %4298 = vmatpush1.bf16.msra.mxu0 %v4220
    %4299 = vmatprep.subr.bf16.mxu0 0
    %4300 = vmatpush1.bf16.msra.mxu0 %v4221
    %4301 = vmatprep.subr.bf16.mxu0 0
    %4302 = vmatpush1.bf16.msra.mxu0 %v4222
    %4303 = vmatprep.mubr.bf16.mxu0 %v4006
    %4304 = vmatmul.mubr.bf16.gmra.mrb[0].mxu0 %v4005
    %v4305 = vpop.f32.mrb[0].mxu0
    %v4306 = vadd.f32 %v4077, %v4305
    %v4307 = vpop.f32.mrb[0].mxu0
    %v4308 = vpop.f32.mrb[0].mxu0
    %v4309 = vadd.f32 %v4077, %v4308
    %v4310 = vpop.f32.mrb[0].mxu0
    %4311 = vdwg.mxu0
    %4312 = vmatprep.subr.bf16.mxu0 0
    %4313 = vmatpush1.bf16.msra.mxu0 %v4223
    %4314 = vmatprep.subr.bf16.mxu0 0
    %4315 = vmatpush1.bf16.msra.mxu0 %v4224
    %4316 = vmatprep.subr.bf16.mxu0 0
    %4317 = vmatpush1.bf16.msra.mxu0 %v4225
    %4318 = vmatprep.subr.bf16.mxu0 0
    %4319 = vmatpush1.bf16.msra.mxu0 %v4226
    %4320 = vmatprep.subr.bf16.mxu0 0
    %4321 = vmatpush1.bf16.msra.mxu0 %v4227
    %4322 = vmatprep.subr.bf16.mxu0 0
    %4323 = vmatpush1.bf16.msra.mxu0 %v4228
    %4324 = vmatprep.subr.bf16.mxu0 0
    %4325 = vmatpush1.bf16.msra.mxu0 %v4229
    %4326 = vmatprep.subr.bf16.mxu0 0
    %4327 = vmatpush1.bf16.msra.mxu0 %v4230
    %4328 = vmatprep.subr.bf16.mxu0 0
    %4329 = vmatpush1.bf16.msra.mxu0 %v4231
    %4330 = vmatprep.subr.bf16.mxu0 0
    %4331 = vmatpush1.bf16.msra.mxu0 %v4232
    %4332 = vmatprep.subr.bf16.mxu0 0
    %4333 = vmatpush1.bf16.msra.mxu0 %v4233
    %4334 = vmatprep.subr.bf16.mxu0 0
    %4335 = vmatpush1.bf16.msra.mxu0 %v4234
    %4336 = vmatprep.subr.bf16.mxu0 0
    %4337 = vmatpush1.bf16.msra.mxu0 %v4235
    %4338 = vmatprep.subr.bf16.mxu0 0
    %4339 = vmatpush1.bf16.msra.mxu0 %v4236
    %4340 = vmatprep.subr.bf16.mxu0 0
    %4341 = vmatpush1.bf16.msra.mxu0 %v4237
    %4342 = vmatprep.subr.bf16.mxu0 0
    %4343 = vmatpush1.bf16.msra.mxu0 %v4238
    %4344 = vmatprep.mubr.bf16.mxu0 %v4008
    %4345 = vmatmul.mubr.bf16.gmra.mrb[0].mxu0 %v4007
    %v4346 = vpop.f32.mrb[0].mxu0
    %v4347 = vadd.f32 %v4306, %v4346
    %v4348 = vpop.f32.mrb[0].mxu0
    %v4349 = vpop.f32.mrb[0].mxu0
    %v4350 = vadd.f32 %v4309, %v4349
    %v4351 = vpop.f32.mrb[0].mxu0
    %4352 = vdwg.mxu0
    %4353 = vst [vmem:[#allocation11] sm:$0xff] %v4347
    %4354 = vst [vmem:[#allocation11 + $0x8] sm:$0xff] %v4350
    // Predicated region
    $region58: #{tpu_custom_call.1} parent=1 // pred_check
      _
    $region59: #{tpu_custom_call.1} parent=1 // pred_check_branch
      %4356 = sbr.rel (0) target = $region61
    $region60: #{tpu_custom_call.1} parent=1 // pred_region
      %s4358 = ssub.s32 256, 256
      %4359 = vsyncadd [#allocation4], %s4358
      %s4360 = sshll.u32 [#allocation11], 4
      %s4361 = int_to_ptr.vmem [resolvable:$true] %s4360
      %4366 = dma.vmem_to_hbm [thread:$0]  %s4361, 256, %s9, [#allocation4], 128, 128, 8
    $region61: #{tpu_custom_call.1} parent=1 // pred_fallthru
      _
    // Predicated region
    $region62: #{tpu_custom_call.1} parent=1 // pred_check
      _
    $region63: #{tpu_custom_call.1} parent=1 // pred_check_branch
      %4368 = sbr.rel (0) target = $region65
    $region64: #{tpu_custom_call.1} parent=1 // pred_region
      %4369 = dma.done [#allocation4], 256
    $region65: #{tpu_custom_call.1} parent=1 // pred_fallthru
      _
    %4370 = vsyncpa [#allocation3], 1
    %4371 = vsyncpa [#allocation6], 1
    %4372 = vsyncpa [#allocation9], 1
    %4373 = vsyncpa [#allocation4], 1

// kernel: tpu_custom_call.1
$region0: #{tpu_custom_call.1}
  #allocation0 [shape = 'u32[]', space=smem, size = 0x4, offset = 0x4, fixed_abs, tag = 'smem constant byte address 0x4 - core index']
  #allocation1 [shape = 'u32[144,128]{1,0:T(1,128)}', space=vmem, size = 0x12000, scoped, tag = 'internal scratch']
  %s0 = inlined_call_operand.hbm [shape: bf16[16,896], index: 0, kind: input, shape index: {}]
  %s1 = inlined_call_operand.hbm [shape: bf16[896,512], index: 1, kind: input, shape index: {}]
  %s2 = inlined_call_operand.vmem [shape: f32[1,512], index: 2, kind: input, shape index: {}]
  %s3 = inlined_call_operand.hbm [shape: bf16[512,512], index: 3, kind: input, shape index: {}]
  %s4 = inlined_call_operand.vmem [shape: f32[1,512], index: 4, kind: input, shape index: {}]
  %s5 = inlined_call_operand.hbm [shape: bf16[512,128], index: 5, kind: input, shape index: {}]
  %s6 = inlined_call_operand.vmem [shape: f32[1,128], index: 6, kind: input, shape index: {}]
  %s7 = inlined_call_operand.hbm [shape: bf16[512,512], index: 7, kind: input, shape index: {}]
  %s8 = inlined_call_operand.vmem [shape: f32[1,512], index: 8, kind: input, shape index: {}]
  %s9 = inlined_call_operand.hbm [shape: f32[16,128], index: 9, kind: output, shape index: {}]
  %s10 = sld [smem:[#allocation0]]
  $region66: #{tpu_custom_call.1} parent=0
    _
  %s12 = ssub.s32 1, %s10
  %s13 = scalar_select 0, %s12, %s10
  $region1: #{tpu_custom_call.1} parent=0
    #allocation2 [shape = 'u8[28672]{0}', space=vmem, size = 0x7000, scoped, tag = 'input window, operand 0, single buffered']
    #allocation3 [shape = 's32[1]{0}', space=sflag, size = 0x4, scoped, tag = 'scoped memory for tpu_custom_call.1']
    #allocation4 [shape = 's32[1]{0}', space=sflag, size = 0x4, scoped, tag = 'scoped memory for tpu_custom_call.1']
    #allocation5 [shape = 'u8[917504]{0}', space=vmem, size = 0xe0000, scoped, tag = 'input window, operand 1, single buffered']
    #allocation6 [shape = 's32[1]{0}', space=sflag, size = 0x4, scoped, tag = 'scoped memory for tpu_custom_call.1']
    #allocation7 [shape = 'u8[524288]{0}', space=vmem, size = 0x80000, scoped, tag = 'input window, operand 3, single buffered']
    #allocation8 [shape = 'u8[131072]{0}', space=vmem, size = 0x20000, scoped, tag = 'input window, operand 5, single buffered']
    #allocation9 [shape = 's32[1]{0}', space=sflag, size = 0x4, scoped, tag = 'scoped memory for tpu_custom_call.1']
    #allocation10 [shape = 'u8[524288]{0}', space=vmem, size = 0x80000, scoped, tag = 'input window, operand 7, single buffered']
    #allocation11 [shape = 'u8[8192]{0}', space=vmem, size = 0x2000, scoped, tag = 'output window, operand 0, single buffered']
    %14 = vsyncpa [#allocation3], 0
    %15 = vsyncpa [#allocation6], 0
    %16 = vsyncpa [#allocation9], 0
    %17 = vsyncpa [#allocation4], 0
    // Predicated region
    $region2: #{tpu_custom_call.1} parent=1 // pred_check
      _
    $region3: #{tpu_custom_call.1} parent=1 // pred_check_branch
      %19 = sbr.rel (0) target = $region5
    $region4: #{tpu_custom_call.1} parent=1 // pred_region
      %s21 = ssub.s32 896, 896
      %22 = vsyncadd [#allocation3], %s21
      %s23 = sshll.u32 [#allocation2], 4
      %s24 = int_to_ptr.vmem [resolvable:$true] %s23
      %29 = dma.hbm_to_vmem [thread:$0]  %s0, 896, %s24, [#allocation3], 448, 448, 28
    $region5: #{tpu_custom_call.1} parent=1 // pred_fallthru
      _
    // Predicated region
    $region6: #{tpu_custom_call.1} parent=1 // pred_check
      _
    $region7: #{tpu_custom_call.1} parent=1 // pred_check_branch
      %31 = sbr.rel (0) target = $region9
    $region8: #{tpu_custom_call.1} parent=1 // pred_region
      %s33 = ssub.s32 28672, 28672
      %34 = vsyncadd [#allocation6], %s33
      %s35 = sshll.u32 [#allocation5], 4
      %s36 = int_to_ptr.vmem [resolvable:$true] %s35
      %41 = dma.hbm_to_vmem [thread:$0]  %s1, 28672, %s36, [#allocation6], 256, 256, 16
    $region9: #{tpu_custom_call.1} parent=1 // pred_fallthru
      _
    // Predicated region
    $region10: #{tpu_custom_call.1} parent=1 // pred_check
      _
    $region11: #{tpu_custom_call.1} parent=1 // pred_check_branch
      %43 = sbr.rel (0) target = $region13
    $region12: #{tpu_custom_call.1} parent=1 // pred_region
      _
    $region13: #{tpu_custom_call.1} parent=1 // pred_fallthru
      _
    // Predicated region
    $region14: #{tpu_custom_call.1} parent=1 // pred_check
      _
    $region15: #{tpu_custom_call.1} parent=1 // pred_check_branch
      %45 = sbr.rel (0) target = $region17
    $region16: #{tpu_custom_call.1} parent=1 // pred_region
      %s47 = ssub.s32 16384, 16384
      %48 = vsyncadd [#allocation6], %s47
      %s49 = sshll.u32 [#allocation7], 4
      %s50 = int_to_ptr.vmem [resolvable:$true] %s49
      %55 = dma.hbm_to_vmem [thread:$0]  %s3, 16384, %s50, [#allocation6], 256, 256, 16
    $region17: #{tpu_custom_call.1} parent=1 // pred_fallthru
      _
    // Predicated region
    $region18: #{tpu_custom_call.1} parent=1 // pred_check
      _
    $region19: #{tpu_custom_call.1} parent=1 // pred_check_branch
      %57 = sbr.rel (0) target = $region21
    $region20: #{tpu_custom_call.1} parent=1 // pred_region
      _
    $region21: #{tpu_custom_call.1} parent=1 // pred_fallthru
      _
    // Predicated region
    $region22: #{tpu_custom_call.1} parent=1 // pred_check
      _
    $region23: #{tpu_custom_call.1} parent=1 // pred_check_branch
      %59 = sbr.rel (0) target = $region25
    $region24: #{tpu_custom_call.1} parent=1 // pred_region
      %s61 = ssub.s32 4096, 4096
      %62 = vsyncadd [#allocation9], %s61
      %s63 = sshll.u32 [#allocation8], 4
      %s64 = int_to_ptr.vmem [resolvable:$true] %s63
      %69 = dma.hbm_to_vmem [thread:$0]  %s5, 4096, %s64, [#allocation9], 64, 64, 4
    $region25: #{tpu_custom_call.1} parent=1 // pred_fallthru
      _
    // Predicated region
    $region26: #{tpu_custom_call.1} parent=1 // pred_check
      _
    $region27: #{tpu_custom_call.1} parent=1 // pred_check_branch
      %71 = sbr.rel (0) target = $region29
    $region28: #{tpu_custom_call.1} parent=1 // pred_region
      _
    $region29: #{tpu_custom_call.1} parent=1 // pred_fallthru
      _
    // Predicated region
    $region30: #{tpu_custom_call.1} parent=1 // pred_check
      _
    $region31: #{tpu_custom_call.1} parent=1 // pred_check_branch
      %73 = sbr.rel (0) target = $region33
    $region32: #{tpu_custom_call.1} parent=1 // pred_region
      %s75 = ssub.s32 16384, 16384
      %76 = vsyncadd [#allocation9], %s75
      %s77 = sshll.u32 [#allocation10], 4
      %s78 = int_to_ptr.vmem [resolvable:$true] %s77
      %83 = dma.hbm_to_vmem [thread:$0]  %s7, 16384, %s78, [#allocation9], 256, 256, 16
    $region33: #{tpu_custom_call.1} parent=1 // pred_fallthru
      _
    // Predicated region
    $region34: #{tpu_custom_call.1} parent=1 // pred_check
      _
    $region35: #{tpu_custom_call.1} parent=1 // pred_check_branch
      %85 = sbr.rel (0) target = $region37
    $region36: #{tpu_custom_call.1} parent=1 // pred_region
      _
    $region37: #{tpu_custom_call.1} parent=1 // pred_fallthru
      _
    // Predicated region
    $region38: #{tpu_custom_call.1} parent=1 // pred_check
      _
    $region39: #{tpu_custom_call.1} parent=1 // pred_check_branch
      %87 = sbr.rel (0) target = $region41
    $region40: #{tpu_custom_call.1} parent=1 // pred_region
      %88 = dma.done [#allocation3], 896
    $region41: #{tpu_custom_call.1} parent=1 // pred_fallthru
      _
    // Predicated region
    $region42: #{tpu_custom_call.1} parent=1 // pred_check
      _
    $region43: #{tpu_custom_call.1} parent=1 // pred_check_branch
      %90 = sbr.rel (0) target = $region45
    $region44: #{tpu_custom_call.1} parent=1 // pred_region
      %91 = dma.done [#allocation6], 28672
    $region45: #{tpu_custom_call.1} parent=1 // pred_fallthru
      _
    // Predicated region
    $region46: #{tpu_custom_call.1} parent=1 // pred_check
      _
    $region47: #{tpu_custom_call.1} parent=1 // pred_check_branch
      %93 = sbr.rel (0) target = $region49
    $region48: #{tpu_custom_call.1} parent=1 // pred_region
      %94 = dma.done [#allocation6], 16384
    $region49: #{tpu_custom_call.1} parent=1 // pred_fallthru
      _
    // Predicated region
    $region50: #{tpu_custom_call.1} parent=1 // pred_check
      _
    $region51: #{tpu_custom_call.1} parent=1 // pred_check_branch
      %96 = sbr.rel (0) target = $region53
    $region52: #{tpu_custom_call.1} parent=1 // pred_region
      %97 = dma.done [#allocation9], 4096
    $region53: #{tpu_custom_call.1} parent=1 // pred_fallthru
      _
    // Predicated region
    $region54: #{tpu_custom_call.1} parent=1 // pred_check
      _
    $region55: #{tpu_custom_call.1} parent=1 // pred_check_branch
      %99 = sbr.rel (0) target = $region57
    $region56: #{tpu_custom_call.1} parent=1 // pred_region
      %100 = dma.done [#allocation9], 16384
    $region57: #{tpu_custom_call.1} parent=1 // pred_fallthru
      _
    %v102 = vld [vmem:[#allocation2] sm:$0xff]
    %v103 = vld [vmem:[#allocation2 + $0x8] sm:$0xff]
    %v104 = vld [vmem:[#allocation2 + $0x10] sm:$0xff]
    %v105 = vld [vmem:[#allocation2 + $0x18] sm:$0xf]
    %v106 = vld [vmem:[#allocation2 + $0x1c] sm:$0xff]
    %v107 = vld [vmem:[#allocation2 + $0x24] sm:$0xff]
    %v108 = vld [vmem:[#allocation2 + $0x2c] sm:$0xff]
    %v109 = vld [vmem:[#allocation2 + $0x34] sm:$0xf]
    %v110 = vld [vmem:[%s2] sm:$0xf]
    %v111 = vld [vmem:[%s4] sm:$0xf]
    %v112 = vld [vmem:[%s6] sm:$0x1]
    %v113 = vld [vmem:[%s8] sm:$0xf]
    %v114 = vld [vmem:[#allocation5] sm:$0xff]
    %v115 = vld [vmem:[#allocation5 + $0x8] sm:$0xff]
    %v116 = vld [vmem:[#allocation5 + $0x10] sm:$0xff]
    %v117 = vld [vmem:[#allocation5 + $0x18] sm:$0xff]
    %v118 = vld [vmem:[#allocation5 + $0x20] sm:$0xff]
    %v119 = vld [vmem:[#allocation5 + $0x28] sm:$0xff]
    %v120 = vld [vmem:[#allocation5 + $0x30] sm:$0xff]
    %v121 = vld [vmem:[#allocation5 + $0x38] sm:$0xff]
    %v122 = vld [vmem:[#allocation5 + $0x40] sm:$0xff]
    %v123 = vld [vmem:[#allocation5 + $0x48] sm:$0xff]
    %v124 = vld [vmem:[#allocation5 + $0x50] sm:$0xff]
    %v125 = vld [vmem:[#allocation5 + $0x58] sm:$0xff]
    %v126 = vld [vmem:[#allocation5 + $0x60] sm:$0xff]
    %v127 = vld [vmem:[#allocation5 + $0x68] sm:$0xff]
    %v128 = vld [vmem:[#allocation5 + $0x70] sm:$0xff]
    %v129 = vld [vmem:[#allocation5 + $0x78] sm:$0xff]
    %v130 = vld [vmem:[#allocation5 + $0x80] sm:$0xff]
    %v131 = vld [vmem:[#allocation5 + $0x88] sm:$0xff]
    %v132 = vld [vmem:[#allocation5 + $0x90] sm:$0xff]
    %v133 = vld [vmem:[#allocation5 + $0x98] sm:$0xff]
    %v134 = vld [vmem:[#allocation5 + $0xa0] sm:$0xff]
    %v135 = vld [vmem:[#allocation5 + $0xa8] sm:$0xff]
    %v136 = vld [vmem:[#allocation5 + $0xb0] sm:$0xff]
    %v137 = vld [vmem:[#allocation5 + $0xb8] sm:$0xff]
    %v138 = vld [vmem:[#allocation5 + $0xc0] sm:$0xff]
    %v139 = vld [vmem:[#allocation5 + $0xc8] sm:$0xff]
    %v140 = vld [vmem:[#allocation5 + $0xd0] sm:$0xff]
    %v141 = vld [vmem:[#allocation5 + $0xd8] sm:$0xff]
    %v142 = vld [vmem:[#allocation5 + $0xe0] sm:$0xff]
    %v143 = vld [vmem:[#allocation5 + $0xe8] sm:$0xff]
    %v144 = vld [vmem:[#allocation5 + $0xf0] sm:$0xff]
    %v145 = vld [vmem:[#allocation5 + $0xf8] sm:$0xff]
    %v146 = vld [vmem:[#allocation5 + $0x100] sm:$0xff]
    %v147 = vld [vmem:[#allocation5 + $0x108] sm:$0xff]
    %v148 = vld [vmem:[#allocation5 + $0x110] sm:$0xff]
    %v149 = vld [vmem:[#allocation5 + $0x118] sm:$0xff]
    %v150 = vld [vmem:[#allocation5 + $0x120] sm:$0xff]
    %v151 = vld [vmem:[#allocation5 + $0x128] sm:$0xff]
    %v152 = vld [vmem:[#allocation5 + $0x130] sm:$0xff]
    %v153 = vld [vmem:[#allocation5 + $0x138] sm:$0xff]
    %v154 = vld [vmem:[#allocation5 + $0x140] sm:$0xff]
    %v155 = vld [vmem:[#allocation5 + $0x148] sm:$0xff]
    %v156 = vld [vmem:[#allocation5 + $0x150] sm:$0xff]
    %v157 = vld [vmem:[#allocation5 + $0x158] sm:$0xff]
    %v158 = vld [vmem:[#allocation5 + $0x160] sm:$0xff]
    %v159 = vld [vmem:[#allocation5 + $0x168] sm:$0xff]
    %v160 = vld [vmem:[#allocation5 + $0x170] sm:$0xff]
    %v161 = vld [vmem:[#allocation5 + $0x178] sm:$0xff]
    %v162 = vld [vmem:[#allocation5 + $0x180] sm:$0xff]
    %v163 = vld [vmem:[#allocation5 + $0x188] sm:$0xff]
    %v164 = vld [vmem:[#allocation5 + $0x190] sm:$0xff]
    %v165 = vld [vmem:[#allocation5 + $0x198] sm:$0xff]
    %v166 = vld [vmem:[#allocation5 + $0x1a0] sm:$0xff]
    %v167 = vld [vmem:[#allocation5 + $0x1a8] sm:$0xff]
    %v168 = vld [vmem:[#allocation5 + $0x1b0] sm:$0xff]
    %v169 = vld [vmem:[#allocation5 + $0x1b8] sm:$0xff]
    %v170 = vld [vmem:[#allocation5 + $0x1c0] sm:$0xff]
    %v171 = vld [vmem:[#allocation5 + $0x1c8] sm:$0xff]
    %v172 = vld [vmem:[#allocation5 + $0x1d0] sm:$0xff]
    %v173 = vld [vmem:[#allocation5 + $0x1d8] sm:$0xff]
    %v174 = vld [vmem:[#allocation5 + $0x1e0] sm:$0xff]
    %v175 = vld [vmem:[#allocation5 + $0x1e8] sm:$0xff]
    %v176 = vld [vmem:[#allocation5 + $0x1f0] sm:$0xff]
    %v177 = vld [vmem:[#allocation5 + $0x1f8] sm:$0xff]
    %v178 = vld [vmem:[#allocation5 + $0x200] sm:$0xff]
    %v179 = vld [vmem:[#allocation5 + $0x208] sm:$0xff]
    %v180 = vld [vmem:[#allocation5 + $0x210] sm:$0xff]
    %v181 = vld [vmem:[#allocation5 + $0x218] sm:$0xff]
    %v182 = vld [vmem:[#allocation5 + $0x220] sm:$0xff]
    %v183 = vld [vmem:[#allocation5 + $0x228] sm:$0xff]
    %v184 = vld [vmem:[#allocation5 + $0x230] sm:$0xff]
    %v185 = vld [vmem:[#allocation5 + $0x238] sm:$0xff]
    %v186 = vld [vmem:[#allocation5 + $0x240] sm:$0xff]
    %v187 = vld [vmem:[#allocation5 + $0x248] sm:$0xff]
    %v188 = vld [vmem:[#allocation5 + $0x250] sm:$0xff]
    %v189 = vld [vmem:[#allocation5 + $0x258] sm:$0xff]
    %v190 = vld [vmem:[#allocation5 + $0x260] sm:$0xff]
    %v191 = vld [vmem:[#allocation5 + $0x268] sm:$0xff]
    %v192 = vld [vmem:[#allocation5 + $0x270] sm:$0xff]
    %v193 = vld [vmem:[#allocation5 + $0x278] sm:$0xff]
    %v194 = vld [vmem:[#allocation5 + $0x280] sm:$0xff]
    %v195 = vld [vmem:[#allocation5 + $0x288] sm:$0xff]
    %v196 = vld [vmem:[#allocation5 + $0x290] sm:$0xff]
    %v197 = vld [vmem:[#allocation5 + $0x298] sm:$0xff]
    %v198 = vld [vmem:[#allocation5 + $0x2a0] sm:$0xff]
    %v199 = vld [vmem:[#allocation5 + $0x2a8] sm:$0xff]
    %v200 = vld [vmem:[#allocation5 + $0x2b0] sm:$0xff]
    %v201 = vld [vmem:[#allocation5 + $0x2b8] sm:$0xff]
    %v202 = vld [vmem:[#allocation5 + $0x2c0] sm:$0xff]
    %v203 = vld [vmem:[#allocation5 + $0x2c8] sm:$0xff]
    %v204 = vld [vmem:[#allocation5 + $0x2d0] sm:$0xff]
    %v205 = vld [vmem:[#allocation5 + $0x2d8] sm:$0xff]
    %v206 = vld [vmem:[#allocation5 + $0x2e0] sm:$0xff]
    %v207 = vld [vmem:[#allocation5 + $0x2e8] sm:$0xff]
    %v208 = vld [vmem:[#allocation5 + $0x2f0] sm:$0xff]
    %v209 = vld [vmem:[#allocation5 + $0x2f8] sm:$0xff]
    %v210 = vld [vmem:[#allocation5 + $0x300] sm:$0xff]
    %v211 = vld [vmem:[#allocation5 + $0x308] sm:$0xff]
    %v212 = vld [vmem:[#allocation5 + $0x310] sm:$0xff]
    %v213 = vld [vmem:[#allocation5 + $0x318] sm:$0xff]
    %v214 = vld [vmem:[#allocation5 + $0x320] sm:$0xff]
    %v215 = vld [vmem:[#allocation5 + $0x328] sm:$0xff]
    %v216 = vld [vmem:[#allocation5 + $0x330] sm:$0xff]
    %v217 = vld [vmem:[#allocation5 + $0x338] sm:$0xff]
    %v218 = vld [vmem:[#allocation5 + $0x340] sm:$0xff]
    %v219 = vld [vmem:[#allocation5 + $0x348] sm:$0xff]
    %v220 = vld [vmem:[#allocation5 + $0x350] sm:$0xff]
    %v221 = vld [vmem:[#allocation5 + $0x358] sm:$0xff]
    %v222 = vld [vmem:[#allocation5 + $0x360] sm:$0xff]
    %v223 = vld [vmem:[#allocation5 + $0x368] sm:$0xff]
    %v224 = vld [vmem:[#allocation5 + $0x370] sm:$0xff]
    %v225 = vld [vmem:[#allocation5 + $0x378] sm:$0xff]
    %v226 = vld [vmem:[#allocation5 + $0x380] sm:$0xff]
    %v227 = vld [vmem:[#allocation5 + $0x388] sm:$0xff]
    %v228 = vld [vmem:[#allocation5 + $0x390] sm:$0xff]
    %v229 = vld [vmem:[#allocation5 + $0x398] sm:$0xff]
    %v230 = vld [vmem:[#allocation5 + $0x3a0] sm:$0xff]
    %v231 = vld [vmem:[#allocation5 + $0x3a8] sm:$0xff]
    %v232 = vld [vmem:[#allocation5 + $0x3b0] sm:$0xff]
    %v233 = vld [vmem:[#allocation5 + $0x3b8] sm:$0xff]
    %v234 = vld [vmem:[#allocation5 + $0x3c0] sm:$0xff]
    %v235 = vld [vmem:[#allocation5 + $0x3c8] sm:$0xff]
    %v236 = vld [vmem:[#allocation5 + $0x3d0] sm:$0xff]
    %v237 = vld [vmem:[#allocation5 + $0x3d8] sm:$0xff]
    %v238 = vld [vmem:[#allocation5 + $0x3e0] sm:$0xff]
    %v239 = vld [vmem:[#allocation5 + $0x3e8] sm:$0xff]
    %v240 = vld [vmem:[#allocation5 + $0x3f0] sm:$0xff]
    %v241 = vld [vmem:[#allocation5 + $0x3f8] sm:$0xff]
    %v242 = vld [vmem:[#allocation5 + $0x400] sm:$0xff]
    %v243 = vld [vmem:[#allocation5 + $0x408] sm:$0xff]
    %v244 = vld [vmem:[#allocation5 + $0x410] sm:$0xff]
    %v245 = vld [vmem:[#allocation5 + $0x418] sm:$0xff]
    %v246 = vld [vmem:[#allocation5 + $0x420] sm:$0xff]
    %v247 = vld [vmem:[#allocation5 + $0x428] sm:$0xff]
    %v248 = vld [vmem:[#allocation5 + $0x430] sm:$0xff]
    %v249 = vld [vmem:[#allocation5 + $0x438] sm:$0xff]
    %v250 = vld [vmem:[#allocation5 + $0x440] sm:$0xff]
    %v251 = vld [vmem:[#allocation5 + $0x448] sm:$0xff]
    %v252 = vld [vmem:[#allocation5 + $0x450] sm:$0xff]
    %v253 = vld [vmem:[#allocation5 + $0x458] sm:$0xff]
    %v254 = vld [vmem:[#allocation5 + $0x460] sm:$0xff]
    %v255 = vld [vmem:[#allocation5 + $0x468] sm:$0xff]
    %v256 = vld [vmem:[#allocation5 + $0x470] sm:$0xff]
    %v257 = vld [vmem:[#allocation5 + $0x478] sm:$0xff]
    %v258 = vld [vmem:[#allocation5 + $0x480] sm:$0xff]
    %v259 = vld [vmem:[#allocation5 + $0x488] sm:$0xff]
    %v260 = vld [vmem:[#allocation5 + $0x490] sm:$0xff]
    %v261 = vld [vmem:[#allocation5 + $0x498] sm:$0xff]
    %v262 = vld [vmem:[#allocation5 + $0x4a0] sm:$0xff]
    %v263 = vld [vmem:[#allocation5 + $0x4a8] sm:$0xff]
    %v264 = vld [vmem:[#allocation5 + $0x4b0] sm:$0xff]
    %v265 = vld [vmem:[#allocation5 + $0x4b8] sm:$0xff]
    %v266 = vld [vmem:[#allocation5 + $0x4c0] sm:$0xff]
    %v267 = vld [vmem:[#allocation5 + $0x4c8] sm:$0xff]
    %v268 = vld [vmem:[#allocation5 + $0x4d0] sm:$0xff]
    %v269 = vld [vmem:[#allocation5 + $0x4d8] sm:$0xff]
    %v270 = vld [vmem:[#allocation5 + $0x4e0] sm:$0xff]
    %v271 = vld [vmem:[#allocation5 + $0x4e8] sm:$0xff]
    %v272 = vld [vmem:[#allocation5 + $0x4f0] sm:$0xff]
    %v273 = vld [vmem:[#allocation5 + $0x4f8] sm:$0xff]
    %v274 = vld [vmem:[#allocation5 + $0x500] sm:$0xff]
    %v275 = vld [vmem:[#allocation5 + $0x508] sm:$0xff]
    %v276 = vld [vmem:[#allocation5 + $0x510] sm:$0xff]
    %v277 = vld [vmem:[#allocation5 + $0x518] sm:$0xff]
    %v278 = vld [vmem:[#allocation5 + $0x520] sm:$0xff]
    %v279 = vld [vmem:[#allocation5 + $0x528] sm:$0xff]
    %v280 = vld [vmem:[#allocation5 + $0x530] sm:$0xff]
    %v281 = vld [vmem:[#allocation5 + $0x538] sm:$0xff]
    %v282 = vld [vmem:[#allocation5 + $0x540] sm:$0xff]
    %v283 = vld [vmem:[#allocation5 + $0x548] sm:$0xff]
    %v284 = vld [vmem:[#allocation5 + $0x550] sm:$0xff]
    %v285 = vld [vmem:[#allocation5 + $0x558] sm:$0xff]
    %v286 = vld [vmem:[#allocation5 + $0x560] sm:$0xff]
    %v287 = vld [vmem:[#allocation5 + $0x568] sm:$0xff]
    %v288 = vld [vmem:[#allocation5 + $0x570] sm:$0xff]
    %v289 = vld [vmem:[#allocation5 + $0x578] sm:$0xff]
    %v290 = vld [vmem:[#allocation5 + $0x580] sm:$0xff]
    %v291 = vld [vmem:[#allocation5 + $0x588] sm:$0xff]
    %v292 = vld [vmem:[#allocation5 + $0x590] sm:$0xff]
    %v293 = vld [vmem:[#allocation5 + $0x598] sm:$0xff]
    %v294 = vld [vmem:[#allocation5 + $0x5a0] sm:$0xff]
    %v295 = vld [vmem:[#allocation5 + $0x5a8] sm:$0xff]
    %v296 = vld [vmem:[#allocation5 + $0x5b0] sm:$0xff]
    %v297 = vld [vmem:[#allocation5 + $0x5b8] sm:$0xff]
    %v298 = vld [vmem:[#allocation5 + $0x5c0] sm:$0xff]
    %v299 = vld [vmem:[#allocation5 + $0x5c8] sm:$0xff]
    %v300 = vld [vmem:[#allocation5 + $0x5d0] sm:$0xff]
    %v301 = vld [vmem:[#allocation5 + $0x5d8] sm:$0xff]
    %v302 = vld [vmem:[#allocation5 + $0x5e0] sm:$0xff]
    %v303 = vld [vmem:[#allocation5 + $0x5e8] sm:$0xff]
    %v304 = vld [vmem:[#allocation5 + $0x5f0] sm:$0xff]
    %v305 = vld [vmem:[#allocation5 + $0x5f8] sm:$0xff]
    %v306 = vld [vmem:[#allocation5 + $0x600] sm:$0xff]
    %v307 = vld [vmem:[#allocation5 + $0x608] sm:$0xff]
    %v308 = vld [vmem:[#allocation5 + $0x610] sm:$0xff]
    %v309 = vld [vmem:[#allocation5 + $0x618] sm:$0xff]
    %v310 = vld [vmem:[#allocation5 + $0x620] sm:$0xff]
    %v311 = vld [vmem:[#allocation5 + $0x628] sm:$0xff]
    %v312 = vld [vmem:[#allocation5 + $0x630] sm:$0xff]
    %v313 = vld [vmem:[#allocation5 + $0x638] sm:$0xff]
    %v314 = vld [vmem:[#allocation5 + $0x640] sm:$0xff]
    %v315 = vld [vmem:[#allocation5 + $0x648] sm:$0xff]
    %v316 = vld [vmem:[#allocation5 + $0x650] sm:$0xff]
    %v317 = vld [vmem:[#allocation5 + $0x658] sm:$0xff]
    %v318 = vld [vmem:[#allocation5 + $0x660] sm:$0xff]
    %v319 = vld [vmem:[#allocation5 + $0x668] sm:$0xff]
    %v320 = vld [vmem:[#allocation5 + $0x670] sm:$0xff]
    %v321 = vld [vmem:[#allocation5 + $0x678] sm:$0xff]
    %v322 = vld [vmem:[#allocation5 + $0x680] sm:$0xff]
    %v323 = vld [vmem:[#allocation5 + $0x688] sm:$0xff]
    %v324 = vld [vmem:[#allocation5 + $0x690] sm:$0xff]
    %v325 = vld [vmem:[#allocation5 + $0x698] sm:$0xff]
    %v326 = vld [vmem:[#allocation5 + $0x6a0] sm:$0xff]
    %v327 = vld [vmem:[#allocation5 + $0x6a8] sm:$0xff]
    %v328 = vld [vmem:[#allocation5 + $0x6b0] sm:$0xff]
    %v329 = vld [vmem:[#allocation5 + $0x6b8] sm:$0xff]
    %v330 = vld [vmem:[#allocation5 + $0x6c0] sm:$0xff]
    %v331 = vld [vmem:[#allocation5 + $0x6c8] sm:$0xff]
    %v332 = vld [vmem:[#allocation5 + $0x6d0] sm:$0xff]
    %v333 = vld [vmem:[#allocation5 + $0x6d8] sm:$0xff]
    %v334 = vld [vmem:[#allocation5 + $0x6e0] sm:$0xff]
    %v335 = vld [vmem:[#allocation5 + $0x6e8] sm:$0xff]
    %v336 = vld [vmem:[#allocation5 + $0x6f0] sm:$0xff]
    %v337 = vld [vmem:[#allocation5 + $0x6f8] sm:$0xff]
    %v339 = vlaneseq
    %v340 = vshrl.u32 %v339, 7
    %v341 = vsub.s32 0, %v340
    %v342 = vrot.slane %v110, %v341
    %v343 = vlaneseq
    %v344 = vshrl.u32 %v343, 7
    %v345 = vsub.s32 1, %v344
    %v346 = vrot.slane %v110, %v345
    %v347 = vlaneseq
    %v348 = vshrl.u32 %v347, 7
    %v349 = vsub.s32 2, %v348
    %v350 = vrot.slane %v110, %v349
    %v351 = vlaneseq
    %v352 = vshrl.u32 %v351, 7
    %v353 = vsub.s32 3, %v352
    %v354 = vrot.slane %v110, %v353
    %v367 = vunpack.c.l.b16 %v102
    %v368 = vunpack.c.h.b16 %v102
    %v369 = vunpack.c.l.b16 %v103
    %v370 = vunpack.c.h.b16 %v103
    %v371 = vunpack.c.l.b16 %v104
    %v372 = vunpack.c.h.b16 %v104
    %v373 = vunpack.c.l.b16 %v105
    %v374 = vunpack.c.l.b16 %v106
    %v375 = vunpack.c.h.b16 %v106
    %v376 = vunpack.c.l.b16 %v107
    %v377 = vunpack.c.h.b16 %v107
    %v378 = vunpack.c.l.b16 %v108
    %v379 = vunpack.c.h.b16 %v108
    %v380 = vunpack.c.l.b16 %v109
    %v381 = vpack.c.b16 %v374, %v367
    %v382 = vpack.c.b16 %v375, %v368
    %v383 = vpack.c.b16 %v376, %v369
    %v384 = vpack.c.b16 %v377, %v370
    %v385 = vpack.c.b16 %v378, %v371
    %v386 = vpack.c.b16 %v379, %v372
    %v387 = vpack.c.b16 %v380, %v373
    %v619 = vunpack.c.l.b16 %v114
    %v620 = vunpack.c.h.b16 %v114
    %v621 = vunpack.c.l.b16 %v115
    %v622 = vunpack.c.h.b16 %v115
    %v623 = vunpack.c.l.b16 %v116
    %v624 = vunpack.c.h.b16 %v116
    %v625 = vunpack.c.l.b16 %v117
    %v626 = vunpack.c.h.b16 %v117
    %v627 = vunpack.c.l.b16 %v118
    %v628 = vunpack.c.h.b16 %v118
    %v629 = vunpack.c.l.b16 %v119
    %v630 = vunpack.c.h.b16 %v119
    %v631 = vunpack.c.l.b16 %v120
    %v632 = vunpack.c.h.b16 %v120
    %v633 = vunpack.c.l.b16 %v121
    %v634 = vunpack.c.h.b16 %v121
    %v635 = vunpack.c.l.b16 %v122
    %v636 = vunpack.c.h.b16 %v122
    %v637 = vunpack.c.l.b16 %v123
    %v638 = vunpack.c.h.b16 %v123
    %v639 = vunpack.c.l.b16 %v124
    %v640 = vunpack.c.h.b16 %v124
    %v641 = vunpack.c.l.b16 %v125
    %v642 = vunpack.c.h.b16 %v125
    %v643 = vunpack.c.l.b16 %v126
    %v644 = vunpack.c.h.b16 %v126
    %v645 = vunpack.c.l.b16 %v127
    %v646 = vunpack.c.h.b16 %v127
    %v647 = vunpack.c.l.b16 %v128
    %v648 = vunpack.c.h.b16 %v128
    %v649 = vunpack.c.l.b16 %v129
    %v650 = vunpack.c.h.b16 %v129
    %v651 = vunpack.c.l.b16 %v130
    %v652 = vunpack.c.h.b16 %v130
    %v653 = vunpack.c.l.b16 %v131
    %v654 = vunpack.c.h.b16 %v131
    %v655 = vunpack.c.l.b16 %v132
    %v656 = vunpack.c.h.b16 %v132
    %v657 = vunpack.c.l.b16 %v133
    %v658 = vunpack.c.h.b16 %v133
    %v659 = vunpack.c.l.b16 %v134
    %v660 = vunpack.c.h.b16 %v134
    %v661 = vunpack.c.l.b16 %v135
    %v662 = vunpack.c.h.b16 %v135
    %v663 = vunpack.c.l.b16 %v136
    %v664 = vunpack.c.h.b16 %v136
    %v665 = vunpack.c.l.b16 %v137
    %v666 = vunpack.c.h.b16 %v137
    %v667 = vunpack.c.l.b16 %v138
    %v668 = vunpack.c.h.b16 %v138
    %v669 = vunpack.c.l.b16 %v139
    %v670 = vunpack.c.h.b16 %v139
    %v671 = vunpack.c.l.b16 %v140
    %v672 = vunpack.c.h.b16 %v140
    %v673 = vunpack.c.l.b16 %v141
    %v674 = vunpack.c.h.b16 %v141
    %v675 = vunpack.c.l.b16 %v142
    %v676 = vunpack.c.h.b16 %v142
    %v677 = vunpack.c.l.b16 %v143
    %v678 = vunpack.c.h.b16 %v143
    %v679 = vunpack.c.l.b16 %v144
    %v680 = vunpack.c.h.b16 %v144
    %v681 = vunpack.c.l.b16 %v145
    %v682 = vunpack.c.h.b16 %v145
    %v683 = vunpack.c.l.b16 %v146
    %v684 = vunpack.c.h.b16 %v146
    %v685 = vunpack.c.l.b16 %v147
    %v686 = vunpack.c.h.b16 %v147
    %v687 = vunpack.c.l.b16 %v148
    %v688 = vunpack.c.h.b16 %v148
    %v689 = vunpack.c.l.b16 %v149
    %v690 = vunpack.c.h.b16 %v149
    %v691 = vunpack.c.l.b16 %v150
    %v692 = vunpack.c.h.b16 %v150
    %v693 = vunpack.c.l.b16 %v151
    %v694 = vunpack.c.h.b16 %v151
    %v695 = vunpack.c.l.b16 %v152
    %v696 = vunpack.c.h.b16 %v152
    %v697 = vunpack.c.l.b16 %v153
    %v698 = vunpack.c.h.b16 %v153
    %v699 = vunpack.c.l.b16 %v154
    %v700 = vunpack.c.h.b16 %v154
    %v701 = vunpack.c.l.b16 %v155
    %v702 = vunpack.c.h.b16 %v155
    %v703 = vunpack.c.l.b16 %v156
    %v704 = vunpack.c.h.b16 %v156
    %v705 = vunpack.c.l.b16 %v157
    %v706 = vunpack.c.h.b16 %v157
    %v707 = vunpack.c.l.b16 %v158
    %v708 = vunpack.c.h.b16 %v158
    %v709 = vunpack.c.l.b16 %v159
    %v710 = vunpack.c.h.b16 %v159
    %v711 = vunpack.c.l.b16 %v160
    %v712 = vunpack.c.h.b16 %v160
    %v713 = vunpack.c.l.b16 %v161
    %v714 = vunpack.c.h.b16 %v161
    %v715 = vunpack.c.l.b16 %v162
    %v716 = vunpack.c.h.b16 %v162
    %v717 = vunpack.c.l.b16 %v163
    %v718 = vunpack.c.h.b16 %v163
    %v719 = vunpack.c.l.b16 %v164
    %v720 = vunpack.c.h.b16 %v164
    %v721 = vunpack.c.l.b16 %v165
    %v722 = vunpack.c.h.b16 %v165
    %v723 = vunpack.c.l.b16 %v166
    %v724 = vunpack.c.h.b16 %v166
    %v725 = vunpack.c.l.b16 %v167
    %v726 = vunpack.c.h.b16 %v167
    %v727 = vunpack.c.l.b16 %v168
    %v728 = vunpack.c.h.b16 %v168
    %v729 = vunpack.c.l.b16 %v169
    %v730 = vunpack.c.h.b16 %v169
    %v731 = vunpack.c.l.b16 %v170
    %v732 = vunpack.c.h.b16 %v170
    %v733 = vunpack.c.l.b16 %v171
    %v734 = vunpack.c.h.b16 %v171
    %v735 = vunpack.c.l.b16 %v172
    %v736 = vunpack.c.h.b16 %v172
    %v737 = vunpack.c.l.b16 %v173
    %v738 = vunpack.c.h.b16 %v173
    %v739 = vunpack.c.l.b16 %v174
    %v740 = vunpack.c.h.b16 %v174
    %v741 = vunpack.c.l.b16 %v175
    %v742 = vunpack.c.h.b16 %v175
    %v743 = vunpack.c.l.b16 %v176
    %v744 = vunpack.c.h.b16 %v176
    %v745 = vunpack.c.l.b16 %v177
    %v746 = vunpack.c.h.b16 %v177
    %v747 = vunpack.c.l.b16 %v178
    %v748 = vunpack.c.h.b16 %v178
    %v749 = vunpack.c.l.b16 %v179
    %v750 = vunpack.c.h.b16 %v179
    %v751 = vunpack.c.l.b16 %v180
    %v752 = vunpack.c.h.b16 %v180
    %v753 = vunpack.c.l.b16 %v181
    %v754 = vunpack.c.h.b16 %v181
    %v755 = vunpack.c.l.b16 %v182
    %v756 = vunpack.c.h.b16 %v182
    %v757 = vunpack.c.l.b16 %v183
    %v758 = vunpack.c.h.b16 %v183
    %v759 = vunpack.c.l.b16 %v184
    %v760 = vunpack.c.h.b16 %v184
    %v761 = vunpack.c.l.b16 %v185
    %v762 = vunpack.c.h.b16 %v185
    %v763 = vunpack.c.l.b16 %v186
    %v764 = vunpack.c.h.b16 %v186
    %v765 = vunpack.c.l.b16 %v187
    %v766 = vunpack.c.h.b16 %v187
    %v767 = vunpack.c.l.b16 %v188
    %v768 = vunpack.c.h.b16 %v188
    %v769 = vunpack.c.l.b16 %v189
    %v770 = vunpack.c.h.b16 %v189
    %v771 = vunpack.c.l.b16 %v190
    %v772 = vunpack.c.h.b16 %v190
    %v773 = vunpack.c.l.b16 %v191
    %v774 = vunpack.c.h.b16 %v191
    %v775 = vunpack.c.l.b16 %v192
    %v776 = vunpack.c.h.b16 %v192
    %v777 = vunpack.c.l.b16 %v193
    %v778 = vunpack.c.h.b16 %v193
    %v779 = vunpack.c.l.b16 %v194
    %v780 = vunpack.c.h.b16 %v194
    %v781 = vunpack.c.l.b16 %v195
    %v782 = vunpack.c.h.b16 %v195
    %v783 = vunpack.c.l.b16 %v196
    %v784 = vunpack.c.h.b16 %v196
    %v785 = vunpack.c.l.b16 %v197
    %v786 = vunpack.c.h.b16 %v197
    %v787 = vunpack.c.l.b16 %v198
    %v788 = vunpack.c.h.b16 %v198
    %v789 = vunpack.c.l.b16 %v199
    %v790 = vunpack.c.h.b16 %v199
    %v791 = vunpack.c.l.b16 %v200
    %v792 = vunpack.c.h.b16 %v200
    %v793 = vunpack.c.l.b16 %v201
    %v794 = vunpack.c.h.b16 %v201
    %v795 = vunpack.c.l.b16 %v202
    %v796 = vunpack.c.h.b16 %v202
    %v797 = vunpack.c.l.b16 %v203
    %v798 = vunpack.c.h.b16 %v203
    %v799 = vunpack.c.l.b16 %v204
    %v800 = vunpack.c.h.b16 %v204
    %v801 = vunpack.c.l.b16 %v205
    %v802 = vunpack.c.h.b16 %v205
    %v803 = vunpack.c.l.b16 %v206
    %v804 = vunpack.c.h.b16 %v206
    %v805 = vunpack.c.l.b16 %v207
    %v806 = vunpack.c.h.b16 %v207
    %v807 = vunpack.c.l.b16 %v208
    %v808 = vunpack.c.h.b16 %v208
    %v809 = vunpack.c.l.b16 %v209
    %v810 = vunpack.c.h.b16 %v209
    %v811 = vunpack.c.l.b16 %v210
    %v812 = vunpack.c.h.b16 %v210
    %v813 = vunpack.c.l.b16 %v211
    %v814 = vunpack.c.h.b16 %v211
    %v815 = vunpack.c.l.b16 %v212
    %v816 = vunpack.c.h.b16 %v212
    %v817 = vunpack.c.l.b16 %v213
    %v818 = vunpack.c.h.b16 %v213
    %v819 = vunpack.c.l.b16 %v214
    %v820 = vunpack.c.h.b16 %v214
    %v821 = vunpack.c.l.b16 %v215
    %v822 = vunpack.c.h.b16 %v215
    %v823 = vunpack.c.l.b16 %v216
    %v824 = vunpack.c.h.b16 %v216
    %v825 = vunpack.c.l.b16 %v217
    %v826 = vunpack.c.h.b16 %v217
    %v827 = vunpack.c.l.b16 %v218
    %v828 = vunpack.c.h.b16 %v218
    %v829 = vunpack.c.l.b16 %v219
    %v830 = vunpack.c.h.b16 %v219
    %v831 = vunpack.c.l.b16 %v220
    %v832 = vunpack.c.h.b16 %v220
    %v833 = vunpack.c.l.b16 %v221
    %v834 = vunpack.c.h.b16 %v221
    %v835 = vunpack.c.l.b16 %v222
    %v836 = vunpack.c.h.b16 %v222
    %v837 = vunpack.c.l.b16 %v223
    %v838 = vunpack.c.h.b16 %v223
    %v839 = vunpack.c.l.b16 %v224
    %v840 = vunpack.c.h.b16 %v224
    %v841 = vunpack.c.l.b16 %v225
    %v842 = vunpack.c.h.b16 %v225
    %v843 = vunpack.c.l.b16 %v226
    %v844 = vunpack.c.h.b16 %v226
    %v845 = vunpack.c.l.b16 %v227
    %v846 = vunpack.c.h.b16 %v227
    %v847 = vunpack.c.l.b16 %v228
    %v848 = vunpack.c.h.b16 %v228
    %v849 = vunpack.c.l.b16 %v229
    %v850 = vunpack.c.h.b16 %v229
    %v851 = vunpack.c.l.b16 %v230
    %v852 = vunpack.c.h.b16 %v230
    %v853 = vunpack.c.l.b16 %v231
    %v854 = vunpack.c.h.b16 %v231
    %v855 = vunpack.c.l.b16 %v232
    %v856 = vunpack.c.h.b16 %v232
    %v857 = vunpack.c.l.b16 %v233
    %v858 = vunpack.c.h.b16 %v233
    %v859 = vunpack.c.l.b16 %v234
    %v860 = vunpack.c.h.b16 %v234
    %v861 = vunpack.c.l.b16 %v235
    %v862 = vunpack.c.h.b16 %v235
    %v863 = vunpack.c.l.b16 %v236
    %v864 = vunpack.c.h.b16 %v236
    %v865 = vunpack.c.l.b16 %v237
    %v866 = vunpack.c.h.b16 %v237
    %v867 = vunpack.c.l.b16 %v238
    %v868 = vunpack.c.h.b16 %v238
    %v869 = vunpack.c.l.b16 %v239
    %v870 = vunpack.c.h.b16 %v239
    %v871 = vunpack.c.l.b16 %v240
    %v872 = vunpack.c.h.b16 %v240
    %v873 = vunpack.c.l.b16 %v241
    %v874 = vunpack.c.h.b16 %v241
    %v875 = vunpack.c.l.b16 %v242
    %v876 = vunpack.c.h.b16 %v242
    %v877 = vunpack.c.l.b16 %v243
    %v878 = vunpack.c.h.b16 %v243
    %v879 = vunpack.c.l.b16 %v244
    %v880 = vunpack.c.h.b16 %v244
    %v881 = vunpack.c.l.b16 %v245
    %v882 = vunpack.c.h.b16 %v245
    %v883 = vunpack.c.l.b16 %v246
    %v884 = vunpack.c.h.b16 %v246
    %v885 = vunpack.c.l.b16 %v247
    %v886 = vunpack.c.h.b16 %v247
    %v887 = vunpack.c.l.b16 %v248
    %v888 = vunpack.c.h.b16 %v248
    %v889 = vunpack.c.l.b16 %v249
    %v890 = vunpack.c.h.b16 %v249
    %v891 = vunpack.c.l.b16 %v250
    %v892 = vunpack.c.h.b16 %v250
    %v893 = vunpack.c.l.b16 %v251
    %v894 = vunpack.c.h.b16 %v251
    %v895 = vunpack.c.l.b16 %v252
    %v896 = vunpack.c.h.b16 %v252
    %v897 = vunpack.c.l.b16 %v253
    %v898 = vunpack.c.h.b16 %v253
    %v899 = vunpack.c.l.b16 %v254
    %v900 = vunpack.c.h.b16 %v254
    %v901 = vunpack.c.l.b16 %v255
    %v902 = vunpack.c.h.b16 %v255
    %v903 = vunpack.c.l.b16 %v256
    %v904 = vunpack.c.h.b16 %v256
    %v905 = vunpack.c.l.b16 %v257
    %v906 = vunpack.c.h.b16 %v257
    %v907 = vunpack.c.l.b16 %v258
    %v908 = vunpack.c.h.b16 %v258
    %v909 = vunpack.c.l.b16 %v259
    %v910 = vunpack.c.h.b16 %v259
    %v911 = vunpack.c.l.b16 %v260
    %v912 = vunpack.c.h.b16 %v260
    %v913 = vunpack.c.l.b16 %v261
    %v914 = vunpack.c.h.b16 %v261
    %v915 = vunpack.c.l.b16 %v262
    %v916 = vunpack.c.h.b16 %v262
    %v917 = vunpack.c.l.b16 %v263
    %v918 = vunpack.c.h.b16 %v263
    %v919 = vunpack.c.l.b16 %v264
    %v920 = vunpack.c.h.b16 %v264
    %v921 = vunpack.c.l.b16 %v265
    %v922 = vunpack.c.h.b16 %v265
    %v923 = vunpack.c.l.b16 %v266
    %v924 = vunpack.c.h.b16 %v266
    %v925 = vunpack.c.l.b16 %v267
    %v926 = vunpack.c.h.b16 %v267
    %v927 = vunpack.c.l.b16 %v268
    %v928 = vunpack.c.h.b16 %v268
    %v929 = vunpack.c.l.b16 %v269
    %v930 = vunpack.c.h.b16 %v269
    %v931 = vunpack.c.l.b16 %v270
    %v932 = vunpack.c.h.b16 %v270
    %v933 = vunpack.c.l.b16 %v271
    %v934 = vunpack.c.h.b16 %v271
    %v935 = vunpack.c.l.b16 %v272
    %v936 = vunpack.c.h.b16 %v272
    %v937 = vunpack.c.l.b16 %v273
    %v938 = vunpack.c.h.b16 %v273
    %v939 = vunpack.c.l.b16 %v274
    %v940 = vunpack.c.h.b16 %v274
    %v941 = vunpack.c.l.b16 %v275
    %v942 = vunpack.c.h.b16 %v275
    %v943 = vunpack.c.l.b16 %v276
    %v944 = vunpack.c.h.b16 %v276
    %v945 = vunpack.c.l.b16 %v277
    %v946 = vunpack.c.h.b16 %v277
    %v947 = vunpack.c.l.b16 %v278
    %v948 = vunpack.c.h.b16 %v278
    %v949 = vunpack.c.l.b16 %v279
    %v950 = vunpack.c.h.b16 %v279
    %v951 = vunpack.c.l.b16 %v280
    %v952 = vunpack.c.h.b16 %v280
    %v953 = vunpack.c.l.b16 %v281
    %v954 = vunpack.c.h.b16 %v281
    %v955 = vunpack.c.l.b16 %v282
    %v956 = vunpack.c.h.b16 %v282
    %v957 = vunpack.c.l.b16 %v283
    %v958 = vunpack.c.h.b16 %v283
    %v959 = vunpack.c.l.b16 %v284
    %v960 = vunpack.c.h.b16 %v284
    %v961 = vunpack.c.l.b16 %v285
    %v962 = vunpack.c.h.b16 %v285
    %v963 = vunpack.c.l.b16 %v286
    %v964 = vunpack.c.h.b16 %v286
    %v965 = vunpack.c.l.b16 %v287
    %v966 = vunpack.c.h.b16 %v287
    %v967 = vunpack.c.l.b16 %v288
    %v968 = vunpack.c.h.b16 %v288
    %v969 = vunpack.c.l.b16 %v289
    %v970 = vunpack.c.h.b16 %v289
    %v971 = vunpack.c.l.b16 %v290
    %v972 = vunpack.c.h.b16 %v290
    %v973 = vunpack.c.l.b16 %v291
    %v974 = vunpack.c.h.b16 %v291
    %v975 = vunpack.c.l.b16 %v292
    %v976 = vunpack.c.h.b16 %v292
    %v977 = vunpack.c.l.b16 %v293
    %v978 = vunpack.c.h.b16 %v293
    %v979 = vunpack.c.l.b16 %v294
    %v980 = vunpack.c.h.b16 %v294
    %v981 = vunpack.c.l.b16 %v295
    %v982 = vunpack.c.h.b16 %v295
    %v983 = vunpack.c.l.b16 %v296
    %v984 = vunpack.c.h.b16 %v296
    %v985 = vunpack.c.l.b16 %v297
    %v986 = vunpack.c.h.b16 %v297
    %v987 = vunpack.c.l.b16 %v298
    %v988 = vunpack.c.h.b16 %v298
    %v989 = vunpack.c.l.b16 %v299
    %v990 = vunpack.c.h.b16 %v299
    %v991 = vunpack.c.l.b16 %v300
    %v992 = vunpack.c.h.b16 %v300
    %v993 = vunpack.c.l.b16 %v301
    %v994 = vunpack.c.h.b16 %v301
    %v995 = vunpack.c.l.b16 %v302
    %v996 = vunpack.c.h.b16 %v302
    %v997 = vunpack.c.l.b16 %v303
    %v998 = vunpack.c.h.b16 %v303
    %v999 = vunpack.c.l.b16 %v304
    %v1000 = vunpack.c.h.b16 %v304
    %v1001 = vunpack.c.l.b16 %v305
    %v1002 = vunpack.c.h.b16 %v305
    %v1003 = vunpack.c.l.b16 %v306
    %v1004 = vunpack.c.h.b16 %v306
    %v1005 = vunpack.c.l.b16 %v307
    %v1006 = vunpack.c.h.b16 %v307
    %v1007 = vunpack.c.l.b16 %v308
    %v1008 = vunpack.c.h.b16 %v308
    %v1009 = vunpack.c.l.b16 %v309
    %v1010 = vunpack.c.h.b16 %v309
    %v1011 = vunpack.c.l.b16 %v310
    %v1012 = vunpack.c.h.b16 %v310
    %v1013 = vunpack.c.l.b16 %v311
    %v1014 = vunpack.c.h.b16 %v311
    %v1015 = vunpack.c.l.b16 %v312
    %v1016 = vunpack.c.h.b16 %v312
    %v1017 = vunpack.c.l.b16 %v313
    %v1018 = vunpack.c.h.b16 %v313
    %v1019 = vunpack.c.l.b16 %v314
    %v1020 = vunpack.c.h.b16 %v314
    %v1021 = vunpack.c.l.b16 %v315
    %v1022 = vunpack.c.h.b16 %v315
    %v1023 = vunpack.c.l.b16 %v316
    %v1024 = vunpack.c.h.b16 %v316
    %v1025 = vunpack.c.l.b16 %v317
    %v1026 = vunpack.c.h.b16 %v317
    %v1027 = vunpack.c.l.b16 %v318
    %v1028 = vunpack.c.h.b16 %v318
    %v1029 = vunpack.c.l.b16 %v319
    %v1030 = vunpack.c.h.b16 %v319
    %v1031 = vunpack.c.l.b16 %v320
    %v1032 = vunpack.c.h.b16 %v320
    %v1033 = vunpack.c.l.b16 %v321
    %v1034 = vunpack.c.h.b16 %v321
    %v1035 = vunpack.c.l.b16 %v322
    %v1036 = vunpack.c.h.b16 %v322
    %v1037 = vunpack.c.l.b16 %v323
    %v1038 = vunpack.c.h.b16 %v323
    %v1039 = vunpack.c.l.b16 %v324
    %v1040 = vunpack.c.h.b16 %v324
    %v1041 = vunpack.c.l.b16 %v325
    %v1042 = vunpack.c.h.b16 %v325
    %v1043 = vunpack.c.l.b16 %v326
    %v1044 = vunpack.c.h.b16 %v326
    %v1045 = vunpack.c.l.b16 %v327
    %v1046 = vunpack.c.h.b16 %v327
    %v1047 = vunpack.c.l.b16 %v328
    %v1048 = vunpack.c.h.b16 %v328
    %v1049 = vunpack.c.l.b16 %v329
    %v1050 = vunpack.c.h.b16 %v329
    %v1051 = vunpack.c.l.b16 %v330
    %v1052 = vunpack.c.h.b16 %v330
    %v1053 = vunpack.c.l.b16 %v331
    %v1054 = vunpack.c.h.b16 %v331
    %v1055 = vunpack.c.l.b16 %v332
    %v1056 = vunpack.c.h.b16 %v332
    %v1057 = vunpack.c.l.b16 %v333
    %v1058 = vunpack.c.h.b16 %v333
    %v1059 = vunpack.c.l.b16 %v334
    %v1060 = vunpack.c.h.b16 %v334
    %v1061 = vunpack.c.l.b16 %v335
    %v1062 = vunpack.c.h.b16 %v335
    %v1063 = vunpack.c.l.b16 %v336
    %v1064 = vunpack.c.h.b16 %v336
    %v1065 = vunpack.c.l.b16 %v337
    %v1066 = vunpack.c.h.b16 %v337
    %v1067 = vpack.c.b16 %v623, %v619
    %v1068 = vpack.c.b16 %v624, %v620
    %v1069 = vpack.c.b16 %v625, %v621
    %v1070 = vpack.c.b16 %v626, %v622
    %v1071 = vpack.c.b16 %v631, %v627
    %v1072 = vpack.c.b16 %v632, %v628
    %v1073 = vpack.c.b16 %v633, %v629
    %v1074 = vpack.c.b16 %v634, %v630
    %v1075 = vpack.c.b16 %v639, %v635
    %v1076 = vpack.c.b16 %v640, %v636
    %v1077 = vpack.c.b16 %v641, %v637
    %v1078 = vpack.c.b16 %v642, %v638
    %v1079 = vpack.c.b16 %v647, %v643
    %v1080 = vpack.c.b16 %v648, %v644
    %v1081 = vpack.c.b16 %v649, %v645
    %v1082 = vpack.c.b16 %v650, %v646
    %v1083 = vpack.c.b16 %v655, %v651
    %v1084 = vpack.c.b16 %v656, %v652
    %v1085 = vpack.c.b16 %v657, %v653
    %v1086 = vpack.c.b16 %v658, %v654
    %v1087 = vpack.c.b16 %v663, %v659
    %v1088 = vpack.c.b16 %v664, %v660
    %v1089 = vpack.c.b16 %v665, %v661
    %v1090 = vpack.c.b16 %v666, %v662
    %v1091 = vpack.c.b16 %v671, %v667
    %v1092 = vpack.c.b16 %v672, %v668
    %v1093 = vpack.c.b16 %v673, %v669
    %v1094 = vpack.c.b16 %v674, %v670
    %v1095 = vpack.c.b16 %v679, %v675
    %v1096 = vpack.c.b16 %v680, %v676
    %v1097 = vpack.c.b16 %v681, %v677
    %v1098 = vpack.c.b16 %v682, %v678
    %v1099 = vpack.c.b16 %v687, %v683
    %v1100 = vpack.c.b16 %v688, %v684
    %v1101 = vpack.c.b16 %v689, %v685
    %v1102 = vpack.c.b16 %v690, %v686
    %v1103 = vpack.c.b16 %v695, %v691
    %v1104 = vpack.c.b16 %v696, %v692
    %v1105 = vpack.c.b16 %v697, %v693
    %v1106 = vpack.c.b16 %v698, %v694
    %v1107 = vpack.c.b16 %v703, %v699
    %v1108 = vpack.c.b16 %v704, %v700
    %v1109 = vpack.c.b16 %v705, %v701
    %v1110 = vpack.c.b16 %v706, %v702
    %v1111 = vpack.c.b16 %v711, %v707
    %v1112 = vpack.c.b16 %v712, %v708
    %v1113 = vpack.c.b16 %v713, %v709
    %v1114 = vpack.c.b16 %v714, %v710
    %v1115 = vpack.c.b16 %v719, %v715
    %v1116 = vpack.c.b16 %v720, %v716
    %v1117 = vpack.c.b16 %v721, %v717
    %v1118 = vpack.c.b16 %v722, %v718
    %v1119 = vpack.c.b16 %v727, %v723
    %v1120 = vpack.c.b16 %v728, %v724
    %v1121 = vpack.c.b16 %v729, %v725
    %v1122 = vpack.c.b16 %v730, %v726
    %v1123 = vpack.c.b16 %v735, %v731
    %v1124 = vpack.c.b16 %v736, %v732
    %v1125 = vpack.c.b16 %v737, %v733
    %v1126 = vpack.c.b16 %v738, %v734
    %v1127 = vpack.c.b16 %v743, %v739
    %v1128 = vpack.c.b16 %v744, %v740
    %v1129 = vpack.c.b16 %v745, %v741
    %v1130 = vpack.c.b16 %v746, %v742
    %v1131 = vpack.c.b16 %v751, %v747
    %v1132 = vpack.c.b16 %v752, %v748
    %v1133 = vpack.c.b16 %v753, %v749
    %v1134 = vpack.c.b16 %v754, %v750
    %v1135 = vpack.c.b16 %v759, %v755
    %v1136 = vpack.c.b16 %v760, %v756
    %v1137 = vpack.c.b16 %v761, %v757
    %v1138 = vpack.c.b16 %v762, %v758
    %v1139 = vpack.c.b16 %v767, %v763
    %v1140 = vpack.c.b16 %v768, %v764
    %v1141 = vpack.c.b16 %v769, %v765
    %v1142 = vpack.c.b16 %v770, %v766
    %v1143 = vpack.c.b16 %v775, %v771
    %v1144 = vpack.c.b16 %v776, %v772
    %v1145 = vpack.c.b16 %v777, %v773
    %v1146 = vpack.c.b16 %v778, %v774
    %v1147 = vpack.c.b16 %v783, %v779
    %v1148 = vpack.c.b16 %v784, %v780
    %v1149 = vpack.c.b16 %v785, %v781
    %v1150 = vpack.c.b16 %v786, %v782
    %v1151 = vpack.c.b16 %v791, %v787
    %v1152 = vpack.c.b16 %v792, %v788
    %v1153 = vpack.c.b16 %v793, %v789
    %v1154 = vpack.c.b16 %v794, %v790
    %v1155 = vpack.c.b16 %v799, %v795
    %v1156 = vpack.c.b16 %v800, %v796
    %v1157 = vpack.c.b16 %v801, %v797
    %v1158 = vpack.c.b16 %v802, %v798
    %v1159 = vpack.c.b16 %v807, %v803
    %v1160 = vpack.c.b16 %v808, %v804
    %v1161 = vpack.c.b16 %v809, %v805
    %v1162 = vpack.c.b16 %v810, %v806
    %v1163 = vpack.c.b16 %v815, %v811
    %v1164 = vpack.c.b16 %v816, %v812
    %v1165 = vpack.c.b16 %v817, %v813
    %v1166 = vpack.c.b16 %v818, %v814
    %v1167 = vpack.c.b16 %v823, %v819
    %v1168 = vpack.c.b16 %v824, %v820
    %v1169 = vpack.c.b16 %v825, %v821
    %v1170 = vpack.c.b16 %v826, %v822
    %v1171 = vpack.c.b16 %v831, %v827
    %v1172 = vpack.c.b16 %v832, %v828
    %v1173 = vpack.c.b16 %v833, %v829
    %v1174 = vpack.c.b16 %v834, %v830
    %v1175 = vpack.c.b16 %v839, %v835
    %v1176 = vpack.c.b16 %v840, %v836
    %v1177 = vpack.c.b16 %v841, %v837
    %v1178 = vpack.c.b16 %v842, %v838
    %v1179 = vpack.c.b16 %v847, %v843
    %v1180 = vpack.c.b16 %v848, %v844
    %v1181 = vpack.c.b16 %v849, %v845
    %v1182 = vpack.c.b16 %v850, %v846
    %v1183 = vpack.c.b16 %v855, %v851
    %v1184 = vpack.c.b16 %v856, %v852
    %v1185 = vpack.c.b16 %v857, %v853
    %v1186 = vpack.c.b16 %v858, %v854
    %v1187 = vpack.c.b16 %v863, %v859
    %v1188 = vpack.c.b16 %v864, %v860
    %v1189 = vpack.c.b16 %v865, %v861
    %v1190 = vpack.c.b16 %v866, %v862
    %v1191 = vpack.c.b16 %v871, %v867
    %v1192 = vpack.c.b16 %v872, %v868
    %v1193 = vpack.c.b16 %v873, %v869
    %v1194 = vpack.c.b16 %v874, %v870
    %v1195 = vpack.c.b16 %v879, %v875
    %v1196 = vpack.c.b16 %v880, %v876
    %v1197 = vpack.c.b16 %v881, %v877
    %v1198 = vpack.c.b16 %v882, %v878
    %v1199 = vpack.c.b16 %v887, %v883
    %v1200 = vpack.c.b16 %v888, %v884
    %v1201 = vpack.c.b16 %v889, %v885
    %v1202 = vpack.c.b16 %v890, %v886
    %v1203 = vpack.c.b16 %v895, %v891
    %v1204 = vpack.c.b16 %v896, %v892
    %v1205 = vpack.c.b16 %v897, %v893
    %v1206 = vpack.c.b16 %v898, %v894
    %v1207 = vpack.c.b16 %v903, %v899
    %v1208 = vpack.c.b16 %v904, %v900
    %v1209 = vpack.c.b16 %v905, %v901
    %v1210 = vpack.c.b16 %v906, %v902
    %v1211 = vpack.c.b16 %v911, %v907
    %v1212 = vpack.c.b16 %v912, %v908
    %v1213 = vpack.c.b16 %v913, %v909
    %v1214 = vpack.c.b16 %v914, %v910
    %v1215 = vpack.c.b16 %v919, %v915
    %v1216 = vpack.c.b16 %v920, %v916
    %v1217 = vpack.c.b16 %v921, %v917
    %v1218 = vpack.c.b16 %v922, %v918
    %v1219 = vpack.c.b16 %v927, %v923
    %v1220 = vpack.c.b16 %v928, %v924
    %v1221 = vpack.c.b16 %v929, %v925
    %v1222 = vpack.c.b16 %v930, %v926
    %v1223 = vpack.c.b16 %v935, %v931
    %v1224 = vpack.c.b16 %v936, %v932
    %v1225 = vpack.c.b16 %v937, %v933
    %v1226 = vpack.c.b16 %v938, %v934
    %v1227 = vpack.c.b16 %v943, %v939
    %v1228 = vpack.c.b16 %v944, %v940
    %v1229 = vpack.c.b16 %v945, %v941
    %v1230 = vpack.c.b16 %v946, %v942
    %v1231 = vpack.c.b16 %v951, %v947
    %v1232 = vpack.c.b16 %v952, %v948
    %v1233 = vpack.c.b16 %v953, %v949
    %v1234 = vpack.c.b16 %v954, %v950
    %v1235 = vpack.c.b16 %v959, %v955
    %v1236 = vpack.c.b16 %v960, %v956
    %v1237 = vpack.c.b16 %v961, %v957
    %v1238 = vpack.c.b16 %v962, %v958
    %v1239 = vpack.c.b16 %v967, %v963
    %v1240 = vpack.c.b16 %v968, %v964
    %v1241 = vpack.c.b16 %v969, %v965
    %v1242 = vpack.c.b16 %v970, %v966
    %v1243 = vpack.c.b16 %v975, %v971
    %v1244 = vpack.c.b16 %v976, %v972
    %v1245 = vpack.c.b16 %v977, %v973
    %v1246 = vpack.c.b16 %v978, %v974
    %v1247 = vpack.c.b16 %v983, %v979
    %v1248 = vpack.c.b16 %v984, %v980
    %v1249 = vpack.c.b16 %v985, %v981
    %v1250 = vpack.c.b16 %v986, %v982
    %v1251 = vpack.c.b16 %v991, %v987
    %v1252 = vpack.c.b16 %v992, %v988
    %v1253 = vpack.c.b16 %v993, %v989
    %v1254 = vpack.c.b16 %v994, %v990
    %v1255 = vpack.c.b16 %v999, %v995
    %v1256 = vpack.c.b16 %v1000, %v996
    %v1257 = vpack.c.b16 %v1001, %v997
    %v1258 = vpack.c.b16 %v1002, %v998
    %v1259 = vpack.c.b16 %v1007, %v1003
    %v1260 = vpack.c.b16 %v1008, %v1004
    %v1261 = vpack.c.b16 %v1009, %v1005
    %v1262 = vpack.c.b16 %v1010, %v1006
    %v1263 = vpack.c.b16 %v1015, %v1011
    %v1264 = vpack.c.b16 %v1016, %v1012
    %v1265 = vpack.c.b16 %v1017, %v1013
    %v1266 = vpack.c.b16 %v1018, %v1014
    %v1267 = vpack.c.b16 %v1023, %v1019
    %v1268 = vpack.c.b16 %v1024, %v1020
    %v1269 = vpack.c.b16 %v1025, %v1021
    %v1270 = vpack.c.b16 %v1026, %v1022
    %v1271 = vpack.c.b16 %v1031, %v1027
    %v1272 = vpack.c.b16 %v1032, %v1028
    %v1273 = vpack.c.b16 %v1033, %v1029
    %v1274 = vpack.c.b16 %v1034, %v1030
    %v1275 = vpack.c.b16 %v1039, %v1035
    %v1276 = vpack.c.b16 %v1040, %v1036
    %v1277 = vpack.c.b16 %v1041, %v1037
    %v1278 = vpack.c.b16 %v1042, %v1038
    %v1279 = vpack.c.b16 %v1047, %v1043
    %v1280 = vpack.c.b16 %v1048, %v1044
    %v1281 = vpack.c.b16 %v1049, %v1045
    %v1282 = vpack.c.b16 %v1050, %v1046
    %v1283 = vpack.c.b16 %v1055, %v1051
    %v1284 = vpack.c.b16 %v1056, %v1052
    %v1285 = vpack.c.b16 %v1057, %v1053
    %v1286 = vpack.c.b16 %v1058, %v1054
    %v1287 = vpack.c.b16 %v1063, %v1059
    %v1288 = vpack.c.b16 %v1064, %v1060
    %v1289 = vpack.c.b16 %v1065, %v1061
    %v1290 = vpack.c.b16 %v1066, %v1062
    %1515 = vmatprep.subr.bf16.mxu0 %v1068
    %1516 = vmatpush1.bf16.msra.mxu0 %v1067
    %1517 = vmatprep.subr.bf16.mxu0 %v1072
    %1518 = vmatpush1.bf16.msra.mxu0 %v1071
    %1519 = vmatprep.subr.bf16.mxu0 %v1076
    %1520 = vmatpush1.bf16.msra.mxu0 %v1075
    %1521 = vmatprep.subr.bf16.mxu0 %v1080
    %1522 = vmatpush1.bf16.msra.mxu0 %v1079
    %1523 = vmatprep.subr.bf16.mxu0 %v1084
    %1524 = vmatpush1.bf16.msra.mxu0 %v1083
    %1525 = vmatprep.subr.bf16.mxu0 %v1088
    %1526 = vmatpush1.bf16.msra.mxu0 %v1087
    %1527 = vmatprep.subr.bf16.mxu0 %v1092
    %1528 = vmatpush1.bf16.msra.mxu0 %v1091
    %1529 = vmatprep.subr.bf16.mxu0 %v1096
    %1530 = vmatpush1.bf16.msra.mxu0 %v1095
    %1531 = vmatprep.subr.bf16.mxu0 %v1100
    %1532 = vmatpush1.bf16.msra.mxu0 %v1099
    %1533 = vmatprep.subr.bf16.mxu0 %v1104
    %1534 = vmatpush1.bf16.msra.mxu0 %v1103
    %1535 = vmatprep.subr.bf16.mxu0 %v1108
    %1536 = vmatpush1.bf16.msra.mxu0 %v1107
    %1537 = vmatprep.subr.bf16.mxu0 %v1112
    %1538 = vmatpush1.bf16.msra.mxu0 %v1111
    %1539 = vmatprep.subr.bf16.mxu0 %v1116
    %1540 = vmatpush1.bf16.msra.mxu0 %v1115
    %1541 = vmatprep.subr.bf16.mxu0 %v1120
    %1542 = vmatpush1.bf16.msra.mxu0 %v1119
    %1543 = vmatprep.subr.bf16.mxu0 %v1124
    %1544 = vmatpush1.bf16.msra.mxu0 %v1123
    %1545 = vmatprep.subr.bf16.mxu0 %v1128
    %1546 = vmatpush1.bf16.msra.mxu0 %v1127
    %1547 = vmatprep.mubr.bf16.mxu0 %v382
    %1548 = vmatmul.mubr.bf16.gmra.mrb[0].mxu0 %v381
    %v1549 = vpop.f32.mrb[0].mxu0
    %v1550 = vadd.f32 %v342, %v1549
    %v1551 = vpop.f32.mrb[0].mxu0
    %v1552 = vadd.f32 %v346, %v1551
    %v1553 = vpop.f32.mrb[0].mxu0
    %v1554 = vadd.f32 %v342, %v1553
    %v1555 = vpop.f32.mrb[0].mxu0
    %v1556 = vadd.f32 %v346, %v1555
    %1557 = vdwg.mxu0
    %1558 = vmatprep.subr.bf16.mxu0 %v1132
    %1559 = vmatpush1.bf16.msra.mxu0 %v1131
    %1560 = vmatprep.subr.bf16.mxu0 %v1136
    %1561 = vmatpush1.bf16.msra.mxu0 %v1135
    %1562 = vmatprep.subr.bf16.mxu0 %v1140
    %1563 = vmatpush1.bf16.msra.mxu0 %v1139
    %1564 = vmatprep.subr.bf16.mxu0 %v1144
    %1565 = vmatpush1.bf16.msra.mxu0 %v1143
    %1566 = vmatprep.subr.bf16.mxu0 %v1148
    %1567 = vmatpush1.bf16.msra.mxu0 %v1147
    %1568 = vmatprep.subr.bf16.mxu0 %v1152
    %1569 = vmatpush1.bf16.msra.mxu0 %v1151
    %1570 = vmatprep.subr.bf16.mxu0 %v1156
    %1571 = vmatpush1.bf16.msra.mxu0 %v1155
    %1572 = vmatprep.subr.bf16.mxu0 %v1160
    %1573 = vmatpush1.bf16.msra.mxu0 %v1159
    %1574 = vmatprep.subr.bf16.mxu0 %v1164
    %1575 = vmatpush1.bf16.msra.mxu0 %v1163
    %1576 = vmatprep.subr.bf16.mxu0 %v1168
    %1577 = vmatpush1.bf16.msra.mxu0 %v1167
    %1578 = vmatprep.subr.bf16.mxu0 %v1172
    %1579 = vmatpush1.bf16.msra.mxu0 %v1171
    %1580 = vmatprep.subr.bf16.mxu0 %v1176
    %1581 = vmatpush1.bf16.msra.mxu0 %v1175
    %1582 = vmatprep.subr.bf16.mxu0 %v1180
    %1583 = vmatpush1.bf16.msra.mxu0 %v1179
    %1584 = vmatprep.subr.bf16.mxu0 %v1184
    %1585 = vmatpush1.bf16.msra.mxu0 %v1183
    %1586 = vmatprep.subr.bf16.mxu0 %v1188
    %1587 = vmatpush1.bf16.msra.mxu0 %v1187
    %1588 = vmatprep.subr.bf16.mxu0 %v1192
    %1589 = vmatpush1.bf16.msra.mxu0 %v1191
    %1590 = vmatprep.mubr.bf16.mxu0 %v384
    %1591 = vmatmul.mubr.bf16.gmra.mrb[0].mxu0 %v383
    %v1592 = vpop.f32.mrb[0].mxu0
    %v1593 = vadd.f32 %v1550, %v1592
    %v1594 = vpop.f32.mrb[0].mxu0
    %v1595 = vadd.f32 %v1552, %v1594
    %v1596 = vpop.f32.mrb[0].mxu0
    %v1597 = vadd.f32 %v1554, %v1596
    %v1598 = vpop.f32.mrb[0].mxu0
    %v1599 = vadd.f32 %v1556, %v1598
    %1600 = vdwg.mxu0
    %1601 = vmatprep.subr.bf16.mxu0 %v1196
    %1602 = vmatpush1.bf16.msra.mxu0 %v1195
    %1603 = vmatprep.subr.bf16.mxu0 %v1200
    %1604 = vmatpush1.bf16.msra.mxu0 %v1199
    %1605 = vmatprep.subr.bf16.mxu0 %v1204
    %1606 = vmatpush1.bf16.msra.mxu0 %v1203
    %1607 = vmatprep.subr.bf16.mxu0 %v1208
    %1608 = vmatpush1.bf16.msra.mxu0 %v1207
    %1609 = vmatprep.subr.bf16.mxu0 %v1212
    %1610 = vmatpush1.bf16.msra.mxu0 %v1211
    %1611 = vmatprep.subr.bf16.mxu0 %v1216
    %1612 = vmatpush1.bf16.msra.mxu0 %v1215
    %1613 = vmatprep.subr.bf16.mxu0 %v1220
    %1614 = vmatpush1.bf16.msra.mxu0 %v1219
    %1615 = vmatprep.subr.bf16.mxu0 %v1224
    %1616 = vmatpush1.bf16.msra.mxu0 %v1223
    %1617 = vmatprep.subr.bf16.mxu0 %v1228
    %1618 = vmatpush1.bf16.msra.mxu0 %v1227
    %1619 = vmatprep.subr.bf16.mxu0 %v1232
    %1620 = vmatpush1.bf16.msra.mxu0 %v1231
    %1621 = vmatprep.subr.bf16.mxu0 %v1236
    %1622 = vmatpush1.bf16.msra.mxu0 %v1235
    %1623 = vmatprep.subr.bf16.mxu0 %v1240
    %1624 = vmatpush1.bf16.msra.mxu0 %v1239
    %1625 = vmatprep.subr.bf16.mxu0 %v1244
    %1626 = vmatpush1.bf16.msra.mxu0 %v1243
    %1627 = vmatprep.subr.bf16.mxu0 %v1248
    %1628 = vmatpush1.bf16.msra.mxu0 %v1247
    %1629 = vmatprep.subr.bf16.mxu0 %v1252
    %1630 = vmatpush1.bf16.msra.mxu0 %v1251
    %1631 = vmatprep.subr.bf16.mxu0 %v1256
    %1632 = vmatpush1.bf16.msra.mxu0 %v1255
    %1633 = vmatprep.mubr.bf16.mxu0 %v386
    %1634 = vmatmul.mubr.bf16.gmra.mrb[0].mxu0 %v385
    %v1635 = vpop.f32.mrb[0].mxu0
    %v1636 = vadd.f32 %v1593, %v1635
    %v1637 = vpop.f32.mrb[0].mxu0
    %v1638 = vadd.f32 %v1595, %v1637
    %v1639 = vpop.f32.mrb[0].mxu0
    %v1640 = vadd.f32 %v1597, %v1639
    %v1641 = vpop.f32.mrb[0].mxu0
    %v1642 = vadd.f32 %v1599, %v1641
    %1643 = vdwg.mxu0
    %1644 = vmatprep.subr.bf16.mxu0 %v1260
    %1645 = vmatpush1.bf16.msra.mxu0 %v1259
    %1646 = vmatprep.subr.bf16.mxu0 %v1264
    %1647 = vmatpush1.bf16.msra.mxu0 %v1263
    %1648 = vmatprep.subr.bf16.mxu0 %v1268
    %1649 = vmatpush1.bf16.msra.mxu0 %v1267
    %1650 = vmatprep.subr.bf16.mxu0 %v1272
    %1651 = vmatpush1.bf16.msra.mxu0 %v1271
    %1652 = vmatprep.subr.bf16.mxu0 %v1276
    %1653 = vmatpush1.bf16.msra.mxu0 %v1275
    %1654 = vmatprep.subr.bf16.mxu0 %v1280
    %1655 = vmatpush1.bf16.msra.mxu0 %v1279
    %1656 = vmatprep.subr.bf16.mxu0 %v1284
    %1657 = vmatpush1.bf16.msra.mxu0 %v1283
    %1658 = vmatprep.subr.bf16.mxu0 %v1288
    %1659 = vmatpush1.bf16.msra.mxu0 %v1287
    %1660 = vmatprep.subr.bf16.mxu0 0
    %1661 = vmatpush1.bf16.msra.mxu0 0
    %1662 = vmatprep.subr.bf16.mxu0 0
    %1663 = vmatpush1.bf16.msra.mxu0 0
    %1664 = vmatprep.subr.bf16.mxu0 0
    %1665 = vmatpush1.bf16.msra.mxu0 0
    %1666 = vmatprep.subr.bf16.mxu0 0
    %1667 = vmatpush1.bf16.msra.mxu0 0
    %1668 = vmatprep.subr.bf16.mxu0 0
    %1669 = vmatpush1.bf16.msra.mxu0 0
    %1670 = vmatprep.subr.bf16.mxu0 0
    %1671 = vmatpush1.bf16.msra.mxu0 0
    %1672 = vmatprep.subr.bf16.mxu0 0
    %1673 = vmatpush1.bf16.msra.mxu0 0
    %1674 = vmatprep.subr.bf16.mxu0 0
    %1675 = vmatpush1.bf16.msra.mxu0 0
    %1676 = vmatprep.mubr.bf16.mxu0 0
    %1677 = vmatmul.mubr.bf16.gmra.mrb[0].mxu0 %v387
    %v1678 = vpop.f32.mrb[0].mxu0
    %v1679 = vadd.f32 %v1636, %v1678
    %v1680 = vpop.f32.mrb[0].mxu0
    %v1681 = vadd.f32 %v1638, %v1680
    %v1682 = vpop.f32.mrb[0].mxu0
    %v1683 = vadd.f32 %v1640, %v1682
    %v1684 = vpop.f32.mrb[0].mxu0
    %v1685 = vadd.f32 %v1642, %v1684
    %1686 = vdwg.mxu0
    %1687 = vmatprep.subr.bf16.mxu0 %v1070
    %1688 = vmatpush1.bf16.msra.mxu0 %v1069
    %1689 = vmatprep.subr.bf16.mxu0 %v1074
    %1690 = vmatpush1.bf16.msra.mxu0 %v1073
    %1691 = vmatprep.subr.bf16.mxu0 %v1078
    %1692 = vmatpush1.bf16.msra.mxu0 %v1077
    %1693 = vmatprep.subr.bf16.mxu0 %v1082
    %1694 = vmatpush1.bf16.msra.mxu0 %v1081
    %1695 = vmatprep.subr.bf16.mxu0 %v1086
    %1696 = vmatpush1.bf16.msra.mxu0 %v1085
    %1697 = vmatprep.subr.bf16.mxu0 %v1090
    %1698 = vmatpush1.bf16.msra.mxu0 %v1089
    %1699 = vmatprep.subr.bf16.mxu0 %v1094
    %1700 = vmatpush1.bf16.msra.mxu0 %v1093
    %1701 = vmatprep.subr.bf16.mxu0 %v1098
    %1702 = vmatpush1.bf16.msra.mxu0 %v1097
    %1703 = vmatprep.subr.bf16.mxu0 %v1102
    %1704 = vmatpush1.bf16.msra.mxu0 %v1101
    %1705 = vmatprep.subr.bf16.mxu0 %v1106
    %1706 = vmatpush1.bf16.msra.mxu0 %v1105
    %1707 = vmatprep.subr.bf16.mxu0 %v1110
    %1708 = vmatpush1.bf16.msra.mxu0 %v1109
    %1709 = vmatprep.subr.bf16.mxu0 %v1114
    %1710 = vmatpush1.bf16.msra.mxu0 %v1113
    %1711 = vmatprep.subr.bf16.mxu0 %v1118
    %1712 = vmatpush1.bf16.msra.mxu0 %v1117
    %1713 = vmatprep.subr.bf16.mxu0 %v1122
    %1714 = vmatpush1.bf16.msra.mxu0 %v1121
    %1715 = vmatprep.subr.bf16.mxu0 %v1126
    %1716 = vmatpush1.bf16.msra.mxu0 %v1125
    %1717 = vmatprep.subr.bf16.mxu0 %v1130
    %1718 = vmatpush1.bf16.msra.mxu0 %v1129
    %1719 = vmatprep.mubr.bf16.mxu0 %v382
    %1720 = vmatmul.mubr.bf16.gmra.mrb[0].mxu0 %v381
    %v1721 = vpop.f32.mrb[0].mxu0
    %v1722 = vadd.f32 %v350, %v1721
    %v1723 = vpop.f32.mrb[0].mxu0
    %v1724 = vadd.f32 %v354, %v1723
    %v1725 = vpop.f32.mrb[0].mxu0
    %v1726 = vadd.f32 %v350, %v1725
    %v1727 = vpop.f32.mrb[0].mxu0
    %v1728 = vadd.f32 %v354, %v1727
    %1729 = vdwg.mxu0
    %1730 = vmatprep.subr.bf16.mxu0 %v1134
    %1731 = vmatpush1.bf16.msra.mxu0 %v1133
    %1732 = vmatprep.subr.bf16.mxu0 %v1138
    %1733 = vmatpush1.bf16.msra.mxu0 %v1137
    %1734 = vmatprep.subr.bf16.mxu0 %v1142
    %1735 = vmatpush1.bf16.msra.mxu0 %v1141
    %1736 = vmatprep.subr.bf16.mxu0 %v1146
    %1737 = vmatpush1.bf16.msra.mxu0 %v1145
    %1738 = vmatprep.subr.bf16.mxu0 %v1150
    %1739 = vmatpush1.bf16.msra.mxu0 %v1149
    %1740 = vmatprep.subr.bf16.mxu0 %v1154
    %1741 = vmatpush1.bf16.msra.mxu0 %v1153
    %1742 = vmatprep.subr.bf16.mxu0 %v1158
    %1743 = vmatpush1.bf16.msra.mxu0 %v1157
    %1744 = vmatprep.subr.bf16.mxu0 %v1162
    %1745 = vmatpush1.bf16.msra.mxu0 %v1161
    %1746 = vmatprep.subr.bf16.mxu0 %v1166
    %1747 = vmatpush1.bf16.msra.mxu0 %v1165
    %1748 = vmatprep.subr.bf16.mxu0 %v1170
    %1749 = vmatpush1.bf16.msra.mxu0 %v1169
    %1750 = vmatprep.subr.bf16.mxu0 %v1174
    %1751 = vmatpush1.bf16.msra.mxu0 %v1173
    %1752 = vmatprep.subr.bf16.mxu0 %v1178
    %1753 = vmatpush1.bf16.msra.mxu0 %v1177
    %1754 = vmatprep.subr.bf16.mxu0 %v1182
    %1755 = vmatpush1.bf16.msra.mxu0 %v1181
    %1756 = vmatprep.subr.bf16.mxu0 %v1186
    %1757 = vmatpush1.bf16.msra.mxu0 %v1185
    %1758 = vmatprep.subr.bf16.mxu0 %v1190
    %1759 = vmatpush1.bf16.msra.mxu0 %v1189
    %1760 = vmatprep.subr.bf16.mxu0 %v1194
    %1761 = vmatpush1.bf16.msra.mxu0 %v1193
    %1762 = vmatprep.mubr.bf16.mxu0 %v384
    %1763 = vmatmul.mubr.bf16.gmra.mrb[0].mxu0 %v383
    %v1764 = vpop.f32.mrb[0].mxu0
    %v1765 = vadd.f32 %v1722, %v1764
    %v1766 = vpop.f32.mrb[0].mxu0
    %v1767 = vadd.f32 %v1724, %v1766
    %v1768 = vpop.f32.mrb[0].mxu0
    %v1769 = vadd.f32 %v1726, %v1768
    %v1770 = vpop.f32.mrb[0].mxu0
    %v1771 = vadd.f32 %v1728, %v1770
    %1772 = vdwg.mxu0
    %1773 = vmatprep.subr.bf16.mxu0 %v1198
    %1774 = vmatpush1.bf16.msra.mxu0 %v1197
    %1775 = vmatprep.subr.bf16.mxu0 %v1202
    %1776 = vmatpush1.bf16.msra.mxu0 %v1201
    %1777 = vmatprep.subr.bf16.mxu0 %v1206
    %1778 = vmatpush1.bf16.msra.mxu0 %v1205
    %1779 = vmatprep.subr.bf16.mxu0 %v1210
    %1780 = vmatpush1.bf16.msra.mxu0 %v1209
    %1781 = vmatprep.subr.bf16.mxu0 %v1214
    %1782 = vmatpush1.bf16.msra.mxu0 %v1213
    %1783 = vmatprep.subr.bf16.mxu0 %v1218
    %1784 = vmatpush1.bf16.msra.mxu0 %v1217
    %1785 = vmatprep.subr.bf16.mxu0 %v1222
    %1786 = vmatpush1.bf16.msra.mxu0 %v1221
    %1787 = vmatprep.subr.bf16.mxu0 %v1226
    %1788 = vmatpush1.bf16.msra.mxu0 %v1225
    %1789 = vmatprep.subr.bf16.mxu0 %v1230
    %1790 = vmatpush1.bf16.msra.mxu0 %v1229
    %1791 = vmatprep.subr.bf16.mxu0 %v1234
    %1792 = vmatpush1.bf16.msra.mxu0 %v1233
    %1793 = vmatprep.subr.bf16.mxu0 %v1238
    %1794 = vmatpush1.bf16.msra.mxu0 %v1237
    %1795 = vmatprep.subr.bf16.mxu0 %v1242
    %1796 = vmatpush1.bf16.msra.mxu0 %v1241
    %1797 = vmatprep.subr.bf16.mxu0 %v1246
    %1798 = vmatpush1.bf16.msra.mxu0 %v1245
    %1799 = vmatprep.subr.bf16.mxu0 %v1250
    %1800 = vmatpush1.bf16.msra.mxu0 %v1249
    %1801 = vmatprep.subr.bf16.mxu0 %v1254
    %1802 = vmatpush1.bf16.msra.mxu0 %v1253
    %1803 = vmatprep.subr.bf16.mxu0 %v1258
    %1804 = vmatpush1.bf16.msra.mxu0 %v1257
    %1805 = vmatprep.mubr.bf16.mxu0 %v386
    %1806 = vmatmul.mubr.bf16.gmra.mrb[0].mxu0 %v385
    %v1807 = vpop.f32.mrb[0].mxu0
    %v1808 = vadd.f32 %v1765, %v1807
    %v1809 = vpop.f32.mrb[0].mxu0
    %v1810 = vadd.f32 %v1767, %v1809
    %v1811 = vpop.f32.mrb[0].mxu0
    %v1812 = vadd.f32 %v1769, %v1811
    %v1813 = vpop.f32.mrb[0].mxu0
    %v1814 = vadd.f32 %v1771, %v1813
    %1815 = vdwg.mxu0
    %1816 = vmatprep.subr.bf16.mxu0 %v1262
    %1817 = vmatpush1.bf16.msra.mxu0 %v1261
    %1818 = vmatprep.subr.bf16.mxu0 %v1266
    %1819 = vmatpush1.bf16.msra.mxu0 %v1265
    %1820 = vmatprep.subr.bf16.mxu0 %v1270
    %1821 = vmatpush1.bf16.msra.mxu0 %v1269
    %1822 = vmatprep.subr.bf16.mxu0 %v1274
    %1823 = vmatpush1.bf16.msra.mxu0 %v1273
    %1824 = vmatprep.subr.bf16.mxu0 %v1278
    %1825 = vmatpush1.bf16.msra.mxu0 %v1277
    %1826 = vmatprep.subr.bf16.mxu0 %v1282
    %1827 = vmatpush1.bf16.msra.mxu0 %v1281
    %1828 = vmatprep.subr.bf16.mxu0 %v1286
    %1829 = vmatpush1.bf16.msra.mxu0 %v1285
    %1830 = vmatprep.subr.bf16.mxu0 %v1290
    %1831 = vmatpush1.bf16.msra.mxu0 %v1289
    %1832 = vmatprep.subr.bf16.mxu0 0
    %1833 = vmatpush1.bf16.msra.mxu0 0
    %1834 = vmatprep.subr.bf16.mxu0 0
    %1835 = vmatpush1.bf16.msra.mxu0 0
    %1836 = vmatprep.subr.bf16.mxu0 0
    %1837 = vmatpush1.bf16.msra.mxu0 0
    %1838 = vmatprep.subr.bf16.mxu0 0
    %1839 = vmatpush1.bf16.msra.mxu0 0
    %1840 = vmatprep.subr.bf16.mxu0 0
    %1841 = vmatpush1.bf16.msra.mxu0 0
    %1842 = vmatprep.subr.bf16.mxu0 0
    %1843 = vmatpush1.bf16.msra.mxu0 0
    %1844 = vmatprep.subr.bf16.mxu0 0
    %1845 = vmatpush1.bf16.msra.mxu0 0
    %1846 = vmatprep.subr.bf16.mxu0 0
    %1847 = vmatpush1.bf16.msra.mxu0 0
    %1848 = vmatprep.mubr.bf16.mxu0 0
    %1849 = vmatmul.mubr.bf16.gmra.mrb[0].mxu0 %v387
    %v1850 = vpop.f32.mrb[0].mxu0
    %v1851 = vadd.f32 %v1808, %v1850
    %v1852 = vpop.f32.mrb[0].mxu0
    %v1853 = vadd.f32 %v1810, %v1852
    %v1854 = vpop.f32.mrb[0].mxu0
    %v1855 = vadd.f32 %v1812, %v1854
    %v1856 = vpop.f32.mrb[0].mxu0
    %v1857 = vadd.f32 %v1814, %v1856
    %1858 = vdwg.mxu0
    %v1859 = vmax.f32 %v1679, 0.0
    %v1860 = vmax.f32 %v1681, 0.0
    %v1861 = vmax.f32 %v1851, 0.0
    %v1862 = vmax.f32 %v1853, 0.0
    %v1863 = vmax.f32 %v1683, 0.0
    %v1864 = vmax.f32 %v1685, 0.0
    %v1865 = vmax.f32 %v1855, 0.0
    %v1866 = vmax.f32 %v1857, 0.0
    %v1867 = vpack.c.bf16 %v1863, %v1859
    %v1868 = vpack.c.bf16 %v1864, %v1860
    %v1869 = vpack.c.bf16 %v1865, %v1861
    %v1870 = vpack.c.bf16 %v1866, %v1862
    %v1871 = vld [vmem:[#allocation7] sm:$0xff]
    %v1872 = vld [vmem:[#allocation7 + $0x8] sm:$0xff]
    %v1873 = vld [vmem:[#allocation7 + $0x10] sm:$0xff]
    %v1874 = vld [vmem:[#allocation7 + $0x18] sm:$0xff]
    %v1875 = vld [vmem:[#allocation7 + $0x20] sm:$0xff]
    %v1876 = vld [vmem:[#allocation7 + $0x28] sm:$0xff]
    %v1877 = vld [vmem:[#allocation7 + $0x30] sm:$0xff]
    %v1878 = vld [vmem:[#allocation7 + $0x38] sm:$0xff]
    %v1879 = vld [vmem:[#allocation7 + $0x40] sm:$0xff]
    %v1880 = vld [vmem:[#allocation7 + $0x48] sm:$0xff]
    %v1881 = vld [vmem:[#allocation7 + $0x50] sm:$0xff]
    %v1882 = vld [vmem:[#allocation7 + $0x58] sm:$0xff]
    %v1883 = vld [vmem:[#allocation7 + $0x60] sm:$0xff]
    %v1884 = vld [vmem:[#allocation7 + $0x68] sm:$0xff]
    %v1885 = vld [vmem:[#allocation7 + $0x70] sm:$0xff]
    %v1886 = vld [vmem:[#allocation7 + $0x78] sm:$0xff]
    %v1887 = vld [vmem:[#allocation7 + $0x80] sm:$0xff]
    %v1888 = vld [vmem:[#allocation7 + $0x88] sm:$0xff]
    %v1889 = vld [vmem:[#allocation7 + $0x90] sm:$0xff]
    %v1890 = vld [vmem:[#allocation7 + $0x98] sm:$0xff]
    %v1891 = vld [vmem:[#allocation7 + $0xa0] sm:$0xff]
    %v1892 = vld [vmem:[#allocation7 + $0xa8] sm:$0xff]
    %v1893 = vld [vmem:[#allocation7 + $0xb0] sm:$0xff]
    %v1894 = vld [vmem:[#allocation7 + $0xb8] sm:$0xff]
    %v1895 = vld [vmem:[#allocation7 + $0xc0] sm:$0xff]
    %v1896 = vld [vmem:[#allocation7 + $0xc8] sm:$0xff]
    %v1897 = vld [vmem:[#allocation7 + $0xd0] sm:$0xff]
    %v1898 = vld [vmem:[#allocation7 + $0xd8] sm:$0xff]
    %v1899 = vld [vmem:[#allocation7 + $0xe0] sm:$0xff]
    %v1900 = vld [vmem:[#allocation7 + $0xe8] sm:$0xff]
    %v1901 = vld [vmem:[#allocation7 + $0xf0] sm:$0xff]
    %v1902 = vld [vmem:[#allocation7 + $0xf8] sm:$0xff]
    %v1903 = vld [vmem:[#allocation7 + $0x100] sm:$0xff]
    %v1904 = vld [vmem:[#allocation7 + $0x108] sm:$0xff]
    %v1905 = vld [vmem:[#allocation7 + $0x110] sm:$0xff]
    %v1906 = vld [vmem:[#allocation7 + $0x118] sm:$0xff]
    %v1907 = vld [vmem:[#allocation7 + $0x120] sm:$0xff]
    %v1908 = vld [vmem:[#allocation7 + $0x128] sm:$0xff]
    %v1909 = vld [vmem:[#allocation7 + $0x130] sm:$0xff]
    %v1910 = vld [vmem:[#allocation7 + $0x138] sm:$0xff]
    %v1911 = vld [vmem:[#allocation7 + $0x140] sm:$0xff]
    %v1912 = vld [vmem:[#allocation7 + $0x148] sm:$0xff]
    %v1913 = vld [vmem:[#allocation7 + $0x150] sm:$0xff]
    %v1914 = vld [vmem:[#allocation7 + $0x158] sm:$0xff]
    %v1915 = vld [vmem:[#allocation7 + $0x160] sm:$0xff]
    %v1916 = vld [vmem:[#allocation7 + $0x168] sm:$0xff]
    %v1917 = vld [vmem:[#allocation7 + $0x170] sm:$0xff]
    %v1918 = vld [vmem:[#allocation7 + $0x178] sm:$0xff]
    %v1919 = vld [vmem:[#allocation7 + $0x180] sm:$0xff]
    %v1920 = vld [vmem:[#allocation7 + $0x188] sm:$0xff]
    %v1921 = vld [vmem:[#allocation7 + $0x190] sm:$0xff]
    %v1922 = vld [vmem:[#allocation7 + $0x198] sm:$0xff]
    %v1923 = vld [vmem:[#allocation7 + $0x1a0] sm:$0xff]
    %v1924 = vld [vmem:[#allocation7 + $0x1a8] sm:$0xff]
    %v1925 = vld [vmem:[#allocation7 + $0x1b0] sm:$0xff]
    %v1926 = vld [vmem:[#allocation7 + $0x1b8] sm:$0xff]
    %v1927 = vld [vmem:[#allocation7 + $0x1c0] sm:$0xff]
    %v1928 = vld [vmem:[#allocation7 + $0x1c8] sm:$0xff]
    %v1929 = vld [vmem:[#allocation7 + $0x1d0] sm:$0xff]
    %v1930 = vld [vmem:[#allocation7 + $0x1d8] sm:$0xff]
    %v1931 = vld [vmem:[#allocation7 + $0x1e0] sm:$0xff]
    %v1932 = vld [vmem:[#allocation7 + $0x1e8] sm:$0xff]
    %v1933 = vld [vmem:[#allocation7 + $0x1f0] sm:$0xff]
    %v1934 = vld [vmem:[#allocation7 + $0x1f8] sm:$0xff]
    %v1935 = vld [vmem:[#allocation7 + $0x200] sm:$0xff]
    %v1936 = vld [vmem:[#allocation7 + $0x208] sm:$0xff]
    %v1937 = vld [vmem:[#allocation7 + $0x210] sm:$0xff]
    %v1938 = vld [vmem:[#allocation7 + $0x218] sm:$0xff]
    %v1939 = vld [vmem:[#allocation7 + $0x220] sm:$0xff]
    %v1940 = vld [vmem:[#allocation7 + $0x228] sm:$0xff]
    %v1941 = vld [vmem:[#allocation7 + $0x230] sm:$0xff]
    %v1942 = vld [vmem:[#allocation7 + $0x238] sm:$0xff]
    %v1943 = vld [vmem:[#allocation7 + $0x240] sm:$0xff]
    %v1944 = vld [vmem:[#allocation7 + $0x248] sm:$0xff]
    %v1945 = vld [vmem:[#allocation7 + $0x250] sm:$0xff]
    %v1946 = vld [vmem:[#allocation7 + $0x258] sm:$0xff]
    %v1947 = vld [vmem:[#allocation7 + $0x260] sm:$0xff]
    %v1948 = vld [vmem:[#allocation7 + $0x268] sm:$0xff]
    %v1949 = vld [vmem:[#allocation7 + $0x270] sm:$0xff]
    %v1950 = vld [vmem:[#allocation7 + $0x278] sm:$0xff]
    %v1951 = vld [vmem:[#allocation7 + $0x280] sm:$0xff]
    %v1952 = vld [vmem:[#allocation7 + $0x288] sm:$0xff]
    %v1953 = vld [vmem:[#allocation7 + $0x290] sm:$0xff]
    %v1954 = vld [vmem:[#allocation7 + $0x298] sm:$0xff]
    %v1955 = vld [vmem:[#allocation7 + $0x2a0] sm:$0xff]
    %v1956 = vld [vmem:[#allocation7 + $0x2a8] sm:$0xff]
    %v1957 = vld [vmem:[#allocation7 + $0x2b0] sm:$0xff]
    %v1958 = vld [vmem:[#allocation7 + $0x2b8] sm:$0xff]
    %v1959 = vld [vmem:[#allocation7 + $0x2c0] sm:$0xff]
    %v1960 = vld [vmem:[#allocation7 + $0x2c8] sm:$0xff]
    %v1961 = vld [vmem:[#allocation7 + $0x2d0] sm:$0xff]
    %v1962 = vld [vmem:[#allocation7 + $0x2d8] sm:$0xff]
    %v1963 = vld [vmem:[#allocation7 + $0x2e0] sm:$0xff]
    %v1964 = vld [vmem:[#allocation7 + $0x2e8] sm:$0xff]
    %v1965 = vld [vmem:[#allocation7 + $0x2f0] sm:$0xff]
    %v1966 = vld [vmem:[#allocation7 + $0x2f8] sm:$0xff]
    %v1967 = vld [vmem:[#allocation7 + $0x300] sm:$0xff]
    %v1968 = vld [vmem:[#allocation7 + $0x308] sm:$0xff]
    %v1969 = vld [vmem:[#allocation7 + $0x310] sm:$0xff]
    %v1970 = vld [vmem:[#allocation7 + $0x318] sm:$0xff]
    %v1971 = vld [vmem:[#allocation7 + $0x320] sm:$0xff]
    %v1972 = vld [vmem:[#allocation7 + $0x328] sm:$0xff]
    %v1973 = vld [vmem:[#allocation7 + $0x330] sm:$0xff]
    %v1974 = vld [vmem:[#allocation7 + $0x338] sm:$0xff]
    %v1975 = vld [vmem:[#allocation7 + $0x340] sm:$0xff]
    %v1976 = vld [vmem:[#allocation7 + $0x348] sm:$0xff]
    %v1977 = vld [vmem:[#allocation7 + $0x350] sm:$0xff]
    %v1978 = vld [vmem:[#allocation7 + $0x358] sm:$0xff]
    %v1979 = vld [vmem:[#allocation7 + $0x360] sm:$0xff]
    %v1980 = vld [vmem:[#allocation7 + $0x368] sm:$0xff]
    %v1981 = vld [vmem:[#allocation7 + $0x370] sm:$0xff]
    %v1982 = vld [vmem:[#allocation7 + $0x378] sm:$0xff]
    %v1983 = vld [vmem:[#allocation7 + $0x380] sm:$0xff]
    %v1984 = vld [vmem:[#allocation7 + $0x388] sm:$0xff]
    %v1985 = vld [vmem:[#allocation7 + $0x390] sm:$0xff]
    %v1986 = vld [vmem:[#allocation7 + $0x398] sm:$0xff]
    %v1987 = vld [vmem:[#allocation7 + $0x3a0] sm:$0xff]
    %v1988 = vld [vmem:[#allocation7 + $0x3a8] sm:$0xff]
    %v1989 = vld [vmem:[#allocation7 + $0x3b0] sm:$0xff]
    %v1990 = vld [vmem:[#allocation7 + $0x3b8] sm:$0xff]
    %v1991 = vld [vmem:[#allocation7 + $0x3c0] sm:$0xff]
    %v1992 = vld [vmem:[#allocation7 + $0x3c8] sm:$0xff]
    %v1993 = vld [vmem:[#allocation7 + $0x3d0] sm:$0xff]
    %v1994 = vld [vmem:[#allocation7 + $0x3d8] sm:$0xff]
    %v1995 = vld [vmem:[#allocation7 + $0x3e0] sm:$0xff]
    %v1996 = vld [vmem:[#allocation7 + $0x3e8] sm:$0xff]
    %v1997 = vld [vmem:[#allocation7 + $0x3f0] sm:$0xff]
    %v1998 = vld [vmem:[#allocation7 + $0x3f8] sm:$0xff]
    %v2000 = vlaneseq
    %v2001 = vshrl.u32 %v2000, 7
    %v2002 = vsub.s32 0, %v2001
    %v2003 = vrot.slane %v111, %v2002
    %v2004 = vlaneseq
    %v2005 = vshrl.u32 %v2004, 7
    %v2006 = vsub.s32 1, %v2005
    %v2007 = vrot.slane %v111, %v2006
    %v2008 = vlaneseq
    %v2009 = vshrl.u32 %v2008, 7
    %v2010 = vsub.s32 2, %v2009
    %v2011 = vrot.slane %v111, %v2010
    %v2012 = vlaneseq
    %v2013 = vshrl.u32 %v2012, 7
    %v2014 = vsub.s32 3, %v2013
    %v2015 = vrot.slane %v111, %v2014
    %v2148 = vunpack.c.l.b16 %v1871
    %v2149 = vunpack.c.h.b16 %v1871
    %v2150 = vunpack.c.l.b16 %v1872
    %v2151 = vunpack.c.h.b16 %v1872
    %v2152 = vunpack.c.l.b16 %v1873
    %v2153 = vunpack.c.h.b16 %v1873
    %v2154 = vunpack.c.l.b16 %v1874
    %v2155 = vunpack.c.h.b16 %v1874
    %v2156 = vunpack.c.l.b16 %v1875
    %v2157 = vunpack.c.h.b16 %v1875
    %v2158 = vunpack.c.l.b16 %v1876
    %v2159 = vunpack.c.h.b16 %v1876
    %v2160 = vunpack.c.l.b16 %v1877
    %v2161 = vunpack.c.h.b16 %v1877
    %v2162 = vunpack.c.l.b16 %v1878
    %v2163 = vunpack.c.h.b16 %v1878
    %v2164 = vunpack.c.l.b16 %v1879
    %v2165 = vunpack.c.h.b16 %v1879
    %v2166 = vunpack.c.l.b16 %v1880
    %v2167 = vunpack.c.h.b16 %v1880
    %v2168 = vunpack.c.l.b16 %v1881
    %v2169 = vunpack.c.h.b16 %v1881
    %v2170 = vunpack.c.l.b16 %v1882
    %v2171 = vunpack.c.h.b16 %v1882
    %v2172 = vunpack.c.l.b16 %v1883
    %v2173 = vunpack.c.h.b16 %v1883
    %v2174 = vunpack.c.l.b16 %v1884
    %v2175 = vunpack.c.h.b16 %v1884
    %v2176 = vunpack.c.l.b16 %v1885
    %v2177 = vunpack.c.h.b16 %v1885
    %v2178 = vunpack.c.l.b16 %v1886
    %v2179 = vunpack.c.h.b16 %v1886
    %v2180 = vunpack.c.l.b16 %v1887
    %v2181 = vunpack.c.h.b16 %v1887
    %v2182 = vunpack.c.l.b16 %v1888
    %v2183 = vunpack.c.h.b16 %v1888
    %v2184 = vunpack.c.l.b16 %v1889
    %v2185 = vunpack.c.h.b16 %v1889
    %v2186 = vunpack.c.l.b16 %v1890
    %v2187 = vunpack.c.h.b16 %v1890
    %v2188 = vunpack.c.l.b16 %v1891
    %v2189 = vunpack.c.h.b16 %v1891
    %v2190 = vunpack.c.l.b16 %v1892
    %v2191 = vunpack.c.h.b16 %v1892
    %v2192 = vunpack.c.l.b16 %v1893
    %v2193 = vunpack.c.h.b16 %v1893
    %v2194 = vunpack.c.l.b16 %v1894
    %v2195 = vunpack.c.h.b16 %v1894
    %v2196 = vunpack.c.l.b16 %v1895
    %v2197 = vunpack.c.h.b16 %v1895
    %v2198 = vunpack.c.l.b16 %v1896
    %v2199 = vunpack.c.h.b16 %v1896
    %v2200 = vunpack.c.l.b16 %v1897
    %v2201 = vunpack.c.h.b16 %v1897
    %v2202 = vunpack.c.l.b16 %v1898
    %v2203 = vunpack.c.h.b16 %v1898
    %v2204 = vunpack.c.l.b16 %v1899
    %v2205 = vunpack.c.h.b16 %v1899
    %v2206 = vunpack.c.l.b16 %v1900
    %v2207 = vunpack.c.h.b16 %v1900
    %v2208 = vunpack.c.l.b16 %v1901
    %v2209 = vunpack.c.h.b16 %v1901
    %v2210 = vunpack.c.l.b16 %v1902
    %v2211 = vunpack.c.h.b16 %v1902
    %v2212 = vunpack.c.l.b16 %v1903
    %v2213 = vunpack.c.h.b16 %v1903
    %v2214 = vunpack.c.l.b16 %v1904
    %v2215 = vunpack.c.h.b16 %v1904
    %v2216 = vunpack.c.l.b16 %v1905
    %v2217 = vunpack.c.h.b16 %v1905
    %v2218 = vunpack.c.l.b16 %v1906
    %v2219 = vunpack.c.h.b16 %v1906
    %v2220 = vunpack.c.l.b16 %v1907
    %v2221 = vunpack.c.h.b16 %v1907
    %v2222 = vunpack.c.l.b16 %v1908
    %v2223 = vunpack.c.h.b16 %v1908
    %v2224 = vunpack.c.l.b16 %v1909
    %v2225 = vunpack.c.h.b16 %v1909
    %v2226 = vunpack.c.l.b16 %v1910
    %v2227 = vunpack.c.h.b16 %v1910
    %v2228 = vunpack.c.l.b16 %v1911
    %v2229 = vunpack.c.h.b16 %v1911
    %v2230 = vunpack.c.l.b16 %v1912
    %v2231 = vunpack.c.h.b16 %v1912
    %v2232 = vunpack.c.l.b16 %v1913
    %v2233 = vunpack.c.h.b16 %v1913
    %v2234 = vunpack.c.l.b16 %v1914
    %v2235 = vunpack.c.h.b16 %v1914
    %v2236 = vunpack.c.l.b16 %v1915
    %v2237 = vunpack.c.h.b16 %v1915
    %v2238 = vunpack.c.l.b16 %v1916
    %v2239 = vunpack.c.h.b16 %v1916
    %v2240 = vunpack.c.l.b16 %v1917
    %v2241 = vunpack.c.h.b16 %v1917
    %v2242 = vunpack.c.l.b16 %v1918
    %v2243 = vunpack.c.h.b16 %v1918
    %v2244 = vunpack.c.l.b16 %v1919
    %v2245 = vunpack.c.h.b16 %v1919
    %v2246 = vunpack.c.l.b16 %v1920
    %v2247 = vunpack.c.h.b16 %v1920
    %v2248 = vunpack.c.l.b16 %v1921
    %v2249 = vunpack.c.h.b16 %v1921
    %v2250 = vunpack.c.l.b16 %v1922
    %v2251 = vunpack.c.h.b16 %v1922
    %v2252 = vunpack.c.l.b16 %v1923
    %v2253 = vunpack.c.h.b16 %v1923
    %v2254 = vunpack.c.l.b16 %v1924
    %v2255 = vunpack.c.h.b16 %v1924
    %v2256 = vunpack.c.l.b16 %v1925
    %v2257 = vunpack.c.h.b16 %v1925
    %v2258 = vunpack.c.l.b16 %v1926
    %v2259 = vunpack.c.h.b16 %v1926
    %v2260 = vunpack.c.l.b16 %v1927
    %v2261 = vunpack.c.h.b16 %v1927
    %v2262 = vunpack.c.l.b16 %v1928
    %v2263 = vunpack.c.h.b16 %v1928
    %v2264 = vunpack.c.l.b16 %v1929
    %v2265 = vunpack.c.h.b16 %v1929
    %v2266 = vunpack.c.l.b16 %v1930
    %v2267 = vunpack.c.h.b16 %v1930
    %v2268 = vunpack.c.l.b16 %v1931
    %v2269 = vunpack.c.h.b16 %v1931
    %v2270 = vunpack.c.l.b16 %v1932
    %v2271 = vunpack.c.h.b16 %v1932
    %v2272 = vunpack.c.l.b16 %v1933
    %v2273 = vunpack.c.h.b16 %v1933
    %v2274 = vunpack.c.l.b16 %v1934
    %v2275 = vunpack.c.h.b16 %v1934
    %v2276 = vunpack.c.l.b16 %v1935
    %v2277 = vunpack.c.h.b16 %v1935
    %v2278 = vunpack.c.l.b16 %v1936
    %v2279 = vunpack.c.h.b16 %v1936
    %v2280 = vunpack.c.l.b16 %v1937
    %v2281 = vunpack.c.h.b16 %v1937
    %v2282 = vunpack.c.l.b16 %v1938
    %v2283 = vunpack.c.h.b16 %v1938
    %v2284 = vunpack.c.l.b16 %v1939
    %v2285 = vunpack.c.h.b16 %v1939
    %v2286 = vunpack.c.l.b16 %v1940
    %v2287 = vunpack.c.h.b16 %v1940
    %v2288 = vunpack.c.l.b16 %v1941
    %v2289 = vunpack.c.h.b16 %v1941
    %v2290 = vunpack.c.l.b16 %v1942
    %v2291 = vunpack.c.h.b16 %v1942
    %v2292 = vunpack.c.l.b16 %v1943
    %v2293 = vunpack.c.h.b16 %v1943
    %v2294 = vunpack.c.l.b16 %v1944
    %v2295 = vunpack.c.h.b16 %v1944
    %v2296 = vunpack.c.l.b16 %v1945
    %v2297 = vunpack.c.h.b16 %v1945
    %v2298 = vunpack.c.l.b16 %v1946
    %v2299 = vunpack.c.h.b16 %v1946
    %v2300 = vunpack.c.l.b16 %v1947
    %v2301 = vunpack.c.h.b16 %v1947
    %v2302 = vunpack.c.l.b16 %v1948
    %v2303 = vunpack.c.h.b16 %v1948
    %v2304 = vunpack.c.l.b16 %v1949
    %v2305 = vunpack.c.h.b16 %v1949
    %v2306 = vunpack.c.l.b16 %v1950
    %v2307 = vunpack.c.h.b16 %v1950
    %v2308 = vunpack.c.l.b16 %v1951
    %v2309 = vunpack.c.h.b16 %v1951
    %v2310 = vunpack.c.l.b16 %v1952
    %v2311 = vunpack.c.h.b16 %v1952
    %v2312 = vunpack.c.l.b16 %v1953
    %v2313 = vunpack.c.h.b16 %v1953
    %v2314 = vunpack.c.l.b16 %v1954
    %v2315 = vunpack.c.h.b16 %v1954
    %v2316 = vunpack.c.l.b16 %v1955
    %v2317 = vunpack.c.h.b16 %v1955
    %v2318 = vunpack.c.l.b16 %v1956
    %v2319 = vunpack.c.h.b16 %v1956
    %v2320 = vunpack.c.l.b16 %v1957
    %v2321 = vunpack.c.h.b16 %v1957
    %v2322 = vunpack.c.l.b16 %v1958
    %v2323 = vunpack.c.h.b16 %v1958
    %v2324 = vunpack.c.l.b16 %v1959
    %v2325 = vunpack.c.h.b16 %v1959
    %v2326 = vunpack.c.l.b16 %v1960
    %v2327 = vunpack.c.h.b16 %v1960
    %v2328 = vunpack.c.l.b16 %v1961
    %v2329 = vunpack.c.h.b16 %v1961
    %v2330 = vunpack.c.l.b16 %v1962
    %v2331 = vunpack.c.h.b16 %v1962
    %v2332 = vunpack.c.l.b16 %v1963
    %v2333 = vunpack.c.h.b16 %v1963
    %v2334 = vunpack.c.l.b16 %v1964
    %v2335 = vunpack.c.h.b16 %v1964
    %v2336 = vunpack.c.l.b16 %v1965
    %v2337 = vunpack.c.h.b16 %v1965
    %v2338 = vunpack.c.l.b16 %v1966
    %v2339 = vunpack.c.h.b16 %v1966
    %v2340 = vunpack.c.l.b16 %v1967
    %v2341 = vunpack.c.h.b16 %v1967
    %v2342 = vunpack.c.l.b16 %v1968
    %v2343 = vunpack.c.h.b16 %v1968
    %v2344 = vunpack.c.l.b16 %v1969
    %v2345 = vunpack.c.h.b16 %v1969
    %v2346 = vunpack.c.l.b16 %v1970
    %v2347 = vunpack.c.h.b16 %v1970
    %v2348 = vunpack.c.l.b16 %v1971
    %v2349 = vunpack.c.h.b16 %v1971
    %v2350 = vunpack.c.l.b16 %v1972
    %v2351 = vunpack.c.h.b16 %v1972
    %v2352 = vunpack.c.l.b16 %v1973
    %v2353 = vunpack.c.h.b16 %v1973
    %v2354 = vunpack.c.l.b16 %v1974
    %v2355 = vunpack.c.h.b16 %v1974
    %v2356 = vunpack.c.l.b16 %v1975
    %v2357 = vunpack.c.h.b16 %v1975
    %v2358 = vunpack.c.l.b16 %v1976
    %v2359 = vunpack.c.h.b16 %v1976
    %v2360 = vunpack.c.l.b16 %v1977
    %v2361 = vunpack.c.h.b16 %v1977
    %v2362 = vunpack.c.l.b16 %v1978
    %v2363 = vunpack.c.h.b16 %v1978
    %v2364 = vunpack.c.l.b16 %v1979
    %v2365 = vunpack.c.h.b16 %v1979
    %v2366 = vunpack.c.l.b16 %v1980
    %v2367 = vunpack.c.h.b16 %v1980
    %v2368 = vunpack.c.l.b16 %v1981
    %v2369 = vunpack.c.h.b16 %v1981
    %v2370 = vunpack.c.l.b16 %v1982
    %v2371 = vunpack.c.h.b16 %v1982
    %v2372 = vunpack.c.l.b16 %v1983
    %v2373 = vunpack.c.h.b16 %v1983
    %v2374 = vunpack.c.l.b16 %v1984
    %v2375 = vunpack.c.h.b16 %v1984
    %v2376 = vunpack.c.l.b16 %v1985
    %v2377 = vunpack.c.h.b16 %v1985
    %v2378 = vunpack.c.l.b16 %v1986
    %v2379 = vunpack.c.h.b16 %v1986
    %v2380 = vunpack.c.l.b16 %v1987
    %v2381 = vunpack.c.h.b16 %v1987
    %v2382 = vunpack.c.l.b16 %v1988
    %v2383 = vunpack.c.h.b16 %v1988
    %v2384 = vunpack.c.l.b16 %v1989
    %v2385 = vunpack.c.h.b16 %v1989
    %v2386 = vunpack.c.l.b16 %v1990
    %v2387 = vunpack.c.h.b16 %v1990
    %v2388 = vunpack.c.l.b16 %v1991
    %v2389 = vunpack.c.h.b16 %v1991
    %v2390 = vunpack.c.l.b16 %v1992
    %v2391 = vunpack.c.h.b16 %v1992
    %v2392 = vunpack.c.l.b16 %v1993
    %v2393 = vunpack.c.h.b16 %v1993
    %v2394 = vunpack.c.l.b16 %v1994
    %v2395 = vunpack.c.h.b16 %v1994
    %v2396 = vunpack.c.l.b16 %v1995
    %v2397 = vunpack.c.h.b16 %v1995
    %v2398 = vunpack.c.l.b16 %v1996
    %v2399 = vunpack.c.h.b16 %v1996
    %v2400 = vunpack.c.l.b16 %v1997
    %v2401 = vunpack.c.h.b16 %v1997
    %v2402 = vunpack.c.l.b16 %v1998
    %v2403 = vunpack.c.h.b16 %v1998
    %v2404 = vpack.c.b16 %v2152, %v2148
    %v2405 = vpack.c.b16 %v2153, %v2149
    %v2406 = vpack.c.b16 %v2154, %v2150
    %v2407 = vpack.c.b16 %v2155, %v2151
    %v2408 = vpack.c.b16 %v2160, %v2156
    %v2409 = vpack.c.b16 %v2161, %v2157
    %v2410 = vpack.c.b16 %v2162, %v2158
    %v2411 = vpack.c.b16 %v2163, %v2159
    %v2412 = vpack.c.b16 %v2168, %v2164
    %v2413 = vpack.c.b16 %v2169, %v2165
    %v2414 = vpack.c.b16 %v2170, %v2166
    %v2415 = vpack.c.b16 %v2171, %v2167
    %v2416 = vpack.c.b16 %v2176, %v2172
    %v2417 = vpack.c.b16 %v2177, %v2173
    %v2418 = vpack.c.b16 %v2178, %v2174
    %v2419 = vpack.c.b16 %v2179, %v2175
    %v2420 = vpack.c.b16 %v2184, %v2180
    %v2421 = vpack.c.b16 %v2185, %v2181
    %v2422 = vpack.c.b16 %v2186, %v2182
    %v2423 = vpack.c.b16 %v2187, %v2183
    %v2424 = vpack.c.b16 %v2192, %v2188
    %v2425 = vpack.c.b16 %v2193, %v2189
    %v2426 = vpack.c.b16 %v2194, %v2190
    %v2427 = vpack.c.b16 %v2195, %v2191
    %v2428 = vpack.c.b16 %v2200, %v2196
    %v2429 = vpack.c.b16 %v2201, %v2197
    %v2430 = vpack.c.b16 %v2202, %v2198
    %v2431 = vpack.c.b16 %v2203, %v2199
    %v2432 = vpack.c.b16 %v2208, %v2204
    %v2433 = vpack.c.b16 %v2209, %v2205
    %v2434 = vpack.c.b16 %v2210, %v2206
    %v2435 = vpack.c.b16 %v2211, %v2207
    %v2436 = vpack.c.b16 %v2216, %v2212
    %v2437 = vpack.c.b16 %v2217, %v2213
    %v2438 = vpack.c.b16 %v2218, %v2214
    %v2439 = vpack.c.b16 %v2219, %v2215
    %v2440 = vpack.c.b16 %v2224, %v2220
    %v2441 = vpack.c.b16 %v2225, %v2221
    %v2442 = vpack.c.b16 %v2226, %v2222
    %v2443 = vpack.c.b16 %v2227, %v2223
    %v2444 = vpack.c.b16 %v2232, %v2228
    %v2445 = vpack.c.b16 %v2233, %v2229
    %v2446 = vpack.c.b16 %v2234, %v2230
    %v2447 = vpack.c.b16 %v2235, %v2231
    %v2448 = vpack.c.b16 %v2240, %v2236
    %v2449 = vpack.c.b16 %v2241, %v2237
    %v2450 = vpack.c.b16 %v2242, %v2238
    %v2451 = vpack.c.b16 %v2243, %v2239
    %v2452 = vpack.c.b16 %v2248, %v2244
    %v2453 = vpack.c.b16 %v2249, %v2245
    %v2454 = vpack.c.b16 %v2250, %v2246
    %v2455 = vpack.c.b16 %v2251, %v2247
    %v2456 = vpack.c.b16 %v2256, %v2252
    %v2457 = vpack.c.b16 %v2257, %v2253
    %v2458 = vpack.c.b16 %v2258, %v2254
    %v2459 = vpack.c.b16 %v2259, %v2255
    %v2460 = vpack.c.b16 %v2264, %v2260
    %v2461 = vpack.c.b16 %v2265, %v2261
    %v2462 = vpack.c.b16 %v2266, %v2262
    %v2463 = vpack.c.b16 %v2267, %v2263
    %v2464 = vpack.c.b16 %v2272, %v2268
    %v2465 = vpack.c.b16 %v2273, %v2269
    %v2466 = vpack.c.b16 %v2274, %v2270
    %v2467 = vpack.c.b16 %v2275, %v2271
    %v2468 = vpack.c.b16 %v2280, %v2276
    %v2469 = vpack.c.b16 %v2281, %v2277
    %v2470 = vpack.c.b16 %v2282, %v2278
    %v2471 = vpack.c.b16 %v2283, %v2279
    %v2472 = vpack.c.b16 %v2288, %v2284
    %v2473 = vpack.c.b16 %v2289, %v2285
    %v2474 = vpack.c.b16 %v2290, %v2286
    %v2475 = vpack.c.b16 %v2291, %v2287
    %v2476 = vpack.c.b16 %v2296, %v2292
    %v2477 = vpack.c.b16 %v2297, %v2293
    %v2478 = vpack.c.b16 %v2298, %v2294
    %v2479 = vpack.c.b16 %v2299, %v2295
    %v2480 = vpack.c.b16 %v2304, %v2300
    %v2481 = vpack.c.b16 %v2305, %v2301
    %v2482 = vpack.c.b16 %v2306, %v2302
    %v2483 = vpack.c.b16 %v2307, %v2303
    %v2484 = vpack.c.b16 %v2312, %v2308
    %v2485 = vpack.c.b16 %v2313, %v2309
    %v2486 = vpack.c.b16 %v2314, %v2310
    %v2487 = vpack.c.b16 %v2315, %v2311
    %v2488 = vpack.c.b16 %v2320, %v2316
    %v2489 = vpack.c.b16 %v2321, %v2317
    %v2490 = vpack.c.b16 %v2322, %v2318
    %v2491 = vpack.c.b16 %v2323, %v2319
    %v2492 = vpack.c.b16 %v2328, %v2324
    %v2493 = vpack.c.b16 %v2329, %v2325
    %v2494 = vpack.c.b16 %v2330, %v2326
    %v2495 = vpack.c.b16 %v2331, %v2327
    %v2496 = vpack.c.b16 %v2336, %v2332
    %v2497 = vpack.c.b16 %v2337, %v2333
    %v2498 = vpack.c.b16 %v2338, %v2334
    %v2499 = vpack.c.b16 %v2339, %v2335
    %v2500 = vpack.c.b16 %v2344, %v2340
    %v2501 = vpack.c.b16 %v2345, %v2341
    %v2502 = vpack.c.b16 %v2346, %v2342
    %v2503 = vpack.c.b16 %v2347, %v2343
    %v2504 = vpack.c.b16 %v2352, %v2348
    %v2505 = vpack.c.b16 %v2353, %v2349
    %v2506 = vpack.c.b16 %v2354, %v2350
    %v2507 = vpack.c.b16 %v2355, %v2351
    %v2508 = vpack.c.b16 %v2360, %v2356
    %v2509 = vpack.c.b16 %v2361, %v2357
    %v2510 = vpack.c.b16 %v2362, %v2358
    %v2511 = vpack.c.b16 %v2363, %v2359
    %v2512 = vpack.c.b16 %v2368, %v2364
    %v2513 = vpack.c.b16 %v2369, %v2365
    %v2514 = vpack.c.b16 %v2370, %v2366
    %v2515 = vpack.c.b16 %v2371, %v2367
    %v2516 = vpack.c.b16 %v2376, %v2372
    %v2517 = vpack.c.b16 %v2377, %v2373
    %v2518 = vpack.c.b16 %v2378, %v2374
    %v2519 = vpack.c.b16 %v2379, %v2375
    %v2520 = vpack.c.b16 %v2384, %v2380
    %v2521 = vpack.c.b16 %v2385, %v2381
    %v2522 = vpack.c.b16 %v2386, %v2382
    %v2523 = vpack.c.b16 %v2387, %v2383
    %v2524 = vpack.c.b16 %v2392, %v2388
    %v2525 = vpack.c.b16 %v2393, %v2389
    %v2526 = vpack.c.b16 %v2394, %v2390
    %v2527 = vpack.c.b16 %v2395, %v2391
    %v2528 = vpack.c.b16 %v2400, %v2396
    %v2529 = vpack.c.b16 %v2401, %v2397
    %v2530 = vpack.c.b16 %v2402, %v2398
    %v2531 = vpack.c.b16 %v2403, %v2399
    %2660 = vmatprep.subr.bf16.mxu0 %v2405
    %2661 = vmatpush1.bf16.msra.mxu0 %v2404
    %2662 = vmatprep.subr.bf16.mxu0 %v2409
    %2663 = vmatpush1.bf16.msra.mxu0 %v2408
    %2664 = vmatprep.subr.bf16.mxu0 %v2413
    %2665 = vmatpush1.bf16.msra.mxu0 %v2412
    %2666 = vmatprep.subr.bf16.mxu0 %v2417
    %2667 = vmatpush1.bf16.msra.mxu0 %v2416
    %2668 = vmatprep.subr.bf16.mxu0 %v2421
    %2669 = vmatpush1.bf16.msra.mxu0 %v2420
    %2670 = vmatprep.subr.bf16.mxu0 %v2425
    %2671 = vmatpush1.bf16.msra.mxu0 %v2424
    %2672 = vmatprep.subr.bf16.mxu0 %v2429
    %2673 = vmatpush1.bf16.msra.mxu0 %v2428
    %2674 = vmatprep.subr.bf16.mxu0 %v2433
    %2675 = vmatpush1.bf16.msra.mxu0 %v2432
    %2676 = vmatprep.subr.bf16.mxu0 %v2437
    %2677 = vmatpush1.bf16.msra.mxu0 %v2436
    %2678 = vmatprep.subr.bf16.mxu0 %v2441
    %2679 = vmatpush1.bf16.msra.mxu0 %v2440
    %2680 = vmatprep.subr.bf16.mxu0 %v2445
    %2681 = vmatpush1.bf16.msra.mxu0 %v2444
    %2682 = vmatprep.subr.bf16.mxu0 %v2449
    %2683 = vmatpush1.bf16.msra.mxu0 %v2448
    %2684 = vmatprep.subr.bf16.mxu0 %v2453
    %2685 = vmatpush1.bf16.msra.mxu0 %v2452
    %2686 = vmatprep.subr.bf16.mxu0 %v2457
    %2687 = vmatpush1.bf16.msra.mxu0 %v2456
    %2688 = vmatprep.subr.bf16.mxu0 %v2461
    %2689 = vmatpush1.bf16.msra.mxu0 %v2460
    %2690 = vmatprep.subr.bf16.mxu0 %v2465
    %2691 = vmatpush1.bf16.msra.mxu0 %v2464
    %2692 = vmatprep.mubr.bf16.mxu0 %v1868
    %2693 = vmatmul.mubr.bf16.gmra.mrb[0].mxu0 %v1867
    %v2694 = vpop.f32.mrb[0].mxu0
    %v2695 = vadd.f32 %v2003, %v2694
    %v2696 = vpop.f32.mrb[0].mxu0
    %v2697 = vadd.f32 %v2007, %v2696
    %v2698 = vpop.f32.mrb[0].mxu0
    %v2699 = vadd.f32 %v2003, %v2698
    %v2700 = vpop.f32.mrb[0].mxu0
    %v2701 = vadd.f32 %v2007, %v2700
    %2702 = vdwg.mxu0
    %2703 = vmatprep.subr.bf16.mxu0 %v2469
    %2704 = vmatpush1.bf16.msra.mxu0 %v2468
    %2705 = vmatprep.subr.bf16.mxu0 %v2473
    %2706 = vmatpush1.bf16.msra.mxu0 %v2472
    %2707 = vmatprep.subr.bf16.mxu0 %v2477
    %2708 = vmatpush1.bf16.msra.mxu0 %v2476
    %2709 = vmatprep.subr.bf16.mxu0 %v2481
    %2710 = vmatpush1.bf16.msra.mxu0 %v2480
    %2711 = vmatprep.subr.bf16.mxu0 %v2485
    %2712 = vmatpush1.bf16.msra.mxu0 %v2484
    %2713 = vmatprep.subr.bf16.mxu0 %v2489
    %2714 = vmatpush1.bf16.msra.mxu0 %v2488
    %2715 = vmatprep.subr.bf16.mxu0 %v2493
    %2716 = vmatpush1.bf16.msra.mxu0 %v2492
    %2717 = vmatprep.subr.bf16.mxu0 %v2497
    %2718 = vmatpush1.bf16.msra.mxu0 %v2496
    %2719 = vmatprep.subr.bf16.mxu0 %v2501
    %2720 = vmatpush1.bf16.msra.mxu0 %v2500
    %2721 = vmatprep.subr.bf16.mxu0 %v2505
    %2722 = vmatpush1.bf16.msra.mxu0 %v2504
    %2723 = vmatprep.subr.bf16.mxu0 %v2509
    %2724 = vmatpush1.bf16.msra.mxu0 %v2508
    %2725 = vmatprep.subr.bf16.mxu0 %v2513
    %2726 = vmatpush1.bf16.msra.mxu0 %v2512
    %2727 = vmatprep.subr.bf16.mxu0 %v2517
    %2728 = vmatpush1.bf16.msra.mxu0 %v2516
    %2729 = vmatprep.subr.bf16.mxu0 %v2521
    %2730 = vmatpush1.bf16.msra.mxu0 %v2520
    %2731 = vmatprep.subr.bf16.mxu0 %v2525
    %2732 = vmatpush1.bf16.msra.mxu0 %v2524
    %2733 = vmatprep.subr.bf16.mxu0 %v2529
    %2734 = vmatpush1.bf16.msra.mxu0 %v2528
    %2735 = vmatprep.mubr.bf16.mxu0 %v1870
    %2736 = vmatmul.mubr.bf16.gmra.mrb[0].mxu0 %v1869
    %v2737 = vpop.f32.mrb[0].mxu0
    %v2738 = vadd.f32 %v2695, %v2737
    %v2739 = vpop.f32.mrb[0].mxu0
    %v2740 = vadd.f32 %v2697, %v2739
    %v2741 = vpop.f32.mrb[0].mxu0
    %v2742 = vadd.f32 %v2699, %v2741
    %v2743 = vpop.f32.mrb[0].mxu0
    %v2744 = vadd.f32 %v2701, %v2743
    %2745 = vdwg.mxu0
    %2746 = vmatprep.subr.bf16.mxu0 %v2407
    %2747 = vmatpush1.bf16.msra.mxu0 %v2406
    %2748 = vmatprep.subr.bf16.mxu0 %v2411
    %2749 = vmatpush1.bf16.msra.mxu0 %v2410
    %2750 = vmatprep.subr.bf16.mxu0 %v2415
    %2751 = vmatpush1.bf16.msra.mxu0 %v2414
    %2752 = vmatprep.subr.bf16.mxu0 %v2419
    %2753 = vmatpush1.bf16.msra.mxu0 %v2418
    %2754 = vmatprep.subr.bf16.mxu0 %v2423
    %2755 = vmatpush1.bf16.msra.mxu0 %v2422
    %2756 = vmatprep.subr.bf16.mxu0 %v2427
    %2757 = vmatpush1.bf16.msra.mxu0 %v2426
    %2758 = vmatprep.subr.bf16.mxu0 %v2431
    %2759 = vmatpush1.bf16.msra.mxu0 %v2430
    %2760 = vmatprep.subr.bf16.mxu0 %v2435
    %2761 = vmatpush1.bf16.msra.mxu0 %v2434
    %2762 = vmatprep.subr.bf16.mxu0 %v2439
    %2763 = vmatpush1.bf16.msra.mxu0 %v2438
    %2764 = vmatprep.subr.bf16.mxu0 %v2443
    %2765 = vmatpush1.bf16.msra.mxu0 %v2442
    %2766 = vmatprep.subr.bf16.mxu0 %v2447
    %2767 = vmatpush1.bf16.msra.mxu0 %v2446
    %2768 = vmatprep.subr.bf16.mxu0 %v2451
    %2769 = vmatpush1.bf16.msra.mxu0 %v2450
    %2770 = vmatprep.subr.bf16.mxu0 %v2455
    %2771 = vmatpush1.bf16.msra.mxu0 %v2454
    %2772 = vmatprep.subr.bf16.mxu0 %v2459
    %2773 = vmatpush1.bf16.msra.mxu0 %v2458
    %2774 = vmatprep.subr.bf16.mxu0 %v2463
    %2775 = vmatpush1.bf16.msra.mxu0 %v2462
    %2776 = vmatprep.subr.bf16.mxu0 %v2467
    %2777 = vmatpush1.bf16.msra.mxu0 %v2466
    %2778 = vmatprep.mubr.bf16.mxu0 %v1868
    %2779 = vmatmul.mubr.bf16.gmra.mrb[0].mxu0 %v1867
    %v2780 = vpop.f32.mrb[0].mxu0
    %v2781 = vadd.f32 %v2011, %v2780
    %v2782 = vpop.f32.mrb[0].mxu0
    %v2783 = vadd.f32 %v2015, %v2782
    %v2784 = vpop.f32.mrb[0].mxu0
    %v2785 = vadd.f32 %v2011, %v2784
    %v2786 = vpop.f32.mrb[0].mxu0
    %v2787 = vadd.f32 %v2015, %v2786
    %2788 = vdwg.mxu0
    %2789 = vmatprep.subr.bf16.mxu0 %v2471
    %2790 = vmatpush1.bf16.msra.mxu0 %v2470
    %2791 = vmatprep.subr.bf16.mxu0 %v2475
    %2792 = vmatpush1.bf16.msra.mxu0 %v2474
    %2793 = vmatprep.subr.bf16.mxu0 %v2479
    %2794 = vmatpush1.bf16.msra.mxu0 %v2478
    %2795 = vmatprep.subr.bf16.mxu0 %v2483
    %2796 = vmatpush1.bf16.msra.mxu0 %v2482
    %2797 = vmatprep.subr.bf16.mxu0 %v2487
    %2798 = vmatpush1.bf16.msra.mxu0 %v2486
    %2799 = vmatprep.subr.bf16.mxu0 %v2491
    %2800 = vmatpush1.bf16.msra.mxu0 %v2490
    %2801 = vmatprep.subr.bf16.mxu0 %v2495
    %2802 = vmatpush1.bf16.msra.mxu0 %v2494
    %2803 = vmatprep.subr.bf16.mxu0 %v2499
    %2804 = vmatpush1.bf16.msra.mxu0 %v2498
    %2805 = vmatprep.subr.bf16.mxu0 %v2503
    %2806 = vmatpush1.bf16.msra.mxu0 %v2502
    %2807 = vmatprep.subr.bf16.mxu0 %v2507
    %2808 = vmatpush1.bf16.msra.mxu0 %v2506
    %2809 = vmatprep.subr.bf16.mxu0 %v2511
    %2810 = vmatpush1.bf16.msra.mxu0 %v2510
    %2811 = vmatprep.subr.bf16.mxu0 %v2515
    %2812 = vmatpush1.bf16.msra.mxu0 %v2514
    %2813 = vmatprep.subr.bf16.mxu0 %v2519
    %2814 = vmatpush1.bf16.msra.mxu0 %v2518
    %2815 = vmatprep.subr.bf16.mxu0 %v2523
    %2816 = vmatpush1.bf16.msra.mxu0 %v2522
    %2817 = vmatprep.subr.bf16.mxu0 %v2527
    %2818 = vmatpush1.bf16.msra.mxu0 %v2526
    %2819 = vmatprep.subr.bf16.mxu0 %v2531
    %2820 = vmatpush1.bf16.msra.mxu0 %v2530
    %2821 = vmatprep.mubr.bf16.mxu0 %v1870
    %2822 = vmatmul.mubr.bf16.gmra.mrb[0].mxu0 %v1869
    %v2823 = vpop.f32.mrb[0].mxu0
    %v2824 = vadd.f32 %v2781, %v2823
    %v2825 = vpop.f32.mrb[0].mxu0
    %v2826 = vadd.f32 %v2783, %v2825
    %v2827 = vpop.f32.mrb[0].mxu0
    %v2828 = vadd.f32 %v2785, %v2827
    %v2829 = vpop.f32.mrb[0].mxu0
    %v2830 = vadd.f32 %v2787, %v2829
    %2831 = vdwg.mxu0
    %v2832 = vmax.f32 %v2738, 0.0
    %v2833 = vmax.f32 %v2740, 0.0
    %v2834 = vmax.f32 %v2824, 0.0
    %v2835 = vmax.f32 %v2826, 0.0
    %v2836 = vmax.f32 %v2742, 0.0
    %v2837 = vmax.f32 %v2744, 0.0
    %v2838 = vmax.f32 %v2828, 0.0
    %v2839 = vmax.f32 %v2830, 0.0
    %v2840 = vpack.c.bf16 %v2836, %v2832
    %v2841 = vpack.c.bf16 %v2837, %v2833
    %v2842 = vpack.c.bf16 %v2838, %v2834
    %v2843 = vpack.c.bf16 %v2839, %v2835
    %v2844 = vld [vmem:[#allocation10] sm:$0xff]
    %v2845 = vld [vmem:[#allocation10 + $0x8] sm:$0xff]
    %v2846 = vld [vmem:[#allocation10 + $0x10] sm:$0xff]
    %v2847 = vld [vmem:[#allocation10 + $0x18] sm:$0xff]
    %v2848 = vld [vmem:[#allocation10 + $0x20] sm:$0xff]
    %v2849 = vld [vmem:[#allocation10 + $0x28] sm:$0xff]
    %v2850 = vld [vmem:[#allocation10 + $0x30] sm:$0xff]
    %v2851 = vld [vmem:[#allocation10 + $0x38] sm:$0xff]
    %v2852 = vld [vmem:[#allocation10 + $0x40] sm:$0xff]
    %v2853 = vld [vmem:[#allocation10 + $0x48] sm:$0xff]
    %v2854 = vld [vmem:[#allocation10 + $0x50] sm:$0xff]
    %v2855 = vld [vmem:[#allocation10 + $0x58] sm:$0xff]
    %v2856 = vld [vmem:[#allocation10 + $0x60] sm:$0xff]
    %v2857 = vld [vmem:[#allocation10 + $0x68] sm:$0xff]
    %v2858 = vld [vmem:[#allocation10 + $0x70] sm:$0xff]
    %v2859 = vld [vmem:[#allocation10 + $0x78] sm:$0xff]
    %v2860 = vld [vmem:[#allocation10 + $0x80] sm:$0xff]
    %v2861 = vld [vmem:[#allocation10 + $0x88] sm:$0xff]
    %v2862 = vld [vmem:[#allocation10 + $0x90] sm:$0xff]
    %v2863 = vld [vmem:[#allocation10 + $0x98] sm:$0xff]
    %v2864 = vld [vmem:[#allocation10 + $0xa0] sm:$0xff]
    %v2865 = vld [vmem:[#allocation10 + $0xa8] sm:$0xff]
    %v2866 = vld [vmem:[#allocation10 + $0xb0] sm:$0xff]
    %v2867 = vld [vmem:[#allocation10 + $0xb8] sm:$0xff]
    %v2868 = vld [vmem:[#allocation10 + $0xc0] sm:$0xff]
    %v2869 = vld [vmem:[#allocation10 + $0xc8] sm:$0xff]
    %v2870 = vld [vmem:[#allocation10 + $0xd0] sm:$0xff]
    %v2871 = vld [vmem:[#allocation10 + $0xd8] sm:$0xff]
    %v2872 = vld [vmem:[#allocation10 + $0xe0] sm:$0xff]
    %v2873 = vld [vmem:[#allocation10 + $0xe8] sm:$0xff]
    %v2874 = vld [vmem:[#allocation10 + $0xf0] sm:$0xff]
    %v2875 = vld [vmem:[#allocation10 + $0xf8] sm:$0xff]
    %v2876 = vld [vmem:[#allocation10 + $0x100] sm:$0xff]
    %v2877 = vld [vmem:[#allocation10 + $0x108] sm:$0xff]
    %v2878 = vld [vmem:[#allocation10 + $0x110] sm:$0xff]
    %v2879 = vld [vmem:[#allocation10 + $0x118] sm:$0xff]
    %v2880 = vld [vmem:[#allocation10 + $0x120] sm:$0xff]
    %v2881 = vld [vmem:[#allocation10 + $0x128] sm:$0xff]
    %v2882 = vld [vmem:[#allocation10 + $0x130] sm:$0xff]
    %v2883 = vld [vmem:[#allocation10 + $0x138] sm:$0xff]
    %v2884 = vld [vmem:[#allocation10 + $0x140] sm:$0xff]
    %v2885 = vld [vmem:[#allocation10 + $0x148] sm:$0xff]
    %v2886 = vld [vmem:[#allocation10 + $0x150] sm:$0xff]
    %v2887 = vld [vmem:[#allocation10 + $0x158] sm:$0xff]
    %v2888 = vld [vmem:[#allocation10 + $0x160] sm:$0xff]
    %v2889 = vld [vmem:[#allocation10 + $0x168] sm:$0xff]
    %v2890 = vld [vmem:[#allocation10 + $0x170] sm:$0xff]
    %v2891 = vld [vmem:[#allocation10 + $0x178] sm:$0xff]
    %v2892 = vld [vmem:[#allocation10 + $0x180] sm:$0xff]
    %v2893 = vld [vmem:[#allocation10 + $0x188] sm:$0xff]
    %v2894 = vld [vmem:[#allocation10 + $0x190] sm:$0xff]
    %v2895 = vld [vmem:[#allocation10 + $0x198] sm:$0xff]
    %v2896 = vld [vmem:[#allocation10 + $0x1a0] sm:$0xff]
    %v2897 = vld [vmem:[#allocation10 + $0x1a8] sm:$0xff]
    %v2898 = vld [vmem:[#allocation10 + $0x1b0] sm:$0xff]
    %v2899 = vld [vmem:[#allocation10 + $0x1b8] sm:$0xff]
    %v2900 = vld [vmem:[#allocation10 + $0x1c0] sm:$0xff]
    %v2901 = vld [vmem:[#allocation10 + $0x1c8] sm:$0xff]
    %v2902 = vld [vmem:[#allocation10 + $0x1d0] sm:$0xff]
    %v2903 = vld [vmem:[#allocation10 + $0x1d8] sm:$0xff]
    %v2904 = vld [vmem:[#allocation10 + $0x1e0] sm:$0xff]
    %v2905 = vld [vmem:[#allocation10 + $0x1e8] sm:$0xff]
    %v2906 = vld [vmem:[#allocation10 + $0x1f0] sm:$0xff]
    %v2907 = vld [vmem:[#allocation10 + $0x1f8] sm:$0xff]
    %v2908 = vld [vmem:[#allocation10 + $0x200] sm:$0xff]
    %v2909 = vld [vmem:[#allocation10 + $0x208] sm:$0xff]
    %v2910 = vld [vmem:[#allocation10 + $0x210] sm:$0xff]
    %v2911 = vld [vmem:[#allocation10 + $0x218] sm:$0xff]
    %v2912 = vld [vmem:[#allocation10 + $0x220] sm:$0xff]
    %v2913 = vld [vmem:[#allocation10 + $0x228] sm:$0xff]
    %v2914 = vld [vmem:[#allocation10 + $0x230] sm:$0xff]
    %v2915 = vld [vmem:[#allocation10 + $0x238] sm:$0xff]
    %v2916 = vld [vmem:[#allocation10 + $0x240] sm:$0xff]
    %v2917 = vld [vmem:[#allocation10 + $0x248] sm:$0xff]
    %v2918 = vld [vmem:[#allocation10 + $0x250] sm:$0xff]
    %v2919 = vld [vmem:[#allocation10 + $0x258] sm:$0xff]
    %v2920 = vld [vmem:[#allocation10 + $0x260] sm:$0xff]
    %v2921 = vld [vmem:[#allocation10 + $0x268] sm:$0xff]
    %v2922 = vld [vmem:[#allocation10 + $0x270] sm:$0xff]
    %v2923 = vld [vmem:[#allocation10 + $0x278] sm:$0xff]
    %v2924 = vld [vmem:[#allocation10 + $0x280] sm:$0xff]
    %v2925 = vld [vmem:[#allocation10 + $0x288] sm:$0xff]
    %v2926 = vld [vmem:[#allocation10 + $0x290] sm:$0xff]
    %v2927 = vld [vmem:[#allocation10 + $0x298] sm:$0xff]
    %v2928 = vld [vmem:[#allocation10 + $0x2a0] sm:$0xff]
    %v2929 = vld [vmem:[#allocation10 + $0x2a8] sm:$0xff]
    %v2930 = vld [vmem:[#allocation10 + $0x2b0] sm:$0xff]
    %v2931 = vld [vmem:[#allocation10 + $0x2b8] sm:$0xff]
    %v2932 = vld [vmem:[#allocation10 + $0x2c0] sm:$0xff]
    %v2933 = vld [vmem:[#allocation10 + $0x2c8] sm:$0xff]
    %v2934 = vld [vmem:[#allocation10 + $0x2d0] sm:$0xff]
    %v2935 = vld [vmem:[#allocation10 + $0x2d8] sm:$0xff]
    %v2936 = vld [vmem:[#allocation10 + $0x2e0] sm:$0xff]
    %v2937 = vld [vmem:[#allocation10 + $0x2e8] sm:$0xff]
    %v2938 = vld [vmem:[#allocation10 + $0x2f0] sm:$0xff]
    %v2939 = vld [vmem:[#allocation10 + $0x2f8] sm:$0xff]
    %v2940 = vld [vmem:[#allocation10 + $0x300] sm:$0xff]
    %v2941 = vld [vmem:[#allocation10 + $0x308] sm:$0xff]
    %v2942 = vld [vmem:[#allocation10 + $0x310] sm:$0xff]
    %v2943 = vld [vmem:[#allocation10 + $0x318] sm:$0xff]
    %v2944 = vld [vmem:[#allocation10 + $0x320] sm:$0xff]
    %v2945 = vld [vmem:[#allocation10 + $0x328] sm:$0xff]
    %v2946 = vld [vmem:[#allocation10 + $0x330] sm:$0xff]
    %v2947 = vld [vmem:[#allocation10 + $0x338] sm:$0xff]
    %v2948 = vld [vmem:[#allocation10 + $0x340] sm:$0xff]
    %v2949 = vld [vmem:[#allocation10 + $0x348] sm:$0xff]
    %v2950 = vld [vmem:[#allocation10 + $0x350] sm:$0xff]
    %v2951 = vld [vmem:[#allocation10 + $0x358] sm:$0xff]
    %v2952 = vld [vmem:[#allocation10 + $0x360] sm:$0xff]
    %v2953 = vld [vmem:[#allocation10 + $0x368] sm:$0xff]
    %v2954 = vld [vmem:[#allocation10 + $0x370] sm:$0xff]
    %v2955 = vld [vmem:[#allocation10 + $0x378] sm:$0xff]
    %v2956 = vld [vmem:[#allocation10 + $0x380] sm:$0xff]
    %v2957 = vld [vmem:[#allocation10 + $0x388] sm:$0xff]
    %v2958 = vld [vmem:[#allocation10 + $0x390] sm:$0xff]
    %v2959 = vld [vmem:[#allocation10 + $0x398] sm:$0xff]
    %v2960 = vld [vmem:[#allocation10 + $0x3a0] sm:$0xff]
    %v2961 = vld [vmem:[#allocation10 + $0x3a8] sm:$0xff]
    %v2962 = vld [vmem:[#allocation10 + $0x3b0] sm:$0xff]
    %v2963 = vld [vmem:[#allocation10 + $0x3b8] sm:$0xff]
    %v2964 = vld [vmem:[#allocation10 + $0x3c0] sm:$0xff]
    %v2965 = vld [vmem:[#allocation10 + $0x3c8] sm:$0xff]
    %v2966 = vld [vmem:[#allocation10 + $0x3d0] sm:$0xff]
    %v2967 = vld [vmem:[#allocation10 + $0x3d8] sm:$0xff]
    %v2968 = vld [vmem:[#allocation10 + $0x3e0] sm:$0xff]
    %v2969 = vld [vmem:[#allocation10 + $0x3e8] sm:$0xff]
    %v2970 = vld [vmem:[#allocation10 + $0x3f0] sm:$0xff]
    %v2971 = vld [vmem:[#allocation10 + $0x3f8] sm:$0xff]
    %v2973 = vlaneseq
    %v2974 = vshrl.u32 %v2973, 7
    %v2975 = vsub.s32 0, %v2974
    %v2976 = vrot.slane %v113, %v2975
    %v2977 = vlaneseq
    %v2978 = vshrl.u32 %v2977, 7
    %v2979 = vsub.s32 1, %v2978
    %v2980 = vrot.slane %v113, %v2979
    %v2981 = vlaneseq
    %v2982 = vshrl.u32 %v2981, 7
    %v2983 = vsub.s32 2, %v2982
    %v2984 = vrot.slane %v113, %v2983
    %v2985 = vlaneseq
    %v2986 = vshrl.u32 %v2985, 7
    %v2987 = vsub.s32 3, %v2986
    %v2988 = vrot.slane %v113, %v2987
    %v3121 = vunpack.c.l.b16 %v2844
    %v3122 = vunpack.c.h.b16 %v2844
    %v3123 = vunpack.c.l.b16 %v2845
    %v3124 = vunpack.c.h.b16 %v2845
    %v3125 = vunpack.c.l.b16 %v2846
    %v3126 = vunpack.c.h.b16 %v2846
    %v3127 = vunpack.c.l.b16 %v2847
    %v3128 = vunpack.c.h.b16 %v2847
    %v3129 = vunpack.c.l.b16 %v2848
    %v3130 = vunpack.c.h.b16 %v2848
    %v3131 = vunpack.c.l.b16 %v2849
    %v3132 = vunpack.c.h.b16 %v2849
    %v3133 = vunpack.c.l.b16 %v2850
    %v3134 = vunpack.c.h.b16 %v2850
    %v3135 = vunpack.c.l.b16 %v2851
    %v3136 = vunpack.c.h.b16 %v2851
    %v3137 = vunpack.c.l.b16 %v2852
    %v3138 = vunpack.c.h.b16 %v2852
    %v3139 = vunpack.c.l.b16 %v2853
    %v3140 = vunpack.c.h.b16 %v2853
    %v3141 = vunpack.c.l.b16 %v2854
    %v3142 = vunpack.c.h.b16 %v2854
    %v3143 = vunpack.c.l.b16 %v2855
    %v3144 = vunpack.c.h.b16 %v2855
    %v3145 = vunpack.c.l.b16 %v2856
    %v3146 = vunpack.c.h.b16 %v2856
    %v3147 = vunpack.c.l.b16 %v2857
    %v3148 = vunpack.c.h.b16 %v2857
    %v3149 = vunpack.c.l.b16 %v2858
    %v3150 = vunpack.c.h.b16 %v2858
    %v3151 = vunpack.c.l.b16 %v2859
    %v3152 = vunpack.c.h.b16 %v2859
    %v3153 = vunpack.c.l.b16 %v2860
    %v3154 = vunpack.c.h.b16 %v2860
    %v3155 = vunpack.c.l.b16 %v2861
    %v3156 = vunpack.c.h.b16 %v2861
    %v3157 = vunpack.c.l.b16 %v2862
    %v3158 = vunpack.c.h.b16 %v2862
    %v3159 = vunpack.c.l.b16 %v2863
    %v3160 = vunpack.c.h.b16 %v2863
    %v3161 = vunpack.c.l.b16 %v2864
    %v3162 = vunpack.c.h.b16 %v2864
    %v3163 = vunpack.c.l.b16 %v2865
    %v3164 = vunpack.c.h.b16 %v2865
    %v3165 = vunpack.c.l.b16 %v2866
    %v3166 = vunpack.c.h.b16 %v2866
    %v3167 = vunpack.c.l.b16 %v2867
    %v3168 = vunpack.c.h.b16 %v2867
    %v3169 = vunpack.c.l.b16 %v2868
    %v3170 = vunpack.c.h.b16 %v2868
    %v3171 = vunpack.c.l.b16 %v2869
    %v3172 = vunpack.c.h.b16 %v2869
    %v3173 = vunpack.c.l.b16 %v2870
    %v3174 = vunpack.c.h.b16 %v2870
    %v3175 = vunpack.c.l.b16 %v2871
    %v3176 = vunpack.c.h.b16 %v2871
    %v3177 = vunpack.c.l.b16 %v2872
    %v3178 = vunpack.c.h.b16 %v2872
    %v3179 = vunpack.c.l.b16 %v2873
    %v3180 = vunpack.c.h.b16 %v2873
    %v3181 = vunpack.c.l.b16 %v2874
    %v3182 = vunpack.c.h.b16 %v2874
    %v3183 = vunpack.c.l.b16 %v2875
    %v3184 = vunpack.c.h.b16 %v2875
    %v3185 = vunpack.c.l.b16 %v2876
    %v3186 = vunpack.c.h.b16 %v2876
    %v3187 = vunpack.c.l.b16 %v2877
    %v3188 = vunpack.c.h.b16 %v2877
    %v3189 = vunpack.c.l.b16 %v2878
    %v3190 = vunpack.c.h.b16 %v2878
    %v3191 = vunpack.c.l.b16 %v2879
    %v3192 = vunpack.c.h.b16 %v2879
    %v3193 = vunpack.c.l.b16 %v2880
    %v3194 = vunpack.c.h.b16 %v2880
    %v3195 = vunpack.c.l.b16 %v2881
    %v3196 = vunpack.c.h.b16 %v2881
    %v3197 = vunpack.c.l.b16 %v2882
    %v3198 = vunpack.c.h.b16 %v2882
    %v3199 = vunpack.c.l.b16 %v2883
    %v3200 = vunpack.c.h.b16 %v2883
    %v3201 = vunpack.c.l.b16 %v2884
    %v3202 = vunpack.c.h.b16 %v2884
    %v3203 = vunpack.c.l.b16 %v2885
    %v3204 = vunpack.c.h.b16 %v2885
    %v3205 = vunpack.c.l.b16 %v2886
    %v3206 = vunpack.c.h.b16 %v2886
    %v3207 = vunpack.c.l.b16 %v2887
    %v3208 = vunpack.c.h.b16 %v2887
    %v3209 = vunpack.c.l.b16 %v2888
    %v3210 = vunpack.c.h.b16 %v2888
    %v3211 = vunpack.c.l.b16 %v2889
    %v3212 = vunpack.c.h.b16 %v2889
    %v3213 = vunpack.c.l.b16 %v2890
    %v3214 = vunpack.c.h.b16 %v2890
    %v3215 = vunpack.c.l.b16 %v2891
    %v3216 = vunpack.c.h.b16 %v2891
    %v3217 = vunpack.c.l.b16 %v2892
    %v3218 = vunpack.c.h.b16 %v2892
    %v3219 = vunpack.c.l.b16 %v2893
    %v3220 = vunpack.c.h.b16 %v2893
    %v3221 = vunpack.c.l.b16 %v2894
    %v3222 = vunpack.c.h.b16 %v2894
    %v3223 = vunpack.c.l.b16 %v2895
    %v3224 = vunpack.c.h.b16 %v2895
    %v3225 = vunpack.c.l.b16 %v2896
    %v3226 = vunpack.c.h.b16 %v2896
    %v3227 = vunpack.c.l.b16 %v2897
    %v3228 = vunpack.c.h.b16 %v2897
    %v3229 = vunpack.c.l.b16 %v2898
    %v3230 = vunpack.c.h.b16 %v2898
    %v3231 = vunpack.c.l.b16 %v2899
    %v3232 = vunpack.c.h.b16 %v2899
    %v3233 = vunpack.c.l.b16 %v2900
    %v3234 = vunpack.c.h.b16 %v2900
    %v3235 = vunpack.c.l.b16 %v2901
    %v3236 = vunpack.c.h.b16 %v2901
    %v3237 = vunpack.c.l.b16 %v2902
    %v3238 = vunpack.c.h.b16 %v2902
    %v3239 = vunpack.c.l.b16 %v2903
    %v3240 = vunpack.c.h.b16 %v2903
    %v3241 = vunpack.c.l.b16 %v2904
    %v3242 = vunpack.c.h.b16 %v2904
    %v3243 = vunpack.c.l.b16 %v2905
    %v3244 = vunpack.c.h.b16 %v2905
    %v3245 = vunpack.c.l.b16 %v2906
    %v3246 = vunpack.c.h.b16 %v2906
    %v3247 = vunpack.c.l.b16 %v2907
    %v3248 = vunpack.c.h.b16 %v2907
    %v3249 = vunpack.c.l.b16 %v2908
    %v3250 = vunpack.c.h.b16 %v2908
    %v3251 = vunpack.c.l.b16 %v2909
    %v3252 = vunpack.c.h.b16 %v2909
    %v3253 = vunpack.c.l.b16 %v2910
    %v3254 = vunpack.c.h.b16 %v2910
    %v3255 = vunpack.c.l.b16 %v2911
    %v3256 = vunpack.c.h.b16 %v2911
    %v3257 = vunpack.c.l.b16 %v2912
    %v3258 = vunpack.c.h.b16 %v2912
    %v3259 = vunpack.c.l.b16 %v2913
    %v3260 = vunpack.c.h.b16 %v2913
    %v3261 = vunpack.c.l.b16 %v2914
    %v3262 = vunpack.c.h.b16 %v2914
    %v3263 = vunpack.c.l.b16 %v2915
    %v3264 = vunpack.c.h.b16 %v2915
    %v3265 = vunpack.c.l.b16 %v2916
    %v3266 = vunpack.c.h.b16 %v2916
    %v3267 = vunpack.c.l.b16 %v2917
    %v3268 = vunpack.c.h.b16 %v2917
    %v3269 = vunpack.c.l.b16 %v2918
    %v3270 = vunpack.c.h.b16 %v2918
    %v3271 = vunpack.c.l.b16 %v2919
    %v3272 = vunpack.c.h.b16 %v2919
    %v3273 = vunpack.c.l.b16 %v2920
    %v3274 = vunpack.c.h.b16 %v2920
    %v3275 = vunpack.c.l.b16 %v2921
    %v3276 = vunpack.c.h.b16 %v2921
    %v3277 = vunpack.c.l.b16 %v2922
    %v3278 = vunpack.c.h.b16 %v2922
    %v3279 = vunpack.c.l.b16 %v2923
    %v3280 = vunpack.c.h.b16 %v2923
    %v3281 = vunpack.c.l.b16 %v2924
    %v3282 = vunpack.c.h.b16 %v2924
    %v3283 = vunpack.c.l.b16 %v2925
    %v3284 = vunpack.c.h.b16 %v2925
    %v3285 = vunpack.c.l.b16 %v2926
    %v3286 = vunpack.c.h.b16 %v2926
    %v3287 = vunpack.c.l.b16 %v2927
    %v3288 = vunpack.c.h.b16 %v2927
    %v3289 = vunpack.c.l.b16 %v2928
    %v3290 = vunpack.c.h.b16 %v2928
    %v3291 = vunpack.c.l.b16 %v2929
    %v3292 = vunpack.c.h.b16 %v2929
    %v3293 = vunpack.c.l.b16 %v2930
    %v3294 = vunpack.c.h.b16 %v2930
    %v3295 = vunpack.c.l.b16 %v2931
    %v3296 = vunpack.c.h.b16 %v2931
    %v3297 = vunpack.c.l.b16 %v2932
    %v3298 = vunpack.c.h.b16 %v2932
    %v3299 = vunpack.c.l.b16 %v2933
    %v3300 = vunpack.c.h.b16 %v2933
    %v3301 = vunpack.c.l.b16 %v2934
    %v3302 = vunpack.c.h.b16 %v2934
    %v3303 = vunpack.c.l.b16 %v2935
    %v3304 = vunpack.c.h.b16 %v2935
    %v3305 = vunpack.c.l.b16 %v2936
    %v3306 = vunpack.c.h.b16 %v2936
    %v3307 = vunpack.c.l.b16 %v2937
    %v3308 = vunpack.c.h.b16 %v2937
    %v3309 = vunpack.c.l.b16 %v2938
    %v3310 = vunpack.c.h.b16 %v2938
    %v3311 = vunpack.c.l.b16 %v2939
    %v3312 = vunpack.c.h.b16 %v2939
    %v3313 = vunpack.c.l.b16 %v2940
    %v3314 = vunpack.c.h.b16 %v2940
    %v3315 = vunpack.c.l.b16 %v2941
    %v3316 = vunpack.c.h.b16 %v2941
    %v3317 = vunpack.c.l.b16 %v2942
    %v3318 = vunpack.c.h.b16 %v2942
    %v3319 = vunpack.c.l.b16 %v2943
    %v3320 = vunpack.c.h.b16 %v2943
    %v3321 = vunpack.c.l.b16 %v2944
    %v3322 = vunpack.c.h.b16 %v2944
    %v3323 = vunpack.c.l.b16 %v2945
    %v3324 = vunpack.c.h.b16 %v2945
    %v3325 = vunpack.c.l.b16 %v2946
    %v3326 = vunpack.c.h.b16 %v2946
    %v3327 = vunpack.c.l.b16 %v2947
    %v3328 = vunpack.c.h.b16 %v2947
    %v3329 = vunpack.c.l.b16 %v2948
    %v3330 = vunpack.c.h.b16 %v2948
    %v3331 = vunpack.c.l.b16 %v2949
    %v3332 = vunpack.c.h.b16 %v2949
    %v3333 = vunpack.c.l.b16 %v2950
    %v3334 = vunpack.c.h.b16 %v2950
    %v3335 = vunpack.c.l.b16 %v2951
    %v3336 = vunpack.c.h.b16 %v2951
    %v3337 = vunpack.c.l.b16 %v2952
    %v3338 = vunpack.c.h.b16 %v2952
    %v3339 = vunpack.c.l.b16 %v2953
    %v3340 = vunpack.c.h.b16 %v2953
    %v3341 = vunpack.c.l.b16 %v2954
    %v3342 = vunpack.c.h.b16 %v2954
    %v3343 = vunpack.c.l.b16 %v2955
    %v3344 = vunpack.c.h.b16 %v2955
    %v3345 = vunpack.c.l.b16 %v2956
    %v3346 = vunpack.c.h.b16 %v2956
    %v3347 = vunpack.c.l.b16 %v2957
    %v3348 = vunpack.c.h.b16 %v2957
    %v3349 = vunpack.c.l.b16 %v2958
    %v3350 = vunpack.c.h.b16 %v2958
    %v3351 = vunpack.c.l.b16 %v2959
    %v3352 = vunpack.c.h.b16 %v2959
    %v3353 = vunpack.c.l.b16 %v2960
    %v3354 = vunpack.c.h.b16 %v2960
    %v3355 = vunpack.c.l.b16 %v2961
    %v3356 = vunpack.c.h.b16 %v2961
    %v3357 = vunpack.c.l.b16 %v2962
    %v3358 = vunpack.c.h.b16 %v2962
    %v3359 = vunpack.c.l.b16 %v2963
    %v3360 = vunpack.c.h.b16 %v2963
    %v3361 = vunpack.c.l.b16 %v2964
    %v3362 = vunpack.c.h.b16 %v2964
    %v3363 = vunpack.c.l.b16 %v2965
    %v3364 = vunpack.c.h.b16 %v2965
    %v3365 = vunpack.c.l.b16 %v2966
    %v3366 = vunpack.c.h.b16 %v2966
    %v3367 = vunpack.c.l.b16 %v2967
    %v3368 = vunpack.c.h.b16 %v2967
    %v3369 = vunpack.c.l.b16 %v2968
    %v3370 = vunpack.c.h.b16 %v2968
    %v3371 = vunpack.c.l.b16 %v2969
    %v3372 = vunpack.c.h.b16 %v2969
    %v3373 = vunpack.c.l.b16 %v2970
    %v3374 = vunpack.c.h.b16 %v2970
    %v3375 = vunpack.c.l.b16 %v2971
    %v3376 = vunpack.c.h.b16 %v2971
    %v3377 = vpack.c.b16 %v3125, %v3121
    %v3378 = vpack.c.b16 %v3126, %v3122
    %v3379 = vpack.c.b16 %v3127, %v3123
    %v3380 = vpack.c.b16 %v3128, %v3124
    %v3381 = vpack.c.b16 %v3133, %v3129
    %v3382 = vpack.c.b16 %v3134, %v3130
    %v3383 = vpack.c.b16 %v3135, %v3131
    %v3384 = vpack.c.b16 %v3136, %v3132
    %v3385 = vpack.c.b16 %v3141, %v3137
    %v3386 = vpack.c.b16 %v3142, %v3138
    %v3387 = vpack.c.b16 %v3143, %v3139
    %v3388 = vpack.c.b16 %v3144, %v3140
    %v3389 = vpack.c.b16 %v3149, %v3145
    %v3390 = vpack.c.b16 %v3150, %v3146
    %v3391 = vpack.c.b16 %v3151, %v3147
    %v3392 = vpack.c.b16 %v3152, %v3148
    %v3393 = vpack.c.b16 %v3157, %v3153
    %v3394 = vpack.c.b16 %v3158, %v3154
    %v3395 = vpack.c.b16 %v3159, %v3155
    %v3396 = vpack.c.b16 %v3160, %v3156
    %v3397 = vpack.c.b16 %v3165, %v3161
    %v3398 = vpack.c.b16 %v3166, %v3162
    %v3399 = vpack.c.b16 %v3167, %v3163
    %v3400 = vpack.c.b16 %v3168, %v3164
    %v3401 = vpack.c.b16 %v3173, %v3169
    %v3402 = vpack.c.b16 %v3174, %v3170
    %v3403 = vpack.c.b16 %v3175, %v3171
    %v3404 = vpack.c.b16 %v3176, %v3172
    %v3405 = vpack.c.b16 %v3181, %v3177
    %v3406 = vpack.c.b16 %v3182, %v3178
    %v3407 = vpack.c.b16 %v3183, %v3179
    %v3408 = vpack.c.b16 %v3184, %v3180
    %v3409 = vpack.c.b16 %v3189, %v3185
    %v3410 = vpack.c.b16 %v3190, %v3186
    %v3411 = vpack.c.b16 %v3191, %v3187
    %v3412 = vpack.c.b16 %v3192, %v3188
    %v3413 = vpack.c.b16 %v3197, %v3193
    %v3414 = vpack.c.b16 %v3198, %v3194
    %v3415 = vpack.c.b16 %v3199, %v3195
    %v3416 = vpack.c.b16 %v3200, %v3196
    %v3417 = vpack.c.b16 %v3205, %v3201
    %v3418 = vpack.c.b16 %v3206, %v3202
    %v3419 = vpack.c.b16 %v3207, %v3203
    %v3420 = vpack.c.b16 %v3208, %v3204
    %v3421 = vpack.c.b16 %v3213, %v3209
    %v3422 = vpack.c.b16 %v3214, %v3210
    %v3423 = vpack.c.b16 %v3215, %v3211
    %v3424 = vpack.c.b16 %v3216, %v3212
    %v3425 = vpack.c.b16 %v3221, %v3217
    %v3426 = vpack.c.b16 %v3222, %v3218
    %v3427 = vpack.c.b16 %v3223, %v3219
    %v3428 = vpack.c.b16 %v3224, %v3220
    %v3429 = vpack.c.b16 %v3229, %v3225
    %v3430 = vpack.c.b16 %v3230, %v3226
    %v3431 = vpack.c.b16 %v3231, %v3227
    %v3432 = vpack.c.b16 %v3232, %v3228
    %v3433 = vpack.c.b16 %v3237, %v3233
    %v3434 = vpack.c.b16 %v3238, %v3234
    %v3435 = vpack.c.b16 %v3239, %v3235
    %v3436 = vpack.c.b16 %v3240, %v3236
    %v3437 = vpack.c.b16 %v3245, %v3241
    %v3438 = vpack.c.b16 %v3246, %v3242
    %v3439 = vpack.c.b16 %v3247, %v3243
    %v3440 = vpack.c.b16 %v3248, %v3244
    %v3441 = vpack.c.b16 %v3253, %v3249
    %v3442 = vpack.c.b16 %v3254, %v3250
    %v3443 = vpack.c.b16 %v3255, %v3251
    %v3444 = vpack.c.b16 %v3256, %v3252
    %v3445 = vpack.c.b16 %v3261, %v3257
    %v3446 = vpack.c.b16 %v3262, %v3258
    %v3447 = vpack.c.b16 %v3263, %v3259
    %v3448 = vpack.c.b16 %v3264, %v3260
    %v3449 = vpack.c.b16 %v3269, %v3265
    %v3450 = vpack.c.b16 %v3270, %v3266
    %v3451 = vpack.c.b16 %v3271, %v3267
    %v3452 = vpack.c.b16 %v3272, %v3268
    %v3453 = vpack.c.b16 %v3277, %v3273
    %v3454 = vpack.c.b16 %v3278, %v3274
    %v3455 = vpack.c.b16 %v3279, %v3275
    %v3456 = vpack.c.b16 %v3280, %v3276
    %v3457 = vpack.c.b16 %v3285, %v3281
    %v3458 = vpack.c.b16 %v3286, %v3282
    %v3459 = vpack.c.b16 %v3287, %v3283
    %v3460 = vpack.c.b16 %v3288, %v3284
    %v3461 = vpack.c.b16 %v3293, %v3289
    %v3462 = vpack.c.b16 %v3294, %v3290
    %v3463 = vpack.c.b16 %v3295, %v3291
    %v3464 = vpack.c.b16 %v3296, %v3292
    %v3465 = vpack.c.b16 %v3301, %v3297
    %v3466 = vpack.c.b16 %v3302, %v3298
    %v3467 = vpack.c.b16 %v3303, %v3299
    %v3468 = vpack.c.b16 %v3304, %v3300
    %v3469 = vpack.c.b16 %v3309, %v3305
    %v3470 = vpack.c.b16 %v3310, %v3306
    %v3471 = vpack.c.b16 %v3311, %v3307
    %v3472 = vpack.c.b16 %v3312, %v3308
    %v3473 = vpack.c.b16 %v3317, %v3313
    %v3474 = vpack.c.b16 %v3318, %v3314
    %v3475 = vpack.c.b16 %v3319, %v3315
    %v3476 = vpack.c.b16 %v3320, %v3316
    %v3477 = vpack.c.b16 %v3325, %v3321
    %v3478 = vpack.c.b16 %v3326, %v3322
    %v3479 = vpack.c.b16 %v3327, %v3323
    %v3480 = vpack.c.b16 %v3328, %v3324
    %v3481 = vpack.c.b16 %v3333, %v3329
    %v3482 = vpack.c.b16 %v3334, %v3330
    %v3483 = vpack.c.b16 %v3335, %v3331
    %v3484 = vpack.c.b16 %v3336, %v3332
    %v3485 = vpack.c.b16 %v3341, %v3337
    %v3486 = vpack.c.b16 %v3342, %v3338
    %v3487 = vpack.c.b16 %v3343, %v3339
    %v3488 = vpack.c.b16 %v3344, %v3340
    %v3489 = vpack.c.b16 %v3349, %v3345
    %v3490 = vpack.c.b16 %v3350, %v3346
    %v3491 = vpack.c.b16 %v3351, %v3347
    %v3492 = vpack.c.b16 %v3352, %v3348
    %v3493 = vpack.c.b16 %v3357, %v3353
    %v3494 = vpack.c.b16 %v3358, %v3354
    %v3495 = vpack.c.b16 %v3359, %v3355
    %v3496 = vpack.c.b16 %v3360, %v3356
    %v3497 = vpack.c.b16 %v3365, %v3361
    %v3498 = vpack.c.b16 %v3366, %v3362
    %v3499 = vpack.c.b16 %v3367, %v3363
    %v3500 = vpack.c.b16 %v3368, %v3364
    %v3501 = vpack.c.b16 %v3373, %v3369
    %v3502 = vpack.c.b16 %v3374, %v3370
    %v3503 = vpack.c.b16 %v3375, %v3371
    %v3504 = vpack.c.b16 %v3376, %v3372
    %3633 = vmatprep.subr.bf16.mxu0 %v3378
    %3634 = vmatpush1.bf16.msra.mxu0 %v3377
    %3635 = vmatprep.subr.bf16.mxu0 %v3382
    %3636 = vmatpush1.bf16.msra.mxu0 %v3381
    %3637 = vmatprep.subr.bf16.mxu0 %v3386
    %3638 = vmatpush1.bf16.msra.mxu0 %v3385
    %3639 = vmatprep.subr.bf16.mxu0 %v3390
    %3640 = vmatpush1.bf16.msra.mxu0 %v3389
    %3641 = vmatprep.subr.bf16.mxu0 %v3394
    %3642 = vmatpush1.bf16.msra.mxu0 %v3393
    %3643 = vmatprep.subr.bf16.mxu0 %v3398
    %3644 = vmatpush1.bf16.msra.mxu0 %v3397
    %3645 = vmatprep.subr.bf16.mxu0 %v3402
    %3646 = vmatpush1.bf16.msra.mxu0 %v3401
    %3647 = vmatprep.subr.bf16.mxu0 %v3406
    %3648 = vmatpush1.bf16.msra.mxu0 %v3405
    %3649 = vmatprep.subr.bf16.mxu0 %v3410
    %3650 = vmatpush1.bf16.msra.mxu0 %v3409
    %3651 = vmatprep.subr.bf16.mxu0 %v3414
    %3652 = vmatpush1.bf16.msra.mxu0 %v3413
    %3653 = vmatprep.subr.bf16.mxu0 %v3418
    %3654 = vmatpush1.bf16.msra.mxu0 %v3417
    %3655 = vmatprep.subr.bf16.mxu0 %v3422
    %3656 = vmatpush1.bf16.msra.mxu0 %v3421
    %3657 = vmatprep.subr.bf16.mxu0 %v3426
    %3658 = vmatpush1.bf16.msra.mxu0 %v3425
    %3659 = vmatprep.subr.bf16.mxu0 %v3430
    %3660 = vmatpush1.bf16.msra.mxu0 %v3429
    %3661 = vmatprep.subr.bf16.mxu0 %v3434
    %3662 = vmatpush1.bf16.msra.mxu0 %v3433
    %3663 = vmatprep.subr.bf16.mxu0 %v3438
    %3664 = vmatpush1.bf16.msra.mxu0 %v3437
    %3665 = vmatprep.mubr.bf16.mxu0 %v2841
    %3666 = vmatmul.mubr.bf16.gmra.mrb[0].mxu0 %v2840
    %v3667 = vpop.f32.mrb[0].mxu0
    %v3668 = vadd.f32 %v2976, %v3667
    %v3669 = vpop.f32.mrb[0].mxu0
    %v3670 = vadd.f32 %v2980, %v3669
    %v3671 = vpop.f32.mrb[0].mxu0
    %v3672 = vadd.f32 %v2976, %v3671
    %v3673 = vpop.f32.mrb[0].mxu0
    %v3674 = vadd.f32 %v2980, %v3673
    %3675 = vdwg.mxu0
    %3676 = vmatprep.subr.bf16.mxu0 %v3442
    %3677 = vmatpush1.bf16.msra.mxu0 %v3441
    %3678 = vmatprep.subr.bf16.mxu0 %v3446
    %3679 = vmatpush1.bf16.msra.mxu0 %v3445
    %3680 = vmatprep.subr.bf16.mxu0 %v3450
    %3681 = vmatpush1.bf16.msra.mxu0 %v3449
    %3682 = vmatprep.subr.bf16.mxu0 %v3454
    %3683 = vmatpush1.bf16.msra.mxu0 %v3453
    %3684 = vmatprep.subr.bf16.mxu0 %v3458
    %3685 = vmatpush1.bf16.msra.mxu0 %v3457
    %3686 = vmatprep.subr.bf16.mxu0 %v3462
    %3687 = vmatpush1.bf16.msra.mxu0 %v3461
    %3688 = vmatprep.subr.bf16.mxu0 %v3466
    %3689 = vmatpush1.bf16.msra.mxu0 %v3465
    %3690 = vmatprep.subr.bf16.mxu0 %v3470
    %3691 = vmatpush1.bf16.msra.mxu0 %v3469
    %3692 = vmatprep.subr.bf16.mxu0 %v3474
    %3693 = vmatpush1.bf16.msra.mxu0 %v3473
    %3694 = vmatprep.subr.bf16.mxu0 %v3478
    %3695 = vmatpush1.bf16.msra.mxu0 %v3477
    %3696 = vmatprep.subr.bf16.mxu0 %v3482
    %3697 = vmatpush1.bf16.msra.mxu0 %v3481
    %3698 = vmatprep.subr.bf16.mxu0 %v3486
    %3699 = vmatpush1.bf16.msra.mxu0 %v3485
    %3700 = vmatprep.subr.bf16.mxu0 %v3490
    %3701 = vmatpush1.bf16.msra.mxu0 %v3489
    %3702 = vmatprep.subr.bf16.mxu0 %v3494
    %3703 = vmatpush1.bf16.msra.mxu0 %v3493
    %3704 = vmatprep.subr.bf16.mxu0 %v3498
    %3705 = vmatpush1.bf16.msra.mxu0 %v3497
    %3706 = vmatprep.subr.bf16.mxu0 %v3502
    %3707 = vmatpush1.bf16.msra.mxu0 %v3501
    %3708 = vmatprep.mubr.bf16.mxu0 %v2843
    %3709 = vmatmul.mubr.bf16.gmra.mrb[0].mxu0 %v2842
    %v3710 = vpop.f32.mrb[0].mxu0
    %v3711 = vadd.f32 %v3668, %v3710
    %v3712 = vpop.f32.mrb[0].mxu0
    %v3713 = vadd.f32 %v3670, %v3712
    %v3714 = vpop.f32.mrb[0].mxu0
    %v3715 = vadd.f32 %v3672, %v3714
    %v3716 = vpop.f32.mrb[0].mxu0
    %v3717 = vadd.f32 %v3674, %v3716
    %3718 = vdwg.mxu0
    %3719 = vmatprep.subr.bf16.mxu0 %v3380
    %3720 = vmatpush1.bf16.msra.mxu0 %v3379
    %3721 = vmatprep.subr.bf16.mxu0 %v3384
    %3722 = vmatpush1.bf16.msra.mxu0 %v3383
    %3723 = vmatprep.subr.bf16.mxu0 %v3388
    %3724 = vmatpush1.bf16.msra.mxu0 %v3387
    %3725 = vmatprep.subr.bf16.mxu0 %v3392
    %3726 = vmatpush1.bf16.msra.mxu0 %v3391
    %3727 = vmatprep.subr.bf16.mxu0 %v3396
    %3728 = vmatpush1.bf16.msra.mxu0 %v3395
    %3729 = vmatprep.subr.bf16.mxu0 %v3400
    %3730 = vmatpush1.bf16.msra.mxu0 %v3399
    %3731 = vmatprep.subr.bf16.mxu0 %v3404
    %3732 = vmatpush1.bf16.msra.mxu0 %v3403
    %3733 = vmatprep.subr.bf16.mxu0 %v3408
    %3734 = vmatpush1.bf16.msra.mxu0 %v3407
    %3735 = vmatprep.subr.bf16.mxu0 %v3412
    %3736 = vmatpush1.bf16.msra.mxu0 %v3411
    %3737 = vmatprep.subr.bf16.mxu0 %v3416
    %3738 = vmatpush1.bf16.msra.mxu0 %v3415
    %3739 = vmatprep.subr.bf16.mxu0 %v3420
    %3740 = vmatpush1.bf16.msra.mxu0 %v3419
    %3741 = vmatprep.subr.bf16.mxu0 %v3424
    %3742 = vmatpush1.bf16.msra.mxu0 %v3423
    %3743 = vmatprep.subr.bf16.mxu0 %v3428
    %3744 = vmatpush1.bf16.msra.mxu0 %v3427
    %3745 = vmatprep.subr.bf16.mxu0 %v3432
    %3746 = vmatpush1.bf16.msra.mxu0 %v3431
    %3747 = vmatprep.subr.bf16.mxu0 %v3436
    %3748 = vmatpush1.bf16.msra.mxu0 %v3435
    %3749 = vmatprep.subr.bf16.mxu0 %v3440
    %3750 = vmatpush1.bf16.msra.mxu0 %v3439
    %3751 = vmatprep.mubr.bf16.mxu0 %v2841
    %3752 = vmatmul.mubr.bf16.gmra.mrb[0].mxu0 %v2840
    %v3753 = vpop.f32.mrb[0].mxu0
    %v3754 = vadd.f32 %v2984, %v3753
    %v3755 = vpop.f32.mrb[0].mxu0
    %v3756 = vadd.f32 %v2988, %v3755
    %v3757 = vpop.f32.mrb[0].mxu0
    %v3758 = vadd.f32 %v2984, %v3757
    %v3759 = vpop.f32.mrb[0].mxu0
    %v3760 = vadd.f32 %v2988, %v3759
    %3761 = vdwg.mxu0
    %3762 = vmatprep.subr.bf16.mxu0 %v3444
    %3763 = vmatpush1.bf16.msra.mxu0 %v3443
    %3764 = vmatprep.subr.bf16.mxu0 %v3448
    %3765 = vmatpush1.bf16.msra.mxu0 %v3447
    %3766 = vmatprep.subr.bf16.mxu0 %v3452
    %3767 = vmatpush1.bf16.msra.mxu0 %v3451
    %3768 = vmatprep.subr.bf16.mxu0 %v3456
    %3769 = vmatpush1.bf16.msra.mxu0 %v3455
    %3770 = vmatprep.subr.bf16.mxu0 %v3460
    %3771 = vmatpush1.bf16.msra.mxu0 %v3459
    %3772 = vmatprep.subr.bf16.mxu0 %v3464
    %3773 = vmatpush1.bf16.msra.mxu0 %v3463
    %3774 = vmatprep.subr.bf16.mxu0 %v3468
    %3775 = vmatpush1.bf16.msra.mxu0 %v3467
    %3776 = vmatprep.subr.bf16.mxu0 %v3472
    %3777 = vmatpush1.bf16.msra.mxu0 %v3471
    %3778 = vmatprep.subr.bf16.mxu0 %v3476
    %3779 = vmatpush1.bf16.msra.mxu0 %v3475
    %3780 = vmatprep.subr.bf16.mxu0 %v3480
    %3781 = vmatpush1.bf16.msra.mxu0 %v3479
    %3782 = vmatprep.subr.bf16.mxu0 %v3484
    %3783 = vmatpush1.bf16.msra.mxu0 %v3483
    %3784 = vmatprep.subr.bf16.mxu0 %v3488
    %3785 = vmatpush1.bf16.msra.mxu0 %v3487
    %3786 = vmatprep.subr.bf16.mxu0 %v3492
    %3787 = vmatpush1.bf16.msra.mxu0 %v3491
    %3788 = vmatprep.subr.bf16.mxu0 %v3496
    %3789 = vmatpush1.bf16.msra.mxu0 %v3495
    %3790 = vmatprep.subr.bf16.mxu0 %v3500
    %3791 = vmatpush1.bf16.msra.mxu0 %v3499
    %3792 = vmatprep.subr.bf16.mxu0 %v3504
    %3793 = vmatpush1.bf16.msra.mxu0 %v3503
    %3794 = vmatprep.mubr.bf16.mxu0 %v2843
    %3795 = vmatmul.mubr.bf16.gmra.mrb[0].mxu0 %v2842
    %v3796 = vpop.f32.mrb[0].mxu0
    %v3797 = vadd.f32 %v3754, %v3796
    %v3798 = vpop.f32.mrb[0].mxu0
    %v3799 = vadd.f32 %v3756, %v3798
    %v3800 = vpop.f32.mrb[0].mxu0
    %v3801 = vadd.f32 %v3758, %v3800
    %v3802 = vpop.f32.mrb[0].mxu0
    %v3803 = vadd.f32 %v3760, %v3802
    %3804 = vdwg.mxu0
    %v3805 = vsub.f32 %v1679, %v3711
    %v3806 = vsub.f32 %v1681, %v3713
    %v3807 = vsub.f32 %v1851, %v3797
    %v3808 = vsub.f32 %v1853, %v3799
    %v3809 = vsub.f32 %v1683, %v3715
    %v3810 = vsub.f32 %v1685, %v3717
    %v3811 = vsub.f32 %v1855, %v3801
    %v3812 = vsub.f32 %v1857, %v3803
    %v3813 = vmax.f32 %v3805, 0.0
    %v3814 = vmax.f32 %v3806, 0.0
    %v3815 = vmax.f32 %v3807, 0.0
    %v3816 = vmax.f32 %v3808, 0.0
    %v3817 = vmax.f32 %v3809, 0.0
    %v3818 = vmax.f32 %v3810, 0.0
    %v3819 = vmax.f32 %v3811, 0.0
    %v3820 = vmax.f32 %v3812, 0.0
    %v3821 = vpack.c.bf16 %v3817, %v3813
    %v3822 = vpack.c.bf16 %v3818, %v3814
    %v3823 = vpack.c.bf16 %v3819, %v3815
    %v3824 = vpack.c.bf16 %v3820, %v3816
    %3825 = vmatprep.subr.bf16.mxu0 %v2405
    %3826 = vmatpush1.bf16.msra.mxu0 %v2404
    %3827 = vmatprep.subr.bf16.mxu0 %v2409
    %3828 = vmatpush1.bf16.msra.mxu0 %v2408
    %3829 = vmatprep.subr.bf16.mxu0 %v2413
    %3830 = vmatpush1.bf16.msra.mxu0 %v2412
    %3831 = vmatprep.subr.bf16.mxu0 %v2417
    %3832 = vmatpush1.bf16.msra.mxu0 %v2416
    %3833 = vmatprep.subr.bf16.mxu0 %v2421
    %3834 = vmatpush1.bf16.msra.mxu0 %v2420
    %3835 = vmatprep.subr.bf16.mxu0 %v2425
    %3836 = vmatpush1.bf16.msra.mxu0 %v2424
    %3837 = vmatprep.subr.bf16.mxu0 %v2429
    %3838 = vmatpush1.bf16.msra.mxu0 %v2428
    %3839 = vmatprep.subr.bf16.mxu0 %v2433
    %3840 = vmatpush1.bf16.msra.mxu0 %v2432
    %3841 = vmatprep.subr.bf16.mxu0 %v2437
    %3842 = vmatpush1.bf16.msra.mxu0 %v2436
    %3843 = vmatprep.subr.bf16.mxu0 %v2441
    %3844 = vmatpush1.bf16.msra.mxu0 %v2440
    %3845 = vmatprep.subr.bf16.mxu0 %v2445
    %3846 = vmatpush1.bf16.msra.mxu0 %v2444
    %3847 = vmatprep.subr.bf16.mxu0 %v2449
    %3848 = vmatpush1.bf16.msra.mxu0 %v2448
    %3849 = vmatprep.subr.bf16.mxu0 %v2453
    %3850 = vmatpush1.bf16.msra.mxu0 %v2452
    %3851 = vmatprep.subr.bf16.mxu0 %v2457
    %3852 = vmatpush1.bf16.msra.mxu0 %v2456
    %3853 = vmatprep.subr.bf16.mxu0 %v2461
    %3854 = vmatpush1.bf16.msra.mxu0 %v2460
    %3855 = vmatprep.subr.bf16.mxu0 %v2465
    %3856 = vmatpush1.bf16.msra.mxu0 %v2464
    %3857 = vmatprep.mubr.bf16.mxu0 %v3822
    %3858 = vmatmul.mubr.bf16.gmra.mrb[0].mxu0 %v3821
    %v3859 = vpop.f32.mrb[0].mxu0
    %v3860 = vadd.f32 %v2003, %v3859
    %v3861 = vpop.f32.mrb[0].mxu0
    %v3862 = vadd.f32 %v2007, %v3861
    %v3863 = vpop.f32.mrb[0].mxu0
    %v3864 = vadd.f32 %v2003, %v3863
    %v3865 = vpop.f32.mrb[0].mxu0
    %v3866 = vadd.f32 %v2007, %v3865
    %3867 = vdwg.mxu0
    %3868 = vmatprep.subr.bf16.mxu0 %v2469
    %3869 = vmatpush1.bf16.msra.mxu0 %v2468
    %3870 = vmatprep.subr.bf16.mxu0 %v2473
    %3871 = vmatpush1.bf16.msra.mxu0 %v2472
    %3872 = vmatprep.subr.bf16.mxu0 %v2477
    %3873 = vmatpush1.bf16.msra.mxu0 %v2476
    %3874 = vmatprep.subr.bf16.mxu0 %v2481
    %3875 = vmatpush1.bf16.msra.mxu0 %v2480
    %3876 = vmatprep.subr.bf16.mxu0 %v2485
    %3877 = vmatpush1.bf16.msra.mxu0 %v2484
    %3878 = vmatprep.subr.bf16.mxu0 %v2489
    %3879 = vmatpush1.bf16.msra.mxu0 %v2488
    %3880 = vmatprep.subr.bf16.mxu0 %v2493
    %3881 = vmatpush1.bf16.msra.mxu0 %v2492
    %3882 = vmatprep.subr.bf16.mxu0 %v2497
    %3883 = vmatpush1.bf16.msra.mxu0 %v2496
    %3884 = vmatprep.subr.bf16.mxu0 %v2501
    %3885 = vmatpush1.bf16.msra.mxu0 %v2500
    %3886 = vmatprep.subr.bf16.mxu0 %v2505
    %3887 = vmatpush1.bf16.msra.mxu0 %v2504
    %3888 = vmatprep.subr.bf16.mxu0 %v2509
    %3889 = vmatpush1.bf16.msra.mxu0 %v2508
    %3890 = vmatprep.subr.bf16.mxu0 %v2513
    %3891 = vmatpush1.bf16.msra.mxu0 %v2512
    %3892 = vmatprep.subr.bf16.mxu0 %v2517
    %3893 = vmatpush1.bf16.msra.mxu0 %v2516
    %3894 = vmatprep.subr.bf16.mxu0 %v2521
    %3895 = vmatpush1.bf16.msra.mxu0 %v2520
    %3896 = vmatprep.subr.bf16.mxu0 %v2525
    %3897 = vmatpush1.bf16.msra.mxu0 %v2524
    %3898 = vmatprep.subr.bf16.mxu0 %v2529
    %3899 = vmatpush1.bf16.msra.mxu0 %v2528
    %3900 = vmatprep.mubr.bf16.mxu0 %v3824
    %3901 = vmatmul.mubr.bf16.gmra.mrb[0].mxu0 %v3823
    %v3902 = vpop.f32.mrb[0].mxu0
    %v3903 = vadd.f32 %v3860, %v3902
    %v3904 = vpop.f32.mrb[0].mxu0
    %v3905 = vadd.f32 %v3862, %v3904
    %v3906 = vpop.f32.mrb[0].mxu0
    %v3907 = vadd.f32 %v3864, %v3906
    %v3908 = vpop.f32.mrb[0].mxu0
    %v3909 = vadd.f32 %v3866, %v3908
    %3910 = vdwg.mxu0
    %3911 = vmatprep.subr.bf16.mxu0 %v2407
    %3912 = vmatpush1.bf16.msra.mxu0 %v2406
    %3913 = vmatprep.subr.bf16.mxu0 %v2411
    %3914 = vmatpush1.bf16.msra.mxu0 %v2410
    %3915 = vmatprep.subr.bf16.mxu0 %v2415
    %3916 = vmatpush1.bf16.msra.mxu0 %v2414
    %3917 = vmatprep.subr.bf16.mxu0 %v2419
    %3918 = vmatpush1.bf16.msra.mxu0 %v2418
    %3919 = vmatprep.subr.bf16.mxu0 %v2423
    %3920 = vmatpush1.bf16.msra.mxu0 %v2422
    %3921 = vmatprep.subr.bf16.mxu0 %v2427
    %3922 = vmatpush1.bf16.msra.mxu0 %v2426
    %3923 = vmatprep.subr.bf16.mxu0 %v2431
    %3924 = vmatpush1.bf16.msra.mxu0 %v2430
    %3925 = vmatprep.subr.bf16.mxu0 %v2435
    %3926 = vmatpush1.bf16.msra.mxu0 %v2434
    %3927 = vmatprep.subr.bf16.mxu0 %v2439
    %3928 = vmatpush1.bf16.msra.mxu0 %v2438
    %3929 = vmatprep.subr.bf16.mxu0 %v2443
    %3930 = vmatpush1.bf16.msra.mxu0 %v2442
    %3931 = vmatprep.subr.bf16.mxu0 %v2447
    %3932 = vmatpush1.bf16.msra.mxu0 %v2446
    %3933 = vmatprep.subr.bf16.mxu0 %v2451
    %3934 = vmatpush1.bf16.msra.mxu0 %v2450
    %3935 = vmatprep.subr.bf16.mxu0 %v2455
    %3936 = vmatpush1.bf16.msra.mxu0 %v2454
    %3937 = vmatprep.subr.bf16.mxu0 %v2459
    %3938 = vmatpush1.bf16.msra.mxu0 %v2458
    %3939 = vmatprep.subr.bf16.mxu0 %v2463
    %3940 = vmatpush1.bf16.msra.mxu0 %v2462
    %3941 = vmatprep.subr.bf16.mxu0 %v2467
    %3942 = vmatpush1.bf16.msra.mxu0 %v2466
    %3943 = vmatprep.mubr.bf16.mxu0 %v3822
    %3944 = vmatmul.mubr.bf16.gmra.mrb[0].mxu0 %v3821
    %v3945 = vpop.f32.mrb[0].mxu0
    %v3946 = vadd.f32 %v2011, %v3945
    %v3947 = vpop.f32.mrb[0].mxu0
    %v3948 = vadd.f32 %v2015, %v3947
    %v3949 = vpop.f32.mrb[0].mxu0
    %v3950 = vadd.f32 %v2011, %v3949
    %v3951 = vpop.f32.mrb[0].mxu0
    %v3952 = vadd.f32 %v2015, %v3951
    %3953 = vdwg.mxu0
    %3954 = vmatprep.subr.bf16.mxu0 %v2471
    %3955 = vmatpush1.bf16.msra.mxu0 %v2470
    %3956 = vmatprep.subr.bf16.mxu0 %v2475
    %3957 = vmatpush1.bf16.msra.mxu0 %v2474
    %3958 = vmatprep.subr.bf16.mxu0 %v2479
    %3959 = vmatpush1.bf16.msra.mxu0 %v2478
    %3960 = vmatprep.subr.bf16.mxu0 %v2483
    %3961 = vmatpush1.bf16.msra.mxu0 %v2482
    %3962 = vmatprep.subr.bf16.mxu0 %v2487
    %3963 = vmatpush1.bf16.msra.mxu0 %v2486
    %3964 = vmatprep.subr.bf16.mxu0 %v2491
    %3965 = vmatpush1.bf16.msra.mxu0 %v2490
    %3966 = vmatprep.subr.bf16.mxu0 %v2495
    %3967 = vmatpush1.bf16.msra.mxu0 %v2494
    %3968 = vmatprep.subr.bf16.mxu0 %v2499
    %3969 = vmatpush1.bf16.msra.mxu0 %v2498
    %3970 = vmatprep.subr.bf16.mxu0 %v2503
    %3971 = vmatpush1.bf16.msra.mxu0 %v2502
    %3972 = vmatprep.subr.bf16.mxu0 %v2507
    %3973 = vmatpush1.bf16.msra.mxu0 %v2506
    %3974 = vmatprep.subr.bf16.mxu0 %v2511
    %3975 = vmatpush1.bf16.msra.mxu0 %v2510
    %3976 = vmatprep.subr.bf16.mxu0 %v2515
    %3977 = vmatpush1.bf16.msra.mxu0 %v2514
    %3978 = vmatprep.subr.bf16.mxu0 %v2519
    %3979 = vmatpush1.bf16.msra.mxu0 %v2518
    %3980 = vmatprep.subr.bf16.mxu0 %v2523
    %3981 = vmatpush1.bf16.msra.mxu0 %v2522
    %3982 = vmatprep.subr.bf16.mxu0 %v2527
    %3983 = vmatpush1.bf16.msra.mxu0 %v2526
    %3984 = vmatprep.subr.bf16.mxu0 %v2531
    %3985 = vmatpush1.bf16.msra.mxu0 %v2530
    %3986 = vmatprep.mubr.bf16.mxu0 %v3824
    %3987 = vmatmul.mubr.bf16.gmra.mrb[0].mxu0 %v3823
    %v3988 = vpop.f32.mrb[0].mxu0
    %v3989 = vadd.f32 %v3946, %v3988
    %v3990 = vpop.f32.mrb[0].mxu0
    %v3991 = vadd.f32 %v3948, %v3990
    %v3992 = vpop.f32.mrb[0].mxu0
    %v3993 = vadd.f32 %v3950, %v3992
    %v3994 = vpop.f32.mrb[0].mxu0
    %v3995 = vadd.f32 %v3952, %v3994
    %3996 = vdwg.mxu0
    %v3997 = vmax.f32 %v3903, 0.0
    %v3998 = vmax.f32 %v3905, 0.0
    %v3999 = vmax.f32 %v3989, 0.0
    %v4000 = vmax.f32 %v3991, 0.0
    %v4001 = vmax.f32 %v3907, 0.0
    %v4002 = vmax.f32 %v3909, 0.0
    %v4003 = vmax.f32 %v3993, 0.0
    %v4004 = vmax.f32 %v3995, 0.0
    %v4005 = vpack.c.bf16 %v4001, %v3997
    %v4006 = vpack.c.bf16 %v4002, %v3998
    %v4007 = vpack.c.bf16 %v4003, %v3999
    %v4008 = vpack.c.bf16 %v4004, %v4000
    %v4009 = vld [vmem:[#allocation8] sm:$0xf]
    %v4010 = vld [vmem:[#allocation8 + $0x4] sm:$0xf]
    %v4011 = vld [vmem:[#allocation8 + $0x8] sm:$0xf]
    %v4012 = vld [vmem:[#allocation8 + $0xc] sm:$0xf]
    %v4013 = vld [vmem:[#allocation8 + $0x10] sm:$0xf]
    %v4014 = vld [vmem:[#allocation8 + $0x14] sm:$0xf]
    %v4015 = vld [vmem:[#allocation8 + $0x18] sm:$0xf]
    %v4016 = vld [vmem:[#allocation8 + $0x1c] sm:$0xf]
    %v4017 = vld [vmem:[#allocation8 + $0x20] sm:$0xf]
    %v4018 = vld [vmem:[#allocation8 + $0x24] sm:$0xf]
    %v4019 = vld [vmem:[#allocation8 + $0x28] sm:$0xf]
    %v4020 = vld [vmem:[#allocation8 + $0x2c] sm:$0xf]
    %v4021 = vld [vmem:[#allocation8 + $0x30] sm:$0xf]
    %v4022 = vld [vmem:[#allocation8 + $0x34] sm:$0xf]
    %v4023 = vld [vmem:[#allocation8 + $0x38] sm:$0xf]
    %v4024 = vld [vmem:[#allocation8 + $0x3c] sm:$0xf]
    %v4025 = vld [vmem:[#allocation8 + $0x40] sm:$0xf]
    %v4026 = vld [vmem:[#allocation8 + $0x44] sm:$0xf]
    %v4027 = vld [vmem:[#allocation8 + $0x48] sm:$0xf]
    %v4028 = vld [vmem:[#allocation8 + $0x4c] sm:$0xf]
    %v4029 = vld [vmem:[#allocation8 + $0x50] sm:$0xf]
    %v4030 = vld [vmem:[#allocation8 + $0x54] sm:$0xf]
    %v4031 = vld [vmem:[#allocation8 + $0x58] sm:$0xf]
    %v4032 = vld [vmem:[#allocation8 + $0x5c] sm:$0xf]
    %v4033 = vld [vmem:[#allocation8 + $0x60] sm:$0xf]
    %v4034 = vld [vmem:[#allocation8 + $0x64] sm:$0xf]
    %v4035 = vld [vmem:[#allocation8 + $0x68] sm:$0xf]
    %v4036 = vld [vmem:[#allocation8 + $0x6c] sm:$0xf]
    %v4037 = vld [vmem:[#allocation8 + $0x70] sm:$0xf]
    %v4038 = vld [vmem:[#allocation8 + $0x74] sm:$0xf]
    %v4039 = vld [vmem:[#allocation8 + $0x78] sm:$0xf]
    %v4040 = vld [vmem:[#allocation8 + $0x7c] sm:$0xf]
    %v4041 = vld [vmem:[#allocation8 + $0x80] sm:$0xf]
    %v4042 = vld [vmem:[#allocation8 + $0x84] sm:$0xf]
    %v4043 = vld [vmem:[#allocation8 + $0x88] sm:$0xf]
    %v4044 = vld [vmem:[#allocation8 + $0x8c] sm:$0xf]
    %v4045 = vld [vmem:[#allocation8 + $0x90] sm:$0xf]
    %v4046 = vld [vmem:[#allocation8 + $0x94] sm:$0xf]
    %v4047 = vld [vmem:[#allocation8 + $0x98] sm:$0xf]
    %v4048 = vld [vmem:[#allocation8 + $0x9c] sm:$0xf]
    %v4049 = vld [vmem:[#allocation8 + $0xa0] sm:$0xf]
    %v4050 = vld [vmem:[#allocation8 + $0xa4] sm:$0xf]
    %v4051 = vld [vmem:[#allocation8 + $0xa8] sm:$0xf]
    %v4052 = vld [vmem:[#allocation8 + $0xac] sm:$0xf]
    %v4053 = vld [vmem:[#allocation8 + $0xb0] sm:$0xf]
    %v4054 = vld [vmem:[#allocation8 + $0xb4] sm:$0xf]
    %v4055 = vld [vmem:[#allocation8 + $0xb8] sm:$0xf]
    %v4056 = vld [vmem:[#allocation8 + $0xbc] sm:$0xf]
    %v4057 = vld [vmem:[#allocation8 + $0xc0] sm:$0xf]
    %v4058 = vld [vmem:[#allocation8 + $0xc4] sm:$0xf]
    %v4059 = vld [vmem:[#allocation8 + $0xc8] sm:$0xf]
    %v4060 = vld [vmem:[#allocation8 + $0xcc] sm:$0xf]
    %v4061 = vld [vmem:[#allocation8 + $0xd0] sm:$0xf]
    %v4062 = vld [vmem:[#allocation8 + $0xd4] sm:$0xf]
    %v4063 = vld [vmem:[#allocation8 + $0xd8] sm:$0xf]
    %v4064 = vld [vmem:[#allocation8 + $0xdc] sm:$0xf]
    %v4065 = vld [vmem:[#allocation8 + $0xe0] sm:$0xf]
    %v4066 = vld [vmem:[#allocation8 + $0xe4] sm:$0xf]
    %v4067 = vld [vmem:[#allocation8 + $0xe8] sm:$0xf]
    %v4068 = vld [vmem:[#allocation8 + $0xec] sm:$0xf]
    %v4069 = vld [vmem:[#allocation8 + $0xf0] sm:$0xf]
    %v4070 = vld [vmem:[#allocation8 + $0xf4] sm:$0xf]
    %v4071 = vld [vmem:[#allocation8 + $0xf8] sm:$0xf]
    %v4072 = vld [vmem:[#allocation8 + $0xfc] sm:$0xf]
    %v4074 = vlaneseq
    %v4075 = vshrl.u32 %v4074, 7
    %v4076 = vsub.s32 0, %v4075
    %v4077 = vrot.slane %v112, %v4076
    %v4143 = vunpack.c.l.b16 %v4009
    %v4144 = vunpack.c.l.b16 %v4010
    %v4145 = vunpack.c.l.b16 %v4011
    %v4146 = vunpack.c.l.b16 %v4012
    %v4147 = vunpack.c.l.b16 %v4013
    %v4148 = vunpack.c.l.b16 %v4014
    %v4149 = vunpack.c.l.b16 %v4015
    %v4150 = vunpack.c.l.b16 %v4016
    %v4151 = vunpack.c.l.b16 %v4017
    %v4152 = vunpack.c.l.b16 %v4018
    %v4153 = vunpack.c.l.b16 %v4019
    %v4154 = vunpack.c.l.b16 %v4020
    %v4155 = vunpack.c.l.b16 %v4021
    %v4156 = vunpack.c.l.b16 %v4022
    %v4157 = vunpack.c.l.b16 %v4023
    %v4158 = vunpack.c.l.b16 %v4024
    %v4159 = vunpack.c.l.b16 %v4025
    %v4160 = vunpack.c.l.b16 %v4026
    %v4161 = vunpack.c.l.b16 %v4027
    %v4162 = vunpack.c.l.b16 %v4028
    %v4163 = vunpack.c.l.b16 %v4029
    %v4164 = vunpack.c.l.b16 %v4030
    %v4165 = vunpack.c.l.b16 %v4031
    %v4166 = vunpack.c.l.b16 %v4032
    %v4167 = vunpack.c.l.b16 %v4033
    %v4168 = vunpack.c.l.b16 %v4034
    %v4169 = vunpack.c.l.b16 %v4035
    %v4170 = vunpack.c.l.b16 %v4036
    %v4171 = vunpack.c.l.b16 %v4037
    %v4172 = vunpack.c.l.b16 %v4038
    %v4173 = vunpack.c.l.b16 %v4039
    %v4174 = vunpack.c.l.b16 %v4040
    %v4175 = vunpack.c.l.b16 %v4041
    %v4176 = vunpack.c.l.b16 %v4042
    %v4177 = vunpack.c.l.b16 %v4043
    %v4178 = vunpack.c.l.b16 %v4044
    %v4179 = vunpack.c.l.b16 %v4045
    %v4180 = vunpack.c.l.b16 %v4046
    %v4181 = vunpack.c.l.b16 %v4047
    %v4182 = vunpack.c.l.b16 %v4048
    %v4183 = vunpack.c.l.b16 %v4049
    %v4184 = vunpack.c.l.b16 %v4050
    %v4185 = vunpack.c.l.b16 %v4051
    %v4186 = vunpack.c.l.b16 %v4052
    %v4187 = vunpack.c.l.b16 %v4053
    %v4188 = vunpack.c.l.b16 %v4054
    %v4189 = vunpack.c.l.b16 %v4055
    %v4190 = vunpack.c.l.b16 %v4056
    %v4191 = vunpack.c.l.b16 %v4057
    %v4192 = vunpack.c.l.b16 %v4058
    %v4193 = vunpack.c.l.b16 %v4059
    %v4194 = vunpack.c.l.b16 %v4060
    %v4195 = vunpack.c.l.b16 %v4061
    %v4196 = vunpack.c.l.b16 %v4062
    %v4197 = vunpack.c.l.b16 %v4063
    %v4198 = vunpack.c.l.b16 %v4064
    %v4199 = vunpack.c.l.b16 %v4065
    %v4200 = vunpack.c.l.b16 %v4066
    %v4201 = vunpack.c.l.b16 %v4067
    %v4202 = vunpack.c.l.b16 %v4068
    %v4203 = vunpack.c.l.b16 %v4069
    %v4204 = vunpack.c.l.b16 %v4070
    %v4205 = vunpack.c.l.b16 %v4071
    %v4206 = vunpack.c.l.b16 %v4072
    %v4207 = vpack.c.b16 %v4144, %v4143
    %v4208 = vpack.c.b16 %v4146, %v4145
    %v4209 = vpack.c.b16 %v4148, %v4147
    %v4210 = vpack.c.b16 %v4150, %v4149
    %v4211 = vpack.c.b16 %v4152, %v4151
    %v4212 = vpack.c.b16 %v4154, %v4153
    %v4213 = vpack.c.b16 %v4156, %v4155
    %v4214 = vpack.c.b16 %v4158, %v4157
    %v4215 = vpack.c.b16 %v4160, %v4159
    %v4216 = vpack.c.b16 %v4162, %v4161
    %v4217 = vpack.c.b16 %v4164, %v4163
    %v4218 = vpack.c.b16 %v4166, %v4165
    %v4219 = vpack.c.b16 %v4168, %v4167
    %v4220 = vpack.c.b16 %v4170, %v4169
    %v4221 = vpack.c.b16 %v4172, %v4171
    %v4222 = vpack.c.b16 %v4174, %v4173
    %v4223 = vpack.c.b16 %v4176, %v4175
    %v4224 = vpack.c.b16 %v4178, %v4177
    %v4225 = vpack.c.b16 %v4180, %v4179
    %v4226 = vpack.c.b16 %v4182, %v4181
    %v4227 = vpack.c.b16 %v4184, %v4183
    %v4228 = vpack.c.b16 %v4186, %v4185
    %v4229 = vpack.c.b16 %v4188, %v4187
    %v4230 = vpack.c.b16 %v4190, %v4189
    %v4231 = vpack.c.b16 %v4192, %v4191
    %v4232 = vpack.c.b16 %v4194, %v4193
    %v4233 = vpack.c.b16 %v4196, %v4195
    %v4234 = vpack.c.b16 %v4198, %v4197
    %v4235 = vpack.c.b16 %v4200, %v4199
    %v4236 = vpack.c.b16 %v4202, %v4201
    %v4237 = vpack.c.b16 %v4204, %v4203
    %v4238 = vpack.c.b16 %v4206, %v4205
    %4271 = vmatprep.subr.bf16.mxu0 0
    %4272 = vmatpush1.bf16.msra.mxu0 %v4207
    %4273 = vmatprep.subr.bf16.mxu0 0
    %4274 = vmatpush1.bf16.msra.mxu0 %v4208
    %4275 = vmatprep.subr.bf16.mxu0 0
    %4276 = vmatpush1.bf16.msra.mxu0 %v4209
    %4277 = vmatprep.subr.bf16.mxu0 0
    %4278 = vmatpush1.bf16.msra.mxu0 %v4210
    %4279 = vmatprep.subr.bf16.mxu0 0
    %4280 = vmatpush1.bf16.msra.mxu0 %v4211
    %4281 = vmatprep.subr.bf16.mxu0 0
    %4282 = vmatpush1.bf16.msra.mxu0 %v4212
    %4283 = vmatprep.subr.bf16.mxu0 0
    %4284 = vmatpush1.bf16.msra.mxu0 %v4213
    %4285 = vmatprep.subr.bf16.mxu0 0
    %4286 = vmatpush1.bf16.msra.mxu0 %v4214
    %4287 = vmatprep.subr.bf16.mxu0 0
    %4288 = vmatpush1.bf16.msra.mxu0 %v4215
    %4289 = vmatprep.subr.bf16.mxu0 0
    %4290 = vmatpush1.bf16.msra.mxu0 %v4216
    %4291 = vmatprep.subr.bf16.mxu0 0
    %4292 = vmatpush1.bf16.msra.mxu0 %v4217
    %4293 = vmatprep.subr.bf16.mxu0 0
    %4294 = vmatpush1.bf16.msra.mxu0 %v4218
    %4295 = vmatprep.subr.bf16.mxu0 0
    %4296 = vmatpush1.bf16.msra.mxu0 %v4219
    %4297 = vmatprep.subr.bf16.mxu0 0
    %4298 = vmatpush1.bf16.msra.mxu0 %v4220
    %4299 = vmatprep.subr.bf16.mxu0 0
    %4300 = vmatpush1.bf16.msra.mxu0 %v4221
    %4301 = vmatprep.subr.bf16.mxu0 0
    %4302 = vmatpush1.bf16.msra.mxu0 %v4222
    %4303 = vmatprep.mubr.bf16.mxu0 %v4006
    %4304 = vmatmul.mubr.bf16.gmra.mrb[0].mxu0 %v4005
    %v4305 = vpop.f32.mrb[0].mxu0
    %v4306 = vadd.f32 %v4077, %v4305
    %v4307 = vpop.f32.mrb[0].mxu0
    %v4308 = vpop.f32.mrb[0].mxu0
    %v4309 = vadd.f32 %v4077, %v4308
    %v4310 = vpop.f32.mrb[0].mxu0
    %4311 = vdwg.mxu0
    %4312 = vmatprep.subr.bf16.mxu0 0
    %4313 = vmatpush1.bf16.msra.mxu0 %v4223
    %4314 = vmatprep.subr.bf16.mxu0 0
    %4315 = vmatpush1.bf16.msra.mxu0 %v4224
    %4316 = vmatprep.subr.bf16.mxu0 0
    %4317 = vmatpush1.bf16.msra.mxu0 %v4225
    %4318 = vmatprep.subr.bf16.mxu0 0
    %4319 = vmatpush1.bf16.msra.mxu0 %v4226
    %4320 = vmatprep.subr.bf16.mxu0 0
    %4321 = vmatpush1.bf16.msra.mxu0 %v4227
    %4322 = vmatprep.subr.bf16.mxu0 0
    %4323 = vmatpush1.bf16.msra.mxu0 %v4228
    %4324 = vmatprep.subr.bf16.mxu0 0
    %4325 = vmatpush1.bf16.msra.mxu0 %v4229
    %4326 = vmatprep.subr.bf16.mxu0 0
    %4327 = vmatpush1.bf16.msra.mxu0 %v4230
    %4328 = vmatprep.subr.bf16.mxu0 0
    %4329 = vmatpush1.bf16.msra.mxu0 %v4231
    %4330 = vmatprep.subr.bf16.mxu0 0
    %4331 = vmatpush1.bf16.msra.mxu0 %v4232
    %4332 = vmatprep.subr.bf16.mxu0 0
    %4333 = vmatpush1.bf16.msra.mxu0 %v4233
    %4334 = vmatprep.subr.bf16.mxu0 0
    %4335 = vmatpush1.bf16.msra.mxu0 %v4234
    %4336 = vmatprep.subr.bf16.mxu0 0
    %4337 = vmatpush1.bf16.msra.mxu0 %v4235
    %4338 = vmatprep.subr.bf16.mxu0 0
    %4339 = vmatpush1.bf16.msra.mxu0 %v4236
    %4340 = vmatprep.subr.bf16.mxu0 0
    %4341 = vmatpush1.bf16.msra.mxu0 %v4237
    %4342 = vmatprep.subr.bf16.mxu0 0
    %4343 = vmatpush1.bf16.msra.mxu0 %v4238
    %4344 = vmatprep.mubr.bf16.mxu0 %v4008
    %4345 = vmatmul.mubr.bf16.gmra.mrb[0].mxu0 %v4007
    %v4346 = vpop.f32.mrb[0].mxu0
    %v4347 = vadd.f32 %v4306, %v4346
    %v4348 = vpop.f32.mrb[0].mxu0
    %v4349 = vpop.f32.mrb[0].mxu0
    %v4350 = vadd.f32 %v4309, %v4349
    %v4351 = vpop.f32.mrb[0].mxu0
    %4352 = vdwg.mxu0
    %4353 = vst [vmem:[#allocation11] sm:$0xff] %v4347
    %4354 = vst [vmem:[#allocation11 + $0x8] sm:$0xff] %v4350
    // Predicated region
    $region58: #{tpu_custom_call.1} parent=1 // pred_check
      _
    $region59: #{tpu_custom_call.1} parent=1 // pred_check_branch
      %4356 = sbr.rel (0) target = $region61
    $region60: #{tpu_custom_call.1} parent=1 // pred_region
      %s4358 = ssub.s32 256, 256
      %4359 = vsyncadd [#allocation4], %s4358
      %s4360 = sshll.u32 [#allocation11], 4
      %s4361 = int_to_ptr.vmem [resolvable:$true] %s4360
      %4366 = dma.vmem_to_hbm [thread:$0]  %s4361, 256, %s9, [#allocation4], 128, 128, 8
    $region61: #{tpu_custom_call.1} parent=1 // pred_fallthru
      _
    // Predicated region
    $region62: #{tpu_custom_call.1} parent=1 // pred_check
      _
    $region63: #{tpu_custom_call.1} parent=1 // pred_check_branch
      %4368 = sbr.rel (0) target = $region65
    $region64: #{tpu_custom_call.1} parent=1 // pred_region
      %4369 = dma.done [#allocation4], 256
    $region65: #{tpu_custom_call.1} parent=1 // pred_fallthru
      _
    %4370 = vsyncpa [#allocation3], 1
    %4371 = vsyncpa [#allocation6], 1
    %4372 = vsyncpa [#allocation9], 1
    %4373 = vsyncpa [#allocation4], 1

</llo_original>
